<compile_context>
chip_gen: v6e
topology: v6e:2x2x1
jax: 0.10.0
libtpu: 0.0.40
codegen_flags: <defaults>
</compile_context>

<pallas_src>
import jax
import jax.numpy as jnp
from jax import lax
from jax.experimental import pallas as pl
from jax.experimental.pallas import tpu as pltpu

_EPS = 1e-5


# ----------------------------------------------------------------------------
# Generation dispatch: fuse branches on 1-TC chips, shard them on 2-TC chips.
# ----------------------------------------------------------------------------
def _tensorcores_per_chip():
    try:
        kind = jax.devices()[0].device_kind.lower().replace(" ", "")
    except Exception:
        return 1
    if any(tag in kind for tag in ("v7", "tpu7", "v5p", "v4")):
        return 2
    return 1


# ----------------------------------------------------------------------------
# Wrapper-side construction of the per-stage linear operators.
#
#   X layout:  rows = (image, height),  lanes = (width, channel)  [c fastest]
#   stage:     ACC = [L0@X | L1@X | L2@X] @ [R0; R1; R2]
# ----------------------------------------------------------------------------
def _row_tap_cat(h_in, n_img, upsample):
    """(3*n_img*h_out, n_img*h_in) bf16 0/1 row maps for the 3 kernel-row taps
    (nearest-2x row upsample + zero pad + row tap dh), block-diag over images."""
    h_out = 2 * h_in if upsample else h_in
    r = jnp.arange(h_out)[:, None]
    i = jnp.arange(h_in)[None, :]
    eye = jnp.eye(n_img, dtype=jnp.float32)
    taps = []
    for dh in range(3):
        v = r + dh                                   # padded (upsampled) row index
        valid = (v >= 1) & (v <= h_out)
        src = (v - 1) // 2 if upsample else (v - 1)
        m = jnp.where(valid & (src == i), 1.0, 0.0).astype(jnp.float32)
        taps.append(jnp.kron(eye, m))                # block-diag over images
    return jnp.concatenate(taps, axis=0).astype(jnp.bfloat16)   # exact 0/1


def _col_tap_cat(w_in, w_hwio, upsample):
    """(3*w_in*c_in, w_out*c_out) bf16: column upsample/pad, the 3 dw taps and
    the channel contraction, stacked along the contraction axis per row tap."""
    c_in, c_out = int(w_hwio.shape[2]), int(w_hwio.shape[3])
    w_out = 2 * w_in if upsample else w_in
    wcol = jnp.arange(w_out)[None, :]
    j = jnp.arange(w_in)[:, None]
    taps = []
    for dh in range(3):
        r4 = jnp.zeros((w_in, c_in, w_out, c_out), jnp.float32)
        for dw in range(3):
            u = wcol + dw                            # padded (upsampled) col index
            valid = (u >= 1) & (u <= w_out)
            src = (u - 1) // 2 if upsample else (u - 1)
            sel = jnp.where(valid & (src == j), 1.0, 0.0).astype(jnp.float32)
            r4 = r4 + jnp.einsum("jw,ic->jiwc", sel, w_hwio[dh, dw])
        taps.append(r4.reshape(w_in * c_in, w_out * c_out))
    return jnp.concatenate(taps, axis=0).astype(jnp.bfloat16)


# ----------------------------------------------------------------------------
# Fused Pallas kernel (one grid step == one block of n_br branches).
# ----------------------------------------------------------------------------
def _make_decoder_kernel(n_br, batch, stage_cfg):
    n_img = n_br * batch

    def _chan_allreduce(v, c_out, w_out):
        # Sum the (1, w_out*c_out) lane vector over the w positions of every
        # channel and broadcast the per-channel total back to all of its lanes.
        # log2(w_out) circular lane rotations (XLU) -- zero MXU round-trips.
        for k in range(w_out.bit_length() - 1):
            v = v + pltpu.roll(v, shift=c_out << k, axis=1)
        return v

    def kernel(x_ref, l0, l1, l2, l3, l4, rslab_ref, rfin_ref, gb_ref, o_ref):
        l_refs = (l0, l1, l2, l3, l4)
        x = x_ref[0]                                  # (rows0, wc) bf16
        for s, (h_in, w_in, c_out, ups) in enumerate(stage_cfg):
            h_out = 2 * h_in if ups else h_in
            w_out = 2 * w_in if ups else w_in
            ro = n_img * h_out

            # (a) the three kernel-row taps of [upsample ->] pad -> conv as ONE
            #     exact bf16 0/1 row-selection matmul,
            z = jnp.dot(l_refs[s][...], x, preferred_element_type=jnp.float32)
            # (b) regroup the three row slabs onto the lane axis (pure vreg
            #     copies: 8-row offsets, 128-lane aligned 256-wide slabs),
            zcat = jnp.concatenate([z[0:ro], z[ro:2 * ro], z[2 * ro:3 * ro]],
                                   axis=1)
            # (c) one K = 3*w_in*c_in matmul for the column taps + channel
            #     contraction, f32 accumulation over the whole 3x3xC_in window.
            rmat = rslab_ref[s] if s < 4 else rfin_ref[...]
            acc = jnp.dot(zcat.astype(jnp.bfloat16), rmat,
                          preferred_element_type=jnp.float32)  # (ro, wc_out) f32

            if s < 4:
                # BatchNorm2d (training-mode stats of THIS branch, exact
                # two-pass variance) + ReLU.  Stats = sublane reduce + lane
                # rolls; gamma/beta arrive already lane-broadcast.
                gamma_l = gb_ref[2 * s:2 * s + 1, :]          # (1, wc)
                beta_l = gb_ref[2 * s + 1:2 * s + 2, :]
                rb = batch * h_out                            # rows per branch
                inv_cnt = 1.0 / float(batch * h_out * w_out)
                outs = []
                for b in range(n_br):
                    blk = acc[b * rb:(b + 1) * rb]
                    tot = _chan_allreduce(
                        jnp.sum(blk, axis=0, keepdims=True), c_out, w_out)
                    cen = blk - tot * inv_cnt
                    sq = _chan_allreduce(
                        jnp.sum(cen * cen, axis=0, keepdims=True), c_out, w_out)
                    inv_std = lax.rsqrt(sq * inv_cnt + _EPS)
                    outs.append(
                        jnp.maximum(cen * (gamma_l * inv_std) + beta_l, 0.0))
                y = outs[0] if n_br == 1 else jnp.concatenate(outs, axis=0)
                x = y.astype(jnp.bfloat16)
            else:
                # final 3x3 conv -> tanh; lane-dense store (channels padded).
                o_ref[0] = jnp.tanh(acc).astype(o_ref.dtype)

    return kernel


# ----------------------------------------------------------------------------
# Decoder1 forward (weights shared between the two branches, as in PyTorch).
# ----------------------------------------------------------------------------
@jax.jit
def decoder1_forward(sketch_code, noise_code, params):
    ups_params = params["upsample"]
    final_w = params["final_w"]
    start_channels = int(ups_params[0][0].shape[2])
    sketch_channels = int(final_w.shape[3])

    # branch packing: fuse branches on 1-TC chips, one branch per core on 2-TC.
    n_br = 1 if _tensorcores_per_chip() >= 2 else 2
    n_blocks = 2 // n_br

    def to_rows(code):
        x = code.reshape(-1, start_channels, 4, 4)            # PyTorch .view, NCHW
        x = jnp.transpose(x, (0, 2, 3, 1))                    # NHWC
        b = x.shape[0]
        return x.reshape(b * 4, 4 * start_channels).astype(jnp.bfloat16)

    xs, xn = to_rows(sketch_code), to_rows(noise_code)
    if xs.shape != xn.shape:
        raise ValueError("sketch_code and noise_code must imply the same batch size")
    batch = xs.shape[0] // 4
    n_img = n_br * batch
    x0 = jnp.concatenate([xs, xn], axis=0).reshape(
        n_blocks, n_img * 4, 4 * start_channels)

    # --- pack the per-stage constants into a handful of operands -------------
    l_ops, r_list, gb_rows, stage_cfg = [], [], [], []
    h = 4
    for (w, gamma, beta) in ups_params:
        c_out = int(w.shape[3])
        l_ops.append(_row_tap_cat(h, n_img, upsample=True))
        r_list.append(_col_tap_cat(h, w, upsample=True))
        gb_rows.append(jnp.tile(gamma.reshape(-1).astype(jnp.float32), 2 * h))
        gb_rows.append(jnp.tile(beta.reshape(-1).astype(jnp.float32), 2 * h))
        stage_cfg.append((h, h, c_out, True))
        h *= 2

    # final conv: pad out-channels so the lane width (h * c_pad) is 128-aligned.
    c_pad = sketch_channels
    while (h * c_pad) % 128:
        c_pad += 1
    w_fin = jnp.pad(final_w, ((0, 0), (0, 0), (0, 0), (0, c_pad - sketch_channels)))
    l_ops.append(_row_tap_cat(h, n_img, upsample=False))
    r_fin = _col_tap_cat(h, w_fin, upsample=False)
    stage_cfg.append((h, h, c_pad, False))

    rslab = jnp.stack(r_list, axis=0)                 # (4, 3*wc, wc) bf16
    gb = jnp.stack(gb_rows, axis=0)                   # (8, wc) f32

    kernel = _make_decoder_kernel(n_br, batch, tuple(stage_cfg))

    rows_out, cols_out = n_img * h, h * c_pad
    out_shape = jax.ShapeDtypeStruct((n_blocks, rows_out, cols_out), jnp.float32)

    def _const(a):
        return pl.BlockSpec(a.shape, lambda i, nd=a.ndim: (0,) * nd)

    consts = [*l_ops, rslab, r_fin, gb]
    in_specs = ([pl.BlockSpec((1,) + x0.shape[1:], lambda i: (i, 0, 0))]
                + [_const(a) for a in consts])
    out_specs = pl.BlockSpec((1, rows_out, cols_out), lambda i: (i, 0, 0))

    out = pl.pallas_call(
        kernel,
        out_shape=out_shape,
        grid=(n_blocks,),                             # branch-block axis
        in_specs=in_specs,
        out_specs=out_specs,
        compiler_params=pltpu.CompilerParams(
            dimension_semantics=("parallel",),        # v7x: one branch / core
            vmem_limit_bytes=32 * 1024 * 1024,        # explicit, v5e-safe
        ),
    )(x0, *consts)

    # (n_blocks, rows, W*Cpad) -> (2, batch, C, H, W), drop the pad channel(s).
    out = out.reshape(2, batch, h, h, c_pad)
    out = jnp.transpose(out, (0, 1, 4, 2, 3))[:, :, :sketch_channels]
    return out[0], out[1]


# ----------------------------------------------------------------------------
# Deterministic parameter construction (HWIO conv weights, BN affine params).
# ----------------------------------------------------------------------------
def init_decoder1_params(key, sketch_channels, start_channels=64):
    chans = [start_channels, start_channels // 2, start_channels // 4,
             start_channels // 8, start_channels // 16]
    ups = []
    for i in range(4):
        cin, cout = chans[i], chans[i + 1]
        key, kw, kg, kb = jax.random.split(key, 4)
        scale = 1.0 / jnp.sqrt(9.0 * cin)
        w = jax.random.normal(kw, (3, 3, cin, cout), jnp.float32) * scale   # HWIO
        gamma = 1.0 + 0.1 * jax.random.normal(kg, (1, cout), jnp.float32)
        beta = 0.1 * jax.random.normal(kb, (1, cout), jnp.float32)
        ups.append((w, gamma, beta))
    key, kf = jax.random.split(key)
    cin = chans[-1]
    scale = 1.0 / jnp.sqrt(9.0 * cin)
    final_w = jax.random.normal(kf, (3, 3, cin, sketch_channels), jnp.float32) * scale
    return {"upsample": tuple(ups), "final_w": final_w}


# ----------------------------------------------------------------------------
# Pure-JAX (XLA) reference of the same forward, for a numerical check.
# ----------------------------------------------------------------------------
def _reference_forward(code, params):
    start_channels = int(params["upsample"][0][0].shape[2])
    x = code.reshape(-1, start_channels, 4, 4)
    x = jnp.transpose(x, (0, 2, 3, 1)).astype(jnp.float32)     # NHWC
    for (w, gamma, beta) in params["upsample"]:
        x = jnp.repeat(jnp.repeat(x, 2, axis=1), 2, axis=2)
        x = lax.conv_general_dilated(x, w, (1, 1), ((1, 1), (1, 1)),
                                     dimension_numbers=("NHWC", "HWIO", "NHWC"),
                                     precision=lax.Precision.HIGHEST)
        mean = jnp.mean(x, axis=(0, 1, 2))
        var = jnp.var(x, axis=(0, 1, 2))
        x = (x - mean) * lax.rsqrt(var + _EPS)
        x = x * gamma.reshape(-1) + beta.reshape(-1)
        x = jnp.maximum(x, 0.0)
    x = lax.conv_general_dilated(x, params["final_w"], (1, 1), ((1, 1), (1, 1)),
                                 dimension_numbers=("NHWC", "HWIO", "NHWC"),
                                 precision=lax.Precision.HIGHEST)
    return jnp.transpose(jnp.tanh(x), (0, 3, 1, 2))            # NCHW


# ----------------------------------------------------------------------------
# Main
# ----------------------------------------------------------------------------
if __name__ == "__main__":
    B = 2
    sketch_channels = 3
    start_channels = 64

    key = jax.random.PRNGKey(0)
    key, k_params, k_sketch, k_noise = jax.random.split(key, 4)
    params = init_decoder1_params(k_params, sketch_channels, start_channels)

    sketch_code = jax.random.normal(k_sketch, (B, start_channels, 4, 4), jnp.float32)
    noise_code = jax.random.normal(k_noise, (B, start_channels * 4 * 4), jnp.float32)

    real_sketch, fake_sketch = decoder1_forward(sketch_code, noise_code, params)
    jax.block_until_ready((real_sketch, fake_sketch))

    assert real_sketch.shape == (B, sketch_channels, 64, 64), real_sketch.shape
    assert fake_sketch.shape == (B, sketch_channels, 64, 64), fake_sketch.shape
    assert bool(jnp.all(jnp.isfinite(real_sketch)))
    assert bool(jnp.all(jnp.isfinite(fake_sketch)))
    assert bool(jnp.all(jnp.abs(real_sketch) <= 1.0))          # tanh range

    # Numerical check vs. a plain-JAX reference (tolerance covers bf16 MXU inputs).
    ref_real = _reference_forward(sketch_code, params)
    ref_fake = _reference_forward(noise_code, params)
    err = max(float(jnp.max(jnp.abs(real_sketch - ref_real))),
              float(jnp.max(jnp.abs(fake_sketch - ref_fake))))
    assert err < 0.2, f"max |pallas - reference| = {err}"

    print("KERNEL_OK")
</pallas_src>

<mosaic_0001>
module attributes {stable_mosaic.version = 11 : i64} {
  func.func @kernel(%arg0: i32, %arg1: memref<1x16x256xbf16, #tpu.memory_space<vmem>>, %arg2: memref<96x16xbf16, #tpu.memory_space<vmem>>, %arg3: memref<192x32xbf16, #tpu.memory_space<vmem>>, %arg4: memref<384x64xbf16, #tpu.memory_space<vmem>>, %arg5: memref<768x128xbf16, #tpu.memory_space<vmem>>, %arg6: memref<768x256xbf16, #tpu.memory_space<vmem>>, %arg7: memref<4x768x256xbf16, #tpu.memory_space<vmem>>, %arg8: memref<768x256xbf16, #tpu.memory_space<vmem>>, %arg9: memref<8x256xf32, #tpu.memory_space<vmem>>, %arg10: memref<1x256x256xf32, #tpu.memory_space<vmem>>) attributes {dimension_semantics = [#tpu.dimension_semantics<parallel>], iteration_bounds = array<i64: 1>, scalar_prefetch = 0 : i64, scratch_operands = 0 : i64, tpu.core_type = #tpu.core_type<tc>, window_params = [{transform_indices = @transform_0, window_bounds = array<i64: 1, 16, 256>}, {pipeline_mode = #tpu.pipeline_mode<synchronous>, transform_indices = @transform_1, window_bounds = array<i64: 96, 16>}, {pipeline_mode = #tpu.pipeline_mode<synchronous>, transform_indices = @transform_2, window_bounds = array<i64: 192, 32>}, {pipeline_mode = #tpu.pipeline_mode<synchronous>, transform_indices = @transform_3, window_bounds = array<i64: 384, 64>}, {pipeline_mode = #tpu.pipeline_mode<synchronous>, transform_indices = @transform_4, window_bounds = array<i64: 768, 128>}, {pipeline_mode = #tpu.pipeline_mode<synchronous>, transform_indices = @transform_5, window_bounds = array<i64: 768, 256>}, {pipeline_mode = #tpu.pipeline_mode<synchronous>, transform_indices = @transform_6, window_bounds = array<i64: 4, 768, 256>}, {pipeline_mode = #tpu.pipeline_mode<synchronous>, transform_indices = @transform_7, window_bounds = array<i64: 768, 256>}, {pipeline_mode = #tpu.pipeline_mode<synchronous>, transform_indices = @transform_8, window_bounds = array<i64: 8, 256>}, {transform_indices = @transform_9, window_bounds = array<i64: 1, 256, 256>}]} {
    %c0 = arith.constant 0 : index
    %c0_0 = arith.constant 0 : index
    %c0_1 = arith.constant 0 : index
    %0 = vector.load %arg1[%c0, %c0_0, %c0_1] : memref<1x16x256xbf16, #tpu.memory_space<vmem>>, vector<1x16x256xbf16>
    %1 = vector.shape_cast %0 : vector<1x16x256xbf16> to vector<16x256xbf16>
    %c0_2 = arith.constant 0 : index
    %c0_3 = arith.constant 0 : index
    %2 = vector.load %arg2[%c0_2, %c0_3] : memref<96x16xbf16, #tpu.memory_space<vmem>>, vector<96x16xbf16>
    %cst = arith.constant dense<0.000000e+00> : vector<96x256xf32>
    %3 = tpu.matmul %2, %1, %cst {dimension_numbers = #tpu.dot_dimension_numbers<[1], [0], [0], [1], [0, 0, 1, 1], [], []>} : vector<96x16xbf16>, vector<16x256xbf16>, vector<96x256xf32> -> vector<96x256xf32>
    %4 = vector.extract_strided_slice %3 {offsets = [0, 0], sizes = [32, 256], strides = [1, 1]} : vector<96x256xf32> to vector<32x256xf32>
    %5 = vector.extract_strided_slice %3 {offsets = [32, 0], sizes = [32, 256], strides = [1, 1]} : vector<96x256xf32> to vector<32x256xf32>
    %6 = vector.extract_strided_slice %3 {offsets = [64, 0], sizes = [32, 256], strides = [1, 1]} : vector<96x256xf32> to vector<32x256xf32>
    %7 = tpu.concatenate %4, %5, %6 in 1 : vector<32x256xf32>, vector<32x256xf32>, vector<32x256xf32> -> vector<32x768xf32>
    %c0_4 = arith.constant 0 : index
    %c0_5 = arith.constant 0 : index
    %c0_6 = arith.constant 0 : index
    %8 = vector.load %arg7[%c0_4, %c0_5, %c0_6] : memref<4x768x256xbf16, #tpu.memory_space<vmem>>, vector<1x768x256xbf16>
    %9 = vector.shape_cast %8 : vector<1x768x256xbf16> to vector<768x256xbf16>
    %10 = arith.truncf %7 : vector<32x768xf32> to vector<32x768xbf16>
    %cst_7 = arith.constant dense<0.000000e+00> : vector<32x256xf32>
    %11 = tpu.matmul %10, %9, %cst_7 {dimension_numbers = #tpu.dot_dimension_numbers<[1], [0], [0], [1], [0, 0, 1, 1], [], []>} : vector<32x768xbf16>, vector<768x256xbf16>, vector<32x256xf32> -> vector<32x256xf32>
    %c0_8 = arith.constant 0 : index
    %c0_9 = arith.constant 0 : index
    %12 = vector.load %arg9[%c0_8, %c0_9] : memref<8x256xf32, #tpu.memory_space<vmem>>, vector<1x256xf32>
    %c1 = arith.constant 1 : index
    %c0_10 = arith.constant 0 : index
    %13 = vector.load %arg9[%c1, %c0_10] : memref<8x256xf32, #tpu.memory_space<vmem>>, vector<1x256xf32>
    %14 = vector.extract_strided_slice %11 {offsets = [0, 0], sizes = [16, 256], strides = [1, 1]} : vector<32x256xf32> to vector<16x256xf32>
    %cst_11 = arith.constant dense<0.000000e+00> : vector<256xf32>
    %15 = vector.multi_reduction <add>, %14, %cst_11 [0] : vector<16x256xf32> to vector<256xf32>
    %16 = vector.shape_cast %15 : vector<256xf32> to vector<1x256xf32>
    %c32_i32 = arith.constant 32 : i32
    %17 = tpu.dynamic_rotate %16 by %c32_i32 dim 1 : vector<1x256xf32>, i32 -> vector<1x256xf32>
    %18 = arith.addf %16, %17 : vector<1x256xf32>
    %c64_i32 = arith.constant 64 : i32
    %19 = tpu.dynamic_rotate %18 by %c64_i32 dim 1 : vector<1x256xf32>, i32 -> vector<1x256xf32>
    %20 = arith.addf %18, %19 : vector<1x256xf32>
    %c128_i32 = arith.constant 128 : i32
    %21 = tpu.dynamic_rotate %20 by %c128_i32 dim 1 : vector<1x256xf32>, i32 -> vector<1x256xf32>
    %22 = arith.addf %20, %21 : vector<1x256xf32>
    %cst_12 = arith.constant 7.812500e-03 : f32
    %23 = vector.broadcast %cst_12 : f32 to vector<1x256xf32>
    %24 = arith.mulf %22, %23 : vector<1x256xf32>
    %25 = vector.broadcast %24 : vector<1x256xf32> to vector<16x256xf32>
    %26 = arith.subf %14, %25 : vector<16x256xf32>
    %27 = arith.mulf %26, %26 : vector<16x256xf32>
    %cst_13 = arith.constant dense<0.000000e+00> : vector<256xf32>
    %28 = vector.multi_reduction <add>, %27, %cst_13 [0] : vector<16x256xf32> to vector<256xf32>
    %29 = vector.shape_cast %28 : vector<256xf32> to vector<1x256xf32>
    %c32_i32_14 = arith.constant 32 : i32
    %30 = tpu.dynamic_rotate %29 by %c32_i32_14 dim 1 : vector<1x256xf32>, i32 -> vector<1x256xf32>
    %31 = arith.addf %29, %30 : vector<1x256xf32>
    %c64_i32_15 = arith.constant 64 : i32
    %32 = tpu.dynamic_rotate %31 by %c64_i32_15 dim 1 : vector<1x256xf32>, i32 -> vector<1x256xf32>
    %33 = arith.addf %31, %32 : vector<1x256xf32>
    %c128_i32_16 = arith.constant 128 : i32
    %34 = tpu.dynamic_rotate %33 by %c128_i32_16 dim 1 : vector<1x256xf32>, i32 -> vector<1x256xf32>
    %35 = arith.addf %33, %34 : vector<1x256xf32>
    %cst_17 = arith.constant 7.812500e-03 : f32
    %36 = vector.broadcast %cst_17 : f32 to vector<1x256xf32>
    %37 = arith.mulf %35, %36 : vector<1x256xf32>
    %cst_18 = arith.constant 9.99999974E-6 : f32
    %38 = vector.broadcast %cst_18 : f32 to vector<1x256xf32>
    %39 = arith.addf %37, %38 : vector<1x256xf32>
    %40 = math.rsqrt %39 : vector<1x256xf32>
    %41 = arith.mulf %12, %40 : vector<1x256xf32>
    %42 = vector.broadcast %41 : vector<1x256xf32> to vector<16x256xf32>
    %43 = arith.mulf %26, %42 : vector<16x256xf32>
    %44 = vector.broadcast %13 : vector<1x256xf32> to vector<16x256xf32>
    %45 = arith.addf %43, %44 : vector<16x256xf32>
    %cst_19 = arith.constant 0.000000e+00 : f32
    %46 = vector.broadcast %cst_19 : f32 to vector<16x256xf32>
    %47 = arith.maximumf %45, %46 : vector<16x256xf32>
    %48 = vector.extract_strided_slice %11 {offsets = [16, 0], sizes = [16, 256], strides = [1, 1]} : vector<32x256xf32> to vector<16x256xf32>
    %cst_20 = arith.constant dense<0.000000e+00> : vector<256xf32>
    %49 = vector.multi_reduction <add>, %48, %cst_20 [0] : vector<16x256xf32> to vector<256xf32>
    %50 = vector.shape_cast %49 : vector<256xf32> to vector<1x256xf32>
    %c32_i32_21 = arith.constant 32 : i32
    %51 = tpu.dynamic_rotate %50 by %c32_i32_21 dim 1 : vector<1x256xf32>, i32 -> vector<1x256xf32>
    %52 = arith.addf %50, %51 : vector<1x256xf32>
    %c64_i32_22 = arith.constant 64 : i32
    %53 = tpu.dynamic_rotate %52 by %c64_i32_22 dim 1 : vector<1x256xf32>, i32 -> vector<1x256xf32>
    %54 = arith.addf %52, %53 : vector<1x256xf32>
    %c128_i32_23 = arith.constant 128 : i32
    %55 = tpu.dynamic_rotate %54 by %c128_i32_23 dim 1 : vector<1x256xf32>, i32 -> vector<1x256xf32>
    %56 = arith.addf %54, %55 : vector<1x256xf32>
    %cst_24 = arith.constant 7.812500e-03 : f32
    %57 = vector.broadcast %cst_24 : f32 to vector<1x256xf32>
    %58 = arith.mulf %56, %57 : vector<1x256xf32>
    %59 = vector.broadcast %58 : vector<1x256xf32> to vector<16x256xf32>
    %60 = arith.subf %48, %59 : vector<16x256xf32>
    %61 = arith.mulf %60, %60 : vector<16x256xf32>
    %cst_25 = arith.constant dense<0.000000e+00> : vector<256xf32>
    %62 = vector.multi_reduction <add>, %61, %cst_25 [0] : vector<16x256xf32> to vector<256xf32>
    %63 = vector.shape_cast %62 : vector<256xf32> to vector<1x256xf32>
    %c32_i32_26 = arith.constant 32 : i32
    %64 = tpu.dynamic_rotate %63 by %c32_i32_26 dim 1 : vector<1x256xf32>, i32 -> vector<1x256xf32>
    %65 = arith.addf %63, %64 : vector<1x256xf32>
    %c64_i32_27 = arith.constant 64 : i32
    %66 = tpu.dynamic_rotate %65 by %c64_i32_27 dim 1 : vector<1x256xf32>, i32 -> vector<1x256xf32>
    %67 = arith.addf %65, %66 : vector<1x256xf32>
    %c128_i32_28 = arith.constant 128 : i32
    %68 = tpu.dynamic_rotate %67 by %c128_i32_28 dim 1 : vector<1x256xf32>, i32 -> vector<1x256xf32>
    %69 = arith.addf %67, %68 : vector<1x256xf32>
    %cst_29 = arith.constant 7.812500e-03 : f32
    %70 = vector.broadcast %cst_29 : f32 to vector<1x256xf32>
    %71 = arith.mulf %69, %70 : vector<1x256xf32>
    %cst_30 = arith.constant 9.99999974E-6 : f32
    %72 = vector.broadcast %cst_30 : f32 to vector<1x256xf32>
    %73 = arith.addf %71, %72 : vector<1x256xf32>
    %74 = math.rsqrt %73 : vector<1x256xf32>
    %75 = arith.mulf %12, %74 : vector<1x256xf32>
    %76 = vector.broadcast %75 : vector<1x256xf32> to vector<16x256xf32>
    %77 = arith.mulf %60, %76 : vector<16x256xf32>
    %78 = vector.broadcast %13 : vector<1x256xf32> to vector<16x256xf32>
    %79 = arith.addf %77, %78 : vector<16x256xf32>
    %cst_31 = arith.constant 0.000000e+00 : f32
    %80 = vector.broadcast %cst_31 : f32 to vector<16x256xf32>
    %81 = arith.maximumf %79, %80 : vector<16x256xf32>
    %82 = tpu.concatenate %47, %81 in 0 : vector<16x256xf32>, vector<16x256xf32> -> vector<32x256xf32>
    %83 = arith.truncf %82 : vector<32x256xf32> to vector<32x256xbf16>
    %c0_32 = arith.constant 0 : index
    %c0_33 = arith.constant 0 : index
    %84 = vector.load %arg3[%c0_32, %c0_33] : memref<192x32xbf16, #tpu.memory_space<vmem>>, vector<192x32xbf16>
    %cst_34 = arith.constant dense<0.000000e+00> : vector<192x256xf32>
    %85 = tpu.matmul %84, %83, %cst_34 {dimension_numbers = #tpu.dot_dimension_numbers<[1], [0], [0], [1], [0, 0, 1, 1], [], []>} : vector<192x32xbf16>, vector<32x256xbf16>, vector<192x256xf32> -> vector<192x256xf32>
    %86 = vector.extract_strided_slice %85 {offsets = [0, 0], sizes = [64, 256], strides = [1, 1]} : vector<192x256xf32> to vector<64x256xf32>
    %87 = vector.extract_strided_slice %85 {offsets = [64, 0], sizes = [64, 256], strides = [1, 1]} : vector<192x256xf32> to vector<64x256xf32>
    %88 = vector.extract_strided_slice %85 {offsets = [128, 0], sizes = [64, 256], strides = [1, 1]} : vector<192x256xf32> to vector<64x256xf32>
    %89 = tpu.concatenate %86, %87, %88 in 1 : vector<64x256xf32>, vector<64x256xf32>, vector<64x256xf32> -> vector<64x768xf32>
    %c1_35 = arith.constant 1 : index
    %c0_36 = arith.constant 0 : index
    %c0_37 = arith.constant 0 : index
    %90 = vector.load %arg7[%c1_35, %c0_36, %c0_37] : memref<4x768x256xbf16, #tpu.memory_space<vmem>>, vector<1x768x256xbf16>
    %91 = vector.shape_cast %90 : vector<1x768x256xbf16> to vector<768x256xbf16>
    %92 = arith.truncf %89 : vector<64x768xf32> to vector<64x768xbf16>
    %cst_38 = arith.constant dense<0.000000e+00> : vector<64x256xf32>
    %93 = tpu.matmul %92, %91, %cst_38 {dimension_numbers = #tpu.dot_dimension_numbers<[1], [0], [0], [1], [0, 0, 1, 1], [], []>} : vector<64x768xbf16>, vector<768x256xbf16>, vector<64x256xf32> -> vector<64x256xf32>
    %c2 = arith.constant 2 : index
    %c0_39 = arith.constant 0 : index
    %94 = vector.load %arg9[%c2, %c0_39] : memref<8x256xf32, #tpu.memory_space<vmem>>, vector<1x256xf32>
    %c3 = arith.constant 3 : index
    %c0_40 = arith.constant 0 : index
    %95 = vector.load %arg9[%c3, %c0_40] : memref<8x256xf32, #tpu.memory_space<vmem>>, vector<1x256xf32>
    %96 = vector.extract_strided_slice %93 {offsets = [0, 0], sizes = [32, 256], strides = [1, 1]} : vector<64x256xf32> to vector<32x256xf32>
    %cst_41 = arith.constant dense<0.000000e+00> : vector<256xf32>
    %97 = vector.multi_reduction <add>, %96, %cst_41 [0] : vector<32x256xf32> to vector<256xf32>
    %98 = vector.shape_cast %97 : vector<256xf32> to vector<1x256xf32>
    %c16_i32 = arith.constant 16 : i32
    %99 = tpu.dynamic_rotate %98 by %c16_i32 dim 1 : vector<1x256xf32>, i32 -> vector<1x256xf32>
    %100 = arith.addf %98, %99 : vector<1x256xf32>
    %c32_i32_42 = arith.constant 32 : i32
    %101 = tpu.dynamic_rotate %100 by %c32_i32_42 dim 1 : vector<1x256xf32>, i32 -> vector<1x256xf32>
    %102 = arith.addf %100, %101 : vector<1x256xf32>
    %c64_i32_43 = arith.constant 64 : i32
    %103 = tpu.dynamic_rotate %102 by %c64_i32_43 dim 1 : vector<1x256xf32>, i32 -> vector<1x256xf32>
    %104 = arith.addf %102, %103 : vector<1x256xf32>
    %c128_i32_44 = arith.constant 128 : i32
    %105 = tpu.dynamic_rotate %104 by %c128_i32_44 dim 1 : vector<1x256xf32>, i32 -> vector<1x256xf32>
    %106 = arith.addf %104, %105 : vector<1x256xf32>
    %cst_45 = arith.constant 0.001953125 : f32
    %107 = vector.broadcast %cst_45 : f32 to vector<1x256xf32>
    %108 = arith.mulf %106, %107 : vector<1x256xf32>
    %109 = vector.broadcast %108 : vector<1x256xf32> to vector<32x256xf32>
    %110 = arith.subf %96, %109 : vector<32x256xf32>
    %111 = arith.mulf %110, %110 : vector<32x256xf32>
    %cst_46 = arith.constant dense<0.000000e+00> : vector<256xf32>
    %112 = vector.multi_reduction <add>, %111, %cst_46 [0] : vector<32x256xf32> to vector<256xf32>
    %113 = vector.shape_cast %112 : vector<256xf32> to vector<1x256xf32>
    %c16_i32_47 = arith.constant 16 : i32
    %114 = tpu.dynamic_rotate %113 by %c16_i32_47 dim 1 : vector<1x256xf32>, i32 -> vector<1x256xf32>
    %115 = arith.addf %113, %114 : vector<1x256xf32>
    %c32_i32_48 = arith.constant 32 : i32
    %116 = tpu.dynamic_rotate %115 by %c32_i32_48 dim 1 : vector<1x256xf32>, i32 -> vector<1x256xf32>
    %117 = arith.addf %115, %116 : vector<1x256xf32>
    %c64_i32_49 = arith.constant 64 : i32
    %118 = tpu.dynamic_rotate %117 by %c64_i32_49 dim 1 : vector<1x256xf32>, i32 -> vector<1x256xf32>
    %119 = arith.addf %117, %118 : vector<1x256xf32>
    %c128_i32_50 = arith.constant 128 : i32
    %120 = tpu.dynamic_rotate %119 by %c128_i32_50 dim 1 : vector<1x256xf32>, i32 -> vector<1x256xf32>
    %121 = arith.addf %119, %120 : vector<1x256xf32>
    %cst_51 = arith.constant 0.001953125 : f32
    %122 = vector.broadcast %cst_51 : f32 to vector<1x256xf32>
    %123 = arith.mulf %121, %122 : vector<1x256xf32>
    %cst_52 = arith.constant 9.99999974E-6 : f32
    %124 = vector.broadcast %cst_52 : f32 to vector<1x256xf32>
    %125 = arith.addf %123, %124 : vector<1x256xf32>
    %126 = math.rsqrt %125 : vector<1x256xf32>
    %127 = arith.mulf %94, %126 : vector<1x256xf32>
    %128 = vector.broadcast %127 : vector<1x256xf32> to vector<32x256xf32>
    %129 = arith.mulf %110, %128 : vector<32x256xf32>
    %130 = vector.broadcast %95 : vector<1x256xf32> to vector<32x256xf32>
    %131 = arith.addf %129, %130 : vector<32x256xf32>
    %cst_53 = arith.constant 0.000000e+00 : f32
    %132 = vector.broadcast %cst_53 : f32 to vector<32x256xf32>
    %133 = arith.maximumf %131, %132 : vector<32x256xf32>
    %134 = vector.extract_strided_slice %93 {offsets = [32, 0], sizes = [32, 256], strides = [1, 1]} : vector<64x256xf32> to vector<32x256xf32>
    %cst_54 = arith.constant dense<0.000000e+00> : vector<256xf32>
    %135 = vector.multi_reduction <add>, %134, %cst_54 [0] : vector<32x256xf32> to vector<256xf32>
    %136 = vector.shape_cast %135 : vector<256xf32> to vector<1x256xf32>
    %c16_i32_55 = arith.constant 16 : i32
    %137 = tpu.dynamic_rotate %136 by %c16_i32_55 dim 1 : vector<1x256xf32>, i32 -> vector<1x256xf32>
    %138 = arith.addf %136, %137 : vector<1x256xf32>
    %c32_i32_56 = arith.constant 32 : i32
    %139 = tpu.dynamic_rotate %138 by %c32_i32_56 dim 1 : vector<1x256xf32>, i32 -> vector<1x256xf32>
    %140 = arith.addf %138, %139 : vector<1x256xf32>
    %c64_i32_57 = arith.constant 64 : i32
    %141 = tpu.dynamic_rotate %140 by %c64_i32_57 dim 1 : vector<1x256xf32>, i32 -> vector<1x256xf32>
    %142 = arith.addf %140, %141 : vector<1x256xf32>
    %c128_i32_58 = arith.constant 128 : i32
    %143 = tpu.dynamic_rotate %142 by %c128_i32_58 dim 1 : vector<1x256xf32>, i32 -> vector<1x256xf32>
    %144 = arith.addf %142, %143 : vector<1x256xf32>
    %cst_59 = arith.constant 0.001953125 : f32
    %145 = vector.broadcast %cst_59 : f32 to vector<1x256xf32>
    %146 = arith.mulf %144, %145 : vector<1x256xf32>
    %147 = vector.broadcast %146 : vector<1x256xf32> to vector<32x256xf32>
    %148 = arith.subf %134, %147 : vector<32x256xf32>
    %149 = arith.mulf %148, %148 : vector<32x256xf32>
    %cst_60 = arith.constant dense<0.000000e+00> : vector<256xf32>
    %150 = vector.multi_reduction <add>, %149, %cst_60 [0] : vector<32x256xf32> to vector<256xf32>
    %151 = vector.shape_cast %150 : vector<256xf32> to vector<1x256xf32>
    %c16_i32_61 = arith.constant 16 : i32
    %152 = tpu.dynamic_rotate %151 by %c16_i32_61 dim 1 : vector<1x256xf32>, i32 -> vector<1x256xf32>
    %153 = arith.addf %151, %152 : vector<1x256xf32>
    %c32_i32_62 = arith.constant 32 : i32
    %154 = tpu.dynamic_rotate %153 by %c32_i32_62 dim 1 : vector<1x256xf32>, i32 -> vector<1x256xf32>
    %155 = arith.addf %153, %154 : vector<1x256xf32>
    %c64_i32_63 = arith.constant 64 : i32
    %156 = tpu.dynamic_rotate %155 by %c64_i32_63 dim 1 : vector<1x256xf32>, i32 -> vector<1x256xf32>
    %157 = arith.addf %155, %156 : vector<1x256xf32>
    %c128_i32_64 = arith.constant 128 : i32
    %158 = tpu.dynamic_rotate %157 by %c128_i32_64 dim 1 : vector<1x256xf32>, i32 -> vector<1x256xf32>
    %159 = arith.addf %157, %158 : vector<1x256xf32>
    %cst_65 = arith.constant 0.001953125 : f32
    %160 = vector.broadcast %cst_65 : f32 to vector<1x256xf32>
    %161 = arith.mulf %159, %160 : vector<1x256xf32>
    %cst_66 = arith.constant 9.99999974E-6 : f32
    %162 = vector.broadcast %cst_66 : f32 to vector<1x256xf32>
    %163 = arith.addf %161, %162 : vector<1x256xf32>
    %164 = math.rsqrt %163 : vector<1x256xf32>
    %165 = arith.mulf %94, %164 : vector<1x256xf32>
    %166 = vector.broadcast %165 : vector<1x256xf32> to vector<32x256xf32>
    %167 = arith.mulf %148, %166 : vector<32x256xf32>
    %168 = vector.broadcast %95 : vector<1x256xf32> to vector<32x256xf32>
    %169 = arith.addf %167, %168 : vector<32x256xf32>
    %cst_67 = arith.constant 0.000000e+00 : f32
    %170 = vector.broadcast %cst_67 : f32 to vector<32x256xf32>
    %171 = arith.maximumf %169, %170 : vector<32x256xf32>
    %172 = tpu.concatenate %133, %171 in 0 : vector<32x256xf32>, vector<32x256xf32> -> vector<64x256xf32>
    %173 = arith.truncf %172 : vector<64x256xf32> to vector<64x256xbf16>
    %c0_68 = arith.constant 0 : index
    %c0_69 = arith.constant 0 : index
    %174 = vector.load %arg4[%c0_68, %c0_69] : memref<384x64xbf16, #tpu.memory_space<vmem>>, vector<384x64xbf16>
    %cst_70 = arith.constant dense<0.000000e+00> : vector<384x256xf32>
    %175 = tpu.matmul %174, %173, %cst_70 {dimension_numbers = #tpu.dot_dimension_numbers<[1], [0], [0], [1], [0, 0, 1, 1], [], []>} : vector<384x64xbf16>, vector<64x256xbf16>, vector<384x256xf32> -> vector<384x256xf32>
    %176 = vector.extract_strided_slice %175 {offsets = [0, 0], sizes = [128, 256], strides = [1, 1]} : vector<384x256xf32> to vector<128x256xf32>
    %177 = vector.extract_strided_slice %175 {offsets = [128, 0], sizes = [128, 256], strides = [1, 1]} : vector<384x256xf32> to vector<128x256xf32>
    %178 = vector.extract_strided_slice %175 {offsets = [256, 0], sizes = [128, 256], strides = [1, 1]} : vector<384x256xf32> to vector<128x256xf32>
    %179 = tpu.concatenate %176, %177, %178 in 1 : vector<128x256xf32>, vector<128x256xf32>, vector<128x256xf32> -> vector<128x768xf32>
    %c2_71 = arith.constant 2 : index
    %c0_72 = arith.constant 0 : index
    %c0_73 = arith.constant 0 : index
    %180 = vector.load %arg7[%c2_71, %c0_72, %c0_73] : memref<4x768x256xbf16, #tpu.memory_space<vmem>>, vector<1x768x256xbf16>
    %181 = vector.shape_cast %180 : vector<1x768x256xbf16> to vector<768x256xbf16>
    %182 = arith.truncf %179 : vector<128x768xf32> to vector<128x768xbf16>
    %cst_74 = arith.constant dense<0.000000e+00> : vector<128x256xf32>
    %183 = tpu.matmul %182, %181, %cst_74 {dimension_numbers = #tpu.dot_dimension_numbers<[1], [0], [0], [1], [0, 0, 1, 1], [], []>} : vector<128x768xbf16>, vector<768x256xbf16>, vector<128x256xf32> -> vector<128x256xf32>
    %c4 = arith.constant 4 : index
    %c0_75 = arith.constant 0 : index
    %184 = vector.load %arg9[%c4, %c0_75] : memref<8x256xf32, #tpu.memory_space<vmem>>, vector<1x256xf32>
    %c5 = arith.constant 5 : index
    %c0_76 = arith.constant 0 : index
    %185 = vector.load %arg9[%c5, %c0_76] : memref<8x256xf32, #tpu.memory_space<vmem>>, vector<1x256xf32>
    %186 = vector.extract_strided_slice %183 {offsets = [0, 0], sizes = [64, 256], strides = [1, 1]} : vector<128x256xf32> to vector<64x256xf32>
    %cst_77 = arith.constant dense<0.000000e+00> : vector<256xf32>
    %187 = vector.multi_reduction <add>, %186, %cst_77 [0] : vector<64x256xf32> to vector<256xf32>
    %188 = vector.shape_cast %187 : vector<256xf32> to vector<1x256xf32>
    %c8_i32 = arith.constant 8 : i32
    %189 = tpu.dynamic_rotate %188 by %c8_i32 dim 1 : vector<1x256xf32>, i32 -> vector<1x256xf32>
    %190 = arith.addf %188, %189 : vector<1x256xf32>
    %c16_i32_78 = arith.constant 16 : i32
    %191 = tpu.dynamic_rotate %190 by %c16_i32_78 dim 1 : vector<1x256xf32>, i32 -> vector<1x256xf32>
    %192 = arith.addf %190, %191 : vector<1x256xf32>
    %c32_i32_79 = arith.constant 32 : i32
    %193 = tpu.dynamic_rotate %192 by %c32_i32_79 dim 1 : vector<1x256xf32>, i32 -> vector<1x256xf32>
    %194 = arith.addf %192, %193 : vector<1x256xf32>
    %c64_i32_80 = arith.constant 64 : i32
    %195 = tpu.dynamic_rotate %194 by %c64_i32_80 dim 1 : vector<1x256xf32>, i32 -> vector<1x256xf32>
    %196 = arith.addf %194, %195 : vector<1x256xf32>
    %c128_i32_81 = arith.constant 128 : i32
    %197 = tpu.dynamic_rotate %196 by %c128_i32_81 dim 1 : vector<1x256xf32>, i32 -> vector<1x256xf32>
    %198 = arith.addf %196, %197 : vector<1x256xf32>
    %cst_82 = arith.constant 4.8828125E-4 : f32
    %199 = vector.broadcast %cst_82 : f32 to vector<1x256xf32>
    %200 = arith.mulf %198, %199 : vector<1x256xf32>
    %201 = vector.broadcast %200 : vector<1x256xf32> to vector<64x256xf32>
    %202 = arith.subf %186, %201 : vector<64x256xf32>
    %203 = arith.mulf %202, %202 : vector<64x256xf32>
    %cst_83 = arith.constant dense<0.000000e+00> : vector<256xf32>
    %204 = vector.multi_reduction <add>, %203, %cst_83 [0] : vector<64x256xf32> to vector<256xf32>
    %205 = vector.shape_cast %204 : vector<256xf32> to vector<1x256xf32>
    %c8_i32_84 = arith.constant 8 : i32
    %206 = tpu.dynamic_rotate %205 by %c8_i32_84 dim 1 : vector<1x256xf32>, i32 -> vector<1x256xf32>
    %207 = arith.addf %205, %206 : vector<1x256xf32>
    %c16_i32_85 = arith.constant 16 : i32
    %208 = tpu.dynamic_rotate %207 by %c16_i32_85 dim 1 : vector<1x256xf32>, i32 -> vector<1x256xf32>
    %209 = arith.addf %207, %208 : vector<1x256xf32>
    %c32_i32_86 = arith.constant 32 : i32
    %210 = tpu.dynamic_rotate %209 by %c32_i32_86 dim 1 : vector<1x256xf32>, i32 -> vector<1x256xf32>
    %211 = arith.addf %209, %210 : vector<1x256xf32>
    %c64_i32_87 = arith.constant 64 : i32
    %212 = tpu.dynamic_rotate %211 by %c64_i32_87 dim 1 : vector<1x256xf32>, i32 -> vector<1x256xf32>
    %213 = arith.addf %211, %212 : vector<1x256xf32>
    %c128_i32_88 = arith.constant 128 : i32
    %214 = tpu.dynamic_rotate %213 by %c128_i32_88 dim 1 : vector<1x256xf32>, i32 -> vector<1x256xf32>
    %215 = arith.addf %213, %214 : vector<1x256xf32>
    %cst_89 = arith.constant 4.8828125E-4 : f32
    %216 = vector.broadcast %cst_89 : f32 to vector<1x256xf32>
    %217 = arith.mulf %215, %216 : vector<1x256xf32>
    %cst_90 = arith.constant 9.99999974E-6 : f32
    %218 = vector.broadcast %cst_90 : f32 to vector<1x256xf32>
    %219 = arith.addf %217, %218 : vector<1x256xf32>
    %220 = math.rsqrt %219 : vector<1x256xf32>
    %221 = arith.mulf %184, %220 : vector<1x256xf32>
    %222 = vector.broadcast %221 : vector<1x256xf32> to vector<64x256xf32>
    %223 = arith.mulf %202, %222 : vector<64x256xf32>
    %224 = vector.broadcast %185 : vector<1x256xf32> to vector<64x256xf32>
    %225 = arith.addf %223, %224 : vector<64x256xf32>
    %cst_91 = arith.constant 0.000000e+00 : f32
    %226 = vector.broadcast %cst_91 : f32 to vector<64x256xf32>
    %227 = arith.maximumf %225, %226 : vector<64x256xf32>
    %228 = vector.extract_strided_slice %183 {offsets = [64, 0], sizes = [64, 256], strides = [1, 1]} : vector<128x256xf32> to vector<64x256xf32>
    %cst_92 = arith.constant dense<0.000000e+00> : vector<256xf32>
    %229 = vector.multi_reduction <add>, %228, %cst_92 [0] : vector<64x256xf32> to vector<256xf32>
    %230 = vector.shape_cast %229 : vector<256xf32> to vector<1x256xf32>
    %c8_i32_93 = arith.constant 8 : i32
    %231 = tpu.dynamic_rotate %230 by %c8_i32_93 dim 1 : vector<1x256xf32>, i32 -> vector<1x256xf32>
    %232 = arith.addf %230, %231 : vector<1x256xf32>
    %c16_i32_94 = arith.constant 16 : i32
    %233 = tpu.dynamic_rotate %232 by %c16_i32_94 dim 1 : vector<1x256xf32>, i32 -> vector<1x256xf32>
    %234 = arith.addf %232, %233 : vector<1x256xf32>
    %c32_i32_95 = arith.constant 32 : i32
    %235 = tpu.dynamic_rotate %234 by %c32_i32_95 dim 1 : vector<1x256xf32>, i32 -> vector<1x256xf32>
    %236 = arith.addf %234, %235 : vector<1x256xf32>
    %c64_i32_96 = arith.constant 64 : i32
    %237 = tpu.dynamic_rotate %236 by %c64_i32_96 dim 1 : vector<1x256xf32>, i32 -> vector<1x256xf32>
    %238 = arith.addf %236, %237 : vector<1x256xf32>
    %c128_i32_97 = arith.constant 128 : i32
    %239 = tpu.dynamic_rotate %238 by %c128_i32_97 dim 1 : vector<1x256xf32>, i32 -> vector<1x256xf32>
    %240 = arith.addf %238, %239 : vector<1x256xf32>
    %cst_98 = arith.constant 4.8828125E-4 : f32
    %241 = vector.broadcast %cst_98 : f32 to vector<1x256xf32>
    %242 = arith.mulf %240, %241 : vector<1x256xf32>
    %243 = vector.broadcast %242 : vector<1x256xf32> to vector<64x256xf32>
    %244 = arith.subf %228, %243 : vector<64x256xf32>
    %245 = arith.mulf %244, %244 : vector<64x256xf32>
    %cst_99 = arith.constant dense<0.000000e+00> : vector<256xf32>
    %246 = vector.multi_reduction <add>, %245, %cst_99 [0] : vector<64x256xf32> to vector<256xf32>
    %247 = vector.shape_cast %246 : vector<256xf32> to vector<1x256xf32>
    %c8_i32_100 = arith.constant 8 : i32
    %248 = tpu.dynamic_rotate %247 by %c8_i32_100 dim 1 : vector<1x256xf32>, i32 -> vector<1x256xf32>
    %249 = arith.addf %247, %248 : vector<1x256xf32>
    %c16_i32_101 = arith.constant 16 : i32
    %250 = tpu.dynamic_rotate %249 by %c16_i32_101 dim 1 : vector<1x256xf32>, i32 -> vector<1x256xf32>
    %251 = arith.addf %249, %250 : vector<1x256xf32>
    %c32_i32_102 = arith.constant 32 : i32
    %252 = tpu.dynamic_rotate %251 by %c32_i32_102 dim 1 : vector<1x256xf32>, i32 -> vector<1x256xf32>
    %253 = arith.addf %251, %252 : vector<1x256xf32>
    %c64_i32_103 = arith.constant 64 : i32
    %254 = tpu.dynamic_rotate %253 by %c64_i32_103 dim 1 : vector<1x256xf32>, i32 -> vector<1x256xf32>
    %255 = arith.addf %253, %254 : vector<1x256xf32>
    %c128_i32_104 = arith.constant 128 : i32
    %256 = tpu.dynamic_rotate %255 by %c128_i32_104 dim 1 : vector<1x256xf32>, i32 -> vector<1x256xf32>
    %257 = arith.addf %255, %256 : vector<1x256xf32>
    %cst_105 = arith.constant 4.8828125E-4 : f32
    %258 = vector.broadcast %cst_105 : f32 to vector<1x256xf32>
    %259 = arith.mulf %257, %258 : vector<1x256xf32>
    %cst_106 = arith.constant 9.99999974E-6 : f32
    %260 = vector.broadcast %cst_106 : f32 to vector<1x256xf32>
    %261 = arith.addf %259, %260 : vector<1x256xf32>
    %262 = math.rsqrt %261 : vector<1x256xf32>
    %263 = arith.mulf %184, %262 : vector<1x256xf32>
    %264 = vector.broadcast %263 : vector<1x256xf32> to vector<64x256xf32>
    %265 = arith.mulf %244, %264 : vector<64x256xf32>
    %266 = vector.broadcast %185 : vector<1x256xf32> to vector<64x256xf32>
    %267 = arith.addf %265, %266 : vector<64x256xf32>
    %cst_107 = arith.constant 0.000000e+00 : f32
    %268 = vector.broadcast %cst_107 : f32 to vector<64x256xf32>
    %269 = arith.maximumf %267, %268 : vector<64x256xf32>
    %270 = tpu.concatenate %227, %269 in 0 : vector<64x256xf32>, vector<64x256xf32> -> vector<128x256xf32>
    %271 = arith.truncf %270 : vector<128x256xf32> to vector<128x256xbf16>
    %c0_108 = arith.constant 0 : index
    %c0_109 = arith.constant 0 : index
    %272 = vector.load %arg5[%c0_108, %c0_109] : memref<768x128xbf16, #tpu.memory_space<vmem>>, vector<768x128xbf16>
    %cst_110 = arith.constant dense<0.000000e+00> : vector<768x256xf32>
    %273 = tpu.matmul %272, %271, %cst_110 {dimension_numbers = #tpu.dot_dimension_numbers<[1], [0], [0], [1], [0, 0, 1, 1], [], []>} : vector<768x128xbf16>, vector<128x256xbf16>, vector<768x256xf32> -> vector<768x256xf32>
    %274 = vector.extract_strided_slice %273 {offsets = [0, 0], sizes = [256, 256], strides = [1, 1]} : vector<768x256xf32> to vector<256x256xf32>
    %275 = vector.extract_strided_slice %273 {offsets = [256, 0], sizes = [256, 256], strides = [1, 1]} : vector<768x256xf32> to vector<256x256xf32>
    %276 = vector.extract_strided_slice %273 {offsets = [512, 0], sizes = [256, 256], strides = [1, 1]} : vector<768x256xf32> to vector<256x256xf32>
    %277 = tpu.concatenate %274, %275, %276 in 1 : vector<256x256xf32>, vector<256x256xf32>, vector<256x256xf32> -> vector<256x768xf32>
    %c3_111 = arith.constant 3 : index
    %c0_112 = arith.constant 0 : index
    %c0_113 = arith.constant 0 : index
    %278 = vector.load %arg7[%c3_111, %c0_112, %c0_113] : memref<4x768x256xbf16, #tpu.memory_space<vmem>>, vector<1x768x256xbf16>
    %279 = vector.shape_cast %278 : vector<1x768x256xbf16> to vector<768x256xbf16>
    %280 = arith.truncf %277 : vector<256x768xf32> to vector<256x768xbf16>
    %cst_114 = arith.constant dense<0.000000e+00> : vector<256x256xf32>
    %281 = tpu.matmul %280, %279, %cst_114 {dimension_numbers = #tpu.dot_dimension_numbers<[1], [0], [0], [1], [0, 0, 1, 1], [], []>} : vector<256x768xbf16>, vector<768x256xbf16>, vector<256x256xf32> -> vector<256x256xf32>
    %c6 = arith.constant 6 : index
    %c0_115 = arith.constant 0 : index
    %282 = vector.load %arg9[%c6, %c0_115] : memref<8x256xf32, #tpu.memory_space<vmem>>, vector<1x256xf32>
    %c7 = arith.constant 7 : index
    %c0_116 = arith.constant 0 : index
    %283 = vector.load %arg9[%c7, %c0_116] : memref<8x256xf32, #tpu.memory_space<vmem>>, vector<1x256xf32>
    %284 = vector.extract_strided_slice %281 {offsets = [0, 0], sizes = [128, 256], strides = [1, 1]} : vector<256x256xf32> to vector<128x256xf32>
    %cst_117 = arith.constant dense<0.000000e+00> : vector<256xf32>
    %285 = vector.multi_reduction <add>, %284, %cst_117 [0] : vector<128x256xf32> to vector<256xf32>
    %286 = vector.shape_cast %285 : vector<256xf32> to vector<1x256xf32>
    %c4_i32 = arith.constant 4 : i32
    %287 = tpu.dynamic_rotate %286 by %c4_i32 dim 1 : vector<1x256xf32>, i32 -> vector<1x256xf32>
    %288 = arith.addf %286, %287 : vector<1x256xf32>
    %c8_i32_118 = arith.constant 8 : i32
    %289 = tpu.dynamic_rotate %288 by %c8_i32_118 dim 1 : vector<1x256xf32>, i32 -> vector<1x256xf32>
    %290 = arith.addf %288, %289 : vector<1x256xf32>
    %c16_i32_119 = arith.constant 16 : i32
    %291 = tpu.dynamic_rotate %290 by %c16_i32_119 dim 1 : vector<1x256xf32>, i32 -> vector<1x256xf32>
    %292 = arith.addf %290, %291 : vector<1x256xf32>
    %c32_i32_120 = arith.constant 32 : i32
    %293 = tpu.dynamic_rotate %292 by %c32_i32_120 dim 1 : vector<1x256xf32>, i32 -> vector<1x256xf32>
    %294 = arith.addf %292, %293 : vector<1x256xf32>
    %c64_i32_121 = arith.constant 64 : i32
    %295 = tpu.dynamic_rotate %294 by %c64_i32_121 dim 1 : vector<1x256xf32>, i32 -> vector<1x256xf32>
    %296 = arith.addf %294, %295 : vector<1x256xf32>
    %c128_i32_122 = arith.constant 128 : i32
    %297 = tpu.dynamic_rotate %296 by %c128_i32_122 dim 1 : vector<1x256xf32>, i32 -> vector<1x256xf32>
    %298 = arith.addf %296, %297 : vector<1x256xf32>
    %cst_123 = arith.constant 1.22070313E-4 : f32
    %299 = vector.broadcast %cst_123 : f32 to vector<1x256xf32>
    %300 = arith.mulf %298, %299 : vector<1x256xf32>
    %301 = vector.broadcast %300 : vector<1x256xf32> to vector<128x256xf32>
    %302 = arith.subf %284, %301 : vector<128x256xf32>
    %303 = arith.mulf %302, %302 : vector<128x256xf32>
    %cst_124 = arith.constant dense<0.000000e+00> : vector<256xf32>
    %304 = vector.multi_reduction <add>, %303, %cst_124 [0] : vector<128x256xf32> to vector<256xf32>
    %305 = vector.shape_cast %304 : vector<256xf32> to vector<1x256xf32>
    %c4_i32_125 = arith.constant 4 : i32
    %306 = tpu.dynamic_rotate %305 by %c4_i32_125 dim 1 : vector<1x256xf32>, i32 -> vector<1x256xf32>
    %307 = arith.addf %305, %306 : vector<1x256xf32>
    %c8_i32_126 = arith.constant 8 : i32
    %308 = tpu.dynamic_rotate %307 by %c8_i32_126 dim 1 : vector<1x256xf32>, i32 -> vector<1x256xf32>
    %309 = arith.addf %307, %308 : vector<1x256xf32>
    %c16_i32_127 = arith.constant 16 : i32
    %310 = tpu.dynamic_rotate %309 by %c16_i32_127 dim 1 : vector<1x256xf32>, i32 -> vector<1x256xf32>
    %311 = arith.addf %309, %310 : vector<1x256xf32>
    %c32_i32_128 = arith.constant 32 : i32
    %312 = tpu.dynamic_rotate %311 by %c32_i32_128 dim 1 : vector<1x256xf32>, i32 -> vector<1x256xf32>
    %313 = arith.addf %311, %312 : vector<1x256xf32>
    %c64_i32_129 = arith.constant 64 : i32
    %314 = tpu.dynamic_rotate %313 by %c64_i32_129 dim 1 : vector<1x256xf32>, i32 -> vector<1x256xf32>
    %315 = arith.addf %313, %314 : vector<1x256xf32>
    %c128_i32_130 = arith.constant 128 : i32
    %316 = tpu.dynamic_rotate %315 by %c128_i32_130 dim 1 : vector<1x256xf32>, i32 -> vector<1x256xf32>
    %317 = arith.addf %315, %316 : vector<1x256xf32>
    %cst_131 = arith.constant 1.22070313E-4 : f32
    %318 = vector.broadcast %cst_131 : f32 to vector<1x256xf32>
    %319 = arith.mulf %317, %318 : vector<1x256xf32>
    %cst_132 = arith.constant 9.99999974E-6 : f32
    %320 = vector.broadcast %cst_132 : f32 to vector<1x256xf32>
    %321 = arith.addf %319, %320 : vector<1x256xf32>
    %322 = math.rsqrt %321 : vector<1x256xf32>
    %323 = arith.mulf %282, %322 : vector<1x256xf32>
    %324 = vector.broadcast %323 : vector<1x256xf32> to vector<128x256xf32>
    %325 = arith.mulf %302, %324 : vector<128x256xf32>
    %326 = vector.broadcast %283 : vector<1x256xf32> to vector<128x256xf32>
    %327 = arith.addf %325, %326 : vector<128x256xf32>
    %cst_133 = arith.constant 0.000000e+00 : f32
    %328 = vector.broadcast %cst_133 : f32 to vector<128x256xf32>
    %329 = arith.maximumf %327, %328 : vector<128x256xf32>
    %330 = vector.extract_strided_slice %281 {offsets = [128, 0], sizes = [128, 256], strides = [1, 1]} : vector<256x256xf32> to vector<128x256xf32>
    %cst_134 = arith.constant dense<0.000000e+00> : vector<256xf32>
    %331 = vector.multi_reduction <add>, %330, %cst_134 [0] : vector<128x256xf32> to vector<256xf32>
    %332 = vector.shape_cast %331 : vector<256xf32> to vector<1x256xf32>
    %c4_i32_135 = arith.constant 4 : i32
    %333 = tpu.dynamic_rotate %332 by %c4_i32_135 dim 1 : vector<1x256xf32>, i32 -> vector<1x256xf32>
    %334 = arith.addf %332, %333 : vector<1x256xf32>
    %c8_i32_136 = arith.constant 8 : i32
    %335 = tpu.dynamic_rotate %334 by %c8_i32_136 dim 1 : vector<1x256xf32>, i32 -> vector<1x256xf32>
    %336 = arith.addf %334, %335 : vector<1x256xf32>
    %c16_i32_137 = arith.constant 16 : i32
    %337 = tpu.dynamic_rotate %336 by %c16_i32_137 dim 1 : vector<1x256xf32>, i32 -> vector<1x256xf32>
    %338 = arith.addf %336, %337 : vector<1x256xf32>
    %c32_i32_138 = arith.constant 32 : i32
    %339 = tpu.dynamic_rotate %338 by %c32_i32_138 dim 1 : vector<1x256xf32>, i32 -> vector<1x256xf32>
    %340 = arith.addf %338, %339 : vector<1x256xf32>
    %c64_i32_139 = arith.constant 64 : i32
    %341 = tpu.dynamic_rotate %340 by %c64_i32_139 dim 1 : vector<1x256xf32>, i32 -> vector<1x256xf32>
    %342 = arith.addf %340, %341 : vector<1x256xf32>
    %c128_i32_140 = arith.constant 128 : i32
    %343 = tpu.dynamic_rotate %342 by %c128_i32_140 dim 1 : vector<1x256xf32>, i32 -> vector<1x256xf32>
    %344 = arith.addf %342, %343 : vector<1x256xf32>
    %cst_141 = arith.constant 1.22070313E-4 : f32
    %345 = vector.broadcast %cst_141 : f32 to vector<1x256xf32>
    %346 = arith.mulf %344, %345 : vector<1x256xf32>
    %347 = vector.broadcast %346 : vector<1x256xf32> to vector<128x256xf32>
    %348 = arith.subf %330, %347 : vector<128x256xf32>
    %349 = arith.mulf %348, %348 : vector<128x256xf32>
    %cst_142 = arith.constant dense<0.000000e+00> : vector<256xf32>
    %350 = vector.multi_reduction <add>, %349, %cst_142 [0] : vector<128x256xf32> to vector<256xf32>
    %351 = vector.shape_cast %350 : vector<256xf32> to vector<1x256xf32>
    %c4_i32_143 = arith.constant 4 : i32
    %352 = tpu.dynamic_rotate %351 by %c4_i32_143 dim 1 : vector<1x256xf32>, i32 -> vector<1x256xf32>
    %353 = arith.addf %351, %352 : vector<1x256xf32>
    %c8_i32_144 = arith.constant 8 : i32
    %354 = tpu.dynamic_rotate %353 by %c8_i32_144 dim 1 : vector<1x256xf32>, i32 -> vector<1x256xf32>
    %355 = arith.addf %353, %354 : vector<1x256xf32>
    %c16_i32_145 = arith.constant 16 : i32
    %356 = tpu.dynamic_rotate %355 by %c16_i32_145 dim 1 : vector<1x256xf32>, i32 -> vector<1x256xf32>
    %357 = arith.addf %355, %356 : vector<1x256xf32>
    %c32_i32_146 = arith.constant 32 : i32
    %358 = tpu.dynamic_rotate %357 by %c32_i32_146 dim 1 : vector<1x256xf32>, i32 -> vector<1x256xf32>
    %359 = arith.addf %357, %358 : vector<1x256xf32>
    %c64_i32_147 = arith.constant 64 : i32
    %360 = tpu.dynamic_rotate %359 by %c64_i32_147 dim 1 : vector<1x256xf32>, i32 -> vector<1x256xf32>
    %361 = arith.addf %359, %360 : vector<1x256xf32>
    %c128_i32_148 = arith.constant 128 : i32
    %362 = tpu.dynamic_rotate %361 by %c128_i32_148 dim 1 : vector<1x256xf32>, i32 -> vector<1x256xf32>
    %363 = arith.addf %361, %362 : vector<1x256xf32>
    %cst_149 = arith.constant 1.22070313E-4 : f32
    %364 = vector.broadcast %cst_149 : f32 to vector<1x256xf32>
    %365 = arith.mulf %363, %364 : vector<1x256xf32>
    %cst_150 = arith.constant 9.99999974E-6 : f32
    %366 = vector.broadcast %cst_150 : f32 to vector<1x256xf32>
    %367 = arith.addf %365, %366 : vector<1x256xf32>
    %368 = math.rsqrt %367 : vector<1x256xf32>
    %369 = arith.mulf %282, %368 : vector<1x256xf32>
    %370 = vector.broadcast %369 : vector<1x256xf32> to vector<128x256xf32>
    %371 = arith.mulf %348, %370 : vector<128x256xf32>
    %372 = vector.broadcast %283 : vector<1x256xf32> to vector<128x256xf32>
    %373 = arith.addf %371, %372 : vector<128x256xf32>
    %cst_151 = arith.constant 0.000000e+00 : f32
    %374 = vector.broadcast %cst_151 : f32 to vector<128x256xf32>
    %375 = arith.maximumf %373, %374 : vector<128x256xf32>
    %376 = tpu.concatenate %329, %375 in 0 : vector<128x256xf32>, vector<128x256xf32> -> vector<256x256xf32>
    %377 = arith.truncf %376 : vector<256x256xf32> to vector<256x256xbf16>
    %c0_152 = arith.constant 0 : index
    %c0_153 = arith.constant 0 : index
    %378 = vector.load %arg6[%c0_152, %c0_153] : memref<768x256xbf16, #tpu.memory_space<vmem>>, vector<768x256xbf16>
    %cst_154 = arith.constant dense<0.000000e+00> : vector<768x256xf32>
    %379 = tpu.matmul %378, %377, %cst_154 {dimension_numbers = #tpu.dot_dimension_numbers<[1], [0], [0], [1], [0, 0, 1, 1], [], []>} : vector<768x256xbf16>, vector<256x256xbf16>, vector<768x256xf32> -> vector<768x256xf32>
    %380 = vector.extract_strided_slice %379 {offsets = [0, 0], sizes = [256, 256], strides = [1, 1]} : vector<768x256xf32> to vector<256x256xf32>
    %381 = vector.extract_strided_slice %379 {offsets = [256, 0], sizes = [256, 256], strides = [1, 1]} : vector<768x256xf32> to vector<256x256xf32>
    %382 = vector.extract_strided_slice %379 {offsets = [512, 0], sizes = [256, 256], strides = [1, 1]} : vector<768x256xf32> to vector<256x256xf32>
    %383 = tpu.concatenate %380, %381, %382 in 1 : vector<256x256xf32>, vector<256x256xf32>, vector<256x256xf32> -> vector<256x768xf32>
    %c0_155 = arith.constant 0 : index
    %c0_156 = arith.constant 0 : index
    %384 = vector.load %arg8[%c0_155, %c0_156] : memref<768x256xbf16, #tpu.memory_space<vmem>>, vector<768x256xbf16>
    %385 = arith.truncf %383 : vector<256x768xf32> to vector<256x768xbf16>
    %cst_157 = arith.constant dense<0.000000e+00> : vector<256x256xf32>
    %386 = tpu.matmul %385, %384, %cst_157 {dimension_numbers = #tpu.dot_dimension_numbers<[1], [0], [0], [1], [0, 0, 1, 1], [], []>} : vector<256x768xbf16>, vector<768x256xbf16>, vector<256x256xf32> -> vector<256x256xf32>
    %387 = math.tanh %386 : vector<256x256xf32>
    %c0_158 = arith.constant 0 : index
    %c0_159 = arith.constant 0 : index
    %c0_160 = arith.constant 0 : index
    %388 = vector.load %arg10[%c0_158, %c0_159, %c0_160] : memref<1x256x256xf32, #tpu.memory_space<vmem>>, vector<1x256x256xf32>
    %389 = vector.shape_cast %388 : vector<1x256x256xf32> to vector<256x256xf32>
    %390 = vector.shape_cast %387 : vector<256x256xf32> to vector<1x256x256xf32>
    tpu.vector_store %arg10[%c0_158, %c0_159, %c0_160], %390 {strides = array<i32>} : memref<1x256x256xf32, #tpu.memory_space<vmem>>, vector<1x256x256xf32>,
    return
  }
  func.func @transform_0(%arg0: i32) -> (i32, i32, i32) {
    %c0_i32 = arith.constant 0 : i32
    %c0_i32_0 = arith.constant 0 : i32
    %c0_i32_1 = arith.constant 0 : i32
    return %arg0, %c0_i32, %c0_i32_0 : i32, i32, i32
  }
  func.func @transform_1(%arg0: i32) -> (i32, i32) {
    %c0_i32 = arith.constant 0 : i32
    %c0_i32_0 = arith.constant 0 : i32
    %c0_i32_1 = arith.constant 0 : i32
    return %c0_i32, %c0_i32_0 : i32, i32
  }
  func.func @transform_2(%arg0: i32) -> (i32, i32) {
    %c0_i32 = arith.constant 0 : i32
    %c0_i32_0 = arith.constant 0 : i32
    %c0_i32_1 = arith.constant 0 : i32
    return %c0_i32, %c0_i32_0 : i32, i32
  }
  func.func @transform_3(%arg0: i32) -> (i32, i32) {
    %c0_i32 = arith.constant 0 : i32
    %c0_i32_0 = arith.constant 0 : i32
    %c0_i32_1 = arith.constant 0 : i32
    return %c0_i32, %c0_i32_0 : i32, i32
  }
  func.func @transform_4(%arg0: i32) -> (i32, i32) {
    %c0_i32 = arith.constant 0 : i32
    %c0_i32_0 = arith.constant 0 : i32
    %c0_i32_1 = arith.constant 0 : i32
    return %c0_i32, %c0_i32_0 : i32, i32
  }
  func.func @transform_5(%arg0: i32) -> (i32, i32) {
    %c0_i32 = arith.constant 0 : i32
    %c0_i32_0 = arith.constant 0 : i32
    %c0_i32_1 = arith.constant 0 : i32
    return %c0_i32, %c0_i32_0 : i32, i32
  }
  func.func @transform_6(%arg0: i32) -> (i32, i32, i32) {
    %c0_i32 = arith.constant 0 : i32
    %c0_i32_0 = arith.constant 0 : i32
    %c0_i32_1 = arith.constant 0 : i32
    %c0_i32_2 = arith.constant 0 : i32
    return %c0_i32, %c0_i32_0, %c0_i32_1 : i32, i32, i32
  }
  func.func @transform_7(%arg0: i32) -> (i32, i32) {
    %c0_i32 = arith.constant 0 : i32
    %c0_i32_0 = arith.constant 0 : i32
    %c0_i32_1 = arith.constant 0 : i32
    return %c0_i32, %c0_i32_0 : i32, i32
  }
  func.func @transform_8(%arg0: i32) -> (i32, i32) {
    %c0_i32 = arith.constant 0 : i32
    %c0_i32_0 = arith.constant 0 : i32
    %c0_i32_1 = arith.constant 0 : i32
    return %c0_i32, %c0_i32_0 : i32, i32
  }
  func.func @transform_9(%arg0: i32) -> (i32, i32, i32) {
    %c0_i32 = arith.constant 0 : i32
    %c0_i32_0 = arith.constant 0 : i32
    %c0_i32_1 = arith.constant 0 : i32
    return %arg0, %c0_i32, %c0_i32_0 : i32, i32, i32
  }
}

</mosaic_0001>

<llo_original>
// kernel: tile.52
$region0: #{tile.52}
  #allocation0 [shape = 's32[1]{0}', space=sflag, size = 0x4, scoped, tag = 'scoped memory for tile.52']
  %s0 = inlined_call_operand.vmem [shape: f32[4], index: 0, kind: input, shape index: {}]
  %s1 = inlined_call_operand.vmem [shape: f32[64,4], index: 1, kind: output, shape index: {}]
  // Predicated region
  $region2: #{tile.52} parent=0 // pred_check
    _
  $region3: #{tile.52} parent=0 // pred_check_branch
    %3 = sbr.rel (0) target = $region5
  $region4: #{tile.52} parent=0 // pred_region
    _
  $region5: #{tile.52} parent=0 // pred_fallthru
    _
  %v4 = vld [vmem:[%s0] ss:$0 sm:$0xff]
  %5 = vst [vmem:[%s1] sm:$0xff] %v4
  %s6 = scalar_lea.vmem %s1, 8
  %7 = vst [vmem:[%s6] sm:$0xff] %v4
  %s8 = scalar_lea.vmem %s1, 16
  %9 = vst [vmem:[%s8] sm:$0xff] %v4
  %s10 = scalar_lea.vmem %s1, 24
  %11 = vst [vmem:[%s10] sm:$0xff] %v4
  %s12 = scalar_lea.vmem %s1, 32
  %13 = vst [vmem:[%s12] sm:$0xff] %v4
  %s14 = scalar_lea.vmem %s1, 40
  %15 = vst [vmem:[%s14] sm:$0xff] %v4
  %s16 = scalar_lea.vmem %s1, 48
  %17 = vst [vmem:[%s16] sm:$0xff] %v4
  %s18 = scalar_lea.vmem %s1, 56
  %19 = vst [vmem:[%s18] sm:$0xff] %v4

// kernel: tile.62
$region0: #{tile.62}
  %s0 = inlined_call_operand.vmem [shape: f32[64,4], index: 0, kind: input, shape index: {}]
  %s1 = inlined_call_operand.vmem [shape: f32[1,256], index: 1, kind: output, shape index: {}]
  $region1: #{tile.62} parent=0
    #allocation0 [shape = 'u8[8192]{0}', space=vmem, size = 0x2000, scoped, tag = 'scoped mem for output reshape']
    %v2 = vld [vmem:[%s0] sm:$0x1]
    %s3 = scalar_lea.vmem %s0, 31
    %v4 = vld [vmem:[%s3] sm:$0x2]
    %vm5 = vcmask 1041409
    %v6 = vsel %vm5, %v4, %v2
    %vm7 = vcmask 31744
    %8 = vst.msk [vmem:[#allocation0] ss:$8 sm:$0x3] %vm7, %v6
    %s9 = scalar_lea.vmem %s0, 31
    %v10 = vld [vmem:[%s9] sm:$0x1]
    %s11 = scalar_lea.vmem %s0, 62
    %v12 = vld [vmem:[%s11] sm:$0x2]
    %vm13 = vcmask 1041409
    %v14 = vsel %vm13, %v12, %v10
    %15 = vrot.lane.b32.xlu0 %v14, 124
    %v16 = vpop.permute.xlu0 %15
    %vm17 = vcmask 1048544
    %18 = vst.msk [vmem:[#allocation0] ss:$8 sm:$0x3] %vm17, %v16
    %s19 = scalar_lea.vmem %s0, 30
    %v20 = vld [vmem:[%s19] sm:$0x1]
    %s21 = scalar_lea.vmem %s0, 61
    %v22 = vld [vmem:[%s21] sm:$0x2]
    %vm23 = vcmask 1041409
    %v24 = vsel %vm23, %v22, %v20
    %25 = vrot.lane.b32.xlu0 %v24, 120
    %v26 = vpop.permute.xlu0 %25
    %vm27 = vcmask 1015744
    %28 = vst.msk [vmem:[#allocation0] ss:$8 sm:$0x3] %vm27, %v26
    %s29 = scalar_lea.vmem %s0, 29
    %v30 = vld [vmem:[%s29] sm:$0x1]
    %s31 = scalar_lea.vmem %s0, 60
    %v32 = vld [vmem:[%s31] sm:$0x2]
    %vm33 = vcmask 1041409
    %v34 = vsel %vm33, %v32, %v30
    %35 = vrot.lane.b32.xlu0 %v34, 116
    %v36 = vpop.permute.xlu0 %35
    %vm37 = vcmask 982944
    %38 = vst.msk [vmem:[#allocation0] ss:$8 sm:$0x3] %vm37, %v36
    %s39 = scalar_lea.vmem %s0, 28
    %v40 = vld [vmem:[%s39] sm:$0x1]
    %s41 = scalar_lea.vmem %s0, 59
    %v42 = vld [vmem:[%s41] sm:$0x2]
    %vm43 = vcmask 1041409
    %v44 = vsel %vm43, %v42, %v40
    %45 = vrot.lane.b32.xlu0 %v44, 112
    %v46 = vpop.permute.xlu0 %45
    %vm47 = vcmask 950144
    %48 = vst.msk [vmem:[#allocation0] ss:$8 sm:$0x3] %vm47, %v46
    %s49 = scalar_lea.vmem %s0, 27
    %v50 = vld [vmem:[%s49] sm:$0x1]
    %s51 = scalar_lea.vmem %s0, 58
    %v52 = vld [vmem:[%s51] sm:$0x2]
    %vm53 = vcmask 1041409
    %v54 = vsel %vm53, %v52, %v50
    %55 = vrot.lane.b32.xlu0 %v54, 108
    %v56 = vpop.permute.xlu0 %55
    %vm57 = vcmask 917344
    %58 = vst.msk [vmem:[#allocation0] ss:$8 sm:$0x3] %vm57, %v56
    %s59 = scalar_lea.vmem %s0, 26
    %v60 = vld [vmem:[%s59] sm:$0x1]
    %s61 = scalar_lea.vmem %s0, 57
    %v62 = vld [vmem:[%s61] sm:$0x2]
    %vm63 = vcmask 1041409
    %v64 = vsel %vm63, %v62, %v60
    %65 = vrot.lane.b32.xlu0 %v64, 104
    %v66 = vpop.permute.xlu0 %65
    %vm67 = vcmask 884544
    %68 = vst.msk [vmem:[#allocation0] ss:$8 sm:$0x3] %vm67, %v66
    %s69 = scalar_lea.vmem %s0, 25
    %v70 = vld [vmem:[%s69] sm:$0x1]
    %s71 = scalar_lea.vmem %s0, 56
    %v72 = vld [vmem:[%s71] sm:$0x2]
    %vm73 = vcmask 1041409
    %v74 = vsel %vm73, %v72, %v70
    %75 = vrot.lane.b32.xlu0 %v74, 100
    %v76 = vpop.permute.xlu0 %75
    %vm77 = vcmask 851744
    %78 = vst.msk [vmem:[#allocation0] ss:$8 sm:$0x3] %vm77, %v76
    %s79 = scalar_lea.vmem %s0, 24
    %v80 = vld [vmem:[%s79] sm:$0x1]
    %s81 = scalar_lea.vmem %s0, 55
    %v82 = vld [vmem:[%s81] sm:$0x2]
    %vm83 = vcmask 1041409
    %v84 = vsel %vm83, %v82, %v80
    %85 = vrot.lane.b32.xlu0 %v84, 96
    %v86 = vpop.permute.xlu0 %85
    %vm87 = vcmask 818944
    %88 = vst.msk [vmem:[#allocation0] ss:$8 sm:$0x3] %vm87, %v86
    %s89 = scalar_lea.vmem %s0, 23
    %v90 = vld [vmem:[%s89] sm:$0x1]
    %s91 = scalar_lea.vmem %s0, 54
    %v92 = vld [vmem:[%s91] sm:$0x2]
    %vm93 = vcmask 1041409
    %v94 = vsel %vm93, %v92, %v90
    %95 = vrot.lane.b32.xlu0 %v94, 92
    %v96 = vpop.permute.xlu0 %95
    %vm97 = vcmask 786144
    %98 = vst.msk [vmem:[#allocation0] ss:$8 sm:$0x3] %vm97, %v96
    %s99 = scalar_lea.vmem %s0, 22
    %v100 = vld [vmem:[%s99] sm:$0x1]
    %s101 = scalar_lea.vmem %s0, 53
    %v102 = vld [vmem:[%s101] sm:$0x2]
    %vm103 = vcmask 1041409
    %v104 = vsel %vm103, %v102, %v100
    %105 = vrot.lane.b32.xlu0 %v104, 88
    %v106 = vpop.permute.xlu0 %105
    %vm107 = vcmask 753344
    %108 = vst.msk [vmem:[#allocation0] ss:$8 sm:$0x3] %vm107, %v106
    %s109 = scalar_lea.vmem %s0, 21
    %v110 = vld [vmem:[%s109] sm:$0x1]
    %s111 = scalar_lea.vmem %s0, 52
    %v112 = vld [vmem:[%s111] sm:$0x2]
    %vm113 = vcmask 1041409
    %v114 = vsel %vm113, %v112, %v110
    %115 = vrot.lane.b32.xlu0 %v114, 84
    %v116 = vpop.permute.xlu0 %115
    %vm117 = vcmask 720544
    %118 = vst.msk [vmem:[#allocation0] ss:$8 sm:$0x3] %vm117, %v116
    %s119 = scalar_lea.vmem %s0, 20
    %v120 = vld [vmem:[%s119] sm:$0x1]
    %s121 = scalar_lea.vmem %s0, 51
    %v122 = vld [vmem:[%s121] sm:$0x2]
    %vm123 = vcmask 1041409
    %v124 = vsel %vm123, %v122, %v120
    %125 = vrot.lane.b32.xlu0 %v124, 80
    %v126 = vpop.permute.xlu0 %125
    %vm127 = vcmask 687744
    %128 = vst.msk [vmem:[#allocation0] ss:$8 sm:$0x3] %vm127, %v126
    %s129 = scalar_lea.vmem %s0, 19
    %v130 = vld [vmem:[%s129] sm:$0x1]
    %s131 = scalar_lea.vmem %s0, 50
    %v132 = vld [vmem:[%s131] sm:$0x2]
    %vm133 = vcmask 1041409
    %v134 = vsel %vm133, %v132, %v130
    %135 = vrot.lane.b32.xlu0 %v134, 76
    %v136 = vpop.permute.xlu0 %135
    %vm137 = vcmask 654944
    %138 = vst.msk [vmem:[#allocation0] ss:$8 sm:$0x3] %vm137, %v136
    %s139 = scalar_lea.vmem %s0, 18
    %v140 = vld [vmem:[%s139] sm:$0x1]
    %s141 = scalar_lea.vmem %s0, 49
    %v142 = vld [vmem:[%s141] sm:$0x2]
    %vm143 = vcmask 1041409
    %v144 = vsel %vm143, %v142, %v140
    %145 = vrot.lane.b32.xlu0 %v144, 72
    %v146 = vpop.permute.xlu0 %145
    %vm147 = vcmask 622144
    %148 = vst.msk [vmem:[#allocation0] ss:$8 sm:$0x3] %vm147, %v146
    %s149 = scalar_lea.vmem %s0, 17
    %v150 = vld [vmem:[%s149] sm:$0x1]
    %s151 = scalar_lea.vmem %s0, 48
    %v152 = vld [vmem:[%s151] sm:$0x2]
    %vm153 = vcmask 1041409
    %v154 = vsel %vm153, %v152, %v150
    %155 = vrot.lane.b32.xlu0 %v154, 68
    %v156 = vpop.permute.xlu0 %155
    %vm157 = vcmask 589344
    %158 = vst.msk [vmem:[#allocation0] ss:$8 sm:$0x3] %vm157, %v156
    %s159 = scalar_lea.vmem %s0, 16
    %v160 = vld [vmem:[%s159] sm:$0x1]
    %s161 = scalar_lea.vmem %s0, 47
    %v162 = vld [vmem:[%s161] sm:$0x2]
    %vm163 = vcmask 1041409
    %v164 = vsel %vm163, %v162, %v160
    %165 = vrot.lane.b32.xlu0 %v164, 64
    %v166 = vpop.permute.xlu0 %165
    %vm167 = vcmask 556544
    %168 = vst.msk [vmem:[#allocation0] ss:$8 sm:$0x3] %vm167, %v166
    %s169 = scalar_lea.vmem %s0, 15
    %v170 = vld [vmem:[%s169] sm:$0x1]
    %s171 = scalar_lea.vmem %s0, 46
    %v172 = vld [vmem:[%s171] sm:$0x2]
    %vm173 = vcmask 1041409
    %v174 = vsel %vm173, %v172, %v170
    %175 = vrot.lane.b32.xlu0 %v174, 60
    %v176 = vpop.permute.xlu0 %175
    %vm177 = vcmask 523744
    %178 = vst.msk [vmem:[#allocation0] ss:$8 sm:$0x3] %vm177, %v176
    %s179 = scalar_lea.vmem %s0, 14
    %v180 = vld [vmem:[%s179] sm:$0x1]
    %s181 = scalar_lea.vmem %s0, 45
    %v182 = vld [vmem:[%s181] sm:$0x2]
    %vm183 = vcmask 1041409
    %v184 = vsel %vm183, %v182, %v180
    %185 = vrot.lane.b32.xlu0 %v184, 56
    %v186 = vpop.permute.xlu0 %185
    %vm187 = vcmask 490944
    %188 = vst.msk [vmem:[#allocation0] ss:$8 sm:$0x3] %vm187, %v186
    %s189 = scalar_lea.vmem %s0, 13
    %v190 = vld [vmem:[%s189] sm:$0x1]
    %s191 = scalar_lea.vmem %s0, 44
    %v192 = vld [vmem:[%s191] sm:$0x2]
    %vm193 = vcmask 1041409
    %v194 = vsel %vm193, %v192, %v190
    %195 = vrot.lane.b32.xlu0 %v194, 52
    %v196 = vpop.permute.xlu0 %195
    %vm197 = vcmask 458144
    %198 = vst.msk [vmem:[#allocation0] ss:$8 sm:$0x3] %vm197, %v196
    %s199 = scalar_lea.vmem %s0, 12
    %v200 = vld [vmem:[%s199] sm:$0x1]
    %s201 = scalar_lea.vmem %s0, 43
    %v202 = vld [vmem:[%s201] sm:$0x2]
    %vm203 = vcmask 1041409
    %v204 = vsel %vm203, %v202, %v200
    %205 = vrot.lane.b32.xlu0 %v204, 48
    %v206 = vpop.permute.xlu0 %205
    %vm207 = vcmask 425344
    %208 = vst.msk [vmem:[#allocation0] ss:$8 sm:$0x3] %vm207, %v206
    %s209 = scalar_lea.vmem %s0, 11
    %v210 = vld [vmem:[%s209] sm:$0x1]
    %s211 = scalar_lea.vmem %s0, 42
    %v212 = vld [vmem:[%s211] sm:$0x2]
    %vm213 = vcmask 1041409
    %v214 = vsel %vm213, %v212, %v210
    %215 = vrot.lane.b32.xlu0 %v214, 44
    %v216 = vpop.permute.xlu0 %215
    %vm217 = vcmask 392544
    %218 = vst.msk [vmem:[#allocation0] ss:$8 sm:$0x3] %vm217, %v216
    %s219 = scalar_lea.vmem %s0, 10
    %v220 = vld [vmem:[%s219] sm:$0x1]
    %s221 = scalar_lea.vmem %s0, 41
    %v222 = vld [vmem:[%s221] sm:$0x2]
    %vm223 = vcmask 1041409
    %v224 = vsel %vm223, %v222, %v220
    %225 = vrot.lane.b32.xlu0 %v224, 40
    %v226 = vpop.permute.xlu0 %225
    %vm227 = vcmask 359744
    %228 = vst.msk [vmem:[#allocation0] ss:$8 sm:$0x3] %vm227, %v226
    %s229 = scalar_lea.vmem %s0, 9
    %v230 = vld [vmem:[%s229] sm:$0x1]
    %s231 = scalar_lea.vmem %s0, 40
    %v232 = vld [vmem:[%s231] sm:$0x2]
    %vm233 = vcmask 1041409
    %v234 = vsel %vm233, %v232, %v230
    %235 = vrot.lane.b32.xlu0 %v234, 36
    %v236 = vpop.permute.xlu0 %235
    %vm237 = vcmask 326944
    %238 = vst.msk [vmem:[#allocation0] ss:$8 sm:$0x3] %vm237, %v236
    %s239 = scalar_lea.vmem %s0, 8
    %v240 = vld [vmem:[%s239] sm:$0x1]
    %s241 = scalar_lea.vmem %s0, 39
    %v242 = vld [vmem:[%s241] sm:$0x2]
    %vm243 = vcmask 1041409
    %v244 = vsel %vm243, %v242, %v240
    %245 = vrot.lane.b32.xlu0 %v244, 32
    %v246 = vpop.permute.xlu0 %245
    %vm247 = vcmask 294144
    %248 = vst.msk [vmem:[#allocation0] ss:$8 sm:$0x3] %vm247, %v246
    %s249 = scalar_lea.vmem %s0, 7
    %v250 = vld [vmem:[%s249] sm:$0x1]
    %s251 = scalar_lea.vmem %s0, 38
    %v252 = vld [vmem:[%s251] sm:$0x2]
    %vm253 = vcmask 1041409
    %v254 = vsel %vm253, %v252, %v250
    %255 = vrot.lane.b32.xlu0 %v254, 28
    %v256 = vpop.permute.xlu0 %255
    %vm257 = vcmask 261344
    %258 = vst.msk [vmem:[#allocation0] ss:$8 sm:$0x3] %vm257, %v256
    %s259 = scalar_lea.vmem %s0, 6
    %v260 = vld [vmem:[%s259] sm:$0x1]
    %s261 = scalar_lea.vmem %s0, 37
    %v262 = vld [vmem:[%s261] sm:$0x2]
    %vm263 = vcmask 1041409
    %v264 = vsel %vm263, %v262, %v260
    %265 = vrot.lane.b32.xlu0 %v264, 24
    %v266 = vpop.permute.xlu0 %265
    %vm267 = vcmask 228544
    %268 = vst.msk [vmem:[#allocation0] ss:$8 sm:$0x3] %vm267, %v266
    %s269 = scalar_lea.vmem %s0, 5
    %v270 = vld [vmem:[%s269] sm:$0x1]
    %s271 = scalar_lea.vmem %s0, 36
    %v272 = vld [vmem:[%s271] sm:$0x2]
    %vm273 = vcmask 1041409
    %v274 = vsel %vm273, %v272, %v270
    %275 = vrot.lane.b32.xlu0 %v274, 20
    %v276 = vpop.permute.xlu0 %275
    %vm277 = vcmask 195744
    %278 = vst.msk [vmem:[#allocation0] ss:$8 sm:$0x3] %vm277, %v276
    %s279 = scalar_lea.vmem %s0, 4
    %v280 = vld [vmem:[%s279] sm:$0x1]
    %s281 = scalar_lea.vmem %s0, 35
    %v282 = vld [vmem:[%s281] sm:$0x2]
    %vm283 = vcmask 1041409
    %v284 = vsel %vm283, %v282, %v280
    %285 = vrot.lane.b32.xlu0 %v284, 16
    %v286 = vpop.permute.xlu0 %285
    %vm287 = vcmask 162944
    %288 = vst.msk [vmem:[#allocation0] ss:$8 sm:$0x3] %vm287, %v286
    %s289 = scalar_lea.vmem %s0, 3
    %v290 = vld [vmem:[%s289] sm:$0x1]
    %s291 = scalar_lea.vmem %s0, 34
    %v292 = vld [vmem:[%s291] sm:$0x2]
    %vm293 = vcmask 1041409
    %v294 = vsel %vm293, %v292, %v290
    %295 = vrot.lane.b32.xlu0 %v294, 12
    %v296 = vpop.permute.xlu0 %295
    %vm297 = vcmask 130144
    %298 = vst.msk [vmem:[#allocation0] ss:$8 sm:$0x3] %vm297, %v296
    %s299 = scalar_lea.vmem %s0, 2
    %v300 = vld [vmem:[%s299] sm:$0x1]
    %s301 = scalar_lea.vmem %s0, 33
    %v302 = vld [vmem:[%s301] sm:$0x2]
    %vm303 = vcmask 1041409
    %v304 = vsel %vm303, %v302, %v300
    %305 = vrot.lane.b32.xlu0 %v304, 8
    %v306 = vpop.permute.xlu0 %305
    %vm307 = vcmask 97344
    %308 = vst.msk [vmem:[#allocation0] ss:$8 sm:$0x3] %vm307, %v306
    %s309 = scalar_lea.vmem %s0, 1
    %v310 = vld [vmem:[%s309] sm:$0x1]
    %s311 = scalar_lea.vmem %s0, 32
    %v312 = vld [vmem:[%s311] sm:$0x2]
    %vm313 = vcmask 1041409
    %v314 = vsel %vm313, %v312, %v310
    %315 = vrot.lane.b32.xlu0 %v314, 4
    %v316 = vpop.permute.xlu0 %315
    %vm317 = vcmask 64544
    %318 = vst.msk [vmem:[#allocation0] ss:$8 sm:$0x3] %vm317, %v316
    %s320 = sshll.u32 1, 1
    %s321 = ssub.s32 %s320, 1
    %v323 = vld [vmem:[#allocation0] sm:%s321]
    %s324 = sshll.u32 1, 1
    %s325 = ssub.s32 %s324, 1
    %326 = vst [vmem:[%s1] sm:%s325] %v323
    %s327 = scalar_lea.vmem [#allocation0], 8
    %v328 = vld [vmem:[%s327] sm:%s321]
    %s329 = sshll.u32 1, 1
    %s330 = ssub.s32 %s329, 1
    %s331 = scalar_lea.vmem %s1, 1
    %332 = vst [vmem:[%s331] sm:%s330] %v328

// kernel: tile.46
$region0: #{tile.46}
  #allocation0 [shape = 's32[1]{0}', space=sflag, size = 0x4, scoped, tag = 'scoped memory for tile.46']
  %s0 = inlined_call_operand.vmem [shape: f32[8], index: 0, kind: input, shape index: {}]
  %s1 = inlined_call_operand.vmem [shape: f32[32,8], index: 1, kind: output, shape index: {}]
  // Predicated region
  $region2: #{tile.46} parent=0 // pred_check
    _
  $region3: #{tile.46} parent=0 // pred_check_branch
    %3 = sbr.rel (0) target = $region5
  $region4: #{tile.46} parent=0 // pred_region
    _
  $region5: #{tile.46} parent=0 // pred_fallthru
    _
  %v4 = vld [vmem:[%s0] ss:$0 sm:$0xff]
  %5 = vst [vmem:[%s1] sm:$0xff] %v4
  %s6 = scalar_lea.vmem %s1, 8
  %7 = vst [vmem:[%s6] sm:$0xff] %v4
  %s8 = scalar_lea.vmem %s1, 16
  %9 = vst [vmem:[%s8] sm:$0xff] %v4
  %s10 = scalar_lea.vmem %s1, 24
  %11 = vst [vmem:[%s10] sm:$0xff] %v4

// kernel: tile.60
$region0: #{tile.60}
  %s0 = inlined_call_operand.vmem [shape: f32[32,8], index: 0, kind: input, shape index: {}]
  %s1 = inlined_call_operand.vmem [shape: f32[1,256], index: 1, kind: output, shape index: {}]
  $region1: #{tile.60} parent=0
    #allocation0 [shape = 'u8[8192]{0}', space=vmem, size = 0x2000, scoped, tag = 'scoped mem for output reshape']
    %s2 = smov 3
    %v3 = vld [vmem:[%s0] ss:$16 sm:%s2]
    %vm4 = vcmask 64512
    %5 = vst.msk [vmem:[#allocation0] ss:$8 sm:$0x3] %vm4, %v3
    %s6 = scalar_lea.vmem %s0, 15
    %s7 = smov 3
    %v8 = vld [vmem:[%s6] ss:$16 sm:%s7]
    %9 = vrot.lane.b32.xlu0 %v8, 120
    %v10 = vpop.permute.xlu0 %9
    %vm11 = vcmask 1048512
    %12 = vst.msk [vmem:[#allocation0] ss:$8 sm:$0x3] %vm11, %v10
    %s13 = scalar_lea.vmem %s0, 14
    %s14 = smov 3
    %v15 = vld [vmem:[%s13] ss:$16 sm:%s14]
    %16 = vrot.lane.b32.xlu0 %v15, 112
    %v17 = vpop.permute.xlu0 %16
    %vm18 = vcmask 982912
    %19 = vst.msk [vmem:[#allocation0] ss:$8 sm:$0x3] %vm18, %v17
    %s20 = scalar_lea.vmem %s0, 13
    %s21 = smov 3
    %v22 = vld [vmem:[%s20] ss:$16 sm:%s21]
    %23 = vrot.lane.b32.xlu0 %v22, 104
    %v24 = vpop.permute.xlu0 %23
    %vm25 = vcmask 917312
    %26 = vst.msk [vmem:[#allocation0] ss:$8 sm:$0x3] %vm25, %v24
    %s27 = scalar_lea.vmem %s0, 12
    %s28 = smov 3
    %v29 = vld [vmem:[%s27] ss:$16 sm:%s28]
    %30 = vrot.lane.b32.xlu0 %v29, 96
    %v31 = vpop.permute.xlu0 %30
    %vm32 = vcmask 851712
    %33 = vst.msk [vmem:[#allocation0] ss:$8 sm:$0x3] %vm32, %v31
    %s34 = scalar_lea.vmem %s0, 11
    %s35 = smov 3
    %v36 = vld [vmem:[%s34] ss:$16 sm:%s35]
    %37 = vrot.lane.b32.xlu0 %v36, 88
    %v38 = vpop.permute.xlu0 %37
    %vm39 = vcmask 786112
    %40 = vst.msk [vmem:[#allocation0] ss:$8 sm:$0x3] %vm39, %v38
    %s41 = scalar_lea.vmem %s0, 10
    %s42 = smov 3
    %v43 = vld [vmem:[%s41] ss:$16 sm:%s42]
    %44 = vrot.lane.b32.xlu0 %v43, 80
    %v45 = vpop.permute.xlu0 %44
    %vm46 = vcmask 720512
    %47 = vst.msk [vmem:[#allocation0] ss:$8 sm:$0x3] %vm46, %v45
    %s48 = scalar_lea.vmem %s0, 9
    %s49 = smov 3
    %v50 = vld [vmem:[%s48] ss:$16 sm:%s49]
    %51 = vrot.lane.b32.xlu0 %v50, 72
    %v52 = vpop.permute.xlu0 %51
    %vm53 = vcmask 654912
    %54 = vst.msk [vmem:[#allocation0] ss:$8 sm:$0x3] %vm53, %v52
    %s55 = scalar_lea.vmem %s0, 8
    %s56 = smov 3
    %v57 = vld [vmem:[%s55] ss:$16 sm:%s56]
    %58 = vrot.lane.b32.xlu0 %v57, 64
    %v59 = vpop.permute.xlu0 %58
    %vm60 = vcmask 589312
    %61 = vst.msk [vmem:[#allocation0] ss:$8 sm:$0x3] %vm60, %v59
    %s62 = scalar_lea.vmem %s0, 7
    %s63 = smov 3
    %v64 = vld [vmem:[%s62] ss:$16 sm:%s63]
    %65 = vrot.lane.b32.xlu0 %v64, 56
    %v66 = vpop.permute.xlu0 %65
    %vm67 = vcmask 523712
    %68 = vst.msk [vmem:[#allocation0] ss:$8 sm:$0x3] %vm67, %v66
    %s69 = scalar_lea.vmem %s0, 6
    %s70 = smov 3
    %v71 = vld [vmem:[%s69] ss:$16 sm:%s70]
    %72 = vrot.lane.b32.xlu0 %v71, 48
    %v73 = vpop.permute.xlu0 %72
    %vm74 = vcmask 458112
    %75 = vst.msk [vmem:[#allocation0] ss:$8 sm:$0x3] %vm74, %v73
    %s76 = scalar_lea.vmem %s0, 5
    %s77 = smov 3
    %v78 = vld [vmem:[%s76] ss:$16 sm:%s77]
    %79 = vrot.lane.b32.xlu0 %v78, 40
    %v80 = vpop.permute.xlu0 %79
    %vm81 = vcmask 392512
    %82 = vst.msk [vmem:[#allocation0] ss:$8 sm:$0x3] %vm81, %v80
    %s83 = scalar_lea.vmem %s0, 4
    %s84 = smov 3
    %v85 = vld [vmem:[%s83] ss:$16 sm:%s84]
    %86 = vrot.lane.b32.xlu0 %v85, 32
    %v87 = vpop.permute.xlu0 %86
    %vm88 = vcmask 326912
    %89 = vst.msk [vmem:[#allocation0] ss:$8 sm:$0x3] %vm88, %v87
    %s90 = scalar_lea.vmem %s0, 3
    %s91 = smov 3
    %v92 = vld [vmem:[%s90] ss:$16 sm:%s91]
    %93 = vrot.lane.b32.xlu0 %v92, 24
    %v94 = vpop.permute.xlu0 %93
    %vm95 = vcmask 261312
    %96 = vst.msk [vmem:[#allocation0] ss:$8 sm:$0x3] %vm95, %v94
    %s97 = scalar_lea.vmem %s0, 2
    %s98 = smov 3
    %v99 = vld [vmem:[%s97] ss:$16 sm:%s98]
    %100 = vrot.lane.b32.xlu0 %v99, 16
    %v101 = vpop.permute.xlu0 %100
    %vm102 = vcmask 195712
    %103 = vst.msk [vmem:[#allocation0] ss:$8 sm:$0x3] %vm102, %v101
    %s104 = scalar_lea.vmem %s0, 1
    %s105 = smov 3
    %v106 = vld [vmem:[%s104] ss:$16 sm:%s105]
    %107 = vrot.lane.b32.xlu0 %v106, 8
    %v108 = vpop.permute.xlu0 %107
    %vm109 = vcmask 130112
    %110 = vst.msk [vmem:[#allocation0] ss:$8 sm:$0x3] %vm109, %v108
    %s112 = sshll.u32 1, 1
    %s113 = ssub.s32 %s112, 1
    %v115 = vld [vmem:[#allocation0] sm:%s113]
    %s116 = sshll.u32 1, 1
    %s117 = ssub.s32 %s116, 1
    %118 = vst [vmem:[%s1] sm:%s117] %v115
    %s119 = scalar_lea.vmem [#allocation0], 8
    %v120 = vld [vmem:[%s119] sm:%s113]
    %s121 = sshll.u32 1, 1
    %s122 = ssub.s32 %s121, 1
    %s123 = scalar_lea.vmem %s1, 1
    %124 = vst [vmem:[%s123] sm:%s122] %v120

// kernel: tile.40
$region0: #{tile.40}
  #allocation0 [shape = 's32[1]{0}', space=sflag, size = 0x4, scoped, tag = 'scoped memory for tile.40']
  %s0 = inlined_call_operand.vmem [shape: f32[16], index: 0, kind: input, shape index: {}]
  %s1 = inlined_call_operand.vmem [shape: f32[16,16], index: 1, kind: output, shape index: {}]
  // Predicated region
  $region2: #{tile.40} parent=0 // pred_check
    _
  $region3: #{tile.40} parent=0 // pred_check_branch
    %3 = sbr.rel (0) target = $region5
  $region4: #{tile.40} parent=0 // pred_region
    _
  $region5: #{tile.40} parent=0 // pred_fallthru
    _
  %v4 = vld [vmem:[%s0] ss:$0 sm:$0xff]
  %5 = vst [vmem:[%s1] sm:$0xff] %v4
  %s6 = scalar_lea.vmem %s1, 8
  %7 = vst [vmem:[%s6] sm:$0xff] %v4

// kernel: tile.34
$region0: #{tile.34}
  #allocation0 [shape = 's32[1]{0}', space=sflag, size = 0x4, scoped, tag = 'scoped memory for tile.34']
  %s0 = inlined_call_operand.vmem [shape: f32[32], index: 0, kind: input, shape index: {}]
  %s1 = inlined_call_operand.vmem [shape: f32[8,32], index: 1, kind: output, shape index: {}]
  // Predicated region
  $region2: #{tile.34} parent=0 // pred_check
    _
  $region3: #{tile.34} parent=0 // pred_check_branch
    %3 = sbr.rel (0) target = $region5
  $region4: #{tile.34} parent=0 // pred_region
    _
  $region5: #{tile.34} parent=0 // pred_fallthru
    _
  %v4 = vld [vmem:[%s0] ss:$0 sm:$0xff]
  %5 = vst [vmem:[%s1] sm:$0xff] %v4

// kernel: tile.58
$region0: #{tile.58}
  %s0 = inlined_call_operand.vmem [shape: f32[16,16], index: 0, kind: input, shape index: {}]
  %s1 = inlined_call_operand.vmem [shape: f32[1,256], index: 1, kind: output, shape index: {}]
  $region1: #{tile.58} parent=0
    #allocation0 [shape = 'u8[8192]{0}', space=vmem, size = 0x2000, scoped, tag = 'scoped mem for output reshape']
    %s2 = smov 3
    %v3 = vld [vmem:[%s0] ss:$8 sm:%s2]
    %vm4 = vcmask 130048
    %5 = vst.msk [vmem:[#allocation0] ss:$8 sm:$0x3] %vm4, %v3
    %s6 = scalar_lea.vmem %s0, 7
    %s7 = smov 3
    %v8 = vld [vmem:[%s6] ss:$8 sm:%s7]
    %9 = vrot.lane.b32.xlu0 %v8, 112
    %v10 = vpop.permute.xlu0 %9
    %vm11 = vcmask 1048448
    %12 = vst.msk [vmem:[#allocation0] ss:$8 sm:$0x3] %vm11, %v10
    %s13 = scalar_lea.vmem %s0, 6
    %s14 = smov 3
    %v15 = vld [vmem:[%s13] ss:$8 sm:%s14]
    %16 = vrot.lane.b32.xlu0 %v15, 96
    %v17 = vpop.permute.xlu0 %16
    %vm18 = vcmask 917248
    %19 = vst.msk [vmem:[#allocation0] ss:$8 sm:$0x3] %vm18, %v17
    %s20 = scalar_lea.vmem %s0, 5
    %s21 = smov 3
    %v22 = vld [vmem:[%s20] ss:$8 sm:%s21]
    %23 = vrot.lane.b32.xlu0 %v22, 80
    %v24 = vpop.permute.xlu0 %23
    %vm25 = vcmask 786048
    %26 = vst.msk [vmem:[#allocation0] ss:$8 sm:$0x3] %vm25, %v24
    %s27 = scalar_lea.vmem %s0, 4
    %s28 = smov 3
    %v29 = vld [vmem:[%s27] ss:$8 sm:%s28]
    %30 = vrot.lane.b32.xlu0 %v29, 64
    %v31 = vpop.permute.xlu0 %30
    %vm32 = vcmask 654848
    %33 = vst.msk [vmem:[#allocation0] ss:$8 sm:$0x3] %vm32, %v31
    %s34 = scalar_lea.vmem %s0, 3
    %s35 = smov 3
    %v36 = vld [vmem:[%s34] ss:$8 sm:%s35]
    %37 = vrot.lane.b32.xlu0 %v36, 48
    %v38 = vpop.permute.xlu0 %37
    %vm39 = vcmask 523648
    %40 = vst.msk [vmem:[#allocation0] ss:$8 sm:$0x3] %vm39, %v38
    %s41 = scalar_lea.vmem %s0, 2
    %s42 = smov 3
    %v43 = vld [vmem:[%s41] ss:$8 sm:%s42]
    %44 = vrot.lane.b32.xlu0 %v43, 32
    %v45 = vpop.permute.xlu0 %44
    %vm46 = vcmask 392448
    %47 = vst.msk [vmem:[#allocation0] ss:$8 sm:$0x3] %vm46, %v45
    %s48 = scalar_lea.vmem %s0, 1
    %s49 = smov 3
    %v50 = vld [vmem:[%s48] ss:$8 sm:%s49]
    %51 = vrot.lane.b32.xlu0 %v50, 16
    %v52 = vpop.permute.xlu0 %51
    %vm53 = vcmask 261248
    %54 = vst.msk [vmem:[#allocation0] ss:$8 sm:$0x3] %vm53, %v52
    %s56 = sshll.u32 1, 1
    %s57 = ssub.s32 %s56, 1
    %v59 = vld [vmem:[#allocation0] sm:%s57]
    %s60 = sshll.u32 1, 1
    %s61 = ssub.s32 %s60, 1
    %62 = vst [vmem:[%s1] sm:%s61] %v59
    %s63 = scalar_lea.vmem [#allocation0], 8
    %v64 = vld [vmem:[%s63] sm:%s57]
    %s65 = sshll.u32 1, 1
    %s66 = ssub.s32 %s65, 1
    %s67 = scalar_lea.vmem %s1, 1
    %68 = vst [vmem:[%s67] sm:%s66] %v64

// kernel: tile.56
$region0: #{tile.56}
  %s0 = inlined_call_operand.vmem [shape: f32[8,32], index: 0, kind: input, shape index: {}]
  %s1 = inlined_call_operand.vmem [shape: f32[1,256], index: 1, kind: output, shape index: {}]
  $region1: #{tile.56} parent=0
    #allocation0 [shape = 'u8[8192]{0}', space=vmem, size = 0x2000, scoped, tag = 'scoped mem for output reshape']
    %s2 = smov 3
    %v3 = vld [vmem:[%s0] ss:$4 sm:%s2]
    %vm4 = vcmask 261120
    %5 = vst.msk [vmem:[#allocation0] ss:$8 sm:$0x3] %vm4, %v3
    %s6 = scalar_lea.vmem %s0, 3
    %s7 = smov 3
    %v8 = vld [vmem:[%s6] ss:$4 sm:%s7]
    %9 = vrot.lane.b32.xlu0 %v8, 96
    %v10 = vpop.permute.xlu0 %9
    %vm11 = vcmask 1048320
    %12 = vst.msk [vmem:[#allocation0] ss:$8 sm:$0x3] %vm11, %v10
    %s13 = scalar_lea.vmem %s0, 2
    %s14 = smov 3
    %v15 = vld [vmem:[%s13] ss:$4 sm:%s14]
    %16 = vrot.lane.b32.xlu0 %v15, 64
    %v17 = vpop.permute.xlu0 %16
    %vm18 = vcmask 785920
    %19 = vst.msk [vmem:[#allocation0] ss:$8 sm:$0x3] %vm18, %v17
    %s20 = scalar_lea.vmem %s0, 1
    %s21 = smov 3
    %v22 = vld [vmem:[%s20] ss:$4 sm:%s21]
    %23 = vrot.lane.b32.xlu0 %v22, 32
    %v24 = vpop.permute.xlu0 %23
    %vm25 = vcmask 523520
    %26 = vst.msk [vmem:[#allocation0] ss:$8 sm:$0x3] %vm25, %v24
    %s28 = sshll.u32 1, 1
    %s29 = ssub.s32 %s28, 1
    %v31 = vld [vmem:[#allocation0] sm:%s29]
    %s32 = sshll.u32 1, 1
    %s33 = ssub.s32 %s32, 1
    %34 = vst [vmem:[%s1] sm:%s33] %v31
    %s35 = scalar_lea.vmem [#allocation0], 8
    %v36 = vld [vmem:[%s35] sm:%s29]
    %s37 = sshll.u32 1, 1
    %s38 = ssub.s32 %s37, 1
    %s39 = scalar_lea.vmem %s1, 1
    %40 = vst [vmem:[%s39] sm:%s38] %v36

// kernel: decoder1_forward.1
$region0: #{decoder1_forward.1}
  #allocation0 [shape = 'u32[]', space=smem, size = 0x4, offset = 0x4, fixed_abs, tag = 'smem constant byte address 0x4 - core index']
  #allocation1 [shape = 'u32[144,128]{1,0:T(1,128)}', space=vmem, size = 0x12000, scoped, tag = 'internal scratch']
  %s0 = inlined_call_operand.vmem [shape: bf16[1,16,256], index: 0, kind: input, shape index: {}]
  %s1 = inlined_call_operand.vmem [shape: bf16[96,16], index: 1, kind: input, shape index: {}]
  %s2 = inlined_call_operand.vmem [shape: bf16[192,32], index: 2, kind: input, shape index: {}]
  %s3 = inlined_call_operand.vmem [shape: bf16[384,64], index: 3, kind: input, shape index: {}]
  %s4 = inlined_call_operand.vmem [shape: bf16[768,128], index: 4, kind: input, shape index: {}]
  %s5 = inlined_call_operand.vmem [shape: bf16[768,256], index: 5, kind: input, shape index: {}]
  %s6 = inlined_call_operand.vmem [shape: bf16[4,768,256], index: 6, kind: input, shape index: {}]
  %s7 = inlined_call_operand.vmem [shape: bf16[768,256], index: 7, kind: input, shape index: {}]
  %s8 = inlined_call_operand.vmem [shape: f32[8,256], index: 8, kind: input, shape index: {}]
  %s9 = inlined_call_operand.vmem [shape: f32[1,256,256], index: 9, kind: output, shape index: {}]
  %s10 = sld [smem:[#allocation0]]
  $region46: #{decoder1_forward.1} parent=0
    _
  %s12 = ssub.s32 1, %s10
  %s13 = scalar_select 0, %s12, %s10
  // Predicated region
  $region2: #{decoder1_forward.1} parent=0 // pred_check
    _
  $region3: #{decoder1_forward.1} parent=0 // pred_check_branch
    %15 = sbr.rel (0) target = $region5
  $region4: #{decoder1_forward.1} parent=0 // pred_region
    _
  $region5: #{decoder1_forward.1} parent=0 // pred_fallthru
    _
  // Predicated region
  $region6: #{decoder1_forward.1} parent=0 // pred_check
    _
  $region7: #{decoder1_forward.1} parent=0 // pred_check_branch
    %17 = sbr.rel (0) target = $region9
  $region8: #{decoder1_forward.1} parent=0 // pred_region
    _
  $region9: #{decoder1_forward.1} parent=0 // pred_fallthru
    _
  // Predicated region
  $region10: #{decoder1_forward.1} parent=0 // pred_check
    _
  $region11: #{decoder1_forward.1} parent=0 // pred_check_branch
    %19 = sbr.rel (0) target = $region13
  $region12: #{decoder1_forward.1} parent=0 // pred_region
    _
  $region13: #{decoder1_forward.1} parent=0 // pred_fallthru
    _
  // Predicated region
  $region14: #{decoder1_forward.1} parent=0 // pred_check
    _
  $region15: #{decoder1_forward.1} parent=0 // pred_check_branch
    %21 = sbr.rel (0) target = $region17
  $region16: #{decoder1_forward.1} parent=0 // pred_region
    _
  $region17: #{decoder1_forward.1} parent=0 // pred_fallthru
    _
  // Predicated region
  $region18: #{decoder1_forward.1} parent=0 // pred_check
    _
  $region19: #{decoder1_forward.1} parent=0 // pred_check_branch
    %23 = sbr.rel (0) target = $region21
  $region20: #{decoder1_forward.1} parent=0 // pred_region
    _
  $region21: #{decoder1_forward.1} parent=0 // pred_fallthru
    _
  // Predicated region
  $region22: #{decoder1_forward.1} parent=0 // pred_check
    _
  $region23: #{decoder1_forward.1} parent=0 // pred_check_branch
    %25 = sbr.rel (0) target = $region25
  $region24: #{decoder1_forward.1} parent=0 // pred_region
    _
  $region25: #{decoder1_forward.1} parent=0 // pred_fallthru
    _
  // Predicated region
  $region26: #{decoder1_forward.1} parent=0 // pred_check
    _
  $region27: #{decoder1_forward.1} parent=0 // pred_check_branch
    %27 = sbr.rel (0) target = $region29
  $region28: #{decoder1_forward.1} parent=0 // pred_region
    _
  $region29: #{decoder1_forward.1} parent=0 // pred_fallthru
    _
  // Predicated region
  $region30: #{decoder1_forward.1} parent=0 // pred_check
    _
  $region31: #{decoder1_forward.1} parent=0 // pred_check_branch
    %29 = sbr.rel (0) target = $region33
  $region32: #{decoder1_forward.1} parent=0 // pred_region
    _
  $region33: #{decoder1_forward.1} parent=0 // pred_fallthru
    _
  // Predicated region
  $region34: #{decoder1_forward.1} parent=0 // pred_check
    _
  $region35: #{decoder1_forward.1} parent=0 // pred_check_branch
    %31 = sbr.rel (0) target = $region37
  $region36: #{decoder1_forward.1} parent=0 // pred_region
    _
  $region37: #{decoder1_forward.1} parent=0 // pred_fallthru
    _
  %v33 = vld [vmem:[%s0] sm:$0xff]
  %v34 = vld [vmem:[%s0 + $0x8] sm:$0xff]
  %v35 = vld [vmem:[%s1] sm:$0xf]
  %v36 = vld [vmem:[%s1 + $0x4] sm:$0xf]
  %v37 = vld [vmem:[%s1 + $0x8] sm:$0xf]
  %v38 = vld [vmem:[%s1 + $0xc] sm:$0xf]
  %v39 = vld [vmem:[%s1 + $0x10] sm:$0xf]
  %v40 = vld [vmem:[%s1 + $0x14] sm:$0xf]
  %v41 = vld [vmem:[%s1 + $0x18] sm:$0xf]
  %v42 = vld [vmem:[%s1 + $0x1c] sm:$0xf]
  %v43 = vld [vmem:[%s1 + $0x20] sm:$0xf]
  %v44 = vld [vmem:[%s1 + $0x24] sm:$0xf]
  %v45 = vld [vmem:[%s1 + $0x28] sm:$0xf]
  %v46 = vld [vmem:[%s1 + $0x2c] sm:$0xf]
  %v59 = vunpack.c.l.b16 %v35
  %v60 = vunpack.c.l.b16 %v36
  %v61 = vunpack.c.l.b16 %v37
  %v62 = vunpack.c.l.b16 %v38
  %v63 = vunpack.c.l.b16 %v39
  %v64 = vunpack.c.l.b16 %v40
  %v65 = vunpack.c.l.b16 %v41
  %v66 = vunpack.c.l.b16 %v42
  %v67 = vunpack.c.l.b16 %v43
  %v68 = vunpack.c.l.b16 %v44
  %v69 = vunpack.c.l.b16 %v45
  %v70 = vunpack.c.l.b16 %v46
  %v71 = vpack.c.b16 %v60, %v59
  %v72 = vpack.c.b16 %v62, %v61
  %v73 = vpack.c.b16 %v64, %v63
  %v74 = vpack.c.b16 %v66, %v65
  %v75 = vpack.c.b16 %v68, %v67
  %v76 = vpack.c.b16 %v70, %v69
  %v79 = vunpack.c.l.b16 %v33
  %v80 = vunpack.c.h.b16 %v33
  %v81 = vunpack.c.l.b16 %v34
  %v82 = vunpack.c.h.b16 %v34
  %v83 = vpack.c.b16 %v81, %v79
  %v84 = vpack.c.b16 %v82, %v80
  %vm87 = vcmask 130048
  %v89 = vsel %vm87, %v71, 0
  %v92 = vsel %vm87, %v72, 0
  %v95 = vsel %vm87, %v73, 0
  %v98 = vsel %vm87, %v74, 0
  %v101 = vsel %vm87, %v75, 0
  %v104 = vsel %vm87, %v76, 0
  %106 = vmatprep.subr.bf16.mxu0 0
  %107 = vmatpush1.bf16.msra.mxu0 0
  %108 = vmatprep.subr.bf16.mxu0 0
  %109 = vmatpush1.bf16.msra.mxu0 0
  %110 = vmatprep.subr.bf16.mxu0 0
  %111 = vmatpush1.bf16.msra.mxu0 0
  %112 = vmatprep.subr.bf16.mxu0 0
  %113 = vmatpush1.bf16.msra.mxu0 0
  %114 = vmatprep.subr.bf16.mxu0 0
  %115 = vmatpush1.bf16.msra.mxu0 0
  %116 = vmatprep.subr.bf16.mxu0 0
  %117 = vmatpush1.bf16.msra.mxu0 0
  %118 = vmatprep.subr.bf16.mxu0 0
  %119 = vmatpush1.bf16.msra.mxu0 0
  %120 = vmatprep.subr.bf16.mxu0 %v84
  %121 = vmatpush1.bf16.msra.mxu0 %v83
  %122 = vmatprep.subr.bf16.mxu0 0
  %123 = vmatpush2.bf16.msra.mxu0 0
  %124 = vmatprep.subr.bf16.mxu0 0
  %125 = vmatpush2.bf16.msra.mxu0 0
  %126 = vmatprep.subr.bf16.mxu0 0
  %127 = vmatpush2.bf16.msra.mxu0 0
  %128 = vmatprep.subr.bf16.mxu0 0
  %129 = vmatpush2.bf16.msra.mxu0 0
  %130 = vmatprep.subr.bf16.mxu0 0
  %131 = vmatpush2.bf16.msra.mxu0 0
  %132 = vmatprep.subr.bf16.mxu0 0
  %133 = vmatpush2.bf16.msra.mxu0 0
  %134 = vmatprep.subr.bf16.mxu0 0
  %135 = vmatpush2.bf16.msra.mxu0 0
  %136 = vmatprep.subr.bf16.mxu0 0
  %137 = vmatpush2.bf16.msra.mxu0 0
  %138 = vmatprep.mubr.bf16.mxu0 0
  %139 = vmatmul.mubr.bf16.gmra.mxu0 %v89
  %v140 = vpop.f32.mrf.mxu0
  %v141 = vadd.f32 0.0, %v140
  %v142 = vpop.f32.mrf.mxu0
  %v143 = vadd.f32 0.0, %v142
  %v144 = vpop.f32.mrf.mxu0
  %v145 = vadd.f32 0.0, %v144
  %v146 = vpop.f32.mrf.mxu0
  %v147 = vadd.f32 0.0, %v146
  %148 = vmatprep.mubr.bf16.mxu0 0
  %149 = vmatmul.mubr.bf16.gmra.mxu0 %v92
  %v150 = vpop.f32.mrf.mxu0
  %v151 = vadd.f32 0.0, %v150
  %v152 = vpop.f32.mrf.mxu0
  %v153 = vadd.f32 0.0, %v152
  %v154 = vpop.f32.mrf.mxu0
  %v155 = vadd.f32 0.0, %v154
  %v156 = vpop.f32.mrf.mxu0
  %v157 = vadd.f32 0.0, %v156
  %158 = vmatprep.mubr.bf16.mxu0 0
  %159 = vmatmul.mubr.bf16.gmra.mxu0 %v95
  %v160 = vpop.f32.mrf.mxu0
  %v161 = vadd.f32 0.0, %v160
  %v162 = vpop.f32.mrf.mxu0
  %v163 = vadd.f32 0.0, %v162
  %v164 = vpop.f32.mrf.mxu0
  %v165 = vadd.f32 0.0, %v164
  %v166 = vpop.f32.mrf.mxu0
  %v167 = vadd.f32 0.0, %v166
  %168 = vmatprep.mubr.bf16.mxu0 0
  %169 = vmatmul.mubr.bf16.gmra.mxu0 %v98
  %v170 = vpop.f32.mrf.mxu0
  %v171 = vadd.f32 0.0, %v170
  %v172 = vpop.f32.mrf.mxu0
  %v173 = vadd.f32 0.0, %v172
  %v174 = vpop.f32.mrf.mxu0
  %v175 = vadd.f32 0.0, %v174
  %v176 = vpop.f32.mrf.mxu0
  %v177 = vadd.f32 0.0, %v176
  %178 = vmatprep.mubr.bf16.mxu0 0
  %179 = vmatmul.mubr.bf16.gmra.mxu0 %v101
  %v180 = vpop.f32.mrf.mxu0
  %v181 = vadd.f32 0.0, %v180
  %v182 = vpop.f32.mrf.mxu0
  %v183 = vadd.f32 0.0, %v182
  %v184 = vpop.f32.mrf.mxu0
  %v185 = vadd.f32 0.0, %v184
  %v186 = vpop.f32.mrf.mxu0
  %v187 = vadd.f32 0.0, %v186
  %188 = vmatprep.mubr.bf16.mxu0 0
  %189 = vmatmul.mubr.bf16.gmra.mxu0 %v104
  %v190 = vpop.f32.mrf.mxu0
  %v191 = vadd.f32 0.0, %v190
  %v192 = vpop.f32.mrf.mxu0
  %v193 = vadd.f32 0.0, %v192
  %v194 = vpop.f32.mrf.mxu0
  %v195 = vadd.f32 0.0, %v194
  %v196 = vpop.f32.mrf.mxu0
  %v197 = vadd.f32 0.0, %v196
  %198 = vdwg.mxu0
  %v199 = vld [vmem:[%s6] sm:$0xff]
  %v200 = vld [vmem:[%s6 + $0x8] sm:$0xff]
  %v201 = vld [vmem:[%s6 + $0x10] sm:$0xff]
  %v202 = vld [vmem:[%s6 + $0x18] sm:$0xff]
  %v203 = vld [vmem:[%s6 + $0x20] sm:$0xff]
  %v204 = vld [vmem:[%s6 + $0x28] sm:$0xff]
  %v205 = vld [vmem:[%s6 + $0x30] sm:$0xff]
  %v206 = vld [vmem:[%s6 + $0x38] sm:$0xff]
  %v207 = vld [vmem:[%s6 + $0x40] sm:$0xff]
  %v208 = vld [vmem:[%s6 + $0x48] sm:$0xff]
  %v209 = vld [vmem:[%s6 + $0x50] sm:$0xff]
  %v210 = vld [vmem:[%s6 + $0x58] sm:$0xff]
  %v211 = vld [vmem:[%s6 + $0x60] sm:$0xff]
  %v212 = vld [vmem:[%s6 + $0x68] sm:$0xff]
  %v213 = vld [vmem:[%s6 + $0x70] sm:$0xff]
  %v214 = vld [vmem:[%s6 + $0x78] sm:$0xff]
  %v215 = vld [vmem:[%s6 + $0x80] sm:$0xff]
  %v216 = vld [vmem:[%s6 + $0x88] sm:$0xff]
  %v217 = vld [vmem:[%s6 + $0x90] sm:$0xff]
  %v218 = vld [vmem:[%s6 + $0x98] sm:$0xff]
  %v219 = vld [vmem:[%s6 + $0xa0] sm:$0xff]
  %v220 = vld [vmem:[%s6 + $0xa8] sm:$0xff]
  %v221 = vld [vmem:[%s6 + $0xb0] sm:$0xff]
  %v222 = vld [vmem:[%s6 + $0xb8] sm:$0xff]
  %v223 = vld [vmem:[%s6 + $0xc0] sm:$0xff]
  %v224 = vld [vmem:[%s6 + $0xc8] sm:$0xff]
  %v225 = vld [vmem:[%s6 + $0xd0] sm:$0xff]
  %v226 = vld [vmem:[%s6 + $0xd8] sm:$0xff]
  %v227 = vld [vmem:[%s6 + $0xe0] sm:$0xff]
  %v228 = vld [vmem:[%s6 + $0xe8] sm:$0xff]
  %v229 = vld [vmem:[%s6 + $0xf0] sm:$0xff]
  %v230 = vld [vmem:[%s6 + $0xf8] sm:$0xff]
  %v231 = vld [vmem:[%s6 + $0x100] sm:$0xff]
  %v232 = vld [vmem:[%s6 + $0x108] sm:$0xff]
  %v233 = vld [vmem:[%s6 + $0x110] sm:$0xff]
  %v234 = vld [vmem:[%s6 + $0x118] sm:$0xff]
  %v235 = vld [vmem:[%s6 + $0x120] sm:$0xff]
  %v236 = vld [vmem:[%s6 + $0x128] sm:$0xff]
  %v237 = vld [vmem:[%s6 + $0x130] sm:$0xff]
  %v238 = vld [vmem:[%s6 + $0x138] sm:$0xff]
  %v239 = vld [vmem:[%s6 + $0x140] sm:$0xff]
  %v240 = vld [vmem:[%s6 + $0x148] sm:$0xff]
  %v241 = vld [vmem:[%s6 + $0x150] sm:$0xff]
  %v242 = vld [vmem:[%s6 + $0x158] sm:$0xff]
  %v243 = vld [vmem:[%s6 + $0x160] sm:$0xff]
  %v244 = vld [vmem:[%s6 + $0x168] sm:$0xff]
  %v245 = vld [vmem:[%s6 + $0x170] sm:$0xff]
  %v246 = vld [vmem:[%s6 + $0x178] sm:$0xff]
  %v247 = vld [vmem:[%s6 + $0x180] sm:$0xff]
  %v248 = vld [vmem:[%s6 + $0x188] sm:$0xff]
  %v249 = vld [vmem:[%s6 + $0x190] sm:$0xff]
  %v250 = vld [vmem:[%s6 + $0x198] sm:$0xff]
  %v251 = vld [vmem:[%s6 + $0x1a0] sm:$0xff]
  %v252 = vld [vmem:[%s6 + $0x1a8] sm:$0xff]
  %v253 = vld [vmem:[%s6 + $0x1b0] sm:$0xff]
  %v254 = vld [vmem:[%s6 + $0x1b8] sm:$0xff]
  %v255 = vld [vmem:[%s6 + $0x1c0] sm:$0xff]
  %v256 = vld [vmem:[%s6 + $0x1c8] sm:$0xff]
  %v257 = vld [vmem:[%s6 + $0x1d0] sm:$0xff]
  %v258 = vld [vmem:[%s6 + $0x1d8] sm:$0xff]
  %v259 = vld [vmem:[%s6 + $0x1e0] sm:$0xff]
  %v260 = vld [vmem:[%s6 + $0x1e8] sm:$0xff]
  %v261 = vld [vmem:[%s6 + $0x1f0] sm:$0xff]
  %v262 = vld [vmem:[%s6 + $0x1f8] sm:$0xff]
  %v263 = vld [vmem:[%s6 + $0x200] sm:$0xff]
  %v264 = vld [vmem:[%s6 + $0x208] sm:$0xff]
  %v265 = vld [vmem:[%s6 + $0x210] sm:$0xff]
  %v266 = vld [vmem:[%s6 + $0x218] sm:$0xff]
  %v267 = vld [vmem:[%s6 + $0x220] sm:$0xff]
  %v268 = vld [vmem:[%s6 + $0x228] sm:$0xff]
  %v269 = vld [vmem:[%s6 + $0x230] sm:$0xff]
  %v270 = vld [vmem:[%s6 + $0x238] sm:$0xff]
  %v271 = vld [vmem:[%s6 + $0x240] sm:$0xff]
  %v272 = vld [vmem:[%s6 + $0x248] sm:$0xff]
  %v273 = vld [vmem:[%s6 + $0x250] sm:$0xff]
  %v274 = vld [vmem:[%s6 + $0x258] sm:$0xff]
  %v275 = vld [vmem:[%s6 + $0x260] sm:$0xff]
  %v276 = vld [vmem:[%s6 + $0x268] sm:$0xff]
  %v277 = vld [vmem:[%s6 + $0x270] sm:$0xff]
  %v278 = vld [vmem:[%s6 + $0x278] sm:$0xff]
  %v279 = vld [vmem:[%s6 + $0x280] sm:$0xff]
  %v280 = vld [vmem:[%s6 + $0x288] sm:$0xff]
  %v281 = vld [vmem:[%s6 + $0x290] sm:$0xff]
  %v282 = vld [vmem:[%s6 + $0x298] sm:$0xff]
  %v283 = vld [vmem:[%s6 + $0x2a0] sm:$0xff]
  %v284 = vld [vmem:[%s6 + $0x2a8] sm:$0xff]
  %v285 = vld [vmem:[%s6 + $0x2b0] sm:$0xff]
  %v286 = vld [vmem:[%s6 + $0x2b8] sm:$0xff]
  %v287 = vld [vmem:[%s6 + $0x2c0] sm:$0xff]
  %v288 = vld [vmem:[%s6 + $0x2c8] sm:$0xff]
  %v289 = vld [vmem:[%s6 + $0x2d0] sm:$0xff]
  %v290 = vld [vmem:[%s6 + $0x2d8] sm:$0xff]
  %v291 = vld [vmem:[%s6 + $0x2e0] sm:$0xff]
  %v292 = vld [vmem:[%s6 + $0x2e8] sm:$0xff]
  %v293 = vld [vmem:[%s6 + $0x2f0] sm:$0xff]
  %v294 = vld [vmem:[%s6 + $0x2f8] sm:$0xff]
  %v295 = vpack.c.bf16 %v145, %v141
  %v296 = vpack.c.bf16 %v147, %v143
  %v297 = vpack.c.bf16 %v165, %v161
  %v298 = vpack.c.bf16 %v167, %v163
  %v299 = vpack.c.bf16 %v185, %v181
  %v300 = vpack.c.bf16 %v187, %v183
  %v301 = vpack.c.bf16 %v155, %v151
  %v302 = vpack.c.bf16 %v157, %v153
  %v303 = vpack.c.bf16 %v175, %v171
  %v304 = vpack.c.bf16 %v177, %v173
  %v305 = vpack.c.bf16 %v195, %v191
  %v306 = vpack.c.bf16 %v197, %v193
  %v403 = vunpack.c.l.b16 %v199
  %v404 = vunpack.c.h.b16 %v199
  %v405 = vunpack.c.l.b16 %v200
  %v406 = vunpack.c.h.b16 %v200
  %v407 = vunpack.c.l.b16 %v201
  %v408 = vunpack.c.h.b16 %v201
  %v409 = vunpack.c.l.b16 %v202
  %v410 = vunpack.c.h.b16 %v202
  %v411 = vunpack.c.l.b16 %v203
  %v412 = vunpack.c.h.b16 %v203
  %v413 = vunpack.c.l.b16 %v204
  %v414 = vunpack.c.h.b16 %v204
  %v415 = vunpack.c.l.b16 %v205
  %v416 = vunpack.c.h.b16 %v205
  %v417 = vunpack.c.l.b16 %v206
  %v418 = vunpack.c.h.b16 %v206
  %v419 = vunpack.c.l.b16 %v207
  %v420 = vunpack.c.h.b16 %v207
  %v421 = vunpack.c.l.b16 %v208
  %v422 = vunpack.c.h.b16 %v208
  %v423 = vunpack.c.l.b16 %v209
  %v424 = vunpack.c.h.b16 %v209
  %v425 = vunpack.c.l.b16 %v210
  %v426 = vunpack.c.h.b16 %v210
  %v427 = vunpack.c.l.b16 %v211
  %v428 = vunpack.c.h.b16 %v211
  %v429 = vunpack.c.l.b16 %v212
  %v430 = vunpack.c.h.b16 %v212
  %v431 = vunpack.c.l.b16 %v213
  %v432 = vunpack.c.h.b16 %v213
  %v433 = vunpack.c.l.b16 %v214
  %v434 = vunpack.c.h.b16 %v214
  %v435 = vunpack.c.l.b16 %v215
  %v436 = vunpack.c.h.b16 %v215
  %v437 = vunpack.c.l.b16 %v216
  %v438 = vunpack.c.h.b16 %v216
  %v439 = vunpack.c.l.b16 %v217
  %v440 = vunpack.c.h.b16 %v217
  %v441 = vunpack.c.l.b16 %v218
  %v442 = vunpack.c.h.b16 %v218
  %v443 = vunpack.c.l.b16 %v219
  %v444 = vunpack.c.h.b16 %v219
  %v445 = vunpack.c.l.b16 %v220
  %v446 = vunpack.c.h.b16 %v220
  %v447 = vunpack.c.l.b16 %v221
  %v448 = vunpack.c.h.b16 %v221
  %v449 = vunpack.c.l.b16 %v222
  %v450 = vunpack.c.h.b16 %v222
  %v451 = vunpack.c.l.b16 %v223
  %v452 = vunpack.c.h.b16 %v223
  %v453 = vunpack.c.l.b16 %v224
  %v454 = vunpack.c.h.b16 %v224
  %v455 = vunpack.c.l.b16 %v225
  %v456 = vunpack.c.h.b16 %v225
  %v457 = vunpack.c.l.b16 %v226
  %v458 = vunpack.c.h.b16 %v226
  %v459 = vunpack.c.l.b16 %v227
  %v460 = vunpack.c.h.b16 %v227
  %v461 = vunpack.c.l.b16 %v228
  %v462 = vunpack.c.h.b16 %v228
  %v463 = vunpack.c.l.b16 %v229
  %v464 = vunpack.c.h.b16 %v229
  %v465 = vunpack.c.l.b16 %v230
  %v466 = vunpack.c.h.b16 %v230
  %v467 = vunpack.c.l.b16 %v231
  %v468 = vunpack.c.h.b16 %v231
  %v469 = vunpack.c.l.b16 %v232
  %v470 = vunpack.c.h.b16 %v232
  %v471 = vunpack.c.l.b16 %v233
  %v472 = vunpack.c.h.b16 %v233
  %v473 = vunpack.c.l.b16 %v234
  %v474 = vunpack.c.h.b16 %v234
  %v475 = vunpack.c.l.b16 %v235
  %v476 = vunpack.c.h.b16 %v235
  %v477 = vunpack.c.l.b16 %v236
  %v478 = vunpack.c.h.b16 %v236
  %v479 = vunpack.c.l.b16 %v237
  %v480 = vunpack.c.h.b16 %v237
  %v481 = vunpack.c.l.b16 %v238
  %v482 = vunpack.c.h.b16 %v238
  %v483 = vunpack.c.l.b16 %v239
  %v484 = vunpack.c.h.b16 %v239
  %v485 = vunpack.c.l.b16 %v240
  %v486 = vunpack.c.h.b16 %v240
  %v487 = vunpack.c.l.b16 %v241
  %v488 = vunpack.c.h.b16 %v241
  %v489 = vunpack.c.l.b16 %v242
  %v490 = vunpack.c.h.b16 %v242
  %v491 = vunpack.c.l.b16 %v243
  %v492 = vunpack.c.h.b16 %v243
  %v493 = vunpack.c.l.b16 %v244
  %v494 = vunpack.c.h.b16 %v244
  %v495 = vunpack.c.l.b16 %v245
  %v496 = vunpack.c.h.b16 %v245
  %v497 = vunpack.c.l.b16 %v246
  %v498 = vunpack.c.h.b16 %v246
  %v499 = vunpack.c.l.b16 %v247
  %v500 = vunpack.c.h.b16 %v247
  %v501 = vunpack.c.l.b16 %v248
  %v502 = vunpack.c.h.b16 %v248
  %v503 = vunpack.c.l.b16 %v249
  %v504 = vunpack.c.h.b16 %v249
  %v505 = vunpack.c.l.b16 %v250
  %v506 = vunpack.c.h.b16 %v250
  %v507 = vunpack.c.l.b16 %v251
  %v508 = vunpack.c.h.b16 %v251
  %v509 = vunpack.c.l.b16 %v252
  %v510 = vunpack.c.h.b16 %v252
  %v511 = vunpack.c.l.b16 %v253
  %v512 = vunpack.c.h.b16 %v253
  %v513 = vunpack.c.l.b16 %v254
  %v514 = vunpack.c.h.b16 %v254
  %v515 = vunpack.c.l.b16 %v255
  %v516 = vunpack.c.h.b16 %v255
  %v517 = vunpack.c.l.b16 %v256
  %v518 = vunpack.c.h.b16 %v256
  %v519 = vunpack.c.l.b16 %v257
  %v520 = vunpack.c.h.b16 %v257
  %v521 = vunpack.c.l.b16 %v258
  %v522 = vunpack.c.h.b16 %v258
  %v523 = vunpack.c.l.b16 %v259
  %v524 = vunpack.c.h.b16 %v259
  %v525 = vunpack.c.l.b16 %v260
  %v526 = vunpack.c.h.b16 %v260
  %v527 = vunpack.c.l.b16 %v261
  %v528 = vunpack.c.h.b16 %v261
  %v529 = vunpack.c.l.b16 %v262
  %v530 = vunpack.c.h.b16 %v262
  %v531 = vunpack.c.l.b16 %v263
  %v532 = vunpack.c.h.b16 %v263
  %v533 = vunpack.c.l.b16 %v264
  %v534 = vunpack.c.h.b16 %v264
  %v535 = vunpack.c.l.b16 %v265
  %v536 = vunpack.c.h.b16 %v265
  %v537 = vunpack.c.l.b16 %v266
  %v538 = vunpack.c.h.b16 %v266
  %v539 = vunpack.c.l.b16 %v267
  %v540 = vunpack.c.h.b16 %v267
  %v541 = vunpack.c.l.b16 %v268
  %v542 = vunpack.c.h.b16 %v268
  %v543 = vunpack.c.l.b16 %v269
  %v544 = vunpack.c.h.b16 %v269
  %v545 = vunpack.c.l.b16 %v270
  %v546 = vunpack.c.h.b16 %v270
  %v547 = vunpack.c.l.b16 %v271
  %v548 = vunpack.c.h.b16 %v271
  %v549 = vunpack.c.l.b16 %v272
  %v550 = vunpack.c.h.b16 %v272
  %v551 = vunpack.c.l.b16 %v273
  %v552 = vunpack.c.h.b16 %v273
  %v553 = vunpack.c.l.b16 %v274
  %v554 = vunpack.c.h.b16 %v274
  %v555 = vunpack.c.l.b16 %v275
  %v556 = vunpack.c.h.b16 %v275
  %v557 = vunpack.c.l.b16 %v276
  %v558 = vunpack.c.h.b16 %v276
  %v559 = vunpack.c.l.b16 %v277
  %v560 = vunpack.c.h.b16 %v277
  %v561 = vunpack.c.l.b16 %v278
  %v562 = vunpack.c.h.b16 %v278
  %v563 = vunpack.c.l.b16 %v279
  %v564 = vunpack.c.h.b16 %v279
  %v565 = vunpack.c.l.b16 %v280
  %v566 = vunpack.c.h.b16 %v280
  %v567 = vunpack.c.l.b16 %v281
  %v568 = vunpack.c.h.b16 %v281
  %v569 = vunpack.c.l.b16 %v282
  %v570 = vunpack.c.h.b16 %v282
  %v571 = vunpack.c.l.b16 %v283
  %v572 = vunpack.c.h.b16 %v283
  %v573 = vunpack.c.l.b16 %v284
  %v574 = vunpack.c.h.b16 %v284
  %v575 = vunpack.c.l.b16 %v285
  %v576 = vunpack.c.h.b16 %v285
  %v577 = vunpack.c.l.b16 %v286
  %v578 = vunpack.c.h.b16 %v286
  %v579 = vunpack.c.l.b16 %v287
  %v580 = vunpack.c.h.b16 %v287
  %v581 = vunpack.c.l.b16 %v288
  %v582 = vunpack.c.h.b16 %v288
  %v583 = vunpack.c.l.b16 %v289
  %v584 = vunpack.c.h.b16 %v289
  %v585 = vunpack.c.l.b16 %v290
  %v586 = vunpack.c.h.b16 %v290
  %v587 = vunpack.c.l.b16 %v291
  %v588 = vunpack.c.h.b16 %v291
  %v589 = vunpack.c.l.b16 %v292
  %v590 = vunpack.c.h.b16 %v292
  %v591 = vunpack.c.l.b16 %v293
  %v592 = vunpack.c.h.b16 %v293
  %v593 = vunpack.c.l.b16 %v294
  %v594 = vunpack.c.h.b16 %v294
  %v595 = vpack.c.b16 %v405, %v403
  %v596 = vpack.c.b16 %v406, %v404
  %v597 = vpack.c.b16 %v409, %v407
  %v598 = vpack.c.b16 %v410, %v408
  %v599 = vpack.c.b16 %v413, %v411
  %v600 = vpack.c.b16 %v414, %v412
  %v601 = vpack.c.b16 %v417, %v415
  %v602 = vpack.c.b16 %v418, %v416
  %v603 = vpack.c.b16 %v421, %v419
  %v604 = vpack.c.b16 %v422, %v420
  %v605 = vpack.c.b16 %v425, %v423
  %v606 = vpack.c.b16 %v426, %v424
  %v607 = vpack.c.b16 %v429, %v427
  %v608 = vpack.c.b16 %v430, %v428
  %v609 = vpack.c.b16 %v433, %v431
  %v610 = vpack.c.b16 %v434, %v432
  %v611 = vpack.c.b16 %v437, %v435
  %v612 = vpack.c.b16 %v438, %v436
  %v613 = vpack.c.b16 %v441, %v439
  %v614 = vpack.c.b16 %v442, %v440
  %v615 = vpack.c.b16 %v445, %v443
  %v616 = vpack.c.b16 %v446, %v444
  %v617 = vpack.c.b16 %v449, %v447
  %v618 = vpack.c.b16 %v450, %v448
  %v619 = vpack.c.b16 %v453, %v451
  %v620 = vpack.c.b16 %v454, %v452
  %v621 = vpack.c.b16 %v457, %v455
  %v622 = vpack.c.b16 %v458, %v456
  %v623 = vpack.c.b16 %v461, %v459
  %v624 = vpack.c.b16 %v462, %v460
  %v625 = vpack.c.b16 %v465, %v463
  %v626 = vpack.c.b16 %v466, %v464
  %v627 = vpack.c.b16 %v469, %v467
  %v628 = vpack.c.b16 %v470, %v468
  %v629 = vpack.c.b16 %v473, %v471
  %v630 = vpack.c.b16 %v474, %v472
  %v631 = vpack.c.b16 %v477, %v475
  %v632 = vpack.c.b16 %v478, %v476
  %v633 = vpack.c.b16 %v481, %v479
  %v634 = vpack.c.b16 %v482, %v480
  %v635 = vpack.c.b16 %v485, %v483
  %v636 = vpack.c.b16 %v486, %v484
  %v637 = vpack.c.b16 %v489, %v487
  %v638 = vpack.c.b16 %v490, %v488
  %v639 = vpack.c.b16 %v493, %v491
  %v640 = vpack.c.b16 %v494, %v492
  %v641 = vpack.c.b16 %v497, %v495
  %v642 = vpack.c.b16 %v498, %v496
  %v643 = vpack.c.b16 %v501, %v499
  %v644 = vpack.c.b16 %v502, %v500
  %v645 = vpack.c.b16 %v505, %v503
  %v646 = vpack.c.b16 %v506, %v504
  %v647 = vpack.c.b16 %v509, %v507
  %v648 = vpack.c.b16 %v510, %v508
  %v649 = vpack.c.b16 %v513, %v511
  %v650 = vpack.c.b16 %v514, %v512
  %v651 = vpack.c.b16 %v517, %v515
  %v652 = vpack.c.b16 %v518, %v516
  %v653 = vpack.c.b16 %v521, %v519
  %v654 = vpack.c.b16 %v522, %v520
  %v655 = vpack.c.b16 %v525, %v523
  %v656 = vpack.c.b16 %v526, %v524
  %v657 = vpack.c.b16 %v529, %v527
  %v658 = vpack.c.b16 %v530, %v528
  %v659 = vpack.c.b16 %v533, %v531
  %v660 = vpack.c.b16 %v534, %v532
  %v661 = vpack.c.b16 %v537, %v535
  %v662 = vpack.c.b16 %v538, %v536
  %v663 = vpack.c.b16 %v541, %v539
  %v664 = vpack.c.b16 %v542, %v540
  %v665 = vpack.c.b16 %v545, %v543
  %v666 = vpack.c.b16 %v546, %v544
  %v667 = vpack.c.b16 %v549, %v547
  %v668 = vpack.c.b16 %v550, %v548
  %v669 = vpack.c.b16 %v553, %v551
  %v670 = vpack.c.b16 %v554, %v552
  %v671 = vpack.c.b16 %v557, %v555
  %v672 = vpack.c.b16 %v558, %v556
  %v673 = vpack.c.b16 %v561, %v559
  %v674 = vpack.c.b16 %v562, %v560
  %v675 = vpack.c.b16 %v565, %v563
  %v676 = vpack.c.b16 %v566, %v564
  %v677 = vpack.c.b16 %v569, %v567
  %v678 = vpack.c.b16 %v570, %v568
  %v679 = vpack.c.b16 %v573, %v571
  %v680 = vpack.c.b16 %v574, %v572
  %v681 = vpack.c.b16 %v577, %v575
  %v682 = vpack.c.b16 %v578, %v576
  %v683 = vpack.c.b16 %v581, %v579
  %v684 = vpack.c.b16 %v582, %v580
  %v685 = vpack.c.b16 %v585, %v583
  %v686 = vpack.c.b16 %v586, %v584
  %v687 = vpack.c.b16 %v589, %v587
  %v688 = vpack.c.b16 %v590, %v588
  %v689 = vpack.c.b16 %v593, %v591
  %v690 = vpack.c.b16 %v594, %v592
  %787 = vmatprep.subr.bf16.mxu0 %v610
  %788 = vmatpush1.bf16.msra.mxu0 %v609
  %789 = vmatprep.subr.bf16.mxu0 %v608
  %790 = vmatpush1.bf16.msra.mxu0 %v607
  %791 = vmatprep.subr.bf16.mxu0 %v606
  %792 = vmatpush1.bf16.msra.mxu0 %v605
  %793 = vmatprep.subr.bf16.mxu0 %v604
  %794 = vmatpush1.bf16.msra.mxu0 %v603
  %795 = vmatprep.subr.bf16.mxu0 %v602
  %796 = vmatpush1.bf16.msra.mxu0 %v601
  %797 = vmatprep.subr.bf16.mxu0 %v600
  %798 = vmatpush1.bf16.msra.mxu0 %v599
  %799 = vmatprep.subr.bf16.mxu0 %v598
  %800 = vmatpush1.bf16.msra.mxu0 %v597
  %801 = vmatprep.subr.bf16.mxu0 %v596
  %802 = vmatpush1.bf16.msra.mxu0 %v595
  %803 = vmatprep.subr.bf16.mxu0 %v626
  %804 = vmatpush2.bf16.msra.mxu0 %v625
  %805 = vmatprep.subr.bf16.mxu0 %v624
  %806 = vmatpush2.bf16.msra.mxu0 %v623
  %807 = vmatprep.subr.bf16.mxu0 %v622
  %808 = vmatpush2.bf16.msra.mxu0 %v621
  %809 = vmatprep.subr.bf16.mxu0 %v620
  %810 = vmatpush2.bf16.msra.mxu0 %v619
  %811 = vmatprep.subr.bf16.mxu0 %v618
  %812 = vmatpush2.bf16.msra.mxu0 %v617
  %813 = vmatprep.subr.bf16.mxu0 %v616
  %814 = vmatpush2.bf16.msra.mxu0 %v615
  %815 = vmatprep.subr.bf16.mxu0 %v614
  %816 = vmatpush2.bf16.msra.mxu0 %v613
  %817 = vmatprep.subr.bf16.mxu0 %v612
  %818 = vmatpush2.bf16.msra.mxu0 %v611
  %819 = vmatprep.mubr.bf16.mxu0 %v296
  %820 = vmatmul.mubr.bf16.gmra.mxu0 %v295
  %v821 = vpop.f32.mrf.mxu0
  %v822 = vadd.f32 0.0, %v821
  %v823 = vpop.f32.mrf.mxu0
  %v824 = vadd.f32 0.0, %v823
  %v825 = vpop.f32.mrf.mxu0
  %v826 = vadd.f32 0.0, %v825
  %v827 = vpop.f32.mrf.mxu0
  %v828 = vadd.f32 0.0, %v827
  %829 = vmatprep.mubr.bf16.mxu0 %v302
  %830 = vmatmul.mubr.bf16.gmra.mxu0 %v301
  %v831 = vpop.f32.mrf.mxu0
  %v832 = vadd.f32 0.0, %v831
  %v833 = vpop.f32.mrf.mxu0
  %v834 = vadd.f32 0.0, %v833
  %v835 = vpop.f32.mrf.mxu0
  %v836 = vadd.f32 0.0, %v835
  %v837 = vpop.f32.mrf.mxu0
  %v838 = vadd.f32 0.0, %v837
  %839 = vdwg.mxu0
  %840 = vmatprep.subr.bf16.mxu0 %v642
  %841 = vmatpush1.bf16.msra.mxu0 %v641
  %842 = vmatprep.subr.bf16.mxu0 %v640
  %843 = vmatpush1.bf16.msra.mxu0 %v639
  %844 = vmatprep.subr.bf16.mxu0 %v638
  %845 = vmatpush1.bf16.msra.mxu0 %v637
  %846 = vmatprep.subr.bf16.mxu0 %v636
  %847 = vmatpush1.bf16.msra.mxu0 %v635
  %848 = vmatprep.subr.bf16.mxu0 %v634
  %849 = vmatpush1.bf16.msra.mxu0 %v633
  %850 = vmatprep.subr.bf16.mxu0 %v632
  %851 = vmatpush1.bf16.msra.mxu0 %v631
  %852 = vmatprep.subr.bf16.mxu0 %v630
  %853 = vmatpush1.bf16.msra.mxu0 %v629
  %854 = vmatprep.subr.bf16.mxu0 %v628
  %855 = vmatpush1.bf16.msra.mxu0 %v627
  %856 = vmatprep.subr.bf16.mxu0 %v658
  %857 = vmatpush2.bf16.msra.mxu0 %v657
  %858 = vmatprep.subr.bf16.mxu0 %v656
  %859 = vmatpush2.bf16.msra.mxu0 %v655
  %860 = vmatprep.subr.bf16.mxu0 %v654
  %861 = vmatpush2.bf16.msra.mxu0 %v653
  %862 = vmatprep.subr.bf16.mxu0 %v652
  %863 = vmatpush2.bf16.msra.mxu0 %v651
  %864 = vmatprep.subr.bf16.mxu0 %v650
  %865 = vmatpush2.bf16.msra.mxu0 %v649
  %866 = vmatprep.subr.bf16.mxu0 %v648
  %867 = vmatpush2.bf16.msra.mxu0 %v647
  %868 = vmatprep.subr.bf16.mxu0 %v646
  %869 = vmatpush2.bf16.msra.mxu0 %v645
  %870 = vmatprep.subr.bf16.mxu0 %v644
  %871 = vmatpush2.bf16.msra.mxu0 %v643
  %872 = vmatprep.mubr.bf16.mxu0 %v298
  %873 = vmatmul.mubr.bf16.gmra.mxu0 %v297
  %v874 = vpop.f32.mrf.mxu0
  %v875 = vadd.f32 %v822, %v874
  %v876 = vpop.f32.mrf.mxu0
  %v877 = vadd.f32 %v824, %v876
  %v878 = vpop.f32.mrf.mxu0
  %v879 = vadd.f32 %v826, %v878
  %v880 = vpop.f32.mrf.mxu0
  %v881 = vadd.f32 %v828, %v880
  %882 = vmatprep.mubr.bf16.mxu0 %v304
  %883 = vmatmul.mubr.bf16.gmra.mxu0 %v303
  %v884 = vpop.f32.mrf.mxu0
  %v885 = vadd.f32 %v832, %v884
  %v886 = vpop.f32.mrf.mxu0
  %v887 = vadd.f32 %v834, %v886
  %v888 = vpop.f32.mrf.mxu0
  %v889 = vadd.f32 %v836, %v888
  %v890 = vpop.f32.mrf.mxu0
  %v891 = vadd.f32 %v838, %v890
  %892 = vdwg.mxu0
  %893 = vmatprep.subr.bf16.mxu0 %v674
  %894 = vmatpush1.bf16.msra.mxu0 %v673
  %895 = vmatprep.subr.bf16.mxu0 %v672
  %896 = vmatpush1.bf16.msra.mxu0 %v671
  %897 = vmatprep.subr.bf16.mxu0 %v670
  %898 = vmatpush1.bf16.msra.mxu0 %v669
  %899 = vmatprep.subr.bf16.mxu0 %v668
  %900 = vmatpush1.bf16.msra.mxu0 %v667
  %901 = vmatprep.subr.bf16.mxu0 %v666
  %902 = vmatpush1.bf16.msra.mxu0 %v665
  %903 = vmatprep.subr.bf16.mxu0 %v664
  %904 = vmatpush1.bf16.msra.mxu0 %v663
  %905 = vmatprep.subr.bf16.mxu0 %v662
  %906 = vmatpush1.bf16.msra.mxu0 %v661
  %907 = vmatprep.subr.bf16.mxu0 %v660
  %908 = vmatpush1.bf16.msra.mxu0 %v659
  %909 = vmatprep.subr.bf16.mxu0 %v690
  %910 = vmatpush2.bf16.msra.mxu0 %v689
  %911 = vmatprep.subr.bf16.mxu0 %v688
  %912 = vmatpush2.bf16.msra.mxu0 %v687
  %913 = vmatprep.subr.bf16.mxu0 %v686
  %914 = vmatpush2.bf16.msra.mxu0 %v685
  %915 = vmatprep.subr.bf16.mxu0 %v684
  %916 = vmatpush2.bf16.msra.mxu0 %v683
  %917 = vmatprep.subr.bf16.mxu0 %v682
  %918 = vmatpush2.bf16.msra.mxu0 %v681
  %919 = vmatprep.subr.bf16.mxu0 %v680
  %920 = vmatpush2.bf16.msra.mxu0 %v679
  %921 = vmatprep.subr.bf16.mxu0 %v678
  %922 = vmatpush2.bf16.msra.mxu0 %v677
  %923 = vmatprep.subr.bf16.mxu0 %v676
  %924 = vmatpush2.bf16.msra.mxu0 %v675
  %925 = vmatprep.mubr.bf16.mxu0 %v300
  %926 = vmatmul.mubr.bf16.gmra.mxu0 %v299
  %v927 = vpop.f32.mrf.mxu0
  %v928 = vadd.f32 %v875, %v927
  %v929 = vpop.f32.mrf.mxu0
  %v930 = vadd.f32 %v877, %v929
  %v931 = vpop.f32.mrf.mxu0
  %v932 = vadd.f32 %v879, %v931
  %v933 = vpop.f32.mrf.mxu0
  %v934 = vadd.f32 %v881, %v933
  %935 = vmatprep.mubr.bf16.mxu0 %v306
  %936 = vmatmul.mubr.bf16.gmra.mxu0 %v305
  %v937 = vpop.f32.mrf.mxu0
  %v938 = vadd.f32 %v885, %v937
  %v939 = vpop.f32.mrf.mxu0
  %v940 = vadd.f32 %v887, %v939
  %v941 = vpop.f32.mrf.mxu0
  %v942 = vadd.f32 %v889, %v941
  %v943 = vpop.f32.mrf.mxu0
  %v944 = vadd.f32 %v891, %v943
  %945 = vdwg.mxu0
  %v946 = vld [vmem:[%s8] ss:$8 sm:$0x3]
  %s947 = scalar_lea.vmem %s8, 1
  %v948 = vld [vmem:[%s947] ss:$8 sm:$0x3]
  %v949 = vadd.f32 %v928, %v932
  %v950 = vrot.slane %v949, 4
  %v951 = vadd.f32 %v949, %v950
  %v952 = vrot.slane %v951, 2
  %v953 = vadd.f32 %v951, %v952
  %v954 = vrot.slane %v953, 1
  %v955 = vadd.f32 %v953, %v954
  %v956 = vadd.f32 %v930, %v934
  %v957 = vrot.slane %v956, 4
  %v958 = vadd.f32 %v956, %v957
  %v959 = vrot.slane %v958, 2
  %v960 = vadd.f32 %v958, %v959
  %v961 = vrot.slane %v960, 1
  %v962 = vadd.f32 %v960, %v961
  %963 = vrot.lane.b32.xlu0 %v955, 32
  %v964 = vpop.permute.xlu0 %963
  %965 = vrot.lane.b32.xlu0 %v962, 32
  %v966 = vpop.permute.xlu0 %965
  %v967 = vlaneseq
  %v968 = vand.u32 %v967, 127
  %vm969 = vcmp.lt.s32.totalorder %v968, 32
  %v970 = vsel %vm969, %v964, %v966
  %v971 = vsel %vm969, %v966, %v964
  %v972 = vadd.f32 %v955, %v971
  %v973 = vadd.f32 %v962, %v970
  %974 = vrot.lane.b32.xlu0 %v972, 64
  %v975 = vpop.permute.xlu0 %974
  %976 = vrot.lane.b32.xlu0 %v973, 64
  %v977 = vpop.permute.xlu0 %976
  %vm978 = vcmp.lt.s32.totalorder %v968, 64
  %v979 = vsel %vm978, %v975, %v977
  %v980 = vsel %vm978, %v977, %v975
  %v981 = vadd.f32 %v972, %v980
  %v982 = vadd.f32 %v973, %v979
  %v983 = vadd.f32 %v981, %v982
  %v984 = vmul.f32 %v983, 0.0078125
  %v985 = vlaneseq
  %v986 = vshrl.u32 %v985, 7
  %v987 = vsub.s32 0, %v986
  %v988 = vrot.slane %v984, %v987
  %v989 = vsub.f32 %v928, %v988
  %v990 = vsub.f32 %v930, %v988
  %v991 = vsub.f32 %v932, %v988
  %v992 = vsub.f32 %v934, %v988
  %v993 = vmul.f32 %v989, %v989
  %v994 = vmul.f32 %v990, %v990
  %v995 = vmul.f32 %v991, %v991
  %v996 = vmul.f32 %v992, %v992
  %v997 = vadd.f32 %v993, %v995
  %v998 = vrot.slane %v997, 4
  %v999 = vadd.f32 %v997, %v998
  %v1000 = vrot.slane %v999, 2
  %v1001 = vadd.f32 %v999, %v1000
  %v1002 = vrot.slane %v1001, 1
  %v1003 = vadd.f32 %v1001, %v1002
  %v1004 = vadd.f32 %v994, %v996
  %v1005 = vrot.slane %v1004, 4
  %v1006 = vadd.f32 %v1004, %v1005
  %v1007 = vrot.slane %v1006, 2
  %v1008 = vadd.f32 %v1006, %v1007
  %v1009 = vrot.slane %v1008, 1
  %v1010 = vadd.f32 %v1008, %v1009
  %1011 = vrot.lane.b32.xlu0 %v1003, 32
  %v1012 = vpop.permute.xlu0 %1011
  %1013 = vrot.lane.b32.xlu0 %v1010, 32
  %v1014 = vpop.permute.xlu0 %1013
  %v1015 = vsel %vm969, %v1012, %v1014
  %v1016 = vsel %vm969, %v1014, %v1012
  %v1017 = vadd.f32 %v1003, %v1016
  %v1018 = vadd.f32 %v1010, %v1015
  %1019 = vrot.lane.b32.xlu0 %v1017, 64
  %v1020 = vpop.permute.xlu0 %1019
  %1021 = vrot.lane.b32.xlu0 %v1018, 64
  %v1022 = vpop.permute.xlu0 %1021
  %v1023 = vsel %vm978, %v1020, %v1022
  %v1024 = vsel %vm978, %v1022, %v1020
  %v1025 = vadd.f32 %v1017, %v1024
  %v1026 = vadd.f32 %v1018, %v1023
  %v1027 = vadd.f32 %v1025, %v1026
  %v1028 = vmul.f32 %v1027, 0.0078125
  %v1029 = vadd.f32 %v1028, 1e-05
  %v1030 = vrsqrt.pop %v1029
  %v1032 = vcombine.low %v1030, %v1030
  %v1034 = vunpack.c.l.s4 1966171168
  %v1035 = vunpack.c.0.s8 %v1034
  %v1036 = vlaneseq
  %v1037 = vshrl.u32 %v1036, 7
  %v1038 = vsub.s32 %v1035, %v1037
  %v1039 = vrot.slane %v1032, %v1038
  %v1041 = vunpack.c.l.s4 1966171168
  %v1042 = vunpack.c.0.s8 %v1041
  %v1043 = vlaneseq
  %v1044 = vshrl.u32 %v1043, 7
  %v1045 = vsub.s32 %v1042, %v1044
  %v1046 = vrot.slane %v1039, %v1045
  %v1048 = vmul.f32 %v946, %v1046
  %v1050 = vlaneseq
  %v1051 = vshrl.u32 %v1050, 7
  %v1052 = vsub.s32 0, %v1051
  %v1053 = vrot.slane %v1048, %v1052
  %v1054 = vlaneseq
  %v1055 = vshrl.u32 %v1054, 7
  %v1056 = vsub.s32 1, %v1055
  %v1057 = vrot.slane %v1048, %v1056
  %v1060 = vmul.f32 %v989, %v1053
  %v1061 = vmul.f32 %v990, %v1057
  %v1062 = vmul.f32 %v991, %v1053
  %v1063 = vmul.f32 %v992, %v1057
  %v1065 = vlaneseq
  %v1066 = vshrl.u32 %v1065, 7
  %v1067 = vsub.s32 0, %v1066
  %v1068 = vrot.slane %v948, %v1067
  %v1069 = vlaneseq
  %v1070 = vshrl.u32 %v1069, 7
  %v1071 = vsub.s32 1, %v1070
  %v1072 = vrot.slane %v948, %v1071
  %v1075 = vadd.f32 %v1060, %v1068
  %v1076 = vadd.f32 %v1061, %v1072
  %v1077 = vadd.f32 %v1062, %v1068
  %v1078 = vadd.f32 %v1063, %v1072
  %v1079 = vmax.f32 %v1075, 0.0
  %v1080 = vmax.f32 %v1076, 0.0
  %v1081 = vmax.f32 %v1077, 0.0
  %v1082 = vmax.f32 %v1078, 0.0
  %v1083 = vadd.f32 %v938, %v942
  %v1084 = vrot.slane %v1083, 4
  %v1085 = vadd.f32 %v1083, %v1084
  %v1086 = vrot.slane %v1085, 2
  %v1087 = vadd.f32 %v1085, %v1086
  %v1088 = vrot.slane %v1087, 1
  %v1089 = vadd.f32 %v1087, %v1088
  %v1090 = vadd.f32 %v940, %v944
  %v1091 = vrot.slane %v1090, 4
  %v1092 = vadd.f32 %v1090, %v1091
  %v1093 = vrot.slane %v1092, 2
  %v1094 = vadd.f32 %v1092, %v1093
  %v1095 = vrot.slane %v1094, 1
  %v1096 = vadd.f32 %v1094, %v1095
  %1097 = vrot.lane.b32.xlu0 %v1089, 32
  %v1098 = vpop.permute.xlu0 %1097
  %1099 = vrot.lane.b32.xlu0 %v1096, 32
  %v1100 = vpop.permute.xlu0 %1099
  %v1101 = vsel %vm969, %v1098, %v1100
  %v1102 = vsel %vm969, %v1100, %v1098
  %v1103 = vadd.f32 %v1089, %v1102
  %v1104 = vadd.f32 %v1096, %v1101
  %1105 = vrot.lane.b32.xlu0 %v1103, 64
  %v1106 = vpop.permute.xlu0 %1105
  %1107 = vrot.lane.b32.xlu0 %v1104, 64
  %v1108 = vpop.permute.xlu0 %1107
  %v1109 = vsel %vm978, %v1106, %v1108
  %v1110 = vsel %vm978, %v1108, %v1106
  %v1111 = vadd.f32 %v1103, %v1110
  %v1112 = vadd.f32 %v1104, %v1109
  %v1113 = vadd.f32 %v1111, %v1112
  %v1114 = vmul.f32 %v1113, 0.0078125
  %v1115 = vlaneseq
  %v1116 = vshrl.u32 %v1115, 7
  %v1117 = vsub.s32 0, %v1116
  %v1118 = vrot.slane %v1114, %v1117
  %v1119 = vsub.f32 %v938, %v1118
  %v1120 = vsub.f32 %v940, %v1118
  %v1121 = vsub.f32 %v942, %v1118
  %v1122 = vsub.f32 %v944, %v1118
  %v1123 = vmul.f32 %v1119, %v1119
  %v1124 = vmul.f32 %v1120, %v1120
  %v1125 = vmul.f32 %v1121, %v1121
  %v1126 = vmul.f32 %v1122, %v1122
  %v1127 = vadd.f32 %v1123, %v1125
  %v1128 = vrot.slane %v1127, 4
  %v1129 = vadd.f32 %v1127, %v1128
  %v1130 = vrot.slane %v1129, 2
  %v1131 = vadd.f32 %v1129, %v1130
  %v1132 = vrot.slane %v1131, 1
  %v1133 = vadd.f32 %v1131, %v1132
  %v1134 = vadd.f32 %v1124, %v1126
  %v1135 = vrot.slane %v1134, 4
  %v1136 = vadd.f32 %v1134, %v1135
  %v1137 = vrot.slane %v1136, 2
  %v1138 = vadd.f32 %v1136, %v1137
  %v1139 = vrot.slane %v1138, 1
  %v1140 = vadd.f32 %v1138, %v1139
  %1141 = vrot.lane.b32.xlu0 %v1133, 32
  %v1142 = vpop.permute.xlu0 %1141
  %1143 = vrot.lane.b32.xlu0 %v1140, 32
  %v1144 = vpop.permute.xlu0 %1143
  %v1145 = vsel %vm969, %v1142, %v1144
  %v1146 = vsel %vm969, %v1144, %v1142
  %v1147 = vadd.f32 %v1133, %v1146
  %v1148 = vadd.f32 %v1140, %v1145
  %1149 = vrot.lane.b32.xlu0 %v1147, 64
  %v1150 = vpop.permute.xlu0 %1149
  %1151 = vrot.lane.b32.xlu0 %v1148, 64
  %v1152 = vpop.permute.xlu0 %1151
  %v1153 = vsel %vm978, %v1150, %v1152
  %v1154 = vsel %vm978, %v1152, %v1150
  %v1155 = vadd.f32 %v1147, %v1154
  %v1156 = vadd.f32 %v1148, %v1153
  %v1157 = vadd.f32 %v1155, %v1156
  %v1158 = vmul.f32 %v1157, 0.0078125
  %v1159 = vadd.f32 %v1158, 1e-05
  %v1160 = vrsqrt.pop %v1159
  %v1162 = vcombine.low %v1160, %v1160
  %v1164 = vunpack.c.l.s4 1966171168
  %v1165 = vunpack.c.0.s8 %v1164
  %v1166 = vlaneseq
  %v1167 = vshrl.u32 %v1166, 7
  %v1168 = vsub.s32 %v1165, %v1167
  %v1169 = vrot.slane %v1162, %v1168
  %v1171 = vunpack.c.l.s4 1966171168
  %v1172 = vunpack.c.0.s8 %v1171
  %v1173 = vlaneseq
  %v1174 = vshrl.u32 %v1173, 7
  %v1175 = vsub.s32 %v1172, %v1174
  %v1176 = vrot.slane %v1169, %v1175
  %v1178 = vmul.f32 %v946, %v1176
  %v1180 = vlaneseq
  %v1181 = vshrl.u32 %v1180, 7
  %v1182 = vsub.s32 0, %v1181
  %v1183 = vrot.slane %v1178, %v1182
  %v1184 = vlaneseq
  %v1185 = vshrl.u32 %v1184, 7
  %v1186 = vsub.s32 1, %v1185
  %v1187 = vrot.slane %v1178, %v1186
  %v1190 = vmul.f32 %v1119, %v1183
  %v1191 = vmul.f32 %v1120, %v1187
  %v1192 = vmul.f32 %v1121, %v1183
  %v1193 = vmul.f32 %v1122, %v1187
  %v1194 = vadd.f32 %v1190, %v1068
  %v1195 = vadd.f32 %v1191, %v1072
  %v1196 = vadd.f32 %v1192, %v1068
  %v1197 = vadd.f32 %v1193, %v1072
  %v1198 = vmax.f32 %v1194, 0.0
  %v1199 = vmax.f32 %v1195, 0.0
  %v1200 = vmax.f32 %v1196, 0.0
  %v1201 = vmax.f32 %v1197, 0.0
  %v1202 = vpack.c.bf16 %v1081, %v1079
  %v1203 = vpack.c.bf16 %v1082, %v1080
  %v1204 = vpack.c.bf16 %v1200, %v1198
  %v1205 = vpack.c.bf16 %v1201, %v1199
  %v1206 = vld [vmem:[%s2] sm:$0xf]
  %v1207 = vld [vmem:[%s2 + $0x4] sm:$0xf]
  %v1208 = vld [vmem:[%s2 + $0x8] sm:$0xf]
  %v1209 = vld [vmem:[%s2 + $0xc] sm:$0xf]
  %v1210 = vld [vmem:[%s2 + $0x10] sm:$0xf]
  %v1211 = vld [vmem:[%s2 + $0x14] sm:$0xf]
  %v1212 = vld [vmem:[%s2 + $0x18] sm:$0xf]
  %v1213 = vld [vmem:[%s2 + $0x1c] sm:$0xf]
  %v1214 = vld [vmem:[%s2 + $0x20] sm:$0xf]
  %v1215 = vld [vmem:[%s2 + $0x24] sm:$0xf]
  %v1216 = vld [vmem:[%s2 + $0x28] sm:$0xf]
  %v1217 = vld [vmem:[%s2 + $0x2c] sm:$0xf]
  %v1218 = vld [vmem:[%s2 + $0x30] sm:$0xf]
  %v1219 = vld [vmem:[%s2 + $0x34] sm:$0xf]
  %v1220 = vld [vmem:[%s2 + $0x38] sm:$0xf]
  %v1221 = vld [vmem:[%s2 + $0x3c] sm:$0xf]
  %v1222 = vld [vmem:[%s2 + $0x40] sm:$0xf]
  %v1223 = vld [vmem:[%s2 + $0x44] sm:$0xf]
  %v1224 = vld [vmem:[%s2 + $0x48] sm:$0xf]
  %v1225 = vld [vmem:[%s2 + $0x4c] sm:$0xf]
  %v1226 = vld [vmem:[%s2 + $0x50] sm:$0xf]
  %v1227 = vld [vmem:[%s2 + $0x54] sm:$0xf]
  %v1228 = vld [vmem:[%s2 + $0x58] sm:$0xf]
  %v1229 = vld [vmem:[%s2 + $0x5c] sm:$0xf]
  %v1254 = vunpack.c.l.b16 %v1206
  %v1255 = vunpack.c.l.b16 %v1207
  %v1256 = vunpack.c.l.b16 %v1208
  %v1257 = vunpack.c.l.b16 %v1209
  %v1258 = vunpack.c.l.b16 %v1210
  %v1259 = vunpack.c.l.b16 %v1211
  %v1260 = vunpack.c.l.b16 %v1212
  %v1261 = vunpack.c.l.b16 %v1213
  %v1262 = vunpack.c.l.b16 %v1214
  %v1263 = vunpack.c.l.b16 %v1215
  %v1264 = vunpack.c.l.b16 %v1216
  %v1265 = vunpack.c.l.b16 %v1217
  %v1266 = vunpack.c.l.b16 %v1218
  %v1267 = vunpack.c.l.b16 %v1219
  %v1268 = vunpack.c.l.b16 %v1220
  %v1269 = vunpack.c.l.b16 %v1221
  %v1270 = vunpack.c.l.b16 %v1222
  %v1271 = vunpack.c.l.b16 %v1223
  %v1272 = vunpack.c.l.b16 %v1224
  %v1273 = vunpack.c.l.b16 %v1225
  %v1274 = vunpack.c.l.b16 %v1226
  %v1275 = vunpack.c.l.b16 %v1227
  %v1276 = vunpack.c.l.b16 %v1228
  %v1277 = vunpack.c.l.b16 %v1229
  %v1278 = vpack.c.b16 %v1255, %v1254
  %v1279 = vpack.c.b16 %v1257, %v1256
  %v1280 = vpack.c.b16 %v1259, %v1258
  %v1281 = vpack.c.b16 %v1261, %v1260
  %v1282 = vpack.c.b16 %v1263, %v1262
  %v1283 = vpack.c.b16 %v1265, %v1264
  %v1284 = vpack.c.b16 %v1267, %v1266
  %v1285 = vpack.c.b16 %v1269, %v1268
  %v1286 = vpack.c.b16 %v1271, %v1270
  %v1287 = vpack.c.b16 %v1273, %v1272
  %v1288 = vpack.c.b16 %v1275, %v1274
  %v1289 = vpack.c.b16 %v1277, %v1276
  %vm1290 = vcmask 261120
  %v1292 = vsel %vm1290, %v1278, 0
  %v1295 = vsel %vm1290, %v1279, 0
  %v1298 = vsel %vm1290, %v1280, 0
  %v1301 = vsel %vm1290, %v1281, 0
  %v1304 = vsel %vm1290, %v1282, 0
  %v1307 = vsel %vm1290, %v1283, 0
  %v1310 = vsel %vm1290, %v1284, 0
  %v1313 = vsel %vm1290, %v1285, 0
  %v1316 = vsel %vm1290, %v1286, 0
  %v1319 = vsel %vm1290, %v1287, 0
  %v1322 = vsel %vm1290, %v1288, 0
  %v1325 = vsel %vm1290, %v1289, 0
  %1327 = vmatprep.subr.bf16.mxu0 0
  %1328 = vmatpush1.bf16.msra.mxu0 0
  %1329 = vmatprep.subr.bf16.mxu0 0
  %1330 = vmatpush1.bf16.msra.mxu0 0
  %1331 = vmatprep.subr.bf16.mxu0 0
  %1332 = vmatpush1.bf16.msra.mxu0 0
  %1333 = vmatprep.subr.bf16.mxu0 0
  %1334 = vmatpush1.bf16.msra.mxu0 0
  %1335 = vmatprep.subr.bf16.mxu0 0
  %1336 = vmatpush1.bf16.msra.mxu0 0
  %1337 = vmatprep.subr.bf16.mxu0 0
  %1338 = vmatpush1.bf16.msra.mxu0 0
  %1339 = vmatprep.subr.bf16.mxu0 %v1205
  %1340 = vmatpush1.bf16.msra.mxu0 %v1204
  %1341 = vmatprep.subr.bf16.mxu0 %v1203
  %1342 = vmatpush1.bf16.msra.mxu0 %v1202
  %1343 = vmatprep.subr.bf16.mxu0 0
  %1344 = vmatpush2.bf16.msra.mxu0 0
  %1345 = vmatprep.subr.bf16.mxu0 0
  %1346 = vmatpush2.bf16.msra.mxu0 0
  %1347 = vmatprep.subr.bf16.mxu0 0
  %1348 = vmatpush2.bf16.msra.mxu0 0
  %1349 = vmatprep.subr.bf16.mxu0 0
  %1350 = vmatpush2.bf16.msra.mxu0 0
  %1351 = vmatprep.subr.bf16.mxu0 0
  %1352 = vmatpush2.bf16.msra.mxu0 0
  %1353 = vmatprep.subr.bf16.mxu0 0
  %1354 = vmatpush2.bf16.msra.mxu0 0
  %1355 = vmatprep.subr.bf16.mxu0 0
  %1356 = vmatpush2.bf16.msra.mxu0 0
  %1357 = vmatprep.subr.bf16.mxu0 0
  %1358 = vmatpush2.bf16.msra.mxu0 0
  %1359 = vmatprep.mubr.bf16.mxu0 0
  %1360 = vmatmul.mubr.bf16.gmra.mxu0 %v1292
  %v1361 = vpop.f32.mrf.mxu0
  %v1362 = vadd.f32 0.0, %v1361
  %v1363 = vpop.f32.mrf.mxu0
  %v1364 = vadd.f32 0.0, %v1363
  %v1365 = vpop.f32.mrf.mxu0
  %v1366 = vadd.f32 0.0, %v1365
  %v1367 = vpop.f32.mrf.mxu0
  %v1368 = vadd.f32 0.0, %v1367
  %1369 = vmatprep.mubr.bf16.mxu0 0
  %1370 = vmatmul.mubr.bf16.gmra.mxu0 %v1295
  %v1371 = vpop.f32.mrf.mxu0
  %v1372 = vadd.f32 0.0, %v1371
  %v1373 = vpop.f32.mrf.mxu0
  %v1374 = vadd.f32 0.0, %v1373
  %v1375 = vpop.f32.mrf.mxu0
  %v1376 = vadd.f32 0.0, %v1375
  %v1377 = vpop.f32.mrf.mxu0
  %v1378 = vadd.f32 0.0, %v1377
  %1379 = vmatprep.mubr.bf16.mxu0 0
  %1380 = vmatmul.mubr.bf16.gmra.mxu0 %v1298
  %v1381 = vpop.f32.mrf.mxu0
  %v1382 = vadd.f32 0.0, %v1381
  %v1383 = vpop.f32.mrf.mxu0
  %v1384 = vadd.f32 0.0, %v1383
  %v1385 = vpop.f32.mrf.mxu0
  %v1386 = vadd.f32 0.0, %v1385
  %v1387 = vpop.f32.mrf.mxu0
  %v1388 = vadd.f32 0.0, %v1387
  %1389 = vmatprep.mubr.bf16.mxu0 0
  %1390 = vmatmul.mubr.bf16.gmra.mxu0 %v1301
  %v1391 = vpop.f32.mrf.mxu0
  %v1392 = vadd.f32 0.0, %v1391
  %v1393 = vpop.f32.mrf.mxu0
  %v1394 = vadd.f32 0.0, %v1393
  %v1395 = vpop.f32.mrf.mxu0
  %v1396 = vadd.f32 0.0, %v1395
  %v1397 = vpop.f32.mrf.mxu0
  %v1398 = vadd.f32 0.0, %v1397
  %1399 = vmatprep.mubr.bf16.mxu0 0
  %1400 = vmatmul.mubr.bf16.gmra.mxu0 %v1304
  %v1401 = vpop.f32.mrf.mxu0
  %v1402 = vadd.f32 0.0, %v1401
  %v1403 = vpop.f32.mrf.mxu0
  %v1404 = vadd.f32 0.0, %v1403
  %v1405 = vpop.f32.mrf.mxu0
  %v1406 = vadd.f32 0.0, %v1405
  %v1407 = vpop.f32.mrf.mxu0
  %v1408 = vadd.f32 0.0, %v1407
  %1409 = vmatprep.mubr.bf16.mxu0 0
  %1410 = vmatmul.mubr.bf16.gmra.mxu0 %v1307
  %v1411 = vpop.f32.mrf.mxu0
  %v1412 = vadd.f32 0.0, %v1411
  %v1413 = vpop.f32.mrf.mxu0
  %v1414 = vadd.f32 0.0, %v1413
  %v1415 = vpop.f32.mrf.mxu0
  %v1416 = vadd.f32 0.0, %v1415
  %v1417 = vpop.f32.mrf.mxu0
  %v1418 = vadd.f32 0.0, %v1417
  %1419 = vmatprep.mubr.bf16.mxu0 0
  %1420 = vmatmul.mubr.bf16.gmra.mxu0 %v1310
  %v1421 = vpop.f32.mrf.mxu0
  %v1422 = vadd.f32 0.0, %v1421
  %v1423 = vpop.f32.mrf.mxu0
  %v1424 = vadd.f32 0.0, %v1423
  %v1425 = vpop.f32.mrf.mxu0
  %v1426 = vadd.f32 0.0, %v1425
  %v1427 = vpop.f32.mrf.mxu0
  %v1428 = vadd.f32 0.0, %v1427
  %1429 = vmatprep.mubr.bf16.mxu0 0
  %1430 = vmatmul.mubr.bf16.gmra.mxu0 %v1313
  %v1431 = vpop.f32.mrf.mxu0
  %v1432 = vadd.f32 0.0, %v1431
  %v1433 = vpop.f32.mrf.mxu0
  %v1434 = vadd.f32 0.0, %v1433
  %v1435 = vpop.f32.mrf.mxu0
  %v1436 = vadd.f32 0.0, %v1435
  %v1437 = vpop.f32.mrf.mxu0
  %v1438 = vadd.f32 0.0, %v1437
  %1439 = vmatprep.mubr.bf16.mxu0 0
  %1440 = vmatmul.mubr.bf16.gmra.mxu0 %v1316
  %v1441 = vpop.f32.mrf.mxu0
  %v1442 = vadd.f32 0.0, %v1441
  %v1443 = vpop.f32.mrf.mxu0
  %v1444 = vadd.f32 0.0, %v1443
  %v1445 = vpop.f32.mrf.mxu0
  %v1446 = vadd.f32 0.0, %v1445
  %v1447 = vpop.f32.mrf.mxu0
  %v1448 = vadd.f32 0.0, %v1447
  %1449 = vmatprep.mubr.bf16.mxu0 0
  %1450 = vmatmul.mubr.bf16.gmra.mxu0 %v1319
  %v1451 = vpop.f32.mrf.mxu0
  %v1452 = vadd.f32 0.0, %v1451
  %v1453 = vpop.f32.mrf.mxu0
  %v1454 = vadd.f32 0.0, %v1453
  %v1455 = vpop.f32.mrf.mxu0
  %v1456 = vadd.f32 0.0, %v1455
  %v1457 = vpop.f32.mrf.mxu0
  %v1458 = vadd.f32 0.0, %v1457
  %1459 = vmatprep.mubr.bf16.mxu0 0
  %1460 = vmatmul.mubr.bf16.gmra.mxu0 %v1322
  %v1461 = vpop.f32.mrf.mxu0
  %v1462 = vadd.f32 0.0, %v1461
  %v1463 = vpop.f32.mrf.mxu0
  %v1464 = vadd.f32 0.0, %v1463
  %v1465 = vpop.f32.mrf.mxu0
  %v1466 = vadd.f32 0.0, %v1465
  %v1467 = vpop.f32.mrf.mxu0
  %v1468 = vadd.f32 0.0, %v1467
  %1469 = vmatprep.mubr.bf16.mxu0 0
  %1470 = vmatmul.mubr.bf16.gmra.mxu0 %v1325
  %v1471 = vpop.f32.mrf.mxu0
  %v1472 = vadd.f32 0.0, %v1471
  %v1473 = vpop.f32.mrf.mxu0
  %v1474 = vadd.f32 0.0, %v1473
  %v1475 = vpop.f32.mrf.mxu0
  %v1476 = vadd.f32 0.0, %v1475
  %v1477 = vpop.f32.mrf.mxu0
  %v1478 = vadd.f32 0.0, %v1477
  %1479 = vdwg.mxu0
  %s1480 = scalar_lea.vmem %s6, 768
  %v1481 = vld [vmem:[%s1480] sm:$0xff]
  %v1482 = vld [vmem:[%s1480 + $0x8] sm:$0xff]
  %v1483 = vld [vmem:[%s1480 + $0x10] sm:$0xff]
  %v1484 = vld [vmem:[%s1480 + $0x18] sm:$0xff]
  %v1485 = vld [vmem:[%s1480 + $0x20] sm:$0xff]
  %v1486 = vld [vmem:[%s1480 + $0x28] sm:$0xff]
  %v1487 = vld [vmem:[%s1480 + $0x30] sm:$0xff]
  %v1488 = vld [vmem:[%s1480 + $0x38] sm:$0xff]
  %v1489 = vld [vmem:[%s1480 + $0x40] sm:$0xff]
  %v1490 = vld [vmem:[%s1480 + $0x48] sm:$0xff]
  %v1491 = vld [vmem:[%s1480 + $0x50] sm:$0xff]
  %v1492 = vld [vmem:[%s1480 + $0x58] sm:$0xff]
  %v1493 = vld [vmem:[%s1480 + $0x60] sm:$0xff]
  %v1494 = vld [vmem:[%s1480 + $0x68] sm:$0xff]
  %v1495 = vld [vmem:[%s1480 + $0x70] sm:$0xff]
  %v1496 = vld [vmem:[%s1480 + $0x78] sm:$0xff]
  %v1497 = vld [vmem:[%s1480 + $0x80] sm:$0xff]
  %v1498 = vld [vmem:[%s1480 + $0x88] sm:$0xff]
  %v1499 = vld [vmem:[%s1480 + $0x90] sm:$0xff]
  %v1500 = vld [vmem:[%s1480 + $0x98] sm:$0xff]
  %v1501 = vld [vmem:[%s1480 + $0xa0] sm:$0xff]
  %v1502 = vld [vmem:[%s1480 + $0xa8] sm:$0xff]
  %v1503 = vld [vmem:[%s1480 + $0xb0] sm:$0xff]
  %v1504 = vld [vmem:[%s1480 + $0xb8] sm:$0xff]
  %v1505 = vld [vmem:[%s1480 + $0xc0] sm:$0xff]
  %v1506 = vld [vmem:[%s1480 + $0xc8] sm:$0xff]
  %v1507 = vld [vmem:[%s1480 + $0xd0] sm:$0xff]
  %v1508 = vld [vmem:[%s1480 + $0xd8] sm:$0xff]
  %v1509 = vld [vmem:[%s1480 + $0xe0] sm:$0xff]
  %v1510 = vld [vmem:[%s1480 + $0xe8] sm:$0xff]
  %v1511 = vld [vmem:[%s1480 + $0xf0] sm:$0xff]
  %v1512 = vld [vmem:[%s1480 + $0xf8] sm:$0xff]
  %v1513 = vld [vmem:[%s1480 + $0x100] sm:$0xff]
  %v1514 = vld [vmem:[%s1480 + $0x108] sm:$0xff]
  %v1515 = vld [vmem:[%s1480 + $0x110] sm:$0xff]
  %v1516 = vld [vmem:[%s1480 + $0x118] sm:$0xff]
  %v1517 = vld [vmem:[%s1480 + $0x120] sm:$0xff]
  %v1518 = vld [vmem:[%s1480 + $0x128] sm:$0xff]
  %v1519 = vld [vmem:[%s1480 + $0x130] sm:$0xff]
  %v1520 = vld [vmem:[%s1480 + $0x138] sm:$0xff]
  %v1521 = vld [vmem:[%s1480 + $0x140] sm:$0xff]
  %v1522 = vld [vmem:[%s1480 + $0x148] sm:$0xff]
  %v1523 = vld [vmem:[%s1480 + $0x150] sm:$0xff]
  %v1524 = vld [vmem:[%s1480 + $0x158] sm:$0xff]
  %v1525 = vld [vmem:[%s1480 + $0x160] sm:$0xff]
  %v1526 = vld [vmem:[%s1480 + $0x168] sm:$0xff]
  %v1527 = vld [vmem:[%s1480 + $0x170] sm:$0xff]
  %v1528 = vld [vmem:[%s1480 + $0x178] sm:$0xff]
  %v1529 = vld [vmem:[%s1480 + $0x180] sm:$0xff]
  %v1530 = vld [vmem:[%s1480 + $0x188] sm:$0xff]
  %v1531 = vld [vmem:[%s1480 + $0x190] sm:$0xff]
  %v1532 = vld [vmem:[%s1480 + $0x198] sm:$0xff]
  %v1533 = vld [vmem:[%s1480 + $0x1a0] sm:$0xff]
  %v1534 = vld [vmem:[%s1480 + $0x1a8] sm:$0xff]
  %v1535 = vld [vmem:[%s1480 + $0x1b0] sm:$0xff]
  %v1536 = vld [vmem:[%s1480 + $0x1b8] sm:$0xff]
  %v1537 = vld [vmem:[%s1480 + $0x1c0] sm:$0xff]
  %v1538 = vld [vmem:[%s1480 + $0x1c8] sm:$0xff]
  %v1539 = vld [vmem:[%s1480 + $0x1d0] sm:$0xff]
  %v1540 = vld [vmem:[%s1480 + $0x1d8] sm:$0xff]
  %v1541 = vld [vmem:[%s1480 + $0x1e0] sm:$0xff]
  %v1542 = vld [vmem:[%s1480 + $0x1e8] sm:$0xff]
  %v1543 = vld [vmem:[%s1480 + $0x1f0] sm:$0xff]
  %v1544 = vld [vmem:[%s1480 + $0x1f8] sm:$0xff]
  %v1545 = vld [vmem:[%s1480 + $0x200] sm:$0xff]
  %v1546 = vld [vmem:[%s1480 + $0x208] sm:$0xff]
  %v1547 = vld [vmem:[%s1480 + $0x210] sm:$0xff]
  %v1548 = vld [vmem:[%s1480 + $0x218] sm:$0xff]
  %v1549 = vld [vmem:[%s1480 + $0x220] sm:$0xff]
  %v1550 = vld [vmem:[%s1480 + $0x228] sm:$0xff]
  %v1551 = vld [vmem:[%s1480 + $0x230] sm:$0xff]
  %v1552 = vld [vmem:[%s1480 + $0x238] sm:$0xff]
  %v1553 = vld [vmem:[%s1480 + $0x240] sm:$0xff]
  %v1554 = vld [vmem:[%s1480 + $0x248] sm:$0xff]
  %v1555 = vld [vmem:[%s1480 + $0x250] sm:$0xff]
  %v1556 = vld [vmem:[%s1480 + $0x258] sm:$0xff]
  %v1557 = vld [vmem:[%s1480 + $0x260] sm:$0xff]
  %v1558 = vld [vmem:[%s1480 + $0x268] sm:$0xff]
  %v1559 = vld [vmem:[%s1480 + $0x270] sm:$0xff]
  %v1560 = vld [vmem:[%s1480 + $0x278] sm:$0xff]
  %v1561 = vld [vmem:[%s1480 + $0x280] sm:$0xff]
  %v1562 = vld [vmem:[%s1480 + $0x288] sm:$0xff]
  %v1563 = vld [vmem:[%s1480 + $0x290] sm:$0xff]
  %v1564 = vld [vmem:[%s1480 + $0x298] sm:$0xff]
  %v1565 = vld [vmem:[%s1480 + $0x2a0] sm:$0xff]
  %v1566 = vld [vmem:[%s1480 + $0x2a8] sm:$0xff]
  %v1567 = vld [vmem:[%s1480 + $0x2b0] sm:$0xff]
  %v1568 = vld [vmem:[%s1480 + $0x2b8] sm:$0xff]
  %v1569 = vld [vmem:[%s1480 + $0x2c0] sm:$0xff]
  %v1570 = vld [vmem:[%s1480 + $0x2c8] sm:$0xff]
  %v1571 = vld [vmem:[%s1480 + $0x2d0] sm:$0xff]
  %v1572 = vld [vmem:[%s1480 + $0x2d8] sm:$0xff]
  %v1573 = vld [vmem:[%s1480 + $0x2e0] sm:$0xff]
  %v1574 = vld [vmem:[%s1480 + $0x2e8] sm:$0xff]
  %v1575 = vld [vmem:[%s1480 + $0x2f0] sm:$0xff]
  %v1576 = vld [vmem:[%s1480 + $0x2f8] sm:$0xff]
  %v1577 = vpack.c.bf16 %v1366, %v1362
  %v1578 = vpack.c.bf16 %v1368, %v1364
  %v1579 = vpack.c.bf16 %v1406, %v1402
  %v1580 = vpack.c.bf16 %v1408, %v1404
  %v1581 = vpack.c.bf16 %v1446, %v1442
  %v1582 = vpack.c.bf16 %v1448, %v1444
  %v1583 = vpack.c.bf16 %v1376, %v1372
  %v1584 = vpack.c.bf16 %v1378, %v1374
  %v1585 = vpack.c.bf16 %v1416, %v1412
  %v1586 = vpack.c.bf16 %v1418, %v1414
  %v1587 = vpack.c.bf16 %v1456, %v1452
  %v1588 = vpack.c.bf16 %v1458, %v1454
  %v1589 = vpack.c.bf16 %v1386, %v1382
  %v1590 = vpack.c.bf16 %v1388, %v1384
  %v1591 = vpack.c.bf16 %v1426, %v1422
  %v1592 = vpack.c.bf16 %v1428, %v1424
  %v1593 = vpack.c.bf16 %v1466, %v1462
  %v1594 = vpack.c.bf16 %v1468, %v1464
  %v1595 = vpack.c.bf16 %v1396, %v1392
  %v1596 = vpack.c.bf16 %v1398, %v1394
  %v1597 = vpack.c.bf16 %v1436, %v1432
  %v1598 = vpack.c.bf16 %v1438, %v1434
  %v1599 = vpack.c.bf16 %v1476, %v1472
  %v1600 = vpack.c.bf16 %v1478, %v1474
  %v1697 = vunpack.c.l.b16 %v1481
  %v1698 = vunpack.c.h.b16 %v1481
  %v1699 = vunpack.c.l.b16 %v1482
  %v1700 = vunpack.c.h.b16 %v1482
  %v1701 = vunpack.c.l.b16 %v1483
  %v1702 = vunpack.c.h.b16 %v1483
  %v1703 = vunpack.c.l.b16 %v1484
  %v1704 = vunpack.c.h.b16 %v1484
  %v1705 = vunpack.c.l.b16 %v1485
  %v1706 = vunpack.c.h.b16 %v1485
  %v1707 = vunpack.c.l.b16 %v1486
  %v1708 = vunpack.c.h.b16 %v1486
  %v1709 = vunpack.c.l.b16 %v1487
  %v1710 = vunpack.c.h.b16 %v1487
  %v1711 = vunpack.c.l.b16 %v1488
  %v1712 = vunpack.c.h.b16 %v1488
  %v1713 = vunpack.c.l.b16 %v1489
  %v1714 = vunpack.c.h.b16 %v1489
  %v1715 = vunpack.c.l.b16 %v1490
  %v1716 = vunpack.c.h.b16 %v1490
  %v1717 = vunpack.c.l.b16 %v1491
  %v1718 = vunpack.c.h.b16 %v1491
  %v1719 = vunpack.c.l.b16 %v1492
  %v1720 = vunpack.c.h.b16 %v1492
  %v1721 = vunpack.c.l.b16 %v1493
  %v1722 = vunpack.c.h.b16 %v1493
  %v1723 = vunpack.c.l.b16 %v1494
  %v1724 = vunpack.c.h.b16 %v1494
  %v1725 = vunpack.c.l.b16 %v1495
  %v1726 = vunpack.c.h.b16 %v1495
  %v1727 = vunpack.c.l.b16 %v1496
  %v1728 = vunpack.c.h.b16 %v1496
  %v1729 = vunpack.c.l.b16 %v1497
  %v1730 = vunpack.c.h.b16 %v1497
  %v1731 = vunpack.c.l.b16 %v1498
  %v1732 = vunpack.c.h.b16 %v1498
  %v1733 = vunpack.c.l.b16 %v1499
  %v1734 = vunpack.c.h.b16 %v1499
  %v1735 = vunpack.c.l.b16 %v1500
  %v1736 = vunpack.c.h.b16 %v1500
  %v1737 = vunpack.c.l.b16 %v1501
  %v1738 = vunpack.c.h.b16 %v1501
  %v1739 = vunpack.c.l.b16 %v1502
  %v1740 = vunpack.c.h.b16 %v1502
  %v1741 = vunpack.c.l.b16 %v1503
  %v1742 = vunpack.c.h.b16 %v1503
  %v1743 = vunpack.c.l.b16 %v1504
  %v1744 = vunpack.c.h.b16 %v1504
  %v1745 = vunpack.c.l.b16 %v1505
  %v1746 = vunpack.c.h.b16 %v1505
  %v1747 = vunpack.c.l.b16 %v1506
  %v1748 = vunpack.c.h.b16 %v1506
  %v1749 = vunpack.c.l.b16 %v1507
  %v1750 = vunpack.c.h.b16 %v1507
  %v1751 = vunpack.c.l.b16 %v1508
  %v1752 = vunpack.c.h.b16 %v1508
  %v1753 = vunpack.c.l.b16 %v1509
  %v1754 = vunpack.c.h.b16 %v1509
  %v1755 = vunpack.c.l.b16 %v1510
  %v1756 = vunpack.c.h.b16 %v1510
  %v1757 = vunpack.c.l.b16 %v1511
  %v1758 = vunpack.c.h.b16 %v1511
  %v1759 = vunpack.c.l.b16 %v1512
  %v1760 = vunpack.c.h.b16 %v1512
  %v1761 = vunpack.c.l.b16 %v1513
  %v1762 = vunpack.c.h.b16 %v1513
  %v1763 = vunpack.c.l.b16 %v1514
  %v1764 = vunpack.c.h.b16 %v1514
  %v1765 = vunpack.c.l.b16 %v1515
  %v1766 = vunpack.c.h.b16 %v1515
  %v1767 = vunpack.c.l.b16 %v1516
  %v1768 = vunpack.c.h.b16 %v1516
  %v1769 = vunpack.c.l.b16 %v1517
  %v1770 = vunpack.c.h.b16 %v1517
  %v1771 = vunpack.c.l.b16 %v1518
  %v1772 = vunpack.c.h.b16 %v1518
  %v1773 = vunpack.c.l.b16 %v1519
  %v1774 = vunpack.c.h.b16 %v1519
  %v1775 = vunpack.c.l.b16 %v1520
  %v1776 = vunpack.c.h.b16 %v1520
  %v1777 = vunpack.c.l.b16 %v1521
  %v1778 = vunpack.c.h.b16 %v1521
  %v1779 = vunpack.c.l.b16 %v1522
  %v1780 = vunpack.c.h.b16 %v1522
  %v1781 = vunpack.c.l.b16 %v1523
  %v1782 = vunpack.c.h.b16 %v1523
  %v1783 = vunpack.c.l.b16 %v1524
  %v1784 = vunpack.c.h.b16 %v1524
  %v1785 = vunpack.c.l.b16 %v1525
  %v1786 = vunpack.c.h.b16 %v1525
  %v1787 = vunpack.c.l.b16 %v1526
  %v1788 = vunpack.c.h.b16 %v1526
  %v1789 = vunpack.c.l.b16 %v1527
  %v1790 = vunpack.c.h.b16 %v1527
  %v1791 = vunpack.c.l.b16 %v1528
  %v1792 = vunpack.c.h.b16 %v1528
  %v1793 = vunpack.c.l.b16 %v1529
  %v1794 = vunpack.c.h.b16 %v1529
  %v1795 = vunpack.c.l.b16 %v1530
  %v1796 = vunpack.c.h.b16 %v1530
  %v1797 = vunpack.c.l.b16 %v1531
  %v1798 = vunpack.c.h.b16 %v1531
  %v1799 = vunpack.c.l.b16 %v1532
  %v1800 = vunpack.c.h.b16 %v1532
  %v1801 = vunpack.c.l.b16 %v1533
  %v1802 = vunpack.c.h.b16 %v1533
  %v1803 = vunpack.c.l.b16 %v1534
  %v1804 = vunpack.c.h.b16 %v1534
  %v1805 = vunpack.c.l.b16 %v1535
  %v1806 = vunpack.c.h.b16 %v1535
  %v1807 = vunpack.c.l.b16 %v1536
  %v1808 = vunpack.c.h.b16 %v1536
  %v1809 = vunpack.c.l.b16 %v1537
  %v1810 = vunpack.c.h.b16 %v1537
  %v1811 = vunpack.c.l.b16 %v1538
  %v1812 = vunpack.c.h.b16 %v1538
  %v1813 = vunpack.c.l.b16 %v1539
  %v1814 = vunpack.c.h.b16 %v1539
  %v1815 = vunpack.c.l.b16 %v1540
  %v1816 = vunpack.c.h.b16 %v1540
  %v1817 = vunpack.c.l.b16 %v1541
  %v1818 = vunpack.c.h.b16 %v1541
  %v1819 = vunpack.c.l.b16 %v1542
  %v1820 = vunpack.c.h.b16 %v1542
  %v1821 = vunpack.c.l.b16 %v1543
  %v1822 = vunpack.c.h.b16 %v1543
  %v1823 = vunpack.c.l.b16 %v1544
  %v1824 = vunpack.c.h.b16 %v1544
  %v1825 = vunpack.c.l.b16 %v1545
  %v1826 = vunpack.c.h.b16 %v1545
  %v1827 = vunpack.c.l.b16 %v1546
  %v1828 = vunpack.c.h.b16 %v1546
  %v1829 = vunpack.c.l.b16 %v1547
  %v1830 = vunpack.c.h.b16 %v1547
  %v1831 = vunpack.c.l.b16 %v1548
  %v1832 = vunpack.c.h.b16 %v1548
  %v1833 = vunpack.c.l.b16 %v1549
  %v1834 = vunpack.c.h.b16 %v1549
  %v1835 = vunpack.c.l.b16 %v1550
  %v1836 = vunpack.c.h.b16 %v1550
  %v1837 = vunpack.c.l.b16 %v1551
  %v1838 = vunpack.c.h.b16 %v1551
  %v1839 = vunpack.c.l.b16 %v1552
  %v1840 = vunpack.c.h.b16 %v1552
  %v1841 = vunpack.c.l.b16 %v1553
  %v1842 = vunpack.c.h.b16 %v1553
  %v1843 = vunpack.c.l.b16 %v1554
  %v1844 = vunpack.c.h.b16 %v1554
  %v1845 = vunpack.c.l.b16 %v1555
  %v1846 = vunpack.c.h.b16 %v1555
  %v1847 = vunpack.c.l.b16 %v1556
  %v1848 = vunpack.c.h.b16 %v1556
  %v1849 = vunpack.c.l.b16 %v1557
  %v1850 = vunpack.c.h.b16 %v1557
  %v1851 = vunpack.c.l.b16 %v1558
  %v1852 = vunpack.c.h.b16 %v1558
  %v1853 = vunpack.c.l.b16 %v1559
  %v1854 = vunpack.c.h.b16 %v1559
  %v1855 = vunpack.c.l.b16 %v1560
  %v1856 = vunpack.c.h.b16 %v1560
  %v1857 = vunpack.c.l.b16 %v1561
  %v1858 = vunpack.c.h.b16 %v1561
  %v1859 = vunpack.c.l.b16 %v1562
  %v1860 = vunpack.c.h.b16 %v1562
  %v1861 = vunpack.c.l.b16 %v1563
  %v1862 = vunpack.c.h.b16 %v1563
  %v1863 = vunpack.c.l.b16 %v1564
  %v1864 = vunpack.c.h.b16 %v1564
  %v1865 = vunpack.c.l.b16 %v1565
  %v1866 = vunpack.c.h.b16 %v1565
  %v1867 = vunpack.c.l.b16 %v1566
  %v1868 = vunpack.c.h.b16 %v1566
  %v1869 = vunpack.c.l.b16 %v1567
  %v1870 = vunpack.c.h.b16 %v1567
  %v1871 = vunpack.c.l.b16 %v1568
  %v1872 = vunpack.c.h.b16 %v1568
  %v1873 = vunpack.c.l.b16 %v1569
  %v1874 = vunpack.c.h.b16 %v1569
  %v1875 = vunpack.c.l.b16 %v1570
  %v1876 = vunpack.c.h.b16 %v1570
  %v1877 = vunpack.c.l.b16 %v1571
  %v1878 = vunpack.c.h.b16 %v1571
  %v1879 = vunpack.c.l.b16 %v1572
  %v1880 = vunpack.c.h.b16 %v1572
  %v1881 = vunpack.c.l.b16 %v1573
  %v1882 = vunpack.c.h.b16 %v1573
  %v1883 = vunpack.c.l.b16 %v1574
  %v1884 = vunpack.c.h.b16 %v1574
  %v1885 = vunpack.c.l.b16 %v1575
  %v1886 = vunpack.c.h.b16 %v1575
  %v1887 = vunpack.c.l.b16 %v1576
  %v1888 = vunpack.c.h.b16 %v1576
  %v1889 = vpack.c.b16 %v1699, %v1697
  %v1890 = vpack.c.b16 %v1700, %v1698
  %v1891 = vpack.c.b16 %v1703, %v1701
  %v1892 = vpack.c.b16 %v1704, %v1702
  %v1893 = vpack.c.b16 %v1707, %v1705
  %v1894 = vpack.c.b16 %v1708, %v1706
  %v1895 = vpack.c.b16 %v1711, %v1709
  %v1896 = vpack.c.b16 %v1712, %v1710
  %v1897 = vpack.c.b16 %v1715, %v1713
  %v1898 = vpack.c.b16 %v1716, %v1714
  %v1899 = vpack.c.b16 %v1719, %v1717
  %v1900 = vpack.c.b16 %v1720, %v1718
  %v1901 = vpack.c.b16 %v1723, %v1721
  %v1902 = vpack.c.b16 %v1724, %v1722
  %v1903 = vpack.c.b16 %v1727, %v1725
  %v1904 = vpack.c.b16 %v1728, %v1726
  %v1905 = vpack.c.b16 %v1731, %v1729
  %v1906 = vpack.c.b16 %v1732, %v1730
  %v1907 = vpack.c.b16 %v1735, %v1733
  %v1908 = vpack.c.b16 %v1736, %v1734
  %v1909 = vpack.c.b16 %v1739, %v1737
  %v1910 = vpack.c.b16 %v1740, %v1738
  %v1911 = vpack.c.b16 %v1743, %v1741
  %v1912 = vpack.c.b16 %v1744, %v1742
  %v1913 = vpack.c.b16 %v1747, %v1745
  %v1914 = vpack.c.b16 %v1748, %v1746
  %v1915 = vpack.c.b16 %v1751, %v1749
  %v1916 = vpack.c.b16 %v1752, %v1750
  %v1917 = vpack.c.b16 %v1755, %v1753
  %v1918 = vpack.c.b16 %v1756, %v1754
  %v1919 = vpack.c.b16 %v1759, %v1757
  %v1920 = vpack.c.b16 %v1760, %v1758
  %v1921 = vpack.c.b16 %v1763, %v1761
  %v1922 = vpack.c.b16 %v1764, %v1762
  %v1923 = vpack.c.b16 %v1767, %v1765
  %v1924 = vpack.c.b16 %v1768, %v1766
  %v1925 = vpack.c.b16 %v1771, %v1769
  %v1926 = vpack.c.b16 %v1772, %v1770
  %v1927 = vpack.c.b16 %v1775, %v1773
  %v1928 = vpack.c.b16 %v1776, %v1774
  %v1929 = vpack.c.b16 %v1779, %v1777
  %v1930 = vpack.c.b16 %v1780, %v1778
  %v1931 = vpack.c.b16 %v1783, %v1781
  %v1932 = vpack.c.b16 %v1784, %v1782
  %v1933 = vpack.c.b16 %v1787, %v1785
  %v1934 = vpack.c.b16 %v1788, %v1786
  %v1935 = vpack.c.b16 %v1791, %v1789
  %v1936 = vpack.c.b16 %v1792, %v1790
  %v1937 = vpack.c.b16 %v1795, %v1793
  %v1938 = vpack.c.b16 %v1796, %v1794
  %v1939 = vpack.c.b16 %v1799, %v1797
  %v1940 = vpack.c.b16 %v1800, %v1798
  %v1941 = vpack.c.b16 %v1803, %v1801
  %v1942 = vpack.c.b16 %v1804, %v1802
  %v1943 = vpack.c.b16 %v1807, %v1805
  %v1944 = vpack.c.b16 %v1808, %v1806
  %v1945 = vpack.c.b16 %v1811, %v1809
  %v1946 = vpack.c.b16 %v1812, %v1810
  %v1947 = vpack.c.b16 %v1815, %v1813
  %v1948 = vpack.c.b16 %v1816, %v1814
  %v1949 = vpack.c.b16 %v1819, %v1817
  %v1950 = vpack.c.b16 %v1820, %v1818
  %v1951 = vpack.c.b16 %v1823, %v1821
  %v1952 = vpack.c.b16 %v1824, %v1822
  %v1953 = vpack.c.b16 %v1827, %v1825
  %v1954 = vpack.c.b16 %v1828, %v1826
  %v1955 = vpack.c.b16 %v1831, %v1829
  %v1956 = vpack.c.b16 %v1832, %v1830
  %v1957 = vpack.c.b16 %v1835, %v1833
  %v1958 = vpack.c.b16 %v1836, %v1834
  %v1959 = vpack.c.b16 %v1839, %v1837
  %v1960 = vpack.c.b16 %v1840, %v1838
  %v1961 = vpack.c.b16 %v1843, %v1841
  %v1962 = vpack.c.b16 %v1844, %v1842
  %v1963 = vpack.c.b16 %v1847, %v1845
  %v1964 = vpack.c.b16 %v1848, %v1846
  %v1965 = vpack.c.b16 %v1851, %v1849
  %v1966 = vpack.c.b16 %v1852, %v1850
  %v1967 = vpack.c.b16 %v1855, %v1853
  %v1968 = vpack.c.b16 %v1856, %v1854
  %v1969 = vpack.c.b16 %v1859, %v1857
  %v1970 = vpack.c.b16 %v1860, %v1858
  %v1971 = vpack.c.b16 %v1863, %v1861
  %v1972 = vpack.c.b16 %v1864, %v1862
  %v1973 = vpack.c.b16 %v1867, %v1865
  %v1974 = vpack.c.b16 %v1868, %v1866
  %v1975 = vpack.c.b16 %v1871, %v1869
  %v1976 = vpack.c.b16 %v1872, %v1870
  %v1977 = vpack.c.b16 %v1875, %v1873
  %v1978 = vpack.c.b16 %v1876, %v1874
  %v1979 = vpack.c.b16 %v1879, %v1877
  %v1980 = vpack.c.b16 %v1880, %v1878
  %v1981 = vpack.c.b16 %v1883, %v1881
  %v1982 = vpack.c.b16 %v1884, %v1882
  %v1983 = vpack.c.b16 %v1887, %v1885
  %v1984 = vpack.c.b16 %v1888, %v1886
  %2081 = vmatprep.subr.bf16.mxu0 %v1904
  %2082 = vmatpush1.bf16.msra.mxu0 %v1903
  %2083 = vmatprep.subr.bf16.mxu0 %v1902
  %2084 = vmatpush1.bf16.msra.mxu0 %v1901
  %2085 = vmatprep.subr.bf16.mxu0 %v1900
  %2086 = vmatpush1.bf16.msra.mxu0 %v1899
  %2087 = vmatprep.subr.bf16.mxu0 %v1898
  %2088 = vmatpush1.bf16.msra.mxu0 %v1897
  %2089 = vmatprep.subr.bf16.mxu0 %v1896
  %2090 = vmatpush1.bf16.msra.mxu0 %v1895
  %2091 = vmatprep.subr.bf16.mxu0 %v1894
  %2092 = vmatpush1.bf16.msra.mxu0 %v1893
  %2093 = vmatprep.subr.bf16.mxu0 %v1892
  %2094 = vmatpush1.bf16.msra.mxu0 %v1891
  %2095 = vmatprep.subr.bf16.mxu0 %v1890
  %2096 = vmatpush1.bf16.msra.mxu0 %v1889
  %2097 = vmatprep.subr.bf16.mxu0 %v1920
  %2098 = vmatpush2.bf16.msra.mxu0 %v1919
  %2099 = vmatprep.subr.bf16.mxu0 %v1918
  %2100 = vmatpush2.bf16.msra.mxu0 %v1917
  %2101 = vmatprep.subr.bf16.mxu0 %v1916
  %2102 = vmatpush2.bf16.msra.mxu0 %v1915
  %2103 = vmatprep.subr.bf16.mxu0 %v1914
  %2104 = vmatpush2.bf16.msra.mxu0 %v1913
  %2105 = vmatprep.subr.bf16.mxu0 %v1912
  %2106 = vmatpush2.bf16.msra.mxu0 %v1911
  %2107 = vmatprep.subr.bf16.mxu0 %v1910
  %2108 = vmatpush2.bf16.msra.mxu0 %v1909
  %2109 = vmatprep.subr.bf16.mxu0 %v1908
  %2110 = vmatpush2.bf16.msra.mxu0 %v1907
  %2111 = vmatprep.subr.bf16.mxu0 %v1906
  %2112 = vmatpush2.bf16.msra.mxu0 %v1905
  %2113 = vmatprep.mubr.bf16.mxu0 %v1578
  %2114 = vmatmul.mubr.bf16.gmra.mxu0 %v1577
  %v2115 = vpop.f32.mrf.mxu0
  %v2116 = vadd.f32 0.0, %v2115
  %v2117 = vpop.f32.mrf.mxu0
  %v2118 = vadd.f32 0.0, %v2117
  %v2119 = vpop.f32.mrf.mxu0
  %v2120 = vadd.f32 0.0, %v2119
  %v2121 = vpop.f32.mrf.mxu0
  %v2122 = vadd.f32 0.0, %v2121
  %2123 = vmatprep.mubr.bf16.mxu0 %v1584
  %2124 = vmatmul.mubr.bf16.gmra.mxu0 %v1583
  %v2125 = vpop.f32.mrf.mxu0
  %v2126 = vadd.f32 0.0, %v2125
  %v2127 = vpop.f32.mrf.mxu0
  %v2128 = vadd.f32 0.0, %v2127
  %v2129 = vpop.f32.mrf.mxu0
  %v2130 = vadd.f32 0.0, %v2129
  %v2131 = vpop.f32.mrf.mxu0
  %v2132 = vadd.f32 0.0, %v2131
  %2133 = vmatprep.mubr.bf16.mxu0 %v1590
  %2134 = vmatmul.mubr.bf16.gmra.mxu0 %v1589
  %v2135 = vpop.f32.mrf.mxu0
  %v2136 = vadd.f32 0.0, %v2135
  %v2137 = vpop.f32.mrf.mxu0
  %v2138 = vadd.f32 0.0, %v2137
  %v2139 = vpop.f32.mrf.mxu0
  %v2140 = vadd.f32 0.0, %v2139
  %v2141 = vpop.f32.mrf.mxu0
  %v2142 = vadd.f32 0.0, %v2141
  %2143 = vmatprep.mubr.bf16.mxu0 %v1596
  %2144 = vmatmul.mubr.bf16.gmra.mxu0 %v1595
  %v2145 = vpop.f32.mrf.mxu0
  %v2146 = vadd.f32 0.0, %v2145
  %v2147 = vpop.f32.mrf.mxu0
  %v2148 = vadd.f32 0.0, %v2147
  %v2149 = vpop.f32.mrf.mxu0
  %v2150 = vadd.f32 0.0, %v2149
  %v2151 = vpop.f32.mrf.mxu0
  %v2152 = vadd.f32 0.0, %v2151
  %2153 = vdwg.mxu0
  %2154 = vmatprep.subr.bf16.mxu0 %v1936
  %2155 = vmatpush1.bf16.msra.mxu0 %v1935
  %2156 = vmatprep.subr.bf16.mxu0 %v1934
  %2157 = vmatpush1.bf16.msra.mxu0 %v1933
  %2158 = vmatprep.subr.bf16.mxu0 %v1932
  %2159 = vmatpush1.bf16.msra.mxu0 %v1931
  %2160 = vmatprep.subr.bf16.mxu0 %v1930
  %2161 = vmatpush1.bf16.msra.mxu0 %v1929
  %2162 = vmatprep.subr.bf16.mxu0 %v1928
  %2163 = vmatpush1.bf16.msra.mxu0 %v1927
  %2164 = vmatprep.subr.bf16.mxu0 %v1926
  %2165 = vmatpush1.bf16.msra.mxu0 %v1925
  %2166 = vmatprep.subr.bf16.mxu0 %v1924
  %2167 = vmatpush1.bf16.msra.mxu0 %v1923
  %2168 = vmatprep.subr.bf16.mxu0 %v1922
  %2169 = vmatpush1.bf16.msra.mxu0 %v1921
  %2170 = vmatprep.subr.bf16.mxu0 %v1952
  %2171 = vmatpush2.bf16.msra.mxu0 %v1951
  %2172 = vmatprep.subr.bf16.mxu0 %v1950
  %2173 = vmatpush2.bf16.msra.mxu0 %v1949
  %2174 = vmatprep.subr.bf16.mxu0 %v1948
  %2175 = vmatpush2.bf16.msra.mxu0 %v1947
  %2176 = vmatprep.subr.bf16.mxu0 %v1946
  %2177 = vmatpush2.bf16.msra.mxu0 %v1945
  %2178 = vmatprep.subr.bf16.mxu0 %v1944
  %2179 = vmatpush2.bf16.msra.mxu0 %v1943
  %2180 = vmatprep.subr.bf16.mxu0 %v1942
  %2181 = vmatpush2.bf16.msra.mxu0 %v1941
  %2182 = vmatprep.subr.bf16.mxu0 %v1940
  %2183 = vmatpush2.bf16.msra.mxu0 %v1939
  %2184 = vmatprep.subr.bf16.mxu0 %v1938
  %2185 = vmatpush2.bf16.msra.mxu0 %v1937
  %2186 = vmatprep.mubr.bf16.mxu0 %v1580
  %2187 = vmatmul.mubr.bf16.gmra.mxu0 %v1579
  %v2188 = vpop.f32.mrf.mxu0
  %v2189 = vadd.f32 %v2116, %v2188
  %v2190 = vpop.f32.mrf.mxu0
  %v2191 = vadd.f32 %v2118, %v2190
  %v2192 = vpop.f32.mrf.mxu0
  %v2193 = vadd.f32 %v2120, %v2192
  %v2194 = vpop.f32.mrf.mxu0
  %v2195 = vadd.f32 %v2122, %v2194
  %2196 = vmatprep.mubr.bf16.mxu0 %v1586
  %2197 = vmatmul.mubr.bf16.gmra.mxu0 %v1585
  %v2198 = vpop.f32.mrf.mxu0
  %v2199 = vadd.f32 %v2126, %v2198
  %v2200 = vpop.f32.mrf.mxu0
  %v2201 = vadd.f32 %v2128, %v2200
  %v2202 = vpop.f32.mrf.mxu0
  %v2203 = vadd.f32 %v2130, %v2202
  %v2204 = vpop.f32.mrf.mxu0
  %v2205 = vadd.f32 %v2132, %v2204
  %2206 = vmatprep.mubr.bf16.mxu0 %v1592
  %2207 = vmatmul.mubr.bf16.gmra.mxu0 %v1591
  %v2208 = vpop.f32.mrf.mxu0
  %v2209 = vadd.f32 %v2136, %v2208
  %v2210 = vpop.f32.mrf.mxu0
  %v2211 = vadd.f32 %v2138, %v2210
  %v2212 = vpop.f32.mrf.mxu0
  %v2213 = vadd.f32 %v2140, %v2212
  %v2214 = vpop.f32.mrf.mxu0
  %v2215 = vadd.f32 %v2142, %v2214
  %2216 = vmatprep.mubr.bf16.mxu0 %v1598
  %2217 = vmatmul.mubr.bf16.gmra.mxu0 %v1597
  %v2218 = vpop.f32.mrf.mxu0
  %v2219 = vadd.f32 %v2146, %v2218
  %v2220 = vpop.f32.mrf.mxu0
  %v2221 = vadd.f32 %v2148, %v2220
  %v2222 = vpop.f32.mrf.mxu0
  %v2223 = vadd.f32 %v2150, %v2222
  %v2224 = vpop.f32.mrf.mxu0
  %v2225 = vadd.f32 %v2152, %v2224
  %2226 = vdwg.mxu0
  %2227 = vmatprep.subr.bf16.mxu0 %v1968
  %2228 = vmatpush1.bf16.msra.mxu0 %v1967
  %2229 = vmatprep.subr.bf16.mxu0 %v1966
  %2230 = vmatpush1.bf16.msra.mxu0 %v1965
  %2231 = vmatprep.subr.bf16.mxu0 %v1964
  %2232 = vmatpush1.bf16.msra.mxu0 %v1963
  %2233 = vmatprep.subr.bf16.mxu0 %v1962
  %2234 = vmatpush1.bf16.msra.mxu0 %v1961
  %2235 = vmatprep.subr.bf16.mxu0 %v1960
  %2236 = vmatpush1.bf16.msra.mxu0 %v1959
  %2237 = vmatprep.subr.bf16.mxu0 %v1958
  %2238 = vmatpush1.bf16.msra.mxu0 %v1957
  %2239 = vmatprep.subr.bf16.mxu0 %v1956
  %2240 = vmatpush1.bf16.msra.mxu0 %v1955
  %2241 = vmatprep.subr.bf16.mxu0 %v1954
  %2242 = vmatpush1.bf16.msra.mxu0 %v1953
  %2243 = vmatprep.subr.bf16.mxu0 %v1984
  %2244 = vmatpush2.bf16.msra.mxu0 %v1983
  %2245 = vmatprep.subr.bf16.mxu0 %v1982
  %2246 = vmatpush2.bf16.msra.mxu0 %v1981
  %2247 = vmatprep.subr.bf16.mxu0 %v1980
  %2248 = vmatpush2.bf16.msra.mxu0 %v1979
  %2249 = vmatprep.subr.bf16.mxu0 %v1978
  %2250 = vmatpush2.bf16.msra.mxu0 %v1977
  %2251 = vmatprep.subr.bf16.mxu0 %v1976
  %2252 = vmatpush2.bf16.msra.mxu0 %v1975
  %2253 = vmatprep.subr.bf16.mxu0 %v1974
  %2254 = vmatpush2.bf16.msra.mxu0 %v1973
  %2255 = vmatprep.subr.bf16.mxu0 %v1972
  %2256 = vmatpush2.bf16.msra.mxu0 %v1971
  %2257 = vmatprep.subr.bf16.mxu0 %v1970
  %2258 = vmatpush2.bf16.msra.mxu0 %v1969
  %2259 = vmatprep.mubr.bf16.mxu0 %v1582
  %2260 = vmatmul.mubr.bf16.gmra.mxu0 %v1581
  %v2261 = vpop.f32.mrf.mxu0
  %v2262 = vadd.f32 %v2189, %v2261
  %v2263 = vpop.f32.mrf.mxu0
  %v2264 = vadd.f32 %v2191, %v2263
  %v2265 = vpop.f32.mrf.mxu0
  %v2266 = vadd.f32 %v2193, %v2265
  %v2267 = vpop.f32.mrf.mxu0
  %v2268 = vadd.f32 %v2195, %v2267
  %2269 = vmatprep.mubr.bf16.mxu0 %v1588
  %2270 = vmatmul.mubr.bf16.gmra.mxu0 %v1587
  %v2271 = vpop.f32.mrf.mxu0
  %v2272 = vadd.f32 %v2199, %v2271
  %v2273 = vpop.f32.mrf.mxu0
  %v2274 = vadd.f32 %v2201, %v2273
  %v2275 = vpop.f32.mrf.mxu0
  %v2276 = vadd.f32 %v2203, %v2275
  %v2277 = vpop.f32.mrf.mxu0
  %v2278 = vadd.f32 %v2205, %v2277
  %2279 = vmatprep.mubr.bf16.mxu0 %v1594
  %2280 = vmatmul.mubr.bf16.gmra.mxu0 %v1593
  %v2281 = vpop.f32.mrf.mxu0
  %v2282 = vadd.f32 %v2209, %v2281
  %v2283 = vpop.f32.mrf.mxu0
  %v2284 = vadd.f32 %v2211, %v2283
  %v2285 = vpop.f32.mrf.mxu0
  %v2286 = vadd.f32 %v2213, %v2285
  %v2287 = vpop.f32.mrf.mxu0
  %v2288 = vadd.f32 %v2215, %v2287
  %2289 = vmatprep.mubr.bf16.mxu0 %v1600
  %2290 = vmatmul.mubr.bf16.gmra.mxu0 %v1599
  %v2291 = vpop.f32.mrf.mxu0
  %v2292 = vadd.f32 %v2219, %v2291
  %v2293 = vpop.f32.mrf.mxu0
  %v2294 = vadd.f32 %v2221, %v2293
  %v2295 = vpop.f32.mrf.mxu0
  %v2296 = vadd.f32 %v2223, %v2295
  %v2297 = vpop.f32.mrf.mxu0
  %v2298 = vadd.f32 %v2225, %v2297
  %2299 = vdwg.mxu0
  %s2300 = scalar_lea.vmem %s8, 2
  %v2301 = vld [vmem:[%s2300] ss:$8 sm:$0x3]
  %s2302 = scalar_lea.vmem %s8, 3
  %v2303 = vld [vmem:[%s2302] ss:$8 sm:$0x3]
  %v2304 = vadd.f32 %v2262, %v2266
  %v2305 = vadd.f32 %v2304, %v2272
  %v2306 = vadd.f32 %v2305, %v2276
  %v2307 = vrot.slane %v2306, 4
  %v2308 = vadd.f32 %v2306, %v2307
  %v2309 = vrot.slane %v2308, 2
  %v2310 = vadd.f32 %v2308, %v2309
  %v2311 = vrot.slane %v2310, 1
  %v2312 = vadd.f32 %v2310, %v2311
  %v2313 = vadd.f32 %v2264, %v2268
  %v2314 = vadd.f32 %v2313, %v2274
  %v2315 = vadd.f32 %v2314, %v2278
  %v2316 = vrot.slane %v2315, 4
  %v2317 = vadd.f32 %v2315, %v2316
  %v2318 = vrot.slane %v2317, 2
  %v2319 = vadd.f32 %v2317, %v2318
  %v2320 = vrot.slane %v2319, 1
  %v2321 = vadd.f32 %v2319, %v2320
  %2322 = vrot.lane.b32.xlu0 %v2312, 16
  %v2323 = vpop.permute.xlu0 %2322
  %2324 = vrot.lane.b32.xlu0 %v2321, 16
  %v2325 = vpop.permute.xlu0 %2324
  %vm2326 = vcmp.lt.s32.totalorder %v968, 16
  %v2327 = vsel %vm2326, %v2323, %v2325
  %v2328 = vsel %vm2326, %v2325, %v2323
  %v2329 = vadd.f32 %v2312, %v2328
  %v2330 = vadd.f32 %v2321, %v2327
  %2331 = vrot.lane.b32.xlu0 %v2329, 32
  %v2332 = vpop.permute.xlu0 %2331
  %2333 = vrot.lane.b32.xlu0 %v2330, 32
  %v2334 = vpop.permute.xlu0 %2333
  %v2335 = vsel %vm969, %v2332, %v2334
  %v2336 = vsel %vm969, %v2334, %v2332
  %v2337 = vadd.f32 %v2329, %v2336
  %v2338 = vadd.f32 %v2330, %v2335
  %2339 = vrot.lane.b32.xlu0 %v2337, 64
  %v2340 = vpop.permute.xlu0 %2339
  %2341 = vrot.lane.b32.xlu0 %v2338, 64
  %v2342 = vpop.permute.xlu0 %2341
  %v2343 = vsel %vm978, %v2340, %v2342
  %v2344 = vsel %vm978, %v2342, %v2340
  %v2345 = vadd.f32 %v2337, %v2344
  %v2346 = vadd.f32 %v2338, %v2343
  %v2347 = vadd.f32 %v2345, %v2346
  %v2348 = vmul.f32 %v2347, 0.001953125
  %v2349 = vlaneseq
  %v2350 = vshrl.u32 %v2349, 7
  %v2351 = vsub.s32 0, %v2350
  %v2352 = vrot.slane %v2348, %v2351
  %v2353 = vsub.f32 %v2262, %v2352
  %v2354 = vsub.f32 %v2264, %v2352
  %v2355 = vsub.f32 %v2266, %v2352
  %v2356 = vsub.f32 %v2268, %v2352
  %v2357 = vsub.f32 %v2272, %v2352
  %v2358 = vsub.f32 %v2274, %v2352
  %v2359 = vsub.f32 %v2276, %v2352
  %v2360 = vsub.f32 %v2278, %v2352
  %v2361 = vmul.f32 %v2353, %v2353
  %v2362 = vmul.f32 %v2354, %v2354
  %v2363 = vmul.f32 %v2355, %v2355
  %v2364 = vmul.f32 %v2356, %v2356
  %v2365 = vmul.f32 %v2357, %v2357
  %v2366 = vmul.f32 %v2358, %v2358
  %v2367 = vmul.f32 %v2359, %v2359
  %v2368 = vmul.f32 %v2360, %v2360
  %v2369 = vadd.f32 %v2361, %v2363
  %v2370 = vadd.f32 %v2369, %v2365
  %v2371 = vadd.f32 %v2370, %v2367
  %v2372 = vrot.slane %v2371, 4
  %v2373 = vadd.f32 %v2371, %v2372
  %v2374 = vrot.slane %v2373, 2
  %v2375 = vadd.f32 %v2373, %v2374
  %v2376 = vrot.slane %v2375, 1
  %v2377 = vadd.f32 %v2375, %v2376
  %v2378 = vadd.f32 %v2362, %v2364
  %v2379 = vadd.f32 %v2378, %v2366
  %v2380 = vadd.f32 %v2379, %v2368
  %v2381 = vrot.slane %v2380, 4
  %v2382 = vadd.f32 %v2380, %v2381
  %v2383 = vrot.slane %v2382, 2
  %v2384 = vadd.f32 %v2382, %v2383
  %v2385 = vrot.slane %v2384, 1
  %v2386 = vadd.f32 %v2384, %v2385
  %2387 = vrot.lane.b32.xlu0 %v2377, 16
  %v2388 = vpop.permute.xlu0 %2387
  %2389 = vrot.lane.b32.xlu0 %v2386, 16
  %v2390 = vpop.permute.xlu0 %2389
  %v2391 = vsel %vm2326, %v2388, %v2390
  %v2392 = vsel %vm2326, %v2390, %v2388
  %v2393 = vadd.f32 %v2377, %v2392
  %v2394 = vadd.f32 %v2386, %v2391
  %2395 = vrot.lane.b32.xlu0 %v2393, 32
  %v2396 = vpop.permute.xlu0 %2395
  %2397 = vrot.lane.b32.xlu0 %v2394, 32
  %v2398 = vpop.permute.xlu0 %2397
  %v2399 = vsel %vm969, %v2396, %v2398
  %v2400 = vsel %vm969, %v2398, %v2396
  %v2401 = vadd.f32 %v2393, %v2400
  %v2402 = vadd.f32 %v2394, %v2399
  %2403 = vrot.lane.b32.xlu0 %v2401, 64
  %v2404 = vpop.permute.xlu0 %2403
  %2405 = vrot.lane.b32.xlu0 %v2402, 64
  %v2406 = vpop.permute.xlu0 %2405
  %v2407 = vsel %vm978, %v2404, %v2406
  %v2408 = vsel %vm978, %v2406, %v2404
  %v2409 = vadd.f32 %v2401, %v2408
  %v2410 = vadd.f32 %v2402, %v2407
  %v2411 = vadd.f32 %v2409, %v2410
  %v2412 = vmul.f32 %v2411, 0.001953125
  %v2413 = vadd.f32 %v2412, 1e-05
  %v2414 = vrsqrt.pop %v2413
  %v2416 = vcombine.low %v2414, %v2414
  %v2418 = vunpack.c.l.s4 1966171168
  %v2419 = vunpack.c.0.s8 %v2418
  %v2420 = vlaneseq
  %v2421 = vshrl.u32 %v2420, 7
  %v2422 = vsub.s32 %v2419, %v2421
  %v2423 = vrot.slane %v2416, %v2422
  %v2425 = vunpack.c.l.s4 1966171168
  %v2426 = vunpack.c.0.s8 %v2425
  %v2427 = vlaneseq
  %v2428 = vshrl.u32 %v2427, 7
  %v2429 = vsub.s32 %v2426, %v2428
  %v2430 = vrot.slane %v2423, %v2429
  %v2432 = vmul.f32 %v2301, %v2430
  %v2434 = vlaneseq
  %v2435 = vshrl.u32 %v2434, 7
  %v2436 = vsub.s32 0, %v2435
  %v2437 = vrot.slane %v2432, %v2436
  %v2438 = vlaneseq
  %v2439 = vshrl.u32 %v2438, 7
  %v2440 = vsub.s32 1, %v2439
  %v2441 = vrot.slane %v2432, %v2440
  %v2444 = vmul.f32 %v2353, %v2437
  %v2445 = vmul.f32 %v2354, %v2441
  %v2446 = vmul.f32 %v2355, %v2437
  %v2447 = vmul.f32 %v2356, %v2441
  %v2448 = vmul.f32 %v2357, %v2437
  %v2449 = vmul.f32 %v2358, %v2441
  %v2450 = vmul.f32 %v2359, %v2437
  %v2451 = vmul.f32 %v2360, %v2441
  %v2453 = vlaneseq
  %v2454 = vshrl.u32 %v2453, 7
  %v2455 = vsub.s32 0, %v2454
  %v2456 = vrot.slane %v2303, %v2455
  %v2457 = vlaneseq
  %v2458 = vshrl.u32 %v2457, 7
  %v2459 = vsub.s32 1, %v2458
  %v2460 = vrot.slane %v2303, %v2459
  %v2463 = vadd.f32 %v2444, %v2456
  %v2464 = vadd.f32 %v2445, %v2460
  %v2465 = vadd.f32 %v2446, %v2456
  %v2466 = vadd.f32 %v2447, %v2460
  %v2467 = vadd.f32 %v2448, %v2456
  %v2468 = vadd.f32 %v2449, %v2460
  %v2469 = vadd.f32 %v2450, %v2456
  %v2470 = vadd.f32 %v2451, %v2460
  %v2471 = vmax.f32 %v2463, 0.0
  %v2472 = vmax.f32 %v2464, 0.0
  %v2473 = vmax.f32 %v2465, 0.0
  %v2474 = vmax.f32 %v2466, 0.0
  %v2475 = vmax.f32 %v2467, 0.0
  %v2476 = vmax.f32 %v2468, 0.0
  %v2477 = vmax.f32 %v2469, 0.0
  %v2478 = vmax.f32 %v2470, 0.0
  %v2479 = vadd.f32 %v2282, %v2286
  %v2480 = vadd.f32 %v2479, %v2292
  %v2481 = vadd.f32 %v2480, %v2296
  %v2482 = vrot.slane %v2481, 4
  %v2483 = vadd.f32 %v2481, %v2482
  %v2484 = vrot.slane %v2483, 2
  %v2485 = vadd.f32 %v2483, %v2484
  %v2486 = vrot.slane %v2485, 1
  %v2487 = vadd.f32 %v2485, %v2486
  %v2488 = vadd.f32 %v2284, %v2288
  %v2489 = vadd.f32 %v2488, %v2294
  %v2490 = vadd.f32 %v2489, %v2298
  %v2491 = vrot.slane %v2490, 4
  %v2492 = vadd.f32 %v2490, %v2491
  %v2493 = vrot.slane %v2492, 2
  %v2494 = vadd.f32 %v2492, %v2493
  %v2495 = vrot.slane %v2494, 1
  %v2496 = vadd.f32 %v2494, %v2495
  %2497 = vrot.lane.b32.xlu0 %v2487, 16
  %v2498 = vpop.permute.xlu0 %2497
  %2499 = vrot.lane.b32.xlu0 %v2496, 16
  %v2500 = vpop.permute.xlu0 %2499
  %v2501 = vsel %vm2326, %v2498, %v2500
  %v2502 = vsel %vm2326, %v2500, %v2498
  %v2503 = vadd.f32 %v2487, %v2502
  %v2504 = vadd.f32 %v2496, %v2501
  %2505 = vrot.lane.b32.xlu0 %v2503, 32
  %v2506 = vpop.permute.xlu0 %2505
  %2507 = vrot.lane.b32.xlu0 %v2504, 32
  %v2508 = vpop.permute.xlu0 %2507
  %v2509 = vsel %vm969, %v2506, %v2508
  %v2510 = vsel %vm969, %v2508, %v2506
  %v2511 = vadd.f32 %v2503, %v2510
  %v2512 = vadd.f32 %v2504, %v2509
  %2513 = vrot.lane.b32.xlu0 %v2511, 64
  %v2514 = vpop.permute.xlu0 %2513
  %2515 = vrot.lane.b32.xlu0 %v2512, 64
  %v2516 = vpop.permute.xlu0 %2515
  %v2517 = vsel %vm978, %v2514, %v2516
  %v2518 = vsel %vm978, %v2516, %v2514
  %v2519 = vadd.f32 %v2511, %v2518
  %v2520 = vadd.f32 %v2512, %v2517
  %v2521 = vadd.f32 %v2519, %v2520
  %v2522 = vmul.f32 %v2521, 0.001953125
  %v2523 = vlaneseq
  %v2524 = vshrl.u32 %v2523, 7
  %v2525 = vsub.s32 0, %v2524
  %v2526 = vrot.slane %v2522, %v2525
  %v2527 = vsub.f32 %v2282, %v2526
  %v2528 = vsub.f32 %v2284, %v2526
  %v2529 = vsub.f32 %v2286, %v2526
  %v2530 = vsub.f32 %v2288, %v2526
  %v2531 = vsub.f32 %v2292, %v2526
  %v2532 = vsub.f32 %v2294, %v2526
  %v2533 = vsub.f32 %v2296, %v2526
  %v2534 = vsub.f32 %v2298, %v2526
  %v2535 = vmul.f32 %v2527, %v2527
  %v2536 = vmul.f32 %v2528, %v2528
  %v2537 = vmul.f32 %v2529, %v2529
  %v2538 = vmul.f32 %v2530, %v2530
  %v2539 = vmul.f32 %v2531, %v2531
  %v2540 = vmul.f32 %v2532, %v2532
  %v2541 = vmul.f32 %v2533, %v2533
  %v2542 = vmul.f32 %v2534, %v2534
  %v2543 = vadd.f32 %v2535, %v2537
  %v2544 = vadd.f32 %v2543, %v2539
  %v2545 = vadd.f32 %v2544, %v2541
  %v2546 = vrot.slane %v2545, 4
  %v2547 = vadd.f32 %v2545, %v2546
  %v2548 = vrot.slane %v2547, 2
  %v2549 = vadd.f32 %v2547, %v2548
  %v2550 = vrot.slane %v2549, 1
  %v2551 = vadd.f32 %v2549, %v2550
  %v2552 = vadd.f32 %v2536, %v2538
  %v2553 = vadd.f32 %v2552, %v2540
  %v2554 = vadd.f32 %v2553, %v2542
  %v2555 = vrot.slane %v2554, 4
  %v2556 = vadd.f32 %v2554, %v2555
  %v2557 = vrot.slane %v2556, 2
  %v2558 = vadd.f32 %v2556, %v2557
  %v2559 = vrot.slane %v2558, 1
  %v2560 = vadd.f32 %v2558, %v2559
  %2561 = vrot.lane.b32.xlu0 %v2551, 16
  %v2562 = vpop.permute.xlu0 %2561
  %2563 = vrot.lane.b32.xlu0 %v2560, 16
  %v2564 = vpop.permute.xlu0 %2563
  %v2565 = vsel %vm2326, %v2562, %v2564
  %v2566 = vsel %vm2326, %v2564, %v2562
  %v2567 = vadd.f32 %v2551, %v2566
  %v2568 = vadd.f32 %v2560, %v2565
  %2569 = vrot.lane.b32.xlu0 %v2567, 32
  %v2570 = vpop.permute.xlu0 %2569
  %2571 = vrot.lane.b32.xlu0 %v2568, 32
  %v2572 = vpop.permute.xlu0 %2571
  %v2573 = vsel %vm969, %v2570, %v2572
  %v2574 = vsel %vm969, %v2572, %v2570
  %v2575 = vadd.f32 %v2567, %v2574
  %v2576 = vadd.f32 %v2568, %v2573
  %2577 = vrot.lane.b32.xlu0 %v2575, 64
  %v2578 = vpop.permute.xlu0 %2577
  %2579 = vrot.lane.b32.xlu0 %v2576, 64
  %v2580 = vpop.permute.xlu0 %2579
  %v2581 = vsel %vm978, %v2578, %v2580
  %v2582 = vsel %vm978, %v2580, %v2578
  %v2583 = vadd.f32 %v2575, %v2582
  %v2584 = vadd.f32 %v2576, %v2581
  %v2585 = vadd.f32 %v2583, %v2584
  %v2586 = vmul.f32 %v2585, 0.001953125
  %v2587 = vadd.f32 %v2586, 1e-05
  %v2588 = vrsqrt.pop %v2587
  %v2590 = vcombine.low %v2588, %v2588
  %v2592 = vunpack.c.l.s4 1966171168
  %v2593 = vunpack.c.0.s8 %v2592
  %v2594 = vlaneseq
  %v2595 = vshrl.u32 %v2594, 7
  %v2596 = vsub.s32 %v2593, %v2595
  %v2597 = vrot.slane %v2590, %v2596
  %v2599 = vunpack.c.l.s4 1966171168
  %v2600 = vunpack.c.0.s8 %v2599
  %v2601 = vlaneseq
  %v2602 = vshrl.u32 %v2601, 7
  %v2603 = vsub.s32 %v2600, %v2602
  %v2604 = vrot.slane %v2597, %v2603
  %v2606 = vmul.f32 %v2301, %v2604
  %v2608 = vlaneseq
  %v2609 = vshrl.u32 %v2608, 7
  %v2610 = vsub.s32 0, %v2609
  %v2611 = vrot.slane %v2606, %v2610
  %v2612 = vlaneseq
  %v2613 = vshrl.u32 %v2612, 7
  %v2614 = vsub.s32 1, %v2613
  %v2615 = vrot.slane %v2606, %v2614
  %v2618 = vmul.f32 %v2527, %v2611
  %v2619 = vmul.f32 %v2528, %v2615
  %v2620 = vmul.f32 %v2529, %v2611
  %v2621 = vmul.f32 %v2530, %v2615
  %v2622 = vmul.f32 %v2531, %v2611
  %v2623 = vmul.f32 %v2532, %v2615
  %v2624 = vmul.f32 %v2533, %v2611
  %v2625 = vmul.f32 %v2534, %v2615
  %v2626 = vadd.f32 %v2618, %v2456
  %v2627 = vadd.f32 %v2619, %v2460
  %v2628 = vadd.f32 %v2620, %v2456
  %v2629 = vadd.f32 %v2621, %v2460
  %v2630 = vadd.f32 %v2622, %v2456
  %v2631 = vadd.f32 %v2623, %v2460
  %v2632 = vadd.f32 %v2624, %v2456
  %v2633 = vadd.f32 %v2625, %v2460
  %v2634 = vmax.f32 %v2626, 0.0
  %v2635 = vmax.f32 %v2627, 0.0
  %v2636 = vmax.f32 %v2628, 0.0
  %v2637 = vmax.f32 %v2629, 0.0
  %v2638 = vmax.f32 %v2630, 0.0
  %v2639 = vmax.f32 %v2631, 0.0
  %v2640 = vmax.f32 %v2632, 0.0
  %v2641 = vmax.f32 %v2633, 0.0
  %v2642 = vpack.c.bf16 %v2473, %v2471
  %v2643 = vpack.c.bf16 %v2474, %v2472
  %v2644 = vpack.c.bf16 %v2477, %v2475
  %v2645 = vpack.c.bf16 %v2478, %v2476
  %v2646 = vpack.c.bf16 %v2636, %v2634
  %v2647 = vpack.c.bf16 %v2637, %v2635
  %v2648 = vpack.c.bf16 %v2640, %v2638
  %v2649 = vpack.c.bf16 %v2641, %v2639
  %v2650 = vld [vmem:[%s3] sm:$0xf]
  %v2651 = vld [vmem:[%s3 + $0x4] sm:$0xf]
  %v2652 = vld [vmem:[%s3 + $0x8] sm:$0xf]
  %v2653 = vld [vmem:[%s3 + $0xc] sm:$0xf]
  %v2654 = vld [vmem:[%s3 + $0x10] sm:$0xf]
  %v2655 = vld [vmem:[%s3 + $0x14] sm:$0xf]
  %v2656 = vld [vmem:[%s3 + $0x18] sm:$0xf]
  %v2657 = vld [vmem:[%s3 + $0x1c] sm:$0xf]
  %v2658 = vld [vmem:[%s3 + $0x20] sm:$0xf]
  %v2659 = vld [vmem:[%s3 + $0x24] sm:$0xf]
  %v2660 = vld [vmem:[%s3 + $0x28] sm:$0xf]
  %v2661 = vld [vmem:[%s3 + $0x2c] sm:$0xf]
  %v2662 = vld [vmem:[%s3 + $0x30] sm:$0xf]
  %v2663 = vld [vmem:[%s3 + $0x34] sm:$0xf]
  %v2664 = vld [vmem:[%s3 + $0x38] sm:$0xf]
  %v2665 = vld [vmem:[%s3 + $0x3c] sm:$0xf]
  %v2666 = vld [vmem:[%s3 + $0x40] sm:$0xf]
  %v2667 = vld [vmem:[%s3 + $0x44] sm:$0xf]
  %v2668 = vld [vmem:[%s3 + $0x48] sm:$0xf]
  %v2669 = vld [vmem:[%s3 + $0x4c] sm:$0xf]
  %v2670 = vld [vmem:[%s3 + $0x50] sm:$0xf]
  %v2671 = vld [vmem:[%s3 + $0x54] sm:$0xf]
  %v2672 = vld [vmem:[%s3 + $0x58] sm:$0xf]
  %v2673 = vld [vmem:[%s3 + $0x5c] sm:$0xf]
  %v2674 = vld [vmem:[%s3 + $0x60] sm:$0xf]
  %v2675 = vld [vmem:[%s3 + $0x64] sm:$0xf]
  %v2676 = vld [vmem:[%s3 + $0x68] sm:$0xf]
  %v2677 = vld [vmem:[%s3 + $0x6c] sm:$0xf]
  %v2678 = vld [vmem:[%s3 + $0x70] sm:$0xf]
  %v2679 = vld [vmem:[%s3 + $0x74] sm:$0xf]
  %v2680 = vld [vmem:[%s3 + $0x78] sm:$0xf]
  %v2681 = vld [vmem:[%s3 + $0x7c] sm:$0xf]
  %v2682 = vld [vmem:[%s3 + $0x80] sm:$0xf]
  %v2683 = vld [vmem:[%s3 + $0x84] sm:$0xf]
  %v2684 = vld [vmem:[%s3 + $0x88] sm:$0xf]
  %v2685 = vld [vmem:[%s3 + $0x8c] sm:$0xf]
  %v2686 = vld [vmem:[%s3 + $0x90] sm:$0xf]
  %v2687 = vld [vmem:[%s3 + $0x94] sm:$0xf]
  %v2688 = vld [vmem:[%s3 + $0x98] sm:$0xf]
  %v2689 = vld [vmem:[%s3 + $0x9c] sm:$0xf]
  %v2690 = vld [vmem:[%s3 + $0xa0] sm:$0xf]
  %v2691 = vld [vmem:[%s3 + $0xa4] sm:$0xf]
  %v2692 = vld [vmem:[%s3 + $0xa8] sm:$0xf]
  %v2693 = vld [vmem:[%s3 + $0xac] sm:$0xf]
  %v2694 = vld [vmem:[%s3 + $0xb0] sm:$0xf]
  %v2695 = vld [vmem:[%s3 + $0xb4] sm:$0xf]
  %v2696 = vld [vmem:[%s3 + $0xb8] sm:$0xf]
  %v2697 = vld [vmem:[%s3 + $0xbc] sm:$0xf]
  %v2746 = vunpack.c.l.b16 %v2650
  %v2747 = vunpack.c.l.b16 %v2651
  %v2748 = vunpack.c.l.b16 %v2652
  %v2749 = vunpack.c.l.b16 %v2653
  %v2750 = vunpack.c.l.b16 %v2654
  %v2751 = vunpack.c.l.b16 %v2655
  %v2752 = vunpack.c.l.b16 %v2656
  %v2753 = vunpack.c.l.b16 %v2657
  %v2754 = vunpack.c.l.b16 %v2658
  %v2755 = vunpack.c.l.b16 %v2659
  %v2756 = vunpack.c.l.b16 %v2660
  %v2757 = vunpack.c.l.b16 %v2661
  %v2758 = vunpack.c.l.b16 %v2662
  %v2759 = vunpack.c.l.b16 %v2663
  %v2760 = vunpack.c.l.b16 %v2664
  %v2761 = vunpack.c.l.b16 %v2665
  %v2762 = vunpack.c.l.b16 %v2666
  %v2763 = vunpack.c.l.b16 %v2667
  %v2764 = vunpack.c.l.b16 %v2668
  %v2765 = vunpack.c.l.b16 %v2669
  %v2766 = vunpack.c.l.b16 %v2670
  %v2767 = vunpack.c.l.b16 %v2671
  %v2768 = vunpack.c.l.b16 %v2672
  %v2769 = vunpack.c.l.b16 %v2673
  %v2770 = vunpack.c.l.b16 %v2674
  %v2771 = vunpack.c.l.b16 %v2675
  %v2772 = vunpack.c.l.b16 %v2676
  %v2773 = vunpack.c.l.b16 %v2677
  %v2774 = vunpack.c.l.b16 %v2678
  %v2775 = vunpack.c.l.b16 %v2679
  %v2776 = vunpack.c.l.b16 %v2680
  %v2777 = vunpack.c.l.b16 %v2681
  %v2778 = vunpack.c.l.b16 %v2682
  %v2779 = vunpack.c.l.b16 %v2683
  %v2780 = vunpack.c.l.b16 %v2684
  %v2781 = vunpack.c.l.b16 %v2685
  %v2782 = vunpack.c.l.b16 %v2686
  %v2783 = vunpack.c.l.b16 %v2687
  %v2784 = vunpack.c.l.b16 %v2688
  %v2785 = vunpack.c.l.b16 %v2689
  %v2786 = vunpack.c.l.b16 %v2690
  %v2787 = vunpack.c.l.b16 %v2691
  %v2788 = vunpack.c.l.b16 %v2692
  %v2789 = vunpack.c.l.b16 %v2693
  %v2790 = vunpack.c.l.b16 %v2694
  %v2791 = vunpack.c.l.b16 %v2695
  %v2792 = vunpack.c.l.b16 %v2696
  %v2793 = vunpack.c.l.b16 %v2697
  %v2794 = vpack.c.b16 %v2747, %v2746
  %v2795 = vpack.c.b16 %v2749, %v2748
  %v2796 = vpack.c.b16 %v2751, %v2750
  %v2797 = vpack.c.b16 %v2753, %v2752
  %v2798 = vpack.c.b16 %v2755, %v2754
  %v2799 = vpack.c.b16 %v2757, %v2756
  %v2800 = vpack.c.b16 %v2759, %v2758
  %v2801 = vpack.c.b16 %v2761, %v2760
  %v2802 = vpack.c.b16 %v2763, %v2762
  %v2803 = vpack.c.b16 %v2765, %v2764
  %v2804 = vpack.c.b16 %v2767, %v2766
  %v2805 = vpack.c.b16 %v2769, %v2768
  %v2806 = vpack.c.b16 %v2771, %v2770
  %v2807 = vpack.c.b16 %v2773, %v2772
  %v2808 = vpack.c.b16 %v2775, %v2774
  %v2809 = vpack.c.b16 %v2777, %v2776
  %v2810 = vpack.c.b16 %v2779, %v2778
  %v2811 = vpack.c.b16 %v2781, %v2780
  %v2812 = vpack.c.b16 %v2783, %v2782
  %v2813 = vpack.c.b16 %v2785, %v2784
  %v2814 = vpack.c.b16 %v2787, %v2786
  %v2815 = vpack.c.b16 %v2789, %v2788
  %v2816 = vpack.c.b16 %v2791, %v2790
  %v2817 = vpack.c.b16 %v2793, %v2792
  %vm2818 = vcmask 523264
  %v2820 = vsel %vm2818, %v2794, 0
  %v2823 = vsel %vm2818, %v2795, 0
  %v2826 = vsel %vm2818, %v2796, 0
  %v2829 = vsel %vm2818, %v2797, 0
  %v2832 = vsel %vm2818, %v2798, 0
  %v2835 = vsel %vm2818, %v2799, 0
  %v2838 = vsel %vm2818, %v2800, 0
  %v2841 = vsel %vm2818, %v2801, 0
  %v2844 = vsel %vm2818, %v2802, 0
  %v2847 = vsel %vm2818, %v2803, 0
  %v2850 = vsel %vm2818, %v2804, 0
  %v2853 = vsel %vm2818, %v2805, 0
  %v2856 = vsel %vm2818, %v2806, 0
  %v2859 = vsel %vm2818, %v2807, 0
  %v2862 = vsel %vm2818, %v2808, 0
  %v2865 = vsel %vm2818, %v2809, 0
  %v2868 = vsel %vm2818, %v2810, 0
  %v2871 = vsel %vm2818, %v2811, 0
  %v2874 = vsel %vm2818, %v2812, 0
  %v2877 = vsel %vm2818, %v2813, 0
  %v2880 = vsel %vm2818, %v2814, 0
  %v2883 = vsel %vm2818, %v2815, 0
  %v2886 = vsel %vm2818, %v2816, 0
  %v2889 = vsel %vm2818, %v2817, 0
  %2891 = vmatprep.subr.bf16.mxu0 0
  %2892 = vmatpush1.bf16.msra.mxu0 0
  %2893 = vmatprep.subr.bf16.mxu0 0
  %2894 = vmatpush1.bf16.msra.mxu0 0
  %2895 = vmatprep.subr.bf16.mxu0 0
  %2896 = vmatpush1.bf16.msra.mxu0 0
  %2897 = vmatprep.subr.bf16.mxu0 0
  %2898 = vmatpush1.bf16.msra.mxu0 0
  %2899 = vmatprep.subr.bf16.mxu0 %v2649
  %2900 = vmatpush1.bf16.msra.mxu0 %v2648
  %2901 = vmatprep.subr.bf16.mxu0 %v2647
  %2902 = vmatpush1.bf16.msra.mxu0 %v2646
  %2903 = vmatprep.subr.bf16.mxu0 %v2645
  %2904 = vmatpush1.bf16.msra.mxu0 %v2644
  %2905 = vmatprep.subr.bf16.mxu0 %v2643
  %2906 = vmatpush1.bf16.msra.mxu0 %v2642
  %2907 = vmatprep.subr.bf16.mxu0 0
  %2908 = vmatpush2.bf16.msra.mxu0 0
  %2909 = vmatprep.subr.bf16.mxu0 0
  %2910 = vmatpush2.bf16.msra.mxu0 0
  %2911 = vmatprep.subr.bf16.mxu0 0
  %2912 = vmatpush2.bf16.msra.mxu0 0
  %2913 = vmatprep.subr.bf16.mxu0 0
  %2914 = vmatpush2.bf16.msra.mxu0 0
  %2915 = vmatprep.subr.bf16.mxu0 0
  %2916 = vmatpush2.bf16.msra.mxu0 0
  %2917 = vmatprep.subr.bf16.mxu0 0
  %2918 = vmatpush2.bf16.msra.mxu0 0
  %2919 = vmatprep.subr.bf16.mxu0 0
  %2920 = vmatpush2.bf16.msra.mxu0 0
  %2921 = vmatprep.subr.bf16.mxu0 0
  %2922 = vmatpush2.bf16.msra.mxu0 0
  %2923 = vmatprep.mubr.bf16.mxu0 0
  %2924 = vmatmul.mubr.bf16.gmra.mxu0 %v2820
  %v2925 = vpop.f32.mrf.mxu0
  %v2926 = vadd.f32 0.0, %v2925
  %v2927 = vpop.f32.mrf.mxu0
  %v2928 = vadd.f32 0.0, %v2927
  %v2929 = vpop.f32.mrf.mxu0
  %v2930 = vadd.f32 0.0, %v2929
  %v2931 = vpop.f32.mrf.mxu0
  %v2932 = vadd.f32 0.0, %v2931
  %2933 = vmatprep.mubr.bf16.mxu0 0
  %2934 = vmatmul.mubr.bf16.gmra.mxu0 %v2823
  %v2935 = vpop.f32.mrf.mxu0
  %v2936 = vadd.f32 0.0, %v2935
  %v2937 = vpop.f32.mrf.mxu0
  %v2938 = vadd.f32 0.0, %v2937
  %v2939 = vpop.f32.mrf.mxu0
  %v2940 = vadd.f32 0.0, %v2939
  %v2941 = vpop.f32.mrf.mxu0
  %v2942 = vadd.f32 0.0, %v2941
  %2943 = vmatprep.mubr.bf16.mxu0 0
  %2944 = vmatmul.mubr.bf16.gmra.mxu0 %v2826
  %v2945 = vpop.f32.mrf.mxu0
  %v2946 = vadd.f32 0.0, %v2945
  %v2947 = vpop.f32.mrf.mxu0
  %v2948 = vadd.f32 0.0, %v2947
  %v2949 = vpop.f32.mrf.mxu0
  %v2950 = vadd.f32 0.0, %v2949
  %v2951 = vpop.f32.mrf.mxu0
  %v2952 = vadd.f32 0.0, %v2951
  %2953 = vmatprep.mubr.bf16.mxu0 0
  %2954 = vmatmul.mubr.bf16.gmra.mxu0 %v2829
  %v2955 = vpop.f32.mrf.mxu0
  %v2956 = vadd.f32 0.0, %v2955
  %v2957 = vpop.f32.mrf.mxu0
  %v2958 = vadd.f32 0.0, %v2957
  %v2959 = vpop.f32.mrf.mxu0
  %v2960 = vadd.f32 0.0, %v2959
  %v2961 = vpop.f32.mrf.mxu0
  %v2962 = vadd.f32 0.0, %v2961
  %2963 = vmatprep.mubr.bf16.mxu0 0
  %2964 = vmatmul.mubr.bf16.gmra.mxu0 %v2832
  %v2965 = vpop.f32.mrf.mxu0
  %v2966 = vadd.f32 0.0, %v2965
  %v2967 = vpop.f32.mrf.mxu0
  %v2968 = vadd.f32 0.0, %v2967
  %v2969 = vpop.f32.mrf.mxu0
  %v2970 = vadd.f32 0.0, %v2969
  %v2971 = vpop.f32.mrf.mxu0
  %v2972 = vadd.f32 0.0, %v2971
  %2973 = vmatprep.mubr.bf16.mxu0 0
  %2974 = vmatmul.mubr.bf16.gmra.mxu0 %v2835
  %v2975 = vpop.f32.mrf.mxu0
  %v2976 = vadd.f32 0.0, %v2975
  %v2977 = vpop.f32.mrf.mxu0
  %v2978 = vadd.f32 0.0, %v2977
  %v2979 = vpop.f32.mrf.mxu0
  %v2980 = vadd.f32 0.0, %v2979
  %v2981 = vpop.f32.mrf.mxu0
  %v2982 = vadd.f32 0.0, %v2981
  %2983 = vmatprep.mubr.bf16.mxu0 0
  %2984 = vmatmul.mubr.bf16.gmra.mxu0 %v2838
  %v2985 = vpop.f32.mrf.mxu0
  %v2986 = vadd.f32 0.0, %v2985
  %v2987 = vpop.f32.mrf.mxu0
  %v2988 = vadd.f32 0.0, %v2987
  %v2989 = vpop.f32.mrf.mxu0
  %v2990 = vadd.f32 0.0, %v2989
  %v2991 = vpop.f32.mrf.mxu0
  %v2992 = vadd.f32 0.0, %v2991
  %2993 = vmatprep.mubr.bf16.mxu0 0
  %2994 = vmatmul.mubr.bf16.gmra.mxu0 %v2841
  %v2995 = vpop.f32.mrf.mxu0
  %v2996 = vadd.f32 0.0, %v2995
  %v2997 = vpop.f32.mrf.mxu0
  %v2998 = vadd.f32 0.0, %v2997
  %v2999 = vpop.f32.mrf.mxu0
  %v3000 = vadd.f32 0.0, %v2999
  %v3001 = vpop.f32.mrf.mxu0
  %v3002 = vadd.f32 0.0, %v3001
  %3003 = vmatprep.mubr.bf16.mxu0 0
  %3004 = vmatmul.mubr.bf16.gmra.mxu0 %v2844
  %v3005 = vpop.f32.mrf.mxu0
  %v3006 = vadd.f32 0.0, %v3005
  %v3007 = vpop.f32.mrf.mxu0
  %v3008 = vadd.f32 0.0, %v3007
  %v3009 = vpop.f32.mrf.mxu0
  %v3010 = vadd.f32 0.0, %v3009
  %v3011 = vpop.f32.mrf.mxu0
  %v3012 = vadd.f32 0.0, %v3011
  %3013 = vmatprep.mubr.bf16.mxu0 0
  %3014 = vmatmul.mubr.bf16.gmra.mxu0 %v2847
  %v3015 = vpop.f32.mrf.mxu0
  %v3016 = vadd.f32 0.0, %v3015
  %v3017 = vpop.f32.mrf.mxu0
  %v3018 = vadd.f32 0.0, %v3017
  %v3019 = vpop.f32.mrf.mxu0
  %v3020 = vadd.f32 0.0, %v3019
  %v3021 = vpop.f32.mrf.mxu0
  %v3022 = vadd.f32 0.0, %v3021
  %3023 = vmatprep.mubr.bf16.mxu0 0
  %3024 = vmatmul.mubr.bf16.gmra.mxu0 %v2850
  %v3025 = vpop.f32.mrf.mxu0
  %v3026 = vadd.f32 0.0, %v3025
  %v3027 = vpop.f32.mrf.mxu0
  %v3028 = vadd.f32 0.0, %v3027
  %v3029 = vpop.f32.mrf.mxu0
  %v3030 = vadd.f32 0.0, %v3029
  %v3031 = vpop.f32.mrf.mxu0
  %v3032 = vadd.f32 0.0, %v3031
  %3033 = vmatprep.mubr.bf16.mxu0 0
  %3034 = vmatmul.mubr.bf16.gmra.mxu0 %v2853
  %v3035 = vpop.f32.mrf.mxu0
  %v3036 = vadd.f32 0.0, %v3035
  %v3037 = vpop.f32.mrf.mxu0
  %v3038 = vadd.f32 0.0, %v3037
  %v3039 = vpop.f32.mrf.mxu0
  %v3040 = vadd.f32 0.0, %v3039
  %v3041 = vpop.f32.mrf.mxu0
  %v3042 = vadd.f32 0.0, %v3041
  %3043 = vmatprep.mubr.bf16.mxu0 0
  %3044 = vmatmul.mubr.bf16.gmra.mxu0 %v2856
  %v3045 = vpop.f32.mrf.mxu0
  %v3046 = vadd.f32 0.0, %v3045
  %v3047 = vpop.f32.mrf.mxu0
  %v3048 = vadd.f32 0.0, %v3047
  %v3049 = vpop.f32.mrf.mxu0
  %v3050 = vadd.f32 0.0, %v3049
  %v3051 = vpop.f32.mrf.mxu0
  %v3052 = vadd.f32 0.0, %v3051
  %3053 = vmatprep.mubr.bf16.mxu0 0
  %3054 = vmatmul.mubr.bf16.gmra.mxu0 %v2859
  %v3055 = vpop.f32.mrf.mxu0
  %v3056 = vadd.f32 0.0, %v3055
  %v3057 = vpop.f32.mrf.mxu0
  %v3058 = vadd.f32 0.0, %v3057
  %v3059 = vpop.f32.mrf.mxu0
  %v3060 = vadd.f32 0.0, %v3059
  %v3061 = vpop.f32.mrf.mxu0
  %v3062 = vadd.f32 0.0, %v3061
  %3063 = vmatprep.mubr.bf16.mxu0 0
  %3064 = vmatmul.mubr.bf16.gmra.mxu0 %v2862
  %v3065 = vpop.f32.mrf.mxu0
  %v3066 = vadd.f32 0.0, %v3065
  %v3067 = vpop.f32.mrf.mxu0
  %v3068 = vadd.f32 0.0, %v3067
  %v3069 = vpop.f32.mrf.mxu0
  %v3070 = vadd.f32 0.0, %v3069
  %v3071 = vpop.f32.mrf.mxu0
  %v3072 = vadd.f32 0.0, %v3071
  %3073 = vmatprep.mubr.bf16.mxu0 0
  %3074 = vmatmul.mubr.bf16.gmra.mxu0 %v2865
  %v3075 = vpop.f32.mrf.mxu0
  %v3076 = vadd.f32 0.0, %v3075
  %v3077 = vpop.f32.mrf.mxu0
  %v3078 = vadd.f32 0.0, %v3077
  %v3079 = vpop.f32.mrf.mxu0
  %v3080 = vadd.f32 0.0, %v3079
  %v3081 = vpop.f32.mrf.mxu0
  %v3082 = vadd.f32 0.0, %v3081
  %3083 = vmatprep.mubr.bf16.mxu0 0
  %3084 = vmatmul.mubr.bf16.gmra.mxu0 %v2868
  %v3085 = vpop.f32.mrf.mxu0
  %v3086 = vadd.f32 0.0, %v3085
  %v3087 = vpop.f32.mrf.mxu0
  %v3088 = vadd.f32 0.0, %v3087
  %v3089 = vpop.f32.mrf.mxu0
  %v3090 = vadd.f32 0.0, %v3089
  %v3091 = vpop.f32.mrf.mxu0
  %v3092 = vadd.f32 0.0, %v3091
  %3093 = vmatprep.mubr.bf16.mxu0 0
  %3094 = vmatmul.mubr.bf16.gmra.mxu0 %v2871
  %v3095 = vpop.f32.mrf.mxu0
  %v3096 = vadd.f32 0.0, %v3095
  %v3097 = vpop.f32.mrf.mxu0
  %v3098 = vadd.f32 0.0, %v3097
  %v3099 = vpop.f32.mrf.mxu0
  %v3100 = vadd.f32 0.0, %v3099
  %v3101 = vpop.f32.mrf.mxu0
  %v3102 = vadd.f32 0.0, %v3101
  %3103 = vmatprep.mubr.bf16.mxu0 0
  %3104 = vmatmul.mubr.bf16.gmra.mxu0 %v2874
  %v3105 = vpop.f32.mrf.mxu0
  %v3106 = vadd.f32 0.0, %v3105
  %v3107 = vpop.f32.mrf.mxu0
  %v3108 = vadd.f32 0.0, %v3107
  %v3109 = vpop.f32.mrf.mxu0
  %v3110 = vadd.f32 0.0, %v3109
  %v3111 = vpop.f32.mrf.mxu0
  %v3112 = vadd.f32 0.0, %v3111
  %3113 = vmatprep.mubr.bf16.mxu0 0
  %3114 = vmatmul.mubr.bf16.gmra.mxu0 %v2877
  %v3115 = vpop.f32.mrf.mxu0
  %v3116 = vadd.f32 0.0, %v3115
  %v3117 = vpop.f32.mrf.mxu0
  %v3118 = vadd.f32 0.0, %v3117
  %v3119 = vpop.f32.mrf.mxu0
  %v3120 = vadd.f32 0.0, %v3119
  %v3121 = vpop.f32.mrf.mxu0
  %v3122 = vadd.f32 0.0, %v3121
  %3123 = vmatprep.mubr.bf16.mxu0 0
  %3124 = vmatmul.mubr.bf16.gmra.mxu0 %v2880
  %v3125 = vpop.f32.mrf.mxu0
  %v3126 = vadd.f32 0.0, %v3125
  %v3127 = vpop.f32.mrf.mxu0
  %v3128 = vadd.f32 0.0, %v3127
  %v3129 = vpop.f32.mrf.mxu0
  %v3130 = vadd.f32 0.0, %v3129
  %v3131 = vpop.f32.mrf.mxu0
  %v3132 = vadd.f32 0.0, %v3131
  %3133 = vmatprep.mubr.bf16.mxu0 0
  %3134 = vmatmul.mubr.bf16.gmra.mxu0 %v2883
  %v3135 = vpop.f32.mrf.mxu0
  %v3136 = vadd.f32 0.0, %v3135
  %v3137 = vpop.f32.mrf.mxu0
  %v3138 = vadd.f32 0.0, %v3137
  %v3139 = vpop.f32.mrf.mxu0
  %v3140 = vadd.f32 0.0, %v3139
  %v3141 = vpop.f32.mrf.mxu0
  %v3142 = vadd.f32 0.0, %v3141
  %3143 = vmatprep.mubr.bf16.mxu0 0
  %3144 = vmatmul.mubr.bf16.gmra.mxu0 %v2886
  %v3145 = vpop.f32.mrf.mxu0
  %v3146 = vadd.f32 0.0, %v3145
  %v3147 = vpop.f32.mrf.mxu0
  %v3148 = vadd.f32 0.0, %v3147
  %v3149 = vpop.f32.mrf.mxu0
  %v3150 = vadd.f32 0.0, %v3149
  %v3151 = vpop.f32.mrf.mxu0
  %v3152 = vadd.f32 0.0, %v3151
  %3153 = vmatprep.mubr.bf16.mxu0 0
  %3154 = vmatmul.mubr.bf16.gmra.mxu0 %v2889
  %v3155 = vpop.f32.mrf.mxu0
  %v3156 = vadd.f32 0.0, %v3155
  %v3157 = vpop.f32.mrf.mxu0
  %v3158 = vadd.f32 0.0, %v3157
  %v3159 = vpop.f32.mrf.mxu0
  %v3160 = vadd.f32 0.0, %v3159
  %v3161 = vpop.f32.mrf.mxu0
  %v3162 = vadd.f32 0.0, %v3161
  %3163 = vdwg.mxu0
  %s3164 = scalar_lea.vmem %s6, 1536
  %v3165 = vld [vmem:[%s3164] sm:$0xff]
  %v3166 = vld [vmem:[%s3164 + $0x8] sm:$0xff]
  %v3167 = vld [vmem:[%s3164 + $0x10] sm:$0xff]
  %v3168 = vld [vmem:[%s3164 + $0x18] sm:$0xff]
  %v3169 = vld [vmem:[%s3164 + $0x20] sm:$0xff]
  %v3170 = vld [vmem:[%s3164 + $0x28] sm:$0xff]
  %v3171 = vld [vmem:[%s3164 + $0x30] sm:$0xff]
  %v3172 = vld [vmem:[%s3164 + $0x38] sm:$0xff]
  %v3173 = vld [vmem:[%s3164 + $0x40] sm:$0xff]
  %v3174 = vld [vmem:[%s3164 + $0x48] sm:$0xff]
  %v3175 = vld [vmem:[%s3164 + $0x50] sm:$0xff]
  %v3176 = vld [vmem:[%s3164 + $0x58] sm:$0xff]
  %v3177 = vld [vmem:[%s3164 + $0x60] sm:$0xff]
  %v3178 = vld [vmem:[%s3164 + $0x68] sm:$0xff]
  %v3179 = vld [vmem:[%s3164 + $0x70] sm:$0xff]
  %v3180 = vld [vmem:[%s3164 + $0x78] sm:$0xff]
  %v3181 = vld [vmem:[%s3164 + $0x80] sm:$0xff]
  %v3182 = vld [vmem:[%s3164 + $0x88] sm:$0xff]
  %v3183 = vld [vmem:[%s3164 + $0x90] sm:$0xff]
  %v3184 = vld [vmem:[%s3164 + $0x98] sm:$0xff]
  %v3185 = vld [vmem:[%s3164 + $0xa0] sm:$0xff]
  %v3186 = vld [vmem:[%s3164 + $0xa8] sm:$0xff]
  %v3187 = vld [vmem:[%s3164 + $0xb0] sm:$0xff]
  %v3188 = vld [vmem:[%s3164 + $0xb8] sm:$0xff]
  %v3189 = vld [vmem:[%s3164 + $0xc0] sm:$0xff]
  %v3190 = vld [vmem:[%s3164 + $0xc8] sm:$0xff]
  %v3191 = vld [vmem:[%s3164 + $0xd0] sm:$0xff]
  %v3192 = vld [vmem:[%s3164 + $0xd8] sm:$0xff]
  %v3193 = vld [vmem:[%s3164 + $0xe0] sm:$0xff]
  %v3194 = vld [vmem:[%s3164 + $0xe8] sm:$0xff]
  %v3195 = vld [vmem:[%s3164 + $0xf0] sm:$0xff]
  %v3196 = vld [vmem:[%s3164 + $0xf8] sm:$0xff]
  %v3197 = vld [vmem:[%s3164 + $0x100] sm:$0xff]
  %v3198 = vld [vmem:[%s3164 + $0x108] sm:$0xff]
  %v3199 = vld [vmem:[%s3164 + $0x110] sm:$0xff]
  %v3200 = vld [vmem:[%s3164 + $0x118] sm:$0xff]
  %v3201 = vld [vmem:[%s3164 + $0x120] sm:$0xff]
  %v3202 = vld [vmem:[%s3164 + $0x128] sm:$0xff]
  %v3203 = vld [vmem:[%s3164 + $0x130] sm:$0xff]
  %v3204 = vld [vmem:[%s3164 + $0x138] sm:$0xff]
  %v3205 = vld [vmem:[%s3164 + $0x140] sm:$0xff]
  %v3206 = vld [vmem:[%s3164 + $0x148] sm:$0xff]
  %v3207 = vld [vmem:[%s3164 + $0x150] sm:$0xff]
  %v3208 = vld [vmem:[%s3164 + $0x158] sm:$0xff]
  %v3209 = vld [vmem:[%s3164 + $0x160] sm:$0xff]
  %v3210 = vld [vmem:[%s3164 + $0x168] sm:$0xff]
  %v3211 = vld [vmem:[%s3164 + $0x170] sm:$0xff]
  %v3212 = vld [vmem:[%s3164 + $0x178] sm:$0xff]
  %v3213 = vld [vmem:[%s3164 + $0x180] sm:$0xff]
  %v3214 = vld [vmem:[%s3164 + $0x188] sm:$0xff]
  %v3215 = vld [vmem:[%s3164 + $0x190] sm:$0xff]
  %v3216 = vld [vmem:[%s3164 + $0x198] sm:$0xff]
  %v3217 = vld [vmem:[%s3164 + $0x1a0] sm:$0xff]
  %v3218 = vld [vmem:[%s3164 + $0x1a8] sm:$0xff]
  %v3219 = vld [vmem:[%s3164 + $0x1b0] sm:$0xff]
  %v3220 = vld [vmem:[%s3164 + $0x1b8] sm:$0xff]
  %v3221 = vld [vmem:[%s3164 + $0x1c0] sm:$0xff]
  %v3222 = vld [vmem:[%s3164 + $0x1c8] sm:$0xff]
  %v3223 = vld [vmem:[%s3164 + $0x1d0] sm:$0xff]
  %v3224 = vld [vmem:[%s3164 + $0x1d8] sm:$0xff]
  %v3225 = vld [vmem:[%s3164 + $0x1e0] sm:$0xff]
  %v3226 = vld [vmem:[%s3164 + $0x1e8] sm:$0xff]
  %v3227 = vld [vmem:[%s3164 + $0x1f0] sm:$0xff]
  %v3228 = vld [vmem:[%s3164 + $0x1f8] sm:$0xff]
  %v3229 = vld [vmem:[%s3164 + $0x200] sm:$0xff]
  %v3230 = vld [vmem:[%s3164 + $0x208] sm:$0xff]
  %v3231 = vld [vmem:[%s3164 + $0x210] sm:$0xff]
  %v3232 = vld [vmem:[%s3164 + $0x218] sm:$0xff]
  %v3233 = vld [vmem:[%s3164 + $0x220] sm:$0xff]
  %v3234 = vld [vmem:[%s3164 + $0x228] sm:$0xff]
  %v3235 = vld [vmem:[%s3164 + $0x230] sm:$0xff]
  %v3236 = vld [vmem:[%s3164 + $0x238] sm:$0xff]
  %v3237 = vld [vmem:[%s3164 + $0x240] sm:$0xff]
  %v3238 = vld [vmem:[%s3164 + $0x248] sm:$0xff]
  %v3239 = vld [vmem:[%s3164 + $0x250] sm:$0xff]
  %v3240 = vld [vmem:[%s3164 + $0x258] sm:$0xff]
  %v3241 = vld [vmem:[%s3164 + $0x260] sm:$0xff]
  %v3242 = vld [vmem:[%s3164 + $0x268] sm:$0xff]
  %v3243 = vld [vmem:[%s3164 + $0x270] sm:$0xff]
  %v3244 = vld [vmem:[%s3164 + $0x278] sm:$0xff]
  %v3245 = vld [vmem:[%s3164 + $0x280] sm:$0xff]
  %v3246 = vld [vmem:[%s3164 + $0x288] sm:$0xff]
  %v3247 = vld [vmem:[%s3164 + $0x290] sm:$0xff]
  %v3248 = vld [vmem:[%s3164 + $0x298] sm:$0xff]
  %v3249 = vld [vmem:[%s3164 + $0x2a0] sm:$0xff]
  %v3250 = vld [vmem:[%s3164 + $0x2a8] sm:$0xff]
  %v3251 = vld [vmem:[%s3164 + $0x2b0] sm:$0xff]
  %v3252 = vld [vmem:[%s3164 + $0x2b8] sm:$0xff]
  %v3253 = vld [vmem:[%s3164 + $0x2c0] sm:$0xff]
  %v3254 = vld [vmem:[%s3164 + $0x2c8] sm:$0xff]
  %v3255 = vld [vmem:[%s3164 + $0x2d0] sm:$0xff]
  %v3256 = vld [vmem:[%s3164 + $0x2d8] sm:$0xff]
  %v3257 = vld [vmem:[%s3164 + $0x2e0] sm:$0xff]
  %v3258 = vld [vmem:[%s3164 + $0x2e8] sm:$0xff]
  %v3259 = vld [vmem:[%s3164 + $0x2f0] sm:$0xff]
  %v3260 = vld [vmem:[%s3164 + $0x2f8] sm:$0xff]
  %v3261 = vpack.c.bf16 %v2930, %v2926
  %v3262 = vpack.c.bf16 %v2932, %v2928
  %v3263 = vpack.c.bf16 %v3010, %v3006
  %v3264 = vpack.c.bf16 %v3012, %v3008
  %v3265 = vpack.c.bf16 %v3090, %v3086
  %v3266 = vpack.c.bf16 %v3092, %v3088
  %v3267 = vpack.c.bf16 %v2940, %v2936
  %v3268 = vpack.c.bf16 %v2942, %v2938
  %v3269 = vpack.c.bf16 %v3020, %v3016
  %v3270 = vpack.c.bf16 %v3022, %v3018
  %v3271 = vpack.c.bf16 %v3100, %v3096
  %v3272 = vpack.c.bf16 %v3102, %v3098
  %v3273 = vpack.c.bf16 %v2950, %v2946
  %v3274 = vpack.c.bf16 %v2952, %v2948
  %v3275 = vpack.c.bf16 %v3030, %v3026
  %v3276 = vpack.c.bf16 %v3032, %v3028
  %v3277 = vpack.c.bf16 %v3110, %v3106
  %v3278 = vpack.c.bf16 %v3112, %v3108
  %v3279 = vpack.c.bf16 %v2960, %v2956
  %v3280 = vpack.c.bf16 %v2962, %v2958
  %v3281 = vpack.c.bf16 %v3040, %v3036
  %v3282 = vpack.c.bf16 %v3042, %v3038
  %v3283 = vpack.c.bf16 %v3120, %v3116
  %v3284 = vpack.c.bf16 %v3122, %v3118
  %v3285 = vpack.c.bf16 %v2970, %v2966
  %v3286 = vpack.c.bf16 %v2972, %v2968
  %v3287 = vpack.c.bf16 %v3050, %v3046
  %v3288 = vpack.c.bf16 %v3052, %v3048
  %v3289 = vpack.c.bf16 %v3130, %v3126
  %v3290 = vpack.c.bf16 %v3132, %v3128
  %v3291 = vpack.c.bf16 %v2980, %v2976
  %v3292 = vpack.c.bf16 %v2982, %v2978
  %v3293 = vpack.c.bf16 %v3060, %v3056
  %v3294 = vpack.c.bf16 %v3062, %v3058
  %v3295 = vpack.c.bf16 %v3140, %v3136
  %v3296 = vpack.c.bf16 %v3142, %v3138
  %v3297 = vpack.c.bf16 %v2990, %v2986
  %v3298 = vpack.c.bf16 %v2992, %v2988
  %v3299 = vpack.c.bf16 %v3070, %v3066
  %v3300 = vpack.c.bf16 %v3072, %v3068
  %v3301 = vpack.c.bf16 %v3150, %v3146
  %v3302 = vpack.c.bf16 %v3152, %v3148
  %v3303 = vpack.c.bf16 %v3000, %v2996
  %v3304 = vpack.c.bf16 %v3002, %v2998
  %v3305 = vpack.c.bf16 %v3080, %v3076
  %v3306 = vpack.c.bf16 %v3082, %v3078
  %v3307 = vpack.c.bf16 %v3160, %v3156
  %v3308 = vpack.c.bf16 %v3162, %v3158
  %v3405 = vunpack.c.l.b16 %v3165
  %v3406 = vunpack.c.h.b16 %v3165
  %v3407 = vunpack.c.l.b16 %v3166
  %v3408 = vunpack.c.h.b16 %v3166
  %v3409 = vunpack.c.l.b16 %v3167
  %v3410 = vunpack.c.h.b16 %v3167
  %v3411 = vunpack.c.l.b16 %v3168
  %v3412 = vunpack.c.h.b16 %v3168
  %v3413 = vunpack.c.l.b16 %v3169
  %v3414 = vunpack.c.h.b16 %v3169
  %v3415 = vunpack.c.l.b16 %v3170
  %v3416 = vunpack.c.h.b16 %v3170
  %v3417 = vunpack.c.l.b16 %v3171
  %v3418 = vunpack.c.h.b16 %v3171
  %v3419 = vunpack.c.l.b16 %v3172
  %v3420 = vunpack.c.h.b16 %v3172
  %v3421 = vunpack.c.l.b16 %v3173
  %v3422 = vunpack.c.h.b16 %v3173
  %v3423 = vunpack.c.l.b16 %v3174
  %v3424 = vunpack.c.h.b16 %v3174
  %v3425 = vunpack.c.l.b16 %v3175
  %v3426 = vunpack.c.h.b16 %v3175
  %v3427 = vunpack.c.l.b16 %v3176
  %v3428 = vunpack.c.h.b16 %v3176
  %v3429 = vunpack.c.l.b16 %v3177
  %v3430 = vunpack.c.h.b16 %v3177
  %v3431 = vunpack.c.l.b16 %v3178
  %v3432 = vunpack.c.h.b16 %v3178
  %v3433 = vunpack.c.l.b16 %v3179
  %v3434 = vunpack.c.h.b16 %v3179
  %v3435 = vunpack.c.l.b16 %v3180
  %v3436 = vunpack.c.h.b16 %v3180
  %v3437 = vunpack.c.l.b16 %v3181
  %v3438 = vunpack.c.h.b16 %v3181
  %v3439 = vunpack.c.l.b16 %v3182
  %v3440 = vunpack.c.h.b16 %v3182
  %v3441 = vunpack.c.l.b16 %v3183
  %v3442 = vunpack.c.h.b16 %v3183
  %v3443 = vunpack.c.l.b16 %v3184
  %v3444 = vunpack.c.h.b16 %v3184
  %v3445 = vunpack.c.l.b16 %v3185
  %v3446 = vunpack.c.h.b16 %v3185
  %v3447 = vunpack.c.l.b16 %v3186
  %v3448 = vunpack.c.h.b16 %v3186
  %v3449 = vunpack.c.l.b16 %v3187
  %v3450 = vunpack.c.h.b16 %v3187
  %v3451 = vunpack.c.l.b16 %v3188
  %v3452 = vunpack.c.h.b16 %v3188
  %v3453 = vunpack.c.l.b16 %v3189
  %v3454 = vunpack.c.h.b16 %v3189
  %v3455 = vunpack.c.l.b16 %v3190
  %v3456 = vunpack.c.h.b16 %v3190
  %v3457 = vunpack.c.l.b16 %v3191
  %v3458 = vunpack.c.h.b16 %v3191
  %v3459 = vunpack.c.l.b16 %v3192
  %v3460 = vunpack.c.h.b16 %v3192
  %v3461 = vunpack.c.l.b16 %v3193
  %v3462 = vunpack.c.h.b16 %v3193
  %v3463 = vunpack.c.l.b16 %v3194
  %v3464 = vunpack.c.h.b16 %v3194
  %v3465 = vunpack.c.l.b16 %v3195
  %v3466 = vunpack.c.h.b16 %v3195
  %v3467 = vunpack.c.l.b16 %v3196
  %v3468 = vunpack.c.h.b16 %v3196
  %v3469 = vunpack.c.l.b16 %v3197
  %v3470 = vunpack.c.h.b16 %v3197
  %v3471 = vunpack.c.l.b16 %v3198
  %v3472 = vunpack.c.h.b16 %v3198
  %v3473 = vunpack.c.l.b16 %v3199
  %v3474 = vunpack.c.h.b16 %v3199
  %v3475 = vunpack.c.l.b16 %v3200
  %v3476 = vunpack.c.h.b16 %v3200
  %v3477 = vunpack.c.l.b16 %v3201
  %v3478 = vunpack.c.h.b16 %v3201
  %v3479 = vunpack.c.l.b16 %v3202
  %v3480 = vunpack.c.h.b16 %v3202
  %v3481 = vunpack.c.l.b16 %v3203
  %v3482 = vunpack.c.h.b16 %v3203
  %v3483 = vunpack.c.l.b16 %v3204
  %v3484 = vunpack.c.h.b16 %v3204
  %v3485 = vunpack.c.l.b16 %v3205
  %v3486 = vunpack.c.h.b16 %v3205
  %v3487 = vunpack.c.l.b16 %v3206
  %v3488 = vunpack.c.h.b16 %v3206
  %v3489 = vunpack.c.l.b16 %v3207
  %v3490 = vunpack.c.h.b16 %v3207
  %v3491 = vunpack.c.l.b16 %v3208
  %v3492 = vunpack.c.h.b16 %v3208
  %v3493 = vunpack.c.l.b16 %v3209
  %v3494 = vunpack.c.h.b16 %v3209
  %v3495 = vunpack.c.l.b16 %v3210
  %v3496 = vunpack.c.h.b16 %v3210
  %v3497 = vunpack.c.l.b16 %v3211
  %v3498 = vunpack.c.h.b16 %v3211
  %v3499 = vunpack.c.l.b16 %v3212
  %v3500 = vunpack.c.h.b16 %v3212
  %v3501 = vunpack.c.l.b16 %v3213
  %v3502 = vunpack.c.h.b16 %v3213
  %v3503 = vunpack.c.l.b16 %v3214
  %v3504 = vunpack.c.h.b16 %v3214
  %v3505 = vunpack.c.l.b16 %v3215
  %v3506 = vunpack.c.h.b16 %v3215
  %v3507 = vunpack.c.l.b16 %v3216
  %v3508 = vunpack.c.h.b16 %v3216
  %v3509 = vunpack.c.l.b16 %v3217
  %v3510 = vunpack.c.h.b16 %v3217
  %v3511 = vunpack.c.l.b16 %v3218
  %v3512 = vunpack.c.h.b16 %v3218
  %v3513 = vunpack.c.l.b16 %v3219
  %v3514 = vunpack.c.h.b16 %v3219
  %v3515 = vunpack.c.l.b16 %v3220
  %v3516 = vunpack.c.h.b16 %v3220
  %v3517 = vunpack.c.l.b16 %v3221
  %v3518 = vunpack.c.h.b16 %v3221
  %v3519 = vunpack.c.l.b16 %v3222
  %v3520 = vunpack.c.h.b16 %v3222
  %v3521 = vunpack.c.l.b16 %v3223
  %v3522 = vunpack.c.h.b16 %v3223
  %v3523 = vunpack.c.l.b16 %v3224
  %v3524 = vunpack.c.h.b16 %v3224
  %v3525 = vunpack.c.l.b16 %v3225
  %v3526 = vunpack.c.h.b16 %v3225
  %v3527 = vunpack.c.l.b16 %v3226
  %v3528 = vunpack.c.h.b16 %v3226
  %v3529 = vunpack.c.l.b16 %v3227
  %v3530 = vunpack.c.h.b16 %v3227
  %v3531 = vunpack.c.l.b16 %v3228
  %v3532 = vunpack.c.h.b16 %v3228
  %v3533 = vunpack.c.l.b16 %v3229
  %v3534 = vunpack.c.h.b16 %v3229
  %v3535 = vunpack.c.l.b16 %v3230
  %v3536 = vunpack.c.h.b16 %v3230
  %v3537 = vunpack.c.l.b16 %v3231
  %v3538 = vunpack.c.h.b16 %v3231
  %v3539 = vunpack.c.l.b16 %v3232
  %v3540 = vunpack.c.h.b16 %v3232
  %v3541 = vunpack.c.l.b16 %v3233
  %v3542 = vunpack.c.h.b16 %v3233
  %v3543 = vunpack.c.l.b16 %v3234
  %v3544 = vunpack.c.h.b16 %v3234
  %v3545 = vunpack.c.l.b16 %v3235
  %v3546 = vunpack.c.h.b16 %v3235
  %v3547 = vunpack.c.l.b16 %v3236
  %v3548 = vunpack.c.h.b16 %v3236
  %v3549 = vunpack.c.l.b16 %v3237
  %v3550 = vunpack.c.h.b16 %v3237
  %v3551 = vunpack.c.l.b16 %v3238
  %v3552 = vunpack.c.h.b16 %v3238
  %v3553 = vunpack.c.l.b16 %v3239
  %v3554 = vunpack.c.h.b16 %v3239
  %v3555 = vunpack.c.l.b16 %v3240
  %v3556 = vunpack.c.h.b16 %v3240
  %v3557 = vunpack.c.l.b16 %v3241
  %v3558 = vunpack.c.h.b16 %v3241
  %v3559 = vunpack.c.l.b16 %v3242
  %v3560 = vunpack.c.h.b16 %v3242
  %v3561 = vunpack.c.l.b16 %v3243
  %v3562 = vunpack.c.h.b16 %v3243
  %v3563 = vunpack.c.l.b16 %v3244
  %v3564 = vunpack.c.h.b16 %v3244
  %v3565 = vunpack.c.l.b16 %v3245
  %v3566 = vunpack.c.h.b16 %v3245
  %v3567 = vunpack.c.l.b16 %v3246
  %v3568 = vunpack.c.h.b16 %v3246
  %v3569 = vunpack.c.l.b16 %v3247
  %v3570 = vunpack.c.h.b16 %v3247
  %v3571 = vunpack.c.l.b16 %v3248
  %v3572 = vunpack.c.h.b16 %v3248
  %v3573 = vunpack.c.l.b16 %v3249
  %v3574 = vunpack.c.h.b16 %v3249
  %v3575 = vunpack.c.l.b16 %v3250
  %v3576 = vunpack.c.h.b16 %v3250
  %v3577 = vunpack.c.l.b16 %v3251
  %v3578 = vunpack.c.h.b16 %v3251
  %v3579 = vunpack.c.l.b16 %v3252
  %v3580 = vunpack.c.h.b16 %v3252
  %v3581 = vunpack.c.l.b16 %v3253
  %v3582 = vunpack.c.h.b16 %v3253
  %v3583 = vunpack.c.l.b16 %v3254
  %v3584 = vunpack.c.h.b16 %v3254
  %v3585 = vunpack.c.l.b16 %v3255
  %v3586 = vunpack.c.h.b16 %v3255
  %v3587 = vunpack.c.l.b16 %v3256
  %v3588 = vunpack.c.h.b16 %v3256
  %v3589 = vunpack.c.l.b16 %v3257
  %v3590 = vunpack.c.h.b16 %v3257
  %v3591 = vunpack.c.l.b16 %v3258
  %v3592 = vunpack.c.h.b16 %v3258
  %v3593 = vunpack.c.l.b16 %v3259
  %v3594 = vunpack.c.h.b16 %v3259
  %v3595 = vunpack.c.l.b16 %v3260
  %v3596 = vunpack.c.h.b16 %v3260
  %v3597 = vpack.c.b16 %v3407, %v3405
  %v3598 = vpack.c.b16 %v3408, %v3406
  %v3599 = vpack.c.b16 %v3411, %v3409
  %v3600 = vpack.c.b16 %v3412, %v3410
  %v3601 = vpack.c.b16 %v3415, %v3413
  %v3602 = vpack.c.b16 %v3416, %v3414
  %v3603 = vpack.c.b16 %v3419, %v3417
  %v3604 = vpack.c.b16 %v3420, %v3418
  %v3605 = vpack.c.b16 %v3423, %v3421
  %v3606 = vpack.c.b16 %v3424, %v3422
  %v3607 = vpack.c.b16 %v3427, %v3425
  %v3608 = vpack.c.b16 %v3428, %v3426
  %v3609 = vpack.c.b16 %v3431, %v3429
  %v3610 = vpack.c.b16 %v3432, %v3430
  %v3611 = vpack.c.b16 %v3435, %v3433
  %v3612 = vpack.c.b16 %v3436, %v3434
  %v3613 = vpack.c.b16 %v3439, %v3437
  %v3614 = vpack.c.b16 %v3440, %v3438
  %v3615 = vpack.c.b16 %v3443, %v3441
  %v3616 = vpack.c.b16 %v3444, %v3442
  %v3617 = vpack.c.b16 %v3447, %v3445
  %v3618 = vpack.c.b16 %v3448, %v3446
  %v3619 = vpack.c.b16 %v3451, %v3449
  %v3620 = vpack.c.b16 %v3452, %v3450
  %v3621 = vpack.c.b16 %v3455, %v3453
  %v3622 = vpack.c.b16 %v3456, %v3454
  %v3623 = vpack.c.b16 %v3459, %v3457
  %v3624 = vpack.c.b16 %v3460, %v3458
  %v3625 = vpack.c.b16 %v3463, %v3461
  %v3626 = vpack.c.b16 %v3464, %v3462
  %v3627 = vpack.c.b16 %v3467, %v3465
  %v3628 = vpack.c.b16 %v3468, %v3466
  %v3629 = vpack.c.b16 %v3471, %v3469
  %v3630 = vpack.c.b16 %v3472, %v3470
  %v3631 = vpack.c.b16 %v3475, %v3473
  %v3632 = vpack.c.b16 %v3476, %v3474
  %v3633 = vpack.c.b16 %v3479, %v3477
  %v3634 = vpack.c.b16 %v3480, %v3478
  %v3635 = vpack.c.b16 %v3483, %v3481
  %v3636 = vpack.c.b16 %v3484, %v3482
  %v3637 = vpack.c.b16 %v3487, %v3485
  %v3638 = vpack.c.b16 %v3488, %v3486
  %v3639 = vpack.c.b16 %v3491, %v3489
  %v3640 = vpack.c.b16 %v3492, %v3490
  %v3641 = vpack.c.b16 %v3495, %v3493
  %v3642 = vpack.c.b16 %v3496, %v3494
  %v3643 = vpack.c.b16 %v3499, %v3497
  %v3644 = vpack.c.b16 %v3500, %v3498
  %v3645 = vpack.c.b16 %v3503, %v3501
  %v3646 = vpack.c.b16 %v3504, %v3502
  %v3647 = vpack.c.b16 %v3507, %v3505
  %v3648 = vpack.c.b16 %v3508, %v3506
  %v3649 = vpack.c.b16 %v3511, %v3509
  %v3650 = vpack.c.b16 %v3512, %v3510
  %v3651 = vpack.c.b16 %v3515, %v3513
  %v3652 = vpack.c.b16 %v3516, %v3514
  %v3653 = vpack.c.b16 %v3519, %v3517
  %v3654 = vpack.c.b16 %v3520, %v3518
  %v3655 = vpack.c.b16 %v3523, %v3521
  %v3656 = vpack.c.b16 %v3524, %v3522
  %v3657 = vpack.c.b16 %v3527, %v3525
  %v3658 = vpack.c.b16 %v3528, %v3526
  %v3659 = vpack.c.b16 %v3531, %v3529
  %v3660 = vpack.c.b16 %v3532, %v3530
  %v3661 = vpack.c.b16 %v3535, %v3533
  %v3662 = vpack.c.b16 %v3536, %v3534
  %v3663 = vpack.c.b16 %v3539, %v3537
  %v3664 = vpack.c.b16 %v3540, %v3538
  %v3665 = vpack.c.b16 %v3543, %v3541
  %v3666 = vpack.c.b16 %v3544, %v3542
  %v3667 = vpack.c.b16 %v3547, %v3545
  %v3668 = vpack.c.b16 %v3548, %v3546
  %v3669 = vpack.c.b16 %v3551, %v3549
  %v3670 = vpack.c.b16 %v3552, %v3550
  %v3671 = vpack.c.b16 %v3555, %v3553
  %v3672 = vpack.c.b16 %v3556, %v3554
  %v3673 = vpack.c.b16 %v3559, %v3557
  %v3674 = vpack.c.b16 %v3560, %v3558
  %v3675 = vpack.c.b16 %v3563, %v3561
  %v3676 = vpack.c.b16 %v3564, %v3562
  %v3677 = vpack.c.b16 %v3567, %v3565
  %v3678 = vpack.c.b16 %v3568, %v3566
  %v3679 = vpack.c.b16 %v3571, %v3569
  %v3680 = vpack.c.b16 %v3572, %v3570
  %v3681 = vpack.c.b16 %v3575, %v3573
  %v3682 = vpack.c.b16 %v3576, %v3574
  %v3683 = vpack.c.b16 %v3579, %v3577
  %v3684 = vpack.c.b16 %v3580, %v3578
  %v3685 = vpack.c.b16 %v3583, %v3581
  %v3686 = vpack.c.b16 %v3584, %v3582
  %v3687 = vpack.c.b16 %v3587, %v3585
  %v3688 = vpack.c.b16 %v3588, %v3586
  %v3689 = vpack.c.b16 %v3591, %v3589
  %v3690 = vpack.c.b16 %v3592, %v3590
  %v3691 = vpack.c.b16 %v3595, %v3593
  %v3692 = vpack.c.b16 %v3596, %v3594
  %3789 = vmatprep.subr.bf16.mxu0 %v3612
  %3790 = vmatpush1.bf16.msra.mxu0 %v3611
  %3791 = vmatprep.subr.bf16.mxu0 %v3610
  %3792 = vmatpush1.bf16.msra.mxu0 %v3609
  %3793 = vmatprep.subr.bf16.mxu0 %v3608
  %3794 = vmatpush1.bf16.msra.mxu0 %v3607
  %3795 = vmatprep.subr.bf16.mxu0 %v3606
  %3796 = vmatpush1.bf16.msra.mxu0 %v3605
  %3797 = vmatprep.subr.bf16.mxu0 %v3604
  %3798 = vmatpush1.bf16.msra.mxu0 %v3603
  %3799 = vmatprep.subr.bf16.mxu0 %v3602
  %3800 = vmatpush1.bf16.msra.mxu0 %v3601
  %3801 = vmatprep.subr.bf16.mxu0 %v3600
  %3802 = vmatpush1.bf16.msra.mxu0 %v3599
  %3803 = vmatprep.subr.bf16.mxu0 %v3598
  %3804 = vmatpush1.bf16.msra.mxu0 %v3597
  %3805 = vmatprep.subr.bf16.mxu0 %v3628
  %3806 = vmatpush2.bf16.msra.mxu0 %v3627
  %3807 = vmatprep.subr.bf16.mxu0 %v3626
  %3808 = vmatpush2.bf16.msra.mxu0 %v3625
  %3809 = vmatprep.subr.bf16.mxu0 %v3624
  %3810 = vmatpush2.bf16.msra.mxu0 %v3623
  %3811 = vmatprep.subr.bf16.mxu0 %v3622
  %3812 = vmatpush2.bf16.msra.mxu0 %v3621
  %3813 = vmatprep.subr.bf16.mxu0 %v3620
  %3814 = vmatpush2.bf16.msra.mxu0 %v3619
  %3815 = vmatprep.subr.bf16.mxu0 %v3618
  %3816 = vmatpush2.bf16.msra.mxu0 %v3617
  %3817 = vmatprep.subr.bf16.mxu0 %v3616
  %3818 = vmatpush2.bf16.msra.mxu0 %v3615
  %3819 = vmatprep.subr.bf16.mxu0 %v3614
  %3820 = vmatpush2.bf16.msra.mxu0 %v3613
  %3821 = vmatprep.mubr.bf16.mxu0 %v3262
  %3822 = vmatmul.mubr.bf16.gmra.mxu0 %v3261
  %v3823 = vpop.f32.mrf.mxu0
  %v3824 = vadd.f32 0.0, %v3823
  %v3825 = vpop.f32.mrf.mxu0
  %v3826 = vadd.f32 0.0, %v3825
  %v3827 = vpop.f32.mrf.mxu0
  %v3828 = vadd.f32 0.0, %v3827
  %v3829 = vpop.f32.mrf.mxu0
  %v3830 = vadd.f32 0.0, %v3829
  %3831 = vmatprep.mubr.bf16.mxu0 %v3268
  %3832 = vmatmul.mubr.bf16.gmra.mxu0 %v3267
  %v3833 = vpop.f32.mrf.mxu0
  %v3834 = vadd.f32 0.0, %v3833
  %v3835 = vpop.f32.mrf.mxu0
  %v3836 = vadd.f32 0.0, %v3835
  %v3837 = vpop.f32.mrf.mxu0
  %v3838 = vadd.f32 0.0, %v3837
  %v3839 = vpop.f32.mrf.mxu0
  %v3840 = vadd.f32 0.0, %v3839
  %3841 = vmatprep.mubr.bf16.mxu0 %v3274
  %3842 = vmatmul.mubr.bf16.gmra.mxu0 %v3273
  %v3843 = vpop.f32.mrf.mxu0
  %v3844 = vadd.f32 0.0, %v3843
  %v3845 = vpop.f32.mrf.mxu0
  %v3846 = vadd.f32 0.0, %v3845
  %v3847 = vpop.f32.mrf.mxu0
  %v3848 = vadd.f32 0.0, %v3847
  %v3849 = vpop.f32.mrf.mxu0
  %v3850 = vadd.f32 0.0, %v3849
  %3851 = vmatprep.mubr.bf16.mxu0 %v3280
  %3852 = vmatmul.mubr.bf16.gmra.mxu0 %v3279
  %v3853 = vpop.f32.mrf.mxu0
  %v3854 = vadd.f32 0.0, %v3853
  %v3855 = vpop.f32.mrf.mxu0
  %v3856 = vadd.f32 0.0, %v3855
  %v3857 = vpop.f32.mrf.mxu0
  %v3858 = vadd.f32 0.0, %v3857
  %v3859 = vpop.f32.mrf.mxu0
  %v3860 = vadd.f32 0.0, %v3859
  %3861 = vmatprep.mubr.bf16.mxu0 %v3286
  %3862 = vmatmul.mubr.bf16.gmra.mxu0 %v3285
  %v3863 = vpop.f32.mrf.mxu0
  %v3864 = vadd.f32 0.0, %v3863
  %v3865 = vpop.f32.mrf.mxu0
  %v3866 = vadd.f32 0.0, %v3865
  %v3867 = vpop.f32.mrf.mxu0
  %v3868 = vadd.f32 0.0, %v3867
  %v3869 = vpop.f32.mrf.mxu0
  %v3870 = vadd.f32 0.0, %v3869
  %3871 = vmatprep.mubr.bf16.mxu0 %v3292
  %3872 = vmatmul.mubr.bf16.gmra.mxu0 %v3291
  %v3873 = vpop.f32.mrf.mxu0
  %v3874 = vadd.f32 0.0, %v3873
  %v3875 = vpop.f32.mrf.mxu0
  %v3876 = vadd.f32 0.0, %v3875
  %v3877 = vpop.f32.mrf.mxu0
  %v3878 = vadd.f32 0.0, %v3877
  %v3879 = vpop.f32.mrf.mxu0
  %v3880 = vadd.f32 0.0, %v3879
  %3881 = vmatprep.mubr.bf16.mxu0 %v3298
  %3882 = vmatmul.mubr.bf16.gmra.mxu0 %v3297
  %v3883 = vpop.f32.mrf.mxu0
  %v3884 = vadd.f32 0.0, %v3883
  %v3885 = vpop.f32.mrf.mxu0
  %v3886 = vadd.f32 0.0, %v3885
  %v3887 = vpop.f32.mrf.mxu0
  %v3888 = vadd.f32 0.0, %v3887
  %v3889 = vpop.f32.mrf.mxu0
  %v3890 = vadd.f32 0.0, %v3889
  %3891 = vmatprep.mubr.bf16.mxu0 %v3304
  %3892 = vmatmul.mubr.bf16.gmra.mxu0 %v3303
  %v3893 = vpop.f32.mrf.mxu0
  %v3894 = vadd.f32 0.0, %v3893
  %v3895 = vpop.f32.mrf.mxu0
  %v3896 = vadd.f32 0.0, %v3895
  %v3897 = vpop.f32.mrf.mxu0
  %v3898 = vadd.f32 0.0, %v3897
  %v3899 = vpop.f32.mrf.mxu0
  %v3900 = vadd.f32 0.0, %v3899
  %3901 = vdwg.mxu0
  %3902 = vmatprep.subr.bf16.mxu0 %v3644
  %3903 = vmatpush1.bf16.msra.mxu0 %v3643
  %3904 = vmatprep.subr.bf16.mxu0 %v3642
  %3905 = vmatpush1.bf16.msra.mxu0 %v3641
  %3906 = vmatprep.subr.bf16.mxu0 %v3640
  %3907 = vmatpush1.bf16.msra.mxu0 %v3639
  %3908 = vmatprep.subr.bf16.mxu0 %v3638
  %3909 = vmatpush1.bf16.msra.mxu0 %v3637
  %3910 = vmatprep.subr.bf16.mxu0 %v3636
  %3911 = vmatpush1.bf16.msra.mxu0 %v3635
  %3912 = vmatprep.subr.bf16.mxu0 %v3634
  %3913 = vmatpush1.bf16.msra.mxu0 %v3633
  %3914 = vmatprep.subr.bf16.mxu0 %v3632
  %3915 = vmatpush1.bf16.msra.mxu0 %v3631
  %3916 = vmatprep.subr.bf16.mxu0 %v3630
  %3917 = vmatpush1.bf16.msra.mxu0 %v3629
  %3918 = vmatprep.subr.bf16.mxu0 %v3660
  %3919 = vmatpush2.bf16.msra.mxu0 %v3659
  %3920 = vmatprep.subr.bf16.mxu0 %v3658
  %3921 = vmatpush2.bf16.msra.mxu0 %v3657
  %3922 = vmatprep.subr.bf16.mxu0 %v3656
  %3923 = vmatpush2.bf16.msra.mxu0 %v3655
  %3924 = vmatprep.subr.bf16.mxu0 %v3654
  %3925 = vmatpush2.bf16.msra.mxu0 %v3653
  %3926 = vmatprep.subr.bf16.mxu0 %v3652
  %3927 = vmatpush2.bf16.msra.mxu0 %v3651
  %3928 = vmatprep.subr.bf16.mxu0 %v3650
  %3929 = vmatpush2.bf16.msra.mxu0 %v3649
  %3930 = vmatprep.subr.bf16.mxu0 %v3648
  %3931 = vmatpush2.bf16.msra.mxu0 %v3647
  %3932 = vmatprep.subr.bf16.mxu0 %v3646
  %3933 = vmatpush2.bf16.msra.mxu0 %v3645
  %3934 = vmatprep.mubr.bf16.mxu0 %v3264
  %3935 = vmatmul.mubr.bf16.gmra.mxu0 %v3263
  %v3936 = vpop.f32.mrf.mxu0
  %v3937 = vadd.f32 %v3824, %v3936
  %v3938 = vpop.f32.mrf.mxu0
  %v3939 = vadd.f32 %v3826, %v3938
  %v3940 = vpop.f32.mrf.mxu0
  %v3941 = vadd.f32 %v3828, %v3940
  %v3942 = vpop.f32.mrf.mxu0
  %v3943 = vadd.f32 %v3830, %v3942
  %3944 = vmatprep.mubr.bf16.mxu0 %v3270
  %3945 = vmatmul.mubr.bf16.gmra.mxu0 %v3269
  %v3946 = vpop.f32.mrf.mxu0
  %v3947 = vadd.f32 %v3834, %v3946
  %v3948 = vpop.f32.mrf.mxu0
  %v3949 = vadd.f32 %v3836, %v3948
  %v3950 = vpop.f32.mrf.mxu0
  %v3951 = vadd.f32 %v3838, %v3950
  %v3952 = vpop.f32.mrf.mxu0
  %v3953 = vadd.f32 %v3840, %v3952
  %3954 = vmatprep.mubr.bf16.mxu0 %v3276
  %3955 = vmatmul.mubr.bf16.gmra.mxu0 %v3275
  %v3956 = vpop.f32.mrf.mxu0
  %v3957 = vadd.f32 %v3844, %v3956
  %v3958 = vpop.f32.mrf.mxu0
  %v3959 = vadd.f32 %v3846, %v3958
  %v3960 = vpop.f32.mrf.mxu0
  %v3961 = vadd.f32 %v3848, %v3960
  %v3962 = vpop.f32.mrf.mxu0
  %v3963 = vadd.f32 %v3850, %v3962
  %3964 = vmatprep.mubr.bf16.mxu0 %v3282
  %3965 = vmatmul.mubr.bf16.gmra.mxu0 %v3281
  %v3966 = vpop.f32.mrf.mxu0
  %v3967 = vadd.f32 %v3854, %v3966
  %v3968 = vpop.f32.mrf.mxu0
  %v3969 = vadd.f32 %v3856, %v3968
  %v3970 = vpop.f32.mrf.mxu0
  %v3971 = vadd.f32 %v3858, %v3970
  %v3972 = vpop.f32.mrf.mxu0
  %v3973 = vadd.f32 %v3860, %v3972
  %3974 = vmatprep.mubr.bf16.mxu0 %v3288
  %3975 = vmatmul.mubr.bf16.gmra.mxu0 %v3287
  %v3976 = vpop.f32.mrf.mxu0
  %v3977 = vadd.f32 %v3864, %v3976
  %v3978 = vpop.f32.mrf.mxu0
  %v3979 = vadd.f32 %v3866, %v3978
  %v3980 = vpop.f32.mrf.mxu0
  %v3981 = vadd.f32 %v3868, %v3980
  %v3982 = vpop.f32.mrf.mxu0
  %v3983 = vadd.f32 %v3870, %v3982
  %3984 = vmatprep.mubr.bf16.mxu0 %v3294
  %3985 = vmatmul.mubr.bf16.gmra.mxu0 %v3293
  %v3986 = vpop.f32.mrf.mxu0
  %v3987 = vadd.f32 %v3874, %v3986
  %v3988 = vpop.f32.mrf.mxu0
  %v3989 = vadd.f32 %v3876, %v3988
  %v3990 = vpop.f32.mrf.mxu0
  %v3991 = vadd.f32 %v3878, %v3990
  %v3992 = vpop.f32.mrf.mxu0
  %v3993 = vadd.f32 %v3880, %v3992
  %3994 = vmatprep.mubr.bf16.mxu0 %v3300
  %3995 = vmatmul.mubr.bf16.gmra.mxu0 %v3299
  %v3996 = vpop.f32.mrf.mxu0
  %v3997 = vadd.f32 %v3884, %v3996
  %v3998 = vpop.f32.mrf.mxu0
  %v3999 = vadd.f32 %v3886, %v3998
  %v4000 = vpop.f32.mrf.mxu0
  %v4001 = vadd.f32 %v3888, %v4000
  %v4002 = vpop.f32.mrf.mxu0
  %v4003 = vadd.f32 %v3890, %v4002
  %4004 = vmatprep.mubr.bf16.mxu0 %v3306
  %4005 = vmatmul.mubr.bf16.gmra.mxu0 %v3305
  %v4006 = vpop.f32.mrf.mxu0
  %v4007 = vadd.f32 %v3894, %v4006
  %v4008 = vpop.f32.mrf.mxu0
  %v4009 = vadd.f32 %v3896, %v4008
  %v4010 = vpop.f32.mrf.mxu0
  %v4011 = vadd.f32 %v3898, %v4010
  %v4012 = vpop.f32.mrf.mxu0
  %v4013 = vadd.f32 %v3900, %v4012
  %4014 = vdwg.mxu0
  %4015 = vmatprep.subr.bf16.mxu0 %v3676
  %4016 = vmatpush1.bf16.msra.mxu0 %v3675
  %4017 = vmatprep.subr.bf16.mxu0 %v3674
  %4018 = vmatpush1.bf16.msra.mxu0 %v3673
  %4019 = vmatprep.subr.bf16.mxu0 %v3672
  %4020 = vmatpush1.bf16.msra.mxu0 %v3671
  %4021 = vmatprep.subr.bf16.mxu0 %v3670
  %4022 = vmatpush1.bf16.msra.mxu0 %v3669
  %4023 = vmatprep.subr.bf16.mxu0 %v3668
  %4024 = vmatpush1.bf16.msra.mxu0 %v3667
  %4025 = vmatprep.subr.bf16.mxu0 %v3666
  %4026 = vmatpush1.bf16.msra.mxu0 %v3665
  %4027 = vmatprep.subr.bf16.mxu0 %v3664
  %4028 = vmatpush1.bf16.msra.mxu0 %v3663
  %4029 = vmatprep.subr.bf16.mxu0 %v3662
  %4030 = vmatpush1.bf16.msra.mxu0 %v3661
  %4031 = vmatprep.subr.bf16.mxu0 %v3692
  %4032 = vmatpush2.bf16.msra.mxu0 %v3691
  %4033 = vmatprep.subr.bf16.mxu0 %v3690
  %4034 = vmatpush2.bf16.msra.mxu0 %v3689
  %4035 = vmatprep.subr.bf16.mxu0 %v3688
  %4036 = vmatpush2.bf16.msra.mxu0 %v3687
  %4037 = vmatprep.subr.bf16.mxu0 %v3686
  %4038 = vmatpush2.bf16.msra.mxu0 %v3685
  %4039 = vmatprep.subr.bf16.mxu0 %v3684
  %4040 = vmatpush2.bf16.msra.mxu0 %v3683
  %4041 = vmatprep.subr.bf16.mxu0 %v3682
  %4042 = vmatpush2.bf16.msra.mxu0 %v3681
  %4043 = vmatprep.subr.bf16.mxu0 %v3680
  %4044 = vmatpush2.bf16.msra.mxu0 %v3679
  %4045 = vmatprep.subr.bf16.mxu0 %v3678
  %4046 = vmatpush2.bf16.msra.mxu0 %v3677
  %4047 = vmatprep.mubr.bf16.mxu0 %v3266
  %4048 = vmatmul.mubr.bf16.gmra.mxu0 %v3265
  %v4049 = vpop.f32.mrf.mxu0
  %v4050 = vadd.f32 %v3937, %v4049
  %v4051 = vpop.f32.mrf.mxu0
  %v4052 = vadd.f32 %v3939, %v4051
  %v4053 = vpop.f32.mrf.mxu0
  %v4054 = vadd.f32 %v3941, %v4053
  %v4055 = vpop.f32.mrf.mxu0
  %v4056 = vadd.f32 %v3943, %v4055
  %4057 = vmatprep.mubr.bf16.mxu0 %v3272
  %4058 = vmatmul.mubr.bf16.gmra.mxu0 %v3271
  %v4059 = vpop.f32.mrf.mxu0
  %v4060 = vadd.f32 %v3947, %v4059
  %v4061 = vpop.f32.mrf.mxu0
  %v4062 = vadd.f32 %v3949, %v4061
  %v4063 = vpop.f32.mrf.mxu0
  %v4064 = vadd.f32 %v3951, %v4063
  %v4065 = vpop.f32.mrf.mxu0
  %v4066 = vadd.f32 %v3953, %v4065
  %4067 = vmatprep.mubr.bf16.mxu0 %v3278
  %4068 = vmatmul.mubr.bf16.gmra.mxu0 %v3277
  %v4069 = vpop.f32.mrf.mxu0
  %v4070 = vadd.f32 %v3957, %v4069
  %v4071 = vpop.f32.mrf.mxu0
  %v4072 = vadd.f32 %v3959, %v4071
  %v4073 = vpop.f32.mrf.mxu0
  %v4074 = vadd.f32 %v3961, %v4073
  %v4075 = vpop.f32.mrf.mxu0
  %v4076 = vadd.f32 %v3963, %v4075
  %4077 = vmatprep.mubr.bf16.mxu0 %v3284
  %4078 = vmatmul.mubr.bf16.gmra.mxu0 %v3283
  %v4079 = vpop.f32.mrf.mxu0
  %v4080 = vadd.f32 %v3967, %v4079
  %v4081 = vpop.f32.mrf.mxu0
  %v4082 = vadd.f32 %v3969, %v4081
  %v4083 = vpop.f32.mrf.mxu0
  %v4084 = vadd.f32 %v3971, %v4083
  %v4085 = vpop.f32.mrf.mxu0
  %v4086 = vadd.f32 %v3973, %v4085
  %4087 = vmatprep.mubr.bf16.mxu0 %v3290
  %4088 = vmatmul.mubr.bf16.gmra.mxu0 %v3289
  %v4089 = vpop.f32.mrf.mxu0
  %v4090 = vadd.f32 %v3977, %v4089
  %v4091 = vpop.f32.mrf.mxu0
  %v4092 = vadd.f32 %v3979, %v4091
  %v4093 = vpop.f32.mrf.mxu0
  %v4094 = vadd.f32 %v3981, %v4093
  %v4095 = vpop.f32.mrf.mxu0
  %v4096 = vadd.f32 %v3983, %v4095
  %4097 = vmatprep.mubr.bf16.mxu0 %v3296
  %4098 = vmatmul.mubr.bf16.gmra.mxu0 %v3295
  %v4099 = vpop.f32.mrf.mxu0
  %v4100 = vadd.f32 %v3987, %v4099
  %v4101 = vpop.f32.mrf.mxu0
  %v4102 = vadd.f32 %v3989, %v4101
  %v4103 = vpop.f32.mrf.mxu0
  %v4104 = vadd.f32 %v3991, %v4103
  %v4105 = vpop.f32.mrf.mxu0
  %v4106 = vadd.f32 %v3993, %v4105
  %4107 = vmatprep.mubr.bf16.mxu0 %v3302
  %4108 = vmatmul.mubr.bf16.gmra.mxu0 %v3301
  %v4109 = vpop.f32.mrf.mxu0
  %v4110 = vadd.f32 %v3997, %v4109
  %v4111 = vpop.f32.mrf.mxu0
  %v4112 = vadd.f32 %v3999, %v4111
  %v4113 = vpop.f32.mrf.mxu0
  %v4114 = vadd.f32 %v4001, %v4113
  %v4115 = vpop.f32.mrf.mxu0
  %v4116 = vadd.f32 %v4003, %v4115
  %4117 = vmatprep.mubr.bf16.mxu0 %v3308
  %4118 = vmatmul.mubr.bf16.gmra.mxu0 %v3307
  %v4119 = vpop.f32.mrf.mxu0
  %v4120 = vadd.f32 %v4007, %v4119
  %v4121 = vpop.f32.mrf.mxu0
  %v4122 = vadd.f32 %v4009, %v4121
  %v4123 = vpop.f32.mrf.mxu0
  %v4124 = vadd.f32 %v4011, %v4123
  %v4125 = vpop.f32.mrf.mxu0
  %v4126 = vadd.f32 %v4013, %v4125
  %4127 = vdwg.mxu0
  %s4128 = scalar_lea.vmem %s8, 4
  %v4129 = vld [vmem:[%s4128] ss:$8 sm:$0x3]
  %s4130 = scalar_lea.vmem %s8, 5
  %v4131 = vld [vmem:[%s4130] ss:$8 sm:$0x3]
  %v4132 = vadd.f32 %v4050, %v4054
  %v4133 = vadd.f32 %v4132, %v4060
  %v4134 = vadd.f32 %v4133, %v4064
  %v4135 = vadd.f32 %v4134, %v4070
  %v4136 = vadd.f32 %v4135, %v4074
  %v4137 = vadd.f32 %v4136, %v4080
  %v4138 = vadd.f32 %v4137, %v4084
  %v4139 = vrot.slane %v4138, 4
  %v4140 = vadd.f32 %v4138, %v4139
  %v4141 = vrot.slane %v4140, 2
  %v4142 = vadd.f32 %v4140, %v4141
  %v4143 = vrot.slane %v4142, 1
  %v4144 = vadd.f32 %v4142, %v4143
  %v4145 = vadd.f32 %v4052, %v4056
  %v4146 = vadd.f32 %v4145, %v4062
  %v4147 = vadd.f32 %v4146, %v4066
  %v4148 = vadd.f32 %v4147, %v4072
  %v4149 = vadd.f32 %v4148, %v4076
  %v4150 = vadd.f32 %v4149, %v4082
  %v4151 = vadd.f32 %v4150, %v4086
  %v4152 = vrot.slane %v4151, 4
  %v4153 = vadd.f32 %v4151, %v4152
  %v4154 = vrot.slane %v4153, 2
  %v4155 = vadd.f32 %v4153, %v4154
  %v4156 = vrot.slane %v4155, 1
  %v4157 = vadd.f32 %v4155, %v4156
  %4158 = vrot.lane.b32.xlu0 %v4144, 8
  %v4159 = vpop.permute.xlu0 %4158
  %4160 = vrot.lane.b32.xlu0 %v4157, 8
  %v4161 = vpop.permute.xlu0 %4160
  %vm4162 = vcmp.lt.s32.totalorder %v968, 8
  %v4163 = vsel %vm4162, %v4159, %v4161
  %v4164 = vsel %vm4162, %v4161, %v4159
  %v4165 = vadd.f32 %v4144, %v4164
  %v4166 = vadd.f32 %v4157, %v4163
  %4167 = vrot.lane.b32.xlu0 %v4165, 16
  %v4168 = vpop.permute.xlu0 %4167
  %4169 = vrot.lane.b32.xlu0 %v4166, 16
  %v4170 = vpop.permute.xlu0 %4169
  %v4171 = vsel %vm2326, %v4168, %v4170
  %v4172 = vsel %vm2326, %v4170, %v4168
  %v4173 = vadd.f32 %v4165, %v4172
  %v4174 = vadd.f32 %v4166, %v4171
  %4175 = vrot.lane.b32.xlu0 %v4173, 32
  %v4176 = vpop.permute.xlu0 %4175
  %4177 = vrot.lane.b32.xlu0 %v4174, 32
  %v4178 = vpop.permute.xlu0 %4177
  %v4179 = vsel %vm969, %v4176, %v4178
  %v4180 = vsel %vm969, %v4178, %v4176
  %v4181 = vadd.f32 %v4173, %v4180
  %v4182 = vadd.f32 %v4174, %v4179
  %4183 = vrot.lane.b32.xlu0 %v4181, 64
  %v4184 = vpop.permute.xlu0 %4183
  %4185 = vrot.lane.b32.xlu0 %v4182, 64
  %v4186 = vpop.permute.xlu0 %4185
  %v4187 = vsel %vm978, %v4184, %v4186
  %v4188 = vsel %vm978, %v4186, %v4184
  %v4189 = vadd.f32 %v4181, %v4188
  %v4190 = vadd.f32 %v4182, %v4187
  %v4191 = vadd.f32 %v4189, %v4190
  %v4192 = vmul.f32 %v4191, 0.00048828125
  %v4193 = vlaneseq
  %v4194 = vshrl.u32 %v4193, 7
  %v4195 = vsub.s32 0, %v4194
  %v4196 = vrot.slane %v4192, %v4195
  %v4197 = vsub.f32 %v4050, %v4196
  %v4198 = vsub.f32 %v4052, %v4196
  %v4199 = vsub.f32 %v4054, %v4196
  %v4200 = vsub.f32 %v4056, %v4196
  %v4201 = vsub.f32 %v4060, %v4196
  %v4202 = vsub.f32 %v4062, %v4196
  %v4203 = vsub.f32 %v4064, %v4196
  %v4204 = vsub.f32 %v4066, %v4196
  %v4205 = vsub.f32 %v4070, %v4196
  %v4206 = vsub.f32 %v4072, %v4196
  %v4207 = vsub.f32 %v4074, %v4196
  %v4208 = vsub.f32 %v4076, %v4196
  %v4209 = vsub.f32 %v4080, %v4196
  %v4210 = vsub.f32 %v4082, %v4196
  %v4211 = vsub.f32 %v4084, %v4196
  %v4212 = vsub.f32 %v4086, %v4196
  %v4213 = vmul.f32 %v4197, %v4197
  %v4214 = vmul.f32 %v4198, %v4198
  %v4215 = vmul.f32 %v4199, %v4199
  %v4216 = vmul.f32 %v4200, %v4200
  %v4217 = vmul.f32 %v4201, %v4201
  %v4218 = vmul.f32 %v4202, %v4202
  %v4219 = vmul.f32 %v4203, %v4203
  %v4220 = vmul.f32 %v4204, %v4204
  %v4221 = vmul.f32 %v4205, %v4205
  %v4222 = vmul.f32 %v4206, %v4206
  %v4223 = vmul.f32 %v4207, %v4207
  %v4224 = vmul.f32 %v4208, %v4208
  %v4225 = vmul.f32 %v4209, %v4209
  %v4226 = vmul.f32 %v4210, %v4210
  %v4227 = vmul.f32 %v4211, %v4211
  %v4228 = vmul.f32 %v4212, %v4212
  %v4229 = vadd.f32 %v4213, %v4215
  %v4230 = vadd.f32 %v4229, %v4217
  %v4231 = vadd.f32 %v4230, %v4219
  %v4232 = vadd.f32 %v4231, %v4221
  %v4233 = vadd.f32 %v4232, %v4223
  %v4234 = vadd.f32 %v4233, %v4225
  %v4235 = vadd.f32 %v4234, %v4227
  %v4236 = vrot.slane %v4235, 4
  %v4237 = vadd.f32 %v4235, %v4236
  %v4238 = vrot.slane %v4237, 2
  %v4239 = vadd.f32 %v4237, %v4238
  %v4240 = vrot.slane %v4239, 1
  %v4241 = vadd.f32 %v4239, %v4240
  %v4242 = vadd.f32 %v4214, %v4216
  %v4243 = vadd.f32 %v4242, %v4218
  %v4244 = vadd.f32 %v4243, %v4220
  %v4245 = vadd.f32 %v4244, %v4222
  %v4246 = vadd.f32 %v4245, %v4224
  %v4247 = vadd.f32 %v4246, %v4226
  %v4248 = vadd.f32 %v4247, %v4228
  %v4249 = vrot.slane %v4248, 4
  %v4250 = vadd.f32 %v4248, %v4249
  %v4251 = vrot.slane %v4250, 2
  %v4252 = vadd.f32 %v4250, %v4251
  %v4253 = vrot.slane %v4252, 1
  %v4254 = vadd.f32 %v4252, %v4253
  %4255 = vrot.lane.b32.xlu0 %v4241, 8
  %v4256 = vpop.permute.xlu0 %4255
  %4257 = vrot.lane.b32.xlu0 %v4254, 8
  %v4258 = vpop.permute.xlu0 %4257
  %v4259 = vsel %vm4162, %v4256, %v4258
  %v4260 = vsel %vm4162, %v4258, %v4256
  %v4261 = vadd.f32 %v4241, %v4260
  %v4262 = vadd.f32 %v4254, %v4259
  %4263 = vrot.lane.b32.xlu0 %v4261, 16
  %v4264 = vpop.permute.xlu0 %4263
  %4265 = vrot.lane.b32.xlu0 %v4262, 16
  %v4266 = vpop.permute.xlu0 %4265
  %v4267 = vsel %vm2326, %v4264, %v4266
  %v4268 = vsel %vm2326, %v4266, %v4264
  %v4269 = vadd.f32 %v4261, %v4268
  %v4270 = vadd.f32 %v4262, %v4267
  %4271 = vrot.lane.b32.xlu0 %v4269, 32
  %v4272 = vpop.permute.xlu0 %4271
  %4273 = vrot.lane.b32.xlu0 %v4270, 32
  %v4274 = vpop.permute.xlu0 %4273
  %v4275 = vsel %vm969, %v4272, %v4274
  %v4276 = vsel %vm969, %v4274, %v4272
  %v4277 = vadd.f32 %v4269, %v4276
  %v4278 = vadd.f32 %v4270, %v4275
  %4279 = vrot.lane.b32.xlu0 %v4277, 64
  %v4280 = vpop.permute.xlu0 %4279
  %4281 = vrot.lane.b32.xlu0 %v4278, 64
  %v4282 = vpop.permute.xlu0 %4281
  %v4283 = vsel %vm978, %v4280, %v4282
  %v4284 = vsel %vm978, %v4282, %v4280
  %v4285 = vadd.f32 %v4277, %v4284
  %v4286 = vadd.f32 %v4278, %v4283
  %v4287 = vadd.f32 %v4285, %v4286
  %v4288 = vmul.f32 %v4287, 0.00048828125
  %v4289 = vadd.f32 %v4288, 1e-05
  %v4290 = vrsqrt.pop %v4289
  %v4292 = vcombine.low %v4290, %v4290
  %v4294 = vunpack.c.l.s4 1966171168
  %v4295 = vunpack.c.0.s8 %v4294
  %v4296 = vlaneseq
  %v4297 = vshrl.u32 %v4296, 7
  %v4298 = vsub.s32 %v4295, %v4297
  %v4299 = vrot.slane %v4292, %v4298
  %v4301 = vunpack.c.l.s4 1966171168
  %v4302 = vunpack.c.0.s8 %v4301
  %v4303 = vlaneseq
  %v4304 = vshrl.u32 %v4303, 7
  %v4305 = vsub.s32 %v4302, %v4304
  %v4306 = vrot.slane %v4299, %v4305
  %v4308 = vmul.f32 %v4129, %v4306
  %v4310 = vlaneseq
  %v4311 = vshrl.u32 %v4310, 7
  %v4312 = vsub.s32 0, %v4311
  %v4313 = vrot.slane %v4308, %v4312
  %v4314 = vlaneseq
  %v4315 = vshrl.u32 %v4314, 7
  %v4316 = vsub.s32 1, %v4315
  %v4317 = vrot.slane %v4308, %v4316
  %v4320 = vmul.f32 %v4197, %v4313
  %v4321 = vmul.f32 %v4198, %v4317
  %v4322 = vmul.f32 %v4199, %v4313
  %v4323 = vmul.f32 %v4200, %v4317
  %v4324 = vmul.f32 %v4201, %v4313
  %v4325 = vmul.f32 %v4202, %v4317
  %v4326 = vmul.f32 %v4203, %v4313
  %v4327 = vmul.f32 %v4204, %v4317
  %v4328 = vmul.f32 %v4205, %v4313
  %v4329 = vmul.f32 %v4206, %v4317
  %v4330 = vmul.f32 %v4207, %v4313
  %v4331 = vmul.f32 %v4208, %v4317
  %v4332 = vmul.f32 %v4209, %v4313
  %v4333 = vmul.f32 %v4210, %v4317
  %v4334 = vmul.f32 %v4211, %v4313
  %v4335 = vmul.f32 %v4212, %v4317
  %v4337 = vlaneseq
  %v4338 = vshrl.u32 %v4337, 7
  %v4339 = vsub.s32 0, %v4338
  %v4340 = vrot.slane %v4131, %v4339
  %v4341 = vlaneseq
  %v4342 = vshrl.u32 %v4341, 7
  %v4343 = vsub.s32 1, %v4342
  %v4344 = vrot.slane %v4131, %v4343
  %v4347 = vadd.f32 %v4320, %v4340
  %v4348 = vadd.f32 %v4321, %v4344
  %v4349 = vadd.f32 %v4322, %v4340
  %v4350 = vadd.f32 %v4323, %v4344
  %v4351 = vadd.f32 %v4324, %v4340
  %v4352 = vadd.f32 %v4325, %v4344
  %v4353 = vadd.f32 %v4326, %v4340
  %v4354 = vadd.f32 %v4327, %v4344
  %v4355 = vadd.f32 %v4328, %v4340
  %v4356 = vadd.f32 %v4329, %v4344
  %v4357 = vadd.f32 %v4330, %v4340
  %v4358 = vadd.f32 %v4331, %v4344
  %v4359 = vadd.f32 %v4332, %v4340
  %v4360 = vadd.f32 %v4333, %v4344
  %v4361 = vadd.f32 %v4334, %v4340
  %v4362 = vadd.f32 %v4335, %v4344
  %v4363 = vmax.f32 %v4347, 0.0
  %v4364 = vmax.f32 %v4348, 0.0
  %v4365 = vmax.f32 %v4349, 0.0
  %v4366 = vmax.f32 %v4350, 0.0
  %v4367 = vmax.f32 %v4351, 0.0
  %v4368 = vmax.f32 %v4352, 0.0
  %v4369 = vmax.f32 %v4353, 0.0
  %v4370 = vmax.f32 %v4354, 0.0
  %v4371 = vmax.f32 %v4355, 0.0
  %v4372 = vmax.f32 %v4356, 0.0
  %v4373 = vmax.f32 %v4357, 0.0
  %v4374 = vmax.f32 %v4358, 0.0
  %v4375 = vmax.f32 %v4359, 0.0
  %v4376 = vmax.f32 %v4360, 0.0
  %v4377 = vmax.f32 %v4361, 0.0
  %v4378 = vmax.f32 %v4362, 0.0
  %v4379 = vadd.f32 %v4090, %v4094
  %v4380 = vadd.f32 %v4379, %v4100
  %v4381 = vadd.f32 %v4380, %v4104
  %v4382 = vadd.f32 %v4381, %v4110
  %v4383 = vadd.f32 %v4382, %v4114
  %v4384 = vadd.f32 %v4383, %v4120
  %v4385 = vadd.f32 %v4384, %v4124
  %v4386 = vrot.slane %v4385, 4
  %v4387 = vadd.f32 %v4385, %v4386
  %v4388 = vrot.slane %v4387, 2
  %v4389 = vadd.f32 %v4387, %v4388
  %v4390 = vrot.slane %v4389, 1
  %v4391 = vadd.f32 %v4389, %v4390
  %v4392 = vadd.f32 %v4092, %v4096
  %v4393 = vadd.f32 %v4392, %v4102
  %v4394 = vadd.f32 %v4393, %v4106
  %v4395 = vadd.f32 %v4394, %v4112
  %v4396 = vadd.f32 %v4395, %v4116
  %v4397 = vadd.f32 %v4396, %v4122
  %v4398 = vadd.f32 %v4397, %v4126
  %v4399 = vrot.slane %v4398, 4
  %v4400 = vadd.f32 %v4398, %v4399
  %v4401 = vrot.slane %v4400, 2
  %v4402 = vadd.f32 %v4400, %v4401
  %v4403 = vrot.slane %v4402, 1
  %v4404 = vadd.f32 %v4402, %v4403
  %4405 = vrot.lane.b32.xlu0 %v4391, 8
  %v4406 = vpop.permute.xlu0 %4405
  %4407 = vrot.lane.b32.xlu0 %v4404, 8
  %v4408 = vpop.permute.xlu0 %4407
  %v4409 = vsel %vm4162, %v4406, %v4408
  %v4410 = vsel %vm4162, %v4408, %v4406
  %v4411 = vadd.f32 %v4391, %v4410
  %v4412 = vadd.f32 %v4404, %v4409
  %4413 = vrot.lane.b32.xlu0 %v4411, 16
  %v4414 = vpop.permute.xlu0 %4413
  %4415 = vrot.lane.b32.xlu0 %v4412, 16
  %v4416 = vpop.permute.xlu0 %4415
  %v4417 = vsel %vm2326, %v4414, %v4416
  %v4418 = vsel %vm2326, %v4416, %v4414
  %v4419 = vadd.f32 %v4411, %v4418
  %v4420 = vadd.f32 %v4412, %v4417
  %4421 = vrot.lane.b32.xlu0 %v4419, 32
  %v4422 = vpop.permute.xlu0 %4421
  %4423 = vrot.lane.b32.xlu0 %v4420, 32
  %v4424 = vpop.permute.xlu0 %4423
  %v4425 = vsel %vm969, %v4422, %v4424
  %v4426 = vsel %vm969, %v4424, %v4422
  %v4427 = vadd.f32 %v4419, %v4426
  %v4428 = vadd.f32 %v4420, %v4425
  %4429 = vrot.lane.b32.xlu0 %v4427, 64
  %v4430 = vpop.permute.xlu0 %4429
  %4431 = vrot.lane.b32.xlu0 %v4428, 64
  %v4432 = vpop.permute.xlu0 %4431
  %v4433 = vsel %vm978, %v4430, %v4432
  %v4434 = vsel %vm978, %v4432, %v4430
  %v4435 = vadd.f32 %v4427, %v4434
  %v4436 = vadd.f32 %v4428, %v4433
  %v4437 = vadd.f32 %v4435, %v4436
  %v4438 = vmul.f32 %v4437, 0.00048828125
  %v4439 = vlaneseq
  %v4440 = vshrl.u32 %v4439, 7
  %v4441 = vsub.s32 0, %v4440
  %v4442 = vrot.slane %v4438, %v4441
  %v4443 = vsub.f32 %v4090, %v4442
  %v4444 = vsub.f32 %v4092, %v4442
  %v4445 = vsub.f32 %v4094, %v4442
  %v4446 = vsub.f32 %v4096, %v4442
  %v4447 = vsub.f32 %v4100, %v4442
  %v4448 = vsub.f32 %v4102, %v4442
  %v4449 = vsub.f32 %v4104, %v4442
  %v4450 = vsub.f32 %v4106, %v4442
  %v4451 = vsub.f32 %v4110, %v4442
  %v4452 = vsub.f32 %v4112, %v4442
  %v4453 = vsub.f32 %v4114, %v4442
  %v4454 = vsub.f32 %v4116, %v4442
  %v4455 = vsub.f32 %v4120, %v4442
  %v4456 = vsub.f32 %v4122, %v4442
  %v4457 = vsub.f32 %v4124, %v4442
  %v4458 = vsub.f32 %v4126, %v4442
  %v4459 = vmul.f32 %v4443, %v4443
  %v4460 = vmul.f32 %v4444, %v4444
  %v4461 = vmul.f32 %v4445, %v4445
  %v4462 = vmul.f32 %v4446, %v4446
  %v4463 = vmul.f32 %v4447, %v4447
  %v4464 = vmul.f32 %v4448, %v4448
  %v4465 = vmul.f32 %v4449, %v4449
  %v4466 = vmul.f32 %v4450, %v4450
  %v4467 = vmul.f32 %v4451, %v4451
  %v4468 = vmul.f32 %v4452, %v4452
  %v4469 = vmul.f32 %v4453, %v4453
  %v4470 = vmul.f32 %v4454, %v4454
  %v4471 = vmul.f32 %v4455, %v4455
  %v4472 = vmul.f32 %v4456, %v4456
  %v4473 = vmul.f32 %v4457, %v4457
  %v4474 = vmul.f32 %v4458, %v4458
  %v4475 = vadd.f32 %v4459, %v4461
  %v4476 = vadd.f32 %v4475, %v4463
  %v4477 = vadd.f32 %v4476, %v4465
  %v4478 = vadd.f32 %v4477, %v4467
  %v4479 = vadd.f32 %v4478, %v4469
  %v4480 = vadd.f32 %v4479, %v4471
  %v4481 = vadd.f32 %v4480, %v4473
  %v4482 = vrot.slane %v4481, 4
  %v4483 = vadd.f32 %v4481, %v4482
  %v4484 = vrot.slane %v4483, 2
  %v4485 = vadd.f32 %v4483, %v4484
  %v4486 = vrot.slane %v4485, 1
  %v4487 = vadd.f32 %v4485, %v4486
  %v4488 = vadd.f32 %v4460, %v4462
  %v4489 = vadd.f32 %v4488, %v4464
  %v4490 = vadd.f32 %v4489, %v4466
  %v4491 = vadd.f32 %v4490, %v4468
  %v4492 = vadd.f32 %v4491, %v4470
  %v4493 = vadd.f32 %v4492, %v4472
  %v4494 = vadd.f32 %v4493, %v4474
  %v4495 = vrot.slane %v4494, 4
  %v4496 = vadd.f32 %v4494, %v4495
  %v4497 = vrot.slane %v4496, 2
  %v4498 = vadd.f32 %v4496, %v4497
  %v4499 = vrot.slane %v4498, 1
  %v4500 = vadd.f32 %v4498, %v4499
  %4501 = vrot.lane.b32.xlu0 %v4487, 8
  %v4502 = vpop.permute.xlu0 %4501
  %4503 = vrot.lane.b32.xlu0 %v4500, 8
  %v4504 = vpop.permute.xlu0 %4503
  %v4505 = vsel %vm4162, %v4502, %v4504
  %v4506 = vsel %vm4162, %v4504, %v4502
  %v4507 = vadd.f32 %v4487, %v4506
  %v4508 = vadd.f32 %v4500, %v4505
  %4509 = vrot.lane.b32.xlu0 %v4507, 16
  %v4510 = vpop.permute.xlu0 %4509
  %4511 = vrot.lane.b32.xlu0 %v4508, 16
  %v4512 = vpop.permute.xlu0 %4511
  %v4513 = vsel %vm2326, %v4510, %v4512
  %v4514 = vsel %vm2326, %v4512, %v4510
  %v4515 = vadd.f32 %v4507, %v4514
  %v4516 = vadd.f32 %v4508, %v4513
  %4517 = vrot.lane.b32.xlu0 %v4515, 32
  %v4518 = vpop.permute.xlu0 %4517
  %4519 = vrot.lane.b32.xlu0 %v4516, 32
  %v4520 = vpop.permute.xlu0 %4519
  %v4521 = vsel %vm969, %v4518, %v4520
  %v4522 = vsel %vm969, %v4520, %v4518
  %v4523 = vadd.f32 %v4515, %v4522
  %v4524 = vadd.f32 %v4516, %v4521
  %4525 = vrot.lane.b32.xlu0 %v4523, 64
  %v4526 = vpop.permute.xlu0 %4525
  %4527 = vrot.lane.b32.xlu0 %v4524, 64
  %v4528 = vpop.permute.xlu0 %4527
  %v4529 = vsel %vm978, %v4526, %v4528
  %v4530 = vsel %vm978, %v4528, %v4526
  %v4531 = vadd.f32 %v4523, %v4530
  %v4532 = vadd.f32 %v4524, %v4529
  %v4533 = vadd.f32 %v4531, %v4532
  %v4534 = vmul.f32 %v4533, 0.00048828125
  %v4535 = vadd.f32 %v4534, 1e-05
  %v4536 = vrsqrt.pop %v4535
  %v4538 = vcombine.low %v4536, %v4536
  %v4540 = vunpack.c.l.s4 1966171168
  %v4541 = vunpack.c.0.s8 %v4540
  %v4542 = vlaneseq
  %v4543 = vshrl.u32 %v4542, 7
  %v4544 = vsub.s32 %v4541, %v4543
  %v4545 = vrot.slane %v4538, %v4544
  %v4547 = vunpack.c.l.s4 1966171168
  %v4548 = vunpack.c.0.s8 %v4547
  %v4549 = vlaneseq
  %v4550 = vshrl.u32 %v4549, 7
  %v4551 = vsub.s32 %v4548, %v4550
  %v4552 = vrot.slane %v4545, %v4551
  %v4554 = vmul.f32 %v4129, %v4552
  %v4556 = vlaneseq
  %v4557 = vshrl.u32 %v4556, 7
  %v4558 = vsub.s32 0, %v4557
  %v4559 = vrot.slane %v4554, %v4558
  %v4560 = vlaneseq
  %v4561 = vshrl.u32 %v4560, 7
  %v4562 = vsub.s32 1, %v4561
  %v4563 = vrot.slane %v4554, %v4562
  %v4566 = vmul.f32 %v4443, %v4559
  %v4567 = vmul.f32 %v4444, %v4563
  %v4568 = vmul.f32 %v4445, %v4559
  %v4569 = vmul.f32 %v4446, %v4563
  %v4570 = vmul.f32 %v4447, %v4559
  %v4571 = vmul.f32 %v4448, %v4563
  %v4572 = vmul.f32 %v4449, %v4559
  %v4573 = vmul.f32 %v4450, %v4563
  %v4574 = vmul.f32 %v4451, %v4559
  %v4575 = vmul.f32 %v4452, %v4563
  %v4576 = vmul.f32 %v4453, %v4559
  %v4577 = vmul.f32 %v4454, %v4563
  %v4578 = vmul.f32 %v4455, %v4559
  %v4579 = vmul.f32 %v4456, %v4563
  %v4580 = vmul.f32 %v4457, %v4559
  %v4581 = vmul.f32 %v4458, %v4563
  %v4582 = vadd.f32 %v4566, %v4340
  %v4583 = vadd.f32 %v4567, %v4344
  %v4584 = vadd.f32 %v4568, %v4340
  %v4585 = vadd.f32 %v4569, %v4344
  %v4586 = vadd.f32 %v4570, %v4340
  %v4587 = vadd.f32 %v4571, %v4344
  %v4588 = vadd.f32 %v4572, %v4340
  %v4589 = vadd.f32 %v4573, %v4344
  %v4590 = vadd.f32 %v4574, %v4340
  %v4591 = vadd.f32 %v4575, %v4344
  %v4592 = vadd.f32 %v4576, %v4340
  %v4593 = vadd.f32 %v4577, %v4344
  %v4594 = vadd.f32 %v4578, %v4340
  %v4595 = vadd.f32 %v4579, %v4344
  %v4596 = vadd.f32 %v4580, %v4340
  %v4597 = vadd.f32 %v4581, %v4344
  %v4598 = vmax.f32 %v4582, 0.0
  %v4599 = vmax.f32 %v4583, 0.0
  %v4600 = vmax.f32 %v4584, 0.0
  %v4601 = vmax.f32 %v4585, 0.0
  %v4602 = vmax.f32 %v4586, 0.0
  %v4603 = vmax.f32 %v4587, 0.0
  %v4604 = vmax.f32 %v4588, 0.0
  %v4605 = vmax.f32 %v4589, 0.0
  %v4606 = vmax.f32 %v4590, 0.0
  %v4607 = vmax.f32 %v4591, 0.0
  %v4608 = vmax.f32 %v4592, 0.0
  %v4609 = vmax.f32 %v4593, 0.0
  %v4610 = vmax.f32 %v4594, 0.0
  %v4611 = vmax.f32 %v4595, 0.0
  %v4612 = vmax.f32 %v4596, 0.0
  %v4613 = vmax.f32 %v4597, 0.0
  %v4614 = vpack.c.bf16 %v4365, %v4363
  %v4615 = vpack.c.bf16 %v4366, %v4364
  %v4616 = vpack.c.bf16 %v4369, %v4367
  %v4617 = vpack.c.bf16 %v4370, %v4368
  %v4618 = vpack.c.bf16 %v4373, %v4371
  %v4619 = vpack.c.bf16 %v4374, %v4372
  %v4620 = vpack.c.bf16 %v4377, %v4375
  %v4621 = vpack.c.bf16 %v4378, %v4376
  %v4622 = vpack.c.bf16 %v4600, %v4598
  %v4623 = vpack.c.bf16 %v4601, %v4599
  %v4624 = vpack.c.bf16 %v4604, %v4602
  %v4625 = vpack.c.bf16 %v4605, %v4603
  %v4626 = vpack.c.bf16 %v4608, %v4606
  %v4627 = vpack.c.bf16 %v4609, %v4607
  %v4628 = vpack.c.bf16 %v4612, %v4610
  %v4629 = vpack.c.bf16 %v4613, %v4611
  %v4630 = vld [vmem:[%s4] sm:$0xf]
  %v4631 = vld [vmem:[%s4 + $0x4] sm:$0xf]
  %v4632 = vld [vmem:[%s4 + $0x8] sm:$0xf]
  %v4633 = vld [vmem:[%s4 + $0xc] sm:$0xf]
  %v4634 = vld [vmem:[%s4 + $0x10] sm:$0xf]
  %v4635 = vld [vmem:[%s4 + $0x14] sm:$0xf]
  %v4636 = vld [vmem:[%s4 + $0x18] sm:$0xf]
  %v4637 = vld [vmem:[%s4 + $0x1c] sm:$0xf]
  %v4638 = vld [vmem:[%s4 + $0x20] sm:$0xf]
  %v4639 = vld [vmem:[%s4 + $0x24] sm:$0xf]
  %v4640 = vld [vmem:[%s4 + $0x28] sm:$0xf]
  %v4641 = vld [vmem:[%s4 + $0x2c] sm:$0xf]
  %v4642 = vld [vmem:[%s4 + $0x30] sm:$0xf]
  %v4643 = vld [vmem:[%s4 + $0x34] sm:$0xf]
  %v4644 = vld [vmem:[%s4 + $0x38] sm:$0xf]
  %v4645 = vld [vmem:[%s4 + $0x3c] sm:$0xf]
  %v4646 = vld [vmem:[%s4 + $0x40] sm:$0xf]
  %v4647 = vld [vmem:[%s4 + $0x44] sm:$0xf]
  %v4648 = vld [vmem:[%s4 + $0x48] sm:$0xf]
  %v4649 = vld [vmem:[%s4 + $0x4c] sm:$0xf]
  %v4650 = vld [vmem:[%s4 + $0x50] sm:$0xf]
  %v4651 = vld [vmem:[%s4 + $0x54] sm:$0xf]
  %v4652 = vld [vmem:[%s4 + $0x58] sm:$0xf]
  %v4653 = vld [vmem:[%s4 + $0x5c] sm:$0xf]
  %v4654 = vld [vmem:[%s4 + $0x60] sm:$0xf]
  %v4655 = vld [vmem:[%s4 + $0x64] sm:$0xf]
  %v4656 = vld [vmem:[%s4 + $0x68] sm:$0xf]
  %v4657 = vld [vmem:[%s4 + $0x6c] sm:$0xf]
  %v4658 = vld [vmem:[%s4 + $0x70] sm:$0xf]
  %v4659 = vld [vmem:[%s4 + $0x74] sm:$0xf]
  %v4660 = vld [vmem:[%s4 + $0x78] sm:$0xf]
  %v4661 = vld [vmem:[%s4 + $0x7c] sm:$0xf]
  %v4662 = vld [vmem:[%s4 + $0x80] sm:$0xf]
  %v4663 = vld [vmem:[%s4 + $0x84] sm:$0xf]
  %v4664 = vld [vmem:[%s4 + $0x88] sm:$0xf]
  %v4665 = vld [vmem:[%s4 + $0x8c] sm:$0xf]
  %v4666 = vld [vmem:[%s4 + $0x90] sm:$0xf]
  %v4667 = vld [vmem:[%s4 + $0x94] sm:$0xf]
  %v4668 = vld [vmem:[%s4 + $0x98] sm:$0xf]
  %v4669 = vld [vmem:[%s4 + $0x9c] sm:$0xf]
  %v4670 = vld [vmem:[%s4 + $0xa0] sm:$0xf]
  %v4671 = vld [vmem:[%s4 + $0xa4] sm:$0xf]
  %v4672 = vld [vmem:[%s4 + $0xa8] sm:$0xf]
  %v4673 = vld [vmem:[%s4 + $0xac] sm:$0xf]
  %v4674 = vld [vmem:[%s4 + $0xb0] sm:$0xf]
  %v4675 = vld [vmem:[%s4 + $0xb4] sm:$0xf]
  %v4676 = vld [vmem:[%s4 + $0xb8] sm:$0xf]
  %v4677 = vld [vmem:[%s4 + $0xbc] sm:$0xf]
  %v4678 = vld [vmem:[%s4 + $0xc0] sm:$0xf]
  %v4679 = vld [vmem:[%s4 + $0xc4] sm:$0xf]
  %v4680 = vld [vmem:[%s4 + $0xc8] sm:$0xf]
  %v4681 = vld [vmem:[%s4 + $0xcc] sm:$0xf]
  %v4682 = vld [vmem:[%s4 + $0xd0] sm:$0xf]
  %v4683 = vld [vmem:[%s4 + $0xd4] sm:$0xf]
  %v4684 = vld [vmem:[%s4 + $0xd8] sm:$0xf]
  %v4685 = vld [vmem:[%s4 + $0xdc] sm:$0xf]
  %v4686 = vld [vmem:[%s4 + $0xe0] sm:$0xf]
  %v4687 = vld [vmem:[%s4 + $0xe4] sm:$0xf]
  %v4688 = vld [vmem:[%s4 + $0xe8] sm:$0xf]
  %v4689 = vld [vmem:[%s4 + $0xec] sm:$0xf]
  %v4690 = vld [vmem:[%s4 + $0xf0] sm:$0xf]
  %v4691 = vld [vmem:[%s4 + $0xf4] sm:$0xf]
  %v4692 = vld [vmem:[%s4 + $0xf8] sm:$0xf]
  %v4693 = vld [vmem:[%s4 + $0xfc] sm:$0xf]
  %v4694 = vld [vmem:[%s4 + $0x100] sm:$0xf]
  %v4695 = vld [vmem:[%s4 + $0x104] sm:$0xf]
  %v4696 = vld [vmem:[%s4 + $0x108] sm:$0xf]
  %v4697 = vld [vmem:[%s4 + $0x10c] sm:$0xf]
  %v4698 = vld [vmem:[%s4 + $0x110] sm:$0xf]
  %v4699 = vld [vmem:[%s4 + $0x114] sm:$0xf]
  %v4700 = vld [vmem:[%s4 + $0x118] sm:$0xf]
  %v4701 = vld [vmem:[%s4 + $0x11c] sm:$0xf]
  %v4702 = vld [vmem:[%s4 + $0x120] sm:$0xf]
  %v4703 = vld [vmem:[%s4 + $0x124] sm:$0xf]
  %v4704 = vld [vmem:[%s4 + $0x128] sm:$0xf]
  %v4705 = vld [vmem:[%s4 + $0x12c] sm:$0xf]
  %v4706 = vld [vmem:[%s4 + $0x130] sm:$0xf]
  %v4707 = vld [vmem:[%s4 + $0x134] sm:$0xf]
  %v4708 = vld [vmem:[%s4 + $0x138] sm:$0xf]
  %v4709 = vld [vmem:[%s4 + $0x13c] sm:$0xf]
  %v4710 = vld [vmem:[%s4 + $0x140] sm:$0xf]
  %v4711 = vld [vmem:[%s4 + $0x144] sm:$0xf]
  %v4712 = vld [vmem:[%s4 + $0x148] sm:$0xf]
  %v4713 = vld [vmem:[%s4 + $0x14c] sm:$0xf]
  %v4714 = vld [vmem:[%s4 + $0x150] sm:$0xf]
  %v4715 = vld [vmem:[%s4 + $0x154] sm:$0xf]
  %v4716 = vld [vmem:[%s4 + $0x158] sm:$0xf]
  %v4717 = vld [vmem:[%s4 + $0x15c] sm:$0xf]
  %v4718 = vld [vmem:[%s4 + $0x160] sm:$0xf]
  %v4719 = vld [vmem:[%s4 + $0x164] sm:$0xf]
  %v4720 = vld [vmem:[%s4 + $0x168] sm:$0xf]
  %v4721 = vld [vmem:[%s4 + $0x16c] sm:$0xf]
  %v4722 = vld [vmem:[%s4 + $0x170] sm:$0xf]
  %v4723 = vld [vmem:[%s4 + $0x174] sm:$0xf]
  %v4724 = vld [vmem:[%s4 + $0x178] sm:$0xf]
  %v4725 = vld [vmem:[%s4 + $0x17c] sm:$0xf]
  %v4822 = vunpack.c.l.b16 %v4630
  %v4823 = vunpack.c.l.b16 %v4631
  %v4824 = vunpack.c.l.b16 %v4632
  %v4825 = vunpack.c.l.b16 %v4633
  %v4826 = vunpack.c.l.b16 %v4634
  %v4827 = vunpack.c.l.b16 %v4635
  %v4828 = vunpack.c.l.b16 %v4636
  %v4829 = vunpack.c.l.b16 %v4637
  %v4830 = vunpack.c.l.b16 %v4638
  %v4831 = vunpack.c.l.b16 %v4639
  %v4832 = vunpack.c.l.b16 %v4640
  %v4833 = vunpack.c.l.b16 %v4641
  %v4834 = vunpack.c.l.b16 %v4642
  %v4835 = vunpack.c.l.b16 %v4643
  %v4836 = vunpack.c.l.b16 %v4644
  %v4837 = vunpack.c.l.b16 %v4645
  %v4838 = vunpack.c.l.b16 %v4646
  %v4839 = vunpack.c.l.b16 %v4647
  %v4840 = vunpack.c.l.b16 %v4648
  %v4841 = vunpack.c.l.b16 %v4649
  %v4842 = vunpack.c.l.b16 %v4650
  %v4843 = vunpack.c.l.b16 %v4651
  %v4844 = vunpack.c.l.b16 %v4652
  %v4845 = vunpack.c.l.b16 %v4653
  %v4846 = vunpack.c.l.b16 %v4654
  %v4847 = vunpack.c.l.b16 %v4655
  %v4848 = vunpack.c.l.b16 %v4656
  %v4849 = vunpack.c.l.b16 %v4657
  %v4850 = vunpack.c.l.b16 %v4658
  %v4851 = vunpack.c.l.b16 %v4659
  %v4852 = vunpack.c.l.b16 %v4660
  %v4853 = vunpack.c.l.b16 %v4661
  %v4854 = vunpack.c.l.b16 %v4662
  %v4855 = vunpack.c.l.b16 %v4663
  %v4856 = vunpack.c.l.b16 %v4664
  %v4857 = vunpack.c.l.b16 %v4665
  %v4858 = vunpack.c.l.b16 %v4666
  %v4859 = vunpack.c.l.b16 %v4667
  %v4860 = vunpack.c.l.b16 %v4668
  %v4861 = vunpack.c.l.b16 %v4669
  %v4862 = vunpack.c.l.b16 %v4670
  %v4863 = vunpack.c.l.b16 %v4671
  %v4864 = vunpack.c.l.b16 %v4672
  %v4865 = vunpack.c.l.b16 %v4673
  %v4866 = vunpack.c.l.b16 %v4674
  %v4867 = vunpack.c.l.b16 %v4675
  %v4868 = vunpack.c.l.b16 %v4676
  %v4869 = vunpack.c.l.b16 %v4677
  %v4870 = vunpack.c.l.b16 %v4678
  %v4871 = vunpack.c.l.b16 %v4679
  %v4872 = vunpack.c.l.b16 %v4680
  %v4873 = vunpack.c.l.b16 %v4681
  %v4874 = vunpack.c.l.b16 %v4682
  %v4875 = vunpack.c.l.b16 %v4683
  %v4876 = vunpack.c.l.b16 %v4684
  %v4877 = vunpack.c.l.b16 %v4685
  %v4878 = vunpack.c.l.b16 %v4686
  %v4879 = vunpack.c.l.b16 %v4687
  %v4880 = vunpack.c.l.b16 %v4688
  %v4881 = vunpack.c.l.b16 %v4689
  %v4882 = vunpack.c.l.b16 %v4690
  %v4883 = vunpack.c.l.b16 %v4691
  %v4884 = vunpack.c.l.b16 %v4692
  %v4885 = vunpack.c.l.b16 %v4693
  %v4886 = vunpack.c.l.b16 %v4694
  %v4887 = vunpack.c.l.b16 %v4695
  %v4888 = vunpack.c.l.b16 %v4696
  %v4889 = vunpack.c.l.b16 %v4697
  %v4890 = vunpack.c.l.b16 %v4698
  %v4891 = vunpack.c.l.b16 %v4699
  %v4892 = vunpack.c.l.b16 %v4700
  %v4893 = vunpack.c.l.b16 %v4701
  %v4894 = vunpack.c.l.b16 %v4702
  %v4895 = vunpack.c.l.b16 %v4703
  %v4896 = vunpack.c.l.b16 %v4704
  %v4897 = vunpack.c.l.b16 %v4705
  %v4898 = vunpack.c.l.b16 %v4706
  %v4899 = vunpack.c.l.b16 %v4707
  %v4900 = vunpack.c.l.b16 %v4708
  %v4901 = vunpack.c.l.b16 %v4709
  %v4902 = vunpack.c.l.b16 %v4710
  %v4903 = vunpack.c.l.b16 %v4711
  %v4904 = vunpack.c.l.b16 %v4712
  %v4905 = vunpack.c.l.b16 %v4713
  %v4906 = vunpack.c.l.b16 %v4714
  %v4907 = vunpack.c.l.b16 %v4715
  %v4908 = vunpack.c.l.b16 %v4716
  %v4909 = vunpack.c.l.b16 %v4717
  %v4910 = vunpack.c.l.b16 %v4718
  %v4911 = vunpack.c.l.b16 %v4719
  %v4912 = vunpack.c.l.b16 %v4720
  %v4913 = vunpack.c.l.b16 %v4721
  %v4914 = vunpack.c.l.b16 %v4722
  %v4915 = vunpack.c.l.b16 %v4723
  %v4916 = vunpack.c.l.b16 %v4724
  %v4917 = vunpack.c.l.b16 %v4725
  %v4918 = vpack.c.b16 %v4823, %v4822
  %v4919 = vpack.c.b16 %v4825, %v4824
  %v4920 = vpack.c.b16 %v4827, %v4826
  %v4921 = vpack.c.b16 %v4829, %v4828
  %v4922 = vpack.c.b16 %v4831, %v4830
  %v4923 = vpack.c.b16 %v4833, %v4832
  %v4924 = vpack.c.b16 %v4835, %v4834
  %v4925 = vpack.c.b16 %v4837, %v4836
  %v4926 = vpack.c.b16 %v4839, %v4838
  %v4927 = vpack.c.b16 %v4841, %v4840
  %v4928 = vpack.c.b16 %v4843, %v4842
  %v4929 = vpack.c.b16 %v4845, %v4844
  %v4930 = vpack.c.b16 %v4847, %v4846
  %v4931 = vpack.c.b16 %v4849, %v4848
  %v4932 = vpack.c.b16 %v4851, %v4850
  %v4933 = vpack.c.b16 %v4853, %v4852
  %v4934 = vpack.c.b16 %v4855, %v4854
  %v4935 = vpack.c.b16 %v4857, %v4856
  %v4936 = vpack.c.b16 %v4859, %v4858
  %v4937 = vpack.c.b16 %v4861, %v4860
  %v4938 = vpack.c.b16 %v4863, %v4862
  %v4939 = vpack.c.b16 %v4865, %v4864
  %v4940 = vpack.c.b16 %v4867, %v4866
  %v4941 = vpack.c.b16 %v4869, %v4868
  %v4942 = vpack.c.b16 %v4871, %v4870
  %v4943 = vpack.c.b16 %v4873, %v4872
  %v4944 = vpack.c.b16 %v4875, %v4874
  %v4945 = vpack.c.b16 %v4877, %v4876
  %v4946 = vpack.c.b16 %v4879, %v4878
  %v4947 = vpack.c.b16 %v4881, %v4880
  %v4948 = vpack.c.b16 %v4883, %v4882
  %v4949 = vpack.c.b16 %v4885, %v4884
  %v4950 = vpack.c.b16 %v4887, %v4886
  %v4951 = vpack.c.b16 %v4889, %v4888
  %v4952 = vpack.c.b16 %v4891, %v4890
  %v4953 = vpack.c.b16 %v4893, %v4892
  %v4954 = vpack.c.b16 %v4895, %v4894
  %v4955 = vpack.c.b16 %v4897, %v4896
  %v4956 = vpack.c.b16 %v4899, %v4898
  %v4957 = vpack.c.b16 %v4901, %v4900
  %v4958 = vpack.c.b16 %v4903, %v4902
  %v4959 = vpack.c.b16 %v4905, %v4904
  %v4960 = vpack.c.b16 %v4907, %v4906
  %v4961 = vpack.c.b16 %v4909, %v4908
  %v4962 = vpack.c.b16 %v4911, %v4910
  %v4963 = vpack.c.b16 %v4913, %v4912
  %v4964 = vpack.c.b16 %v4915, %v4914
  %v4965 = vpack.c.b16 %v4917, %v4916
  %5014 = vmatprep.subr.bf16.mxu0 %v4629
  %5015 = vmatpush1.bf16.msra.mxu0 %v4628
  %5016 = vmatprep.subr.bf16.mxu0 %v4627
  %5017 = vmatpush1.bf16.msra.mxu0 %v4626
  %5018 = vmatprep.subr.bf16.mxu0 %v4625
  %5019 = vmatpush1.bf16.msra.mxu0 %v4624
  %5020 = vmatprep.subr.bf16.mxu0 %v4623
  %5021 = vmatpush1.bf16.msra.mxu0 %v4622
  %5022 = vmatprep.subr.bf16.mxu0 %v4621
  %5023 = vmatpush1.bf16.msra.mxu0 %v4620
  %5024 = vmatprep.subr.bf16.mxu0 %v4619
  %5025 = vmatpush1.bf16.msra.mxu0 %v4618
  %5026 = vmatprep.subr.bf16.mxu0 %v4617
  %5027 = vmatpush1.bf16.msra.mxu0 %v4616
  %5028 = vmatprep.subr.bf16.mxu0 %v4615
  %5029 = vmatpush1.bf16.msra.mxu0 %v4614
  %5030 = vmatprep.subr.bf16.mxu0 0
  %5031 = vmatpush2.bf16.msra.mxu0 0
  %5032 = vmatprep.subr.bf16.mxu0 0
  %5033 = vmatpush2.bf16.msra.mxu0 0
  %5034 = vmatprep.subr.bf16.mxu0 0
  %5035 = vmatpush2.bf16.msra.mxu0 0
  %5036 = vmatprep.subr.bf16.mxu0 0
  %5037 = vmatpush2.bf16.msra.mxu0 0
  %5038 = vmatprep.subr.bf16.mxu0 0
  %5039 = vmatpush2.bf16.msra.mxu0 0
  %5040 = vmatprep.subr.bf16.mxu0 0
  %5041 = vmatpush2.bf16.msra.mxu0 0
  %5042 = vmatprep.subr.bf16.mxu0 0
  %5043 = vmatpush2.bf16.msra.mxu0 0
  %5044 = vmatprep.subr.bf16.mxu0 0
  %5045 = vmatpush2.bf16.msra.mxu0 0
  %5046 = vmatprep.mubr.bf16.mxu0 0
  %5047 = vmatmul.mubr.bf16.gmra.mxu0 %v4918
  %v5048 = vpop.f32.mrf.mxu0
  %v5049 = vadd.f32 0.0, %v5048
  %v5050 = vpop.f32.mrf.mxu0
  %v5051 = vadd.f32 0.0, %v5050
  %v5052 = vpop.f32.mrf.mxu0
  %v5053 = vadd.f32 0.0, %v5052
  %v5054 = vpop.f32.mrf.mxu0
  %v5055 = vadd.f32 0.0, %v5054
  %5056 = vmatprep.mubr.bf16.mxu0 0
  %5057 = vmatmul.mubr.bf16.gmra.mxu0 %v4919
  %v5058 = vpop.f32.mrf.mxu0
  %v5059 = vadd.f32 0.0, %v5058
  %v5060 = vpop.f32.mrf.mxu0
  %v5061 = vadd.f32 0.0, %v5060
  %v5062 = vpop.f32.mrf.mxu0
  %v5063 = vadd.f32 0.0, %v5062
  %v5064 = vpop.f32.mrf.mxu0
  %v5065 = vadd.f32 0.0, %v5064
  %5066 = vmatprep.mubr.bf16.mxu0 0
  %5067 = vmatmul.mubr.bf16.gmra.mxu0 %v4920
  %v5068 = vpop.f32.mrf.mxu0
  %v5069 = vadd.f32 0.0, %v5068
  %v5070 = vpop.f32.mrf.mxu0
  %v5071 = vadd.f32 0.0, %v5070
  %v5072 = vpop.f32.mrf.mxu0
  %v5073 = vadd.f32 0.0, %v5072
  %v5074 = vpop.f32.mrf.mxu0
  %v5075 = vadd.f32 0.0, %v5074
  %5076 = vmatprep.mubr.bf16.mxu0 0
  %5077 = vmatmul.mubr.bf16.gmra.mxu0 %v4921
  %v5078 = vpop.f32.mrf.mxu0
  %v5079 = vadd.f32 0.0, %v5078
  %v5080 = vpop.f32.mrf.mxu0
  %v5081 = vadd.f32 0.0, %v5080
  %v5082 = vpop.f32.mrf.mxu0
  %v5083 = vadd.f32 0.0, %v5082
  %v5084 = vpop.f32.mrf.mxu0
  %v5085 = vadd.f32 0.0, %v5084
  %5086 = vmatprep.mubr.bf16.mxu0 0
  %5087 = vmatmul.mubr.bf16.gmra.mxu0 %v4922
  %v5088 = vpop.f32.mrf.mxu0
  %v5089 = vadd.f32 0.0, %v5088
  %v5090 = vpop.f32.mrf.mxu0
  %v5091 = vadd.f32 0.0, %v5090
  %v5092 = vpop.f32.mrf.mxu0
  %v5093 = vadd.f32 0.0, %v5092
  %v5094 = vpop.f32.mrf.mxu0
  %v5095 = vadd.f32 0.0, %v5094
  %5096 = vmatprep.mubr.bf16.mxu0 0
  %5097 = vmatmul.mubr.bf16.gmra.mxu0 %v4923
  %v5098 = vpop.f32.mrf.mxu0
  %v5099 = vadd.f32 0.0, %v5098
  %v5100 = vpop.f32.mrf.mxu0
  %v5101 = vadd.f32 0.0, %v5100
  %v5102 = vpop.f32.mrf.mxu0
  %v5103 = vadd.f32 0.0, %v5102
  %v5104 = vpop.f32.mrf.mxu0
  %v5105 = vadd.f32 0.0, %v5104
  %5106 = vmatprep.mubr.bf16.mxu0 0
  %5107 = vmatmul.mubr.bf16.gmra.mxu0 %v4924
  %v5108 = vpop.f32.mrf.mxu0
  %v5109 = vadd.f32 0.0, %v5108
  %v5110 = vpop.f32.mrf.mxu0
  %v5111 = vadd.f32 0.0, %v5110
  %v5112 = vpop.f32.mrf.mxu0
  %v5113 = vadd.f32 0.0, %v5112
  %v5114 = vpop.f32.mrf.mxu0
  %v5115 = vadd.f32 0.0, %v5114
  %5116 = vmatprep.mubr.bf16.mxu0 0
  %5117 = vmatmul.mubr.bf16.gmra.mxu0 %v4925
  %v5118 = vpop.f32.mrf.mxu0
  %v5119 = vadd.f32 0.0, %v5118
  %v5120 = vpop.f32.mrf.mxu0
  %v5121 = vadd.f32 0.0, %v5120
  %v5122 = vpop.f32.mrf.mxu0
  %v5123 = vadd.f32 0.0, %v5122
  %v5124 = vpop.f32.mrf.mxu0
  %v5125 = vadd.f32 0.0, %v5124
  %5126 = vmatprep.mubr.bf16.mxu0 0
  %5127 = vmatmul.mubr.bf16.gmra.mxu0 %v4926
  %v5128 = vpop.f32.mrf.mxu0
  %v5129 = vadd.f32 0.0, %v5128
  %v5130 = vpop.f32.mrf.mxu0
  %v5131 = vadd.f32 0.0, %v5130
  %v5132 = vpop.f32.mrf.mxu0
  %v5133 = vadd.f32 0.0, %v5132
  %v5134 = vpop.f32.mrf.mxu0
  %v5135 = vadd.f32 0.0, %v5134
  %5136 = vmatprep.mubr.bf16.mxu0 0
  %5137 = vmatmul.mubr.bf16.gmra.mxu0 %v4927
  %v5138 = vpop.f32.mrf.mxu0
  %v5139 = vadd.f32 0.0, %v5138
  %v5140 = vpop.f32.mrf.mxu0
  %v5141 = vadd.f32 0.0, %v5140
  %v5142 = vpop.f32.mrf.mxu0
  %v5143 = vadd.f32 0.0, %v5142
  %v5144 = vpop.f32.mrf.mxu0
  %v5145 = vadd.f32 0.0, %v5144
  %5146 = vmatprep.mubr.bf16.mxu0 0
  %5147 = vmatmul.mubr.bf16.gmra.mxu0 %v4928
  %v5148 = vpop.f32.mrf.mxu0
  %v5149 = vadd.f32 0.0, %v5148
  %v5150 = vpop.f32.mrf.mxu0
  %v5151 = vadd.f32 0.0, %v5150
  %v5152 = vpop.f32.mrf.mxu0
  %v5153 = vadd.f32 0.0, %v5152
  %v5154 = vpop.f32.mrf.mxu0
  %v5155 = vadd.f32 0.0, %v5154
  %5156 = vmatprep.mubr.bf16.mxu0 0
  %5157 = vmatmul.mubr.bf16.gmra.mxu0 %v4929
  %v5158 = vpop.f32.mrf.mxu0
  %v5159 = vadd.f32 0.0, %v5158
  %v5160 = vpop.f32.mrf.mxu0
  %v5161 = vadd.f32 0.0, %v5160
  %v5162 = vpop.f32.mrf.mxu0
  %v5163 = vadd.f32 0.0, %v5162
  %v5164 = vpop.f32.mrf.mxu0
  %v5165 = vadd.f32 0.0, %v5164
  %5166 = vmatprep.mubr.bf16.mxu0 0
  %5167 = vmatmul.mubr.bf16.gmra.mxu0 %v4930
  %v5168 = vpop.f32.mrf.mxu0
  %v5169 = vadd.f32 0.0, %v5168
  %v5170 = vpop.f32.mrf.mxu0
  %v5171 = vadd.f32 0.0, %v5170
  %v5172 = vpop.f32.mrf.mxu0
  %v5173 = vadd.f32 0.0, %v5172
  %v5174 = vpop.f32.mrf.mxu0
  %v5175 = vadd.f32 0.0, %v5174
  %5176 = vmatprep.mubr.bf16.mxu0 0
  %5177 = vmatmul.mubr.bf16.gmra.mxu0 %v4931
  %v5178 = vpop.f32.mrf.mxu0
  %v5179 = vadd.f32 0.0, %v5178
  %v5180 = vpop.f32.mrf.mxu0
  %v5181 = vadd.f32 0.0, %v5180
  %v5182 = vpop.f32.mrf.mxu0
  %v5183 = vadd.f32 0.0, %v5182
  %v5184 = vpop.f32.mrf.mxu0
  %v5185 = vadd.f32 0.0, %v5184
  %5186 = vmatprep.mubr.bf16.mxu0 0
  %5187 = vmatmul.mubr.bf16.gmra.mxu0 %v4932
  %v5188 = vpop.f32.mrf.mxu0
  %v5189 = vadd.f32 0.0, %v5188
  %v5190 = vpop.f32.mrf.mxu0
  %v5191 = vadd.f32 0.0, %v5190
  %v5192 = vpop.f32.mrf.mxu0
  %v5193 = vadd.f32 0.0, %v5192
  %v5194 = vpop.f32.mrf.mxu0
  %v5195 = vadd.f32 0.0, %v5194
  %5196 = vmatprep.mubr.bf16.mxu0 0
  %5197 = vmatmul.mubr.bf16.gmra.mxu0 %v4933
  %v5198 = vpop.f32.mrf.mxu0
  %v5199 = vadd.f32 0.0, %v5198
  %v5200 = vpop.f32.mrf.mxu0
  %v5201 = vadd.f32 0.0, %v5200
  %v5202 = vpop.f32.mrf.mxu0
  %v5203 = vadd.f32 0.0, %v5202
  %v5204 = vpop.f32.mrf.mxu0
  %v5205 = vadd.f32 0.0, %v5204
  %5206 = vmatprep.mubr.bf16.mxu0 0
  %5207 = vmatmul.mubr.bf16.gmra.mxu0 %v4934
  %v5208 = vpop.f32.mrf.mxu0
  %v5209 = vadd.f32 0.0, %v5208
  %v5210 = vpop.f32.mrf.mxu0
  %v5211 = vadd.f32 0.0, %v5210
  %v5212 = vpop.f32.mrf.mxu0
  %v5213 = vadd.f32 0.0, %v5212
  %v5214 = vpop.f32.mrf.mxu0
  %v5215 = vadd.f32 0.0, %v5214
  %5216 = vmatprep.mubr.bf16.mxu0 0
  %5217 = vmatmul.mubr.bf16.gmra.mxu0 %v4935
  %v5218 = vpop.f32.mrf.mxu0
  %v5219 = vadd.f32 0.0, %v5218
  %v5220 = vpop.f32.mrf.mxu0
  %v5221 = vadd.f32 0.0, %v5220
  %v5222 = vpop.f32.mrf.mxu0
  %v5223 = vadd.f32 0.0, %v5222
  %v5224 = vpop.f32.mrf.mxu0
  %v5225 = vadd.f32 0.0, %v5224
  %5226 = vmatprep.mubr.bf16.mxu0 0
  %5227 = vmatmul.mubr.bf16.gmra.mxu0 %v4936
  %v5228 = vpop.f32.mrf.mxu0
  %v5229 = vadd.f32 0.0, %v5228
  %v5230 = vpop.f32.mrf.mxu0
  %v5231 = vadd.f32 0.0, %v5230
  %v5232 = vpop.f32.mrf.mxu0
  %v5233 = vadd.f32 0.0, %v5232
  %v5234 = vpop.f32.mrf.mxu0
  %v5235 = vadd.f32 0.0, %v5234
  %5236 = vmatprep.mubr.bf16.mxu0 0
  %5237 = vmatmul.mubr.bf16.gmra.mxu0 %v4937
  %v5238 = vpop.f32.mrf.mxu0
  %v5239 = vadd.f32 0.0, %v5238
  %v5240 = vpop.f32.mrf.mxu0
  %v5241 = vadd.f32 0.0, %v5240
  %v5242 = vpop.f32.mrf.mxu0
  %v5243 = vadd.f32 0.0, %v5242
  %v5244 = vpop.f32.mrf.mxu0
  %v5245 = vadd.f32 0.0, %v5244
  %5246 = vmatprep.mubr.bf16.mxu0 0
  %5247 = vmatmul.mubr.bf16.gmra.mxu0 %v4938
  %v5248 = vpop.f32.mrf.mxu0
  %v5249 = vadd.f32 0.0, %v5248
  %v5250 = vpop.f32.mrf.mxu0
  %v5251 = vadd.f32 0.0, %v5250
  %v5252 = vpop.f32.mrf.mxu0
  %v5253 = vadd.f32 0.0, %v5252
  %v5254 = vpop.f32.mrf.mxu0
  %v5255 = vadd.f32 0.0, %v5254
  %5256 = vmatprep.mubr.bf16.mxu0 0
  %5257 = vmatmul.mubr.bf16.gmra.mxu0 %v4939
  %v5258 = vpop.f32.mrf.mxu0
  %v5259 = vadd.f32 0.0, %v5258
  %v5260 = vpop.f32.mrf.mxu0
  %v5261 = vadd.f32 0.0, %v5260
  %v5262 = vpop.f32.mrf.mxu0
  %v5263 = vadd.f32 0.0, %v5262
  %v5264 = vpop.f32.mrf.mxu0
  %v5265 = vadd.f32 0.0, %v5264
  %5266 = vmatprep.mubr.bf16.mxu0 0
  %5267 = vmatmul.mubr.bf16.gmra.mxu0 %v4940
  %v5268 = vpop.f32.mrf.mxu0
  %v5269 = vadd.f32 0.0, %v5268
  %v5270 = vpop.f32.mrf.mxu0
  %v5271 = vadd.f32 0.0, %v5270
  %v5272 = vpop.f32.mrf.mxu0
  %v5273 = vadd.f32 0.0, %v5272
  %v5274 = vpop.f32.mrf.mxu0
  %v5275 = vadd.f32 0.0, %v5274
  %5276 = vmatprep.mubr.bf16.mxu0 0
  %5277 = vmatmul.mubr.bf16.gmra.mxu0 %v4941
  %v5278 = vpop.f32.mrf.mxu0
  %v5279 = vadd.f32 0.0, %v5278
  %v5280 = vpop.f32.mrf.mxu0
  %v5281 = vadd.f32 0.0, %v5280
  %v5282 = vpop.f32.mrf.mxu0
  %v5283 = vadd.f32 0.0, %v5282
  %v5284 = vpop.f32.mrf.mxu0
  %v5285 = vadd.f32 0.0, %v5284
  %5286 = vmatprep.mubr.bf16.mxu0 0
  %5287 = vmatmul.mubr.bf16.gmra.mxu0 %v4942
  %v5288 = vpop.f32.mrf.mxu0
  %v5289 = vadd.f32 0.0, %v5288
  %v5290 = vpop.f32.mrf.mxu0
  %v5291 = vadd.f32 0.0, %v5290
  %v5292 = vpop.f32.mrf.mxu0
  %v5293 = vadd.f32 0.0, %v5292
  %v5294 = vpop.f32.mrf.mxu0
  %v5295 = vadd.f32 0.0, %v5294
  %5296 = vmatprep.mubr.bf16.mxu0 0
  %5297 = vmatmul.mubr.bf16.gmra.mxu0 %v4943
  %v5298 = vpop.f32.mrf.mxu0
  %v5299 = vadd.f32 0.0, %v5298
  %v5300 = vpop.f32.mrf.mxu0
  %v5301 = vadd.f32 0.0, %v5300
  %v5302 = vpop.f32.mrf.mxu0
  %v5303 = vadd.f32 0.0, %v5302
  %v5304 = vpop.f32.mrf.mxu0
  %v5305 = vadd.f32 0.0, %v5304
  %5306 = vmatprep.mubr.bf16.mxu0 0
  %5307 = vmatmul.mubr.bf16.gmra.mxu0 %v4944
  %v5308 = vpop.f32.mrf.mxu0
  %v5309 = vadd.f32 0.0, %v5308
  %v5310 = vpop.f32.mrf.mxu0
  %v5311 = vadd.f32 0.0, %v5310
  %v5312 = vpop.f32.mrf.mxu0
  %v5313 = vadd.f32 0.0, %v5312
  %v5314 = vpop.f32.mrf.mxu0
  %v5315 = vadd.f32 0.0, %v5314
  %5316 = vmatprep.mubr.bf16.mxu0 0
  %5317 = vmatmul.mubr.bf16.gmra.mxu0 %v4945
  %v5318 = vpop.f32.mrf.mxu0
  %v5319 = vadd.f32 0.0, %v5318
  %v5320 = vpop.f32.mrf.mxu0
  %v5321 = vadd.f32 0.0, %v5320
  %v5322 = vpop.f32.mrf.mxu0
  %v5323 = vadd.f32 0.0, %v5322
  %v5324 = vpop.f32.mrf.mxu0
  %v5325 = vadd.f32 0.0, %v5324
  %5326 = vmatprep.mubr.bf16.mxu0 0
  %5327 = vmatmul.mubr.bf16.gmra.mxu0 %v4946
  %v5328 = vpop.f32.mrf.mxu0
  %v5329 = vadd.f32 0.0, %v5328
  %v5330 = vpop.f32.mrf.mxu0
  %v5331 = vadd.f32 0.0, %v5330
  %v5332 = vpop.f32.mrf.mxu0
  %v5333 = vadd.f32 0.0, %v5332
  %v5334 = vpop.f32.mrf.mxu0
  %v5335 = vadd.f32 0.0, %v5334
  %5336 = vmatprep.mubr.bf16.mxu0 0
  %5337 = vmatmul.mubr.bf16.gmra.mxu0 %v4947
  %v5338 = vpop.f32.mrf.mxu0
  %v5339 = vadd.f32 0.0, %v5338
  %v5340 = vpop.f32.mrf.mxu0
  %v5341 = vadd.f32 0.0, %v5340
  %v5342 = vpop.f32.mrf.mxu0
  %v5343 = vadd.f32 0.0, %v5342
  %v5344 = vpop.f32.mrf.mxu0
  %v5345 = vadd.f32 0.0, %v5344
  %5346 = vmatprep.mubr.bf16.mxu0 0
  %5347 = vmatmul.mubr.bf16.gmra.mxu0 %v4948
  %v5348 = vpop.f32.mrf.mxu0
  %v5349 = vadd.f32 0.0, %v5348
  %v5350 = vpop.f32.mrf.mxu0
  %v5351 = vadd.f32 0.0, %v5350
  %v5352 = vpop.f32.mrf.mxu0
  %v5353 = vadd.f32 0.0, %v5352
  %v5354 = vpop.f32.mrf.mxu0
  %v5355 = vadd.f32 0.0, %v5354
  %5356 = vmatprep.mubr.bf16.mxu0 0
  %5357 = vmatmul.mubr.bf16.gmra.mxu0 %v4949
  %v5358 = vpop.f32.mrf.mxu0
  %v5359 = vadd.f32 0.0, %v5358
  %v5360 = vpop.f32.mrf.mxu0
  %v5361 = vadd.f32 0.0, %v5360
  %v5362 = vpop.f32.mrf.mxu0
  %v5363 = vadd.f32 0.0, %v5362
  %v5364 = vpop.f32.mrf.mxu0
  %v5365 = vadd.f32 0.0, %v5364
  %5366 = vmatprep.mubr.bf16.mxu0 0
  %5367 = vmatmul.mubr.bf16.gmra.mxu0 %v4950
  %v5368 = vpop.f32.mrf.mxu0
  %v5369 = vadd.f32 0.0, %v5368
  %v5370 = vpop.f32.mrf.mxu0
  %v5371 = vadd.f32 0.0, %v5370
  %v5372 = vpop.f32.mrf.mxu0
  %v5373 = vadd.f32 0.0, %v5372
  %v5374 = vpop.f32.mrf.mxu0
  %v5375 = vadd.f32 0.0, %v5374
  %5376 = vmatprep.mubr.bf16.mxu0 0
  %5377 = vmatmul.mubr.bf16.gmra.mxu0 %v4951
  %v5378 = vpop.f32.mrf.mxu0
  %v5379 = vadd.f32 0.0, %v5378
  %v5380 = vpop.f32.mrf.mxu0
  %v5381 = vadd.f32 0.0, %v5380
  %v5382 = vpop.f32.mrf.mxu0
  %v5383 = vadd.f32 0.0, %v5382
  %v5384 = vpop.f32.mrf.mxu0
  %v5385 = vadd.f32 0.0, %v5384
  %5386 = vmatprep.mubr.bf16.mxu0 0
  %5387 = vmatmul.mubr.bf16.gmra.mxu0 %v4952
  %v5388 = vpop.f32.mrf.mxu0
  %v5389 = vadd.f32 0.0, %v5388
  %v5390 = vpop.f32.mrf.mxu0
  %v5391 = vadd.f32 0.0, %v5390
  %v5392 = vpop.f32.mrf.mxu0
  %v5393 = vadd.f32 0.0, %v5392
  %v5394 = vpop.f32.mrf.mxu0
  %v5395 = vadd.f32 0.0, %v5394
  %5396 = vmatprep.mubr.bf16.mxu0 0
  %5397 = vmatmul.mubr.bf16.gmra.mxu0 %v4953
  %v5398 = vpop.f32.mrf.mxu0
  %v5399 = vadd.f32 0.0, %v5398
  %v5400 = vpop.f32.mrf.mxu0
  %v5401 = vadd.f32 0.0, %v5400
  %v5402 = vpop.f32.mrf.mxu0
  %v5403 = vadd.f32 0.0, %v5402
  %v5404 = vpop.f32.mrf.mxu0
  %v5405 = vadd.f32 0.0, %v5404
  %5406 = vmatprep.mubr.bf16.mxu0 0
  %5407 = vmatmul.mubr.bf16.gmra.mxu0 %v4954
  %v5408 = vpop.f32.mrf.mxu0
  %v5409 = vadd.f32 0.0, %v5408
  %v5410 = vpop.f32.mrf.mxu0
  %v5411 = vadd.f32 0.0, %v5410
  %v5412 = vpop.f32.mrf.mxu0
  %v5413 = vadd.f32 0.0, %v5412
  %v5414 = vpop.f32.mrf.mxu0
  %v5415 = vadd.f32 0.0, %v5414
  %5416 = vmatprep.mubr.bf16.mxu0 0
  %5417 = vmatmul.mubr.bf16.gmra.mxu0 %v4955
  %v5418 = vpop.f32.mrf.mxu0
  %v5419 = vadd.f32 0.0, %v5418
  %v5420 = vpop.f32.mrf.mxu0
  %v5421 = vadd.f32 0.0, %v5420
  %v5422 = vpop.f32.mrf.mxu0
  %v5423 = vadd.f32 0.0, %v5422
  %v5424 = vpop.f32.mrf.mxu0
  %v5425 = vadd.f32 0.0, %v5424
  %5426 = vmatprep.mubr.bf16.mxu0 0
  %5427 = vmatmul.mubr.bf16.gmra.mxu0 %v4956
  %v5428 = vpop.f32.mrf.mxu0
  %v5429 = vadd.f32 0.0, %v5428
  %v5430 = vpop.f32.mrf.mxu0
  %v5431 = vadd.f32 0.0, %v5430
  %v5432 = vpop.f32.mrf.mxu0
  %v5433 = vadd.f32 0.0, %v5432
  %v5434 = vpop.f32.mrf.mxu0
  %v5435 = vadd.f32 0.0, %v5434
  %5436 = vmatprep.mubr.bf16.mxu0 0
  %5437 = vmatmul.mubr.bf16.gmra.mxu0 %v4957
  %v5438 = vpop.f32.mrf.mxu0
  %v5439 = vadd.f32 0.0, %v5438
  %v5440 = vpop.f32.mrf.mxu0
  %v5441 = vadd.f32 0.0, %v5440
  %v5442 = vpop.f32.mrf.mxu0
  %v5443 = vadd.f32 0.0, %v5442
  %v5444 = vpop.f32.mrf.mxu0
  %v5445 = vadd.f32 0.0, %v5444
  %5446 = vmatprep.mubr.bf16.mxu0 0
  %5447 = vmatmul.mubr.bf16.gmra.mxu0 %v4958
  %v5448 = vpop.f32.mrf.mxu0
  %v5449 = vadd.f32 0.0, %v5448
  %v5450 = vpop.f32.mrf.mxu0
  %v5451 = vadd.f32 0.0, %v5450
  %v5452 = vpop.f32.mrf.mxu0
  %v5453 = vadd.f32 0.0, %v5452
  %v5454 = vpop.f32.mrf.mxu0
  %v5455 = vadd.f32 0.0, %v5454
  %5456 = vmatprep.mubr.bf16.mxu0 0
  %5457 = vmatmul.mubr.bf16.gmra.mxu0 %v4959
  %v5458 = vpop.f32.mrf.mxu0
  %v5459 = vadd.f32 0.0, %v5458
  %v5460 = vpop.f32.mrf.mxu0
  %v5461 = vadd.f32 0.0, %v5460
  %v5462 = vpop.f32.mrf.mxu0
  %v5463 = vadd.f32 0.0, %v5462
  %v5464 = vpop.f32.mrf.mxu0
  %v5465 = vadd.f32 0.0, %v5464
  %5466 = vmatprep.mubr.bf16.mxu0 0
  %5467 = vmatmul.mubr.bf16.gmra.mxu0 %v4960
  %v5468 = vpop.f32.mrf.mxu0
  %v5469 = vadd.f32 0.0, %v5468
  %v5470 = vpop.f32.mrf.mxu0
  %v5471 = vadd.f32 0.0, %v5470
  %v5472 = vpop.f32.mrf.mxu0
  %v5473 = vadd.f32 0.0, %v5472
  %v5474 = vpop.f32.mrf.mxu0
  %v5475 = vadd.f32 0.0, %v5474
  %5476 = vmatprep.mubr.bf16.mxu0 0
  %5477 = vmatmul.mubr.bf16.gmra.mxu0 %v4961
  %v5478 = vpop.f32.mrf.mxu0
  %v5479 = vadd.f32 0.0, %v5478
  %v5480 = vpop.f32.mrf.mxu0
  %v5481 = vadd.f32 0.0, %v5480
  %v5482 = vpop.f32.mrf.mxu0
  %v5483 = vadd.f32 0.0, %v5482
  %v5484 = vpop.f32.mrf.mxu0
  %v5485 = vadd.f32 0.0, %v5484
  %5486 = vmatprep.mubr.bf16.mxu0 0
  %5487 = vmatmul.mubr.bf16.gmra.mxu0 %v4962
  %v5488 = vpop.f32.mrf.mxu0
  %v5489 = vadd.f32 0.0, %v5488
  %v5490 = vpop.f32.mrf.mxu0
  %v5491 = vadd.f32 0.0, %v5490
  %v5492 = vpop.f32.mrf.mxu0
  %v5493 = vadd.f32 0.0, %v5492
  %v5494 = vpop.f32.mrf.mxu0
  %v5495 = vadd.f32 0.0, %v5494
  %5496 = vmatprep.mubr.bf16.mxu0 0
  %5497 = vmatmul.mubr.bf16.gmra.mxu0 %v4963
  %v5498 = vpop.f32.mrf.mxu0
  %v5499 = vadd.f32 0.0, %v5498
  %v5500 = vpop.f32.mrf.mxu0
  %v5501 = vadd.f32 0.0, %v5500
  %v5502 = vpop.f32.mrf.mxu0
  %v5503 = vadd.f32 0.0, %v5502
  %v5504 = vpop.f32.mrf.mxu0
  %v5505 = vadd.f32 0.0, %v5504
  %5506 = vmatprep.mubr.bf16.mxu0 0
  %5507 = vmatmul.mubr.bf16.gmra.mxu0 %v4964
  %v5508 = vpop.f32.mrf.mxu0
  %v5509 = vadd.f32 0.0, %v5508
  %v5510 = vpop.f32.mrf.mxu0
  %v5511 = vadd.f32 0.0, %v5510
  %v5512 = vpop.f32.mrf.mxu0
  %v5513 = vadd.f32 0.0, %v5512
  %v5514 = vpop.f32.mrf.mxu0
  %v5515 = vadd.f32 0.0, %v5514
  %5516 = vmatprep.mubr.bf16.mxu0 0
  %5517 = vmatmul.mubr.bf16.gmra.mxu0 %v4965
  %v5518 = vpop.f32.mrf.mxu0
  %v5519 = vadd.f32 0.0, %v5518
  %v5520 = vpop.f32.mrf.mxu0
  %v5521 = vadd.f32 0.0, %v5520
  %v5522 = vpop.f32.mrf.mxu0
  %v5523 = vadd.f32 0.0, %v5522
  %v5524 = vpop.f32.mrf.mxu0
  %v5525 = vadd.f32 0.0, %v5524
  %5526 = vdwg.mxu0
  %s5527 = scalar_lea.vmem %s6, 2304
  %v5528 = vld [vmem:[%s5527] sm:$0xff]
  %v5529 = vld [vmem:[%s5527 + $0x8] sm:$0xff]
  %v5530 = vld [vmem:[%s5527 + $0x10] sm:$0xff]
  %v5531 = vld [vmem:[%s5527 + $0x18] sm:$0xff]
  %v5532 = vld [vmem:[%s5527 + $0x20] sm:$0xff]
  %v5533 = vld [vmem:[%s5527 + $0x28] sm:$0xff]
  %v5534 = vld [vmem:[%s5527 + $0x30] sm:$0xff]
  %v5535 = vld [vmem:[%s5527 + $0x38] sm:$0xff]
  %v5536 = vld [vmem:[%s5527 + $0x40] sm:$0xff]
  %v5537 = vld [vmem:[%s5527 + $0x48] sm:$0xff]
  %v5538 = vld [vmem:[%s5527 + $0x50] sm:$0xff]
  %v5539 = vld [vmem:[%s5527 + $0x58] sm:$0xff]
  %v5540 = vld [vmem:[%s5527 + $0x60] sm:$0xff]
  %v5541 = vld [vmem:[%s5527 + $0x68] sm:$0xff]
  %v5542 = vld [vmem:[%s5527 + $0x70] sm:$0xff]
  %v5543 = vld [vmem:[%s5527 + $0x78] sm:$0xff]
  %v5544 = vld [vmem:[%s5527 + $0x80] sm:$0xff]
  %v5545 = vld [vmem:[%s5527 + $0x88] sm:$0xff]
  %v5546 = vld [vmem:[%s5527 + $0x90] sm:$0xff]
  %v5547 = vld [vmem:[%s5527 + $0x98] sm:$0xff]
  %v5548 = vld [vmem:[%s5527 + $0xa0] sm:$0xff]
  %v5549 = vld [vmem:[%s5527 + $0xa8] sm:$0xff]
  %v5550 = vld [vmem:[%s5527 + $0xb0] sm:$0xff]
  %v5551 = vld [vmem:[%s5527 + $0xb8] sm:$0xff]
  %v5552 = vld [vmem:[%s5527 + $0xc0] sm:$0xff]
  %v5553 = vld [vmem:[%s5527 + $0xc8] sm:$0xff]
  %v5554 = vld [vmem:[%s5527 + $0xd0] sm:$0xff]
  %v5555 = vld [vmem:[%s5527 + $0xd8] sm:$0xff]
  %v5556 = vld [vmem:[%s5527 + $0xe0] sm:$0xff]
  %v5557 = vld [vmem:[%s5527 + $0xe8] sm:$0xff]
  %v5558 = vld [vmem:[%s5527 + $0xf0] sm:$0xff]
  %v5559 = vld [vmem:[%s5527 + $0xf8] sm:$0xff]
  %v5560 = vld [vmem:[%s5527 + $0x100] sm:$0xff]
  %v5561 = vld [vmem:[%s5527 + $0x108] sm:$0xff]
  %v5562 = vld [vmem:[%s5527 + $0x110] sm:$0xff]
  %v5563 = vld [vmem:[%s5527 + $0x118] sm:$0xff]
  %v5564 = vld [vmem:[%s5527 + $0x120] sm:$0xff]
  %v5565 = vld [vmem:[%s5527 + $0x128] sm:$0xff]
  %v5566 = vld [vmem:[%s5527 + $0x130] sm:$0xff]
  %v5567 = vld [vmem:[%s5527 + $0x138] sm:$0xff]
  %v5568 = vld [vmem:[%s5527 + $0x140] sm:$0xff]
  %v5569 = vld [vmem:[%s5527 + $0x148] sm:$0xff]
  %v5570 = vld [vmem:[%s5527 + $0x150] sm:$0xff]
  %v5571 = vld [vmem:[%s5527 + $0x158] sm:$0xff]
  %v5572 = vld [vmem:[%s5527 + $0x160] sm:$0xff]
  %v5573 = vld [vmem:[%s5527 + $0x168] sm:$0xff]
  %v5574 = vld [vmem:[%s5527 + $0x170] sm:$0xff]
  %v5575 = vld [vmem:[%s5527 + $0x178] sm:$0xff]
  %v5576 = vld [vmem:[%s5527 + $0x180] sm:$0xff]
  %v5577 = vld [vmem:[%s5527 + $0x188] sm:$0xff]
  %v5578 = vld [vmem:[%s5527 + $0x190] sm:$0xff]
  %v5579 = vld [vmem:[%s5527 + $0x198] sm:$0xff]
  %v5580 = vld [vmem:[%s5527 + $0x1a0] sm:$0xff]
  %v5581 = vld [vmem:[%s5527 + $0x1a8] sm:$0xff]
  %v5582 = vld [vmem:[%s5527 + $0x1b0] sm:$0xff]
  %v5583 = vld [vmem:[%s5527 + $0x1b8] sm:$0xff]
  %v5584 = vld [vmem:[%s5527 + $0x1c0] sm:$0xff]
  %v5585 = vld [vmem:[%s5527 + $0x1c8] sm:$0xff]
  %v5586 = vld [vmem:[%s5527 + $0x1d0] sm:$0xff]
  %v5587 = vld [vmem:[%s5527 + $0x1d8] sm:$0xff]
  %v5588 = vld [vmem:[%s5527 + $0x1e0] sm:$0xff]
  %v5589 = vld [vmem:[%s5527 + $0x1e8] sm:$0xff]
  %v5590 = vld [vmem:[%s5527 + $0x1f0] sm:$0xff]
  %v5591 = vld [vmem:[%s5527 + $0x1f8] sm:$0xff]
  %v5592 = vld [vmem:[%s5527 + $0x200] sm:$0xff]
  %v5593 = vld [vmem:[%s5527 + $0x208] sm:$0xff]
  %v5594 = vld [vmem:[%s5527 + $0x210] sm:$0xff]
  %v5595 = vld [vmem:[%s5527 + $0x218] sm:$0xff]
  %v5596 = vld [vmem:[%s5527 + $0x220] sm:$0xff]
  %v5597 = vld [vmem:[%s5527 + $0x228] sm:$0xff]
  %v5598 = vld [vmem:[%s5527 + $0x230] sm:$0xff]
  %v5599 = vld [vmem:[%s5527 + $0x238] sm:$0xff]
  %v5600 = vld [vmem:[%s5527 + $0x240] sm:$0xff]
  %v5601 = vld [vmem:[%s5527 + $0x248] sm:$0xff]
  %v5602 = vld [vmem:[%s5527 + $0x250] sm:$0xff]
  %v5603 = vld [vmem:[%s5527 + $0x258] sm:$0xff]
  %v5604 = vld [vmem:[%s5527 + $0x260] sm:$0xff]
  %v5605 = vld [vmem:[%s5527 + $0x268] sm:$0xff]
  %v5606 = vld [vmem:[%s5527 + $0x270] sm:$0xff]
  %v5607 = vld [vmem:[%s5527 + $0x278] sm:$0xff]
  %v5608 = vld [vmem:[%s5527 + $0x280] sm:$0xff]
  %v5609 = vld [vmem:[%s5527 + $0x288] sm:$0xff]
  %v5610 = vld [vmem:[%s5527 + $0x290] sm:$0xff]
  %v5611 = vld [vmem:[%s5527 + $0x298] sm:$0xff]
  %v5612 = vld [vmem:[%s5527 + $0x2a0] sm:$0xff]
  %v5613 = vld [vmem:[%s5527 + $0x2a8] sm:$0xff]
  %v5614 = vld [vmem:[%s5527 + $0x2b0] sm:$0xff]
  %v5615 = vld [vmem:[%s5527 + $0x2b8] sm:$0xff]
  %v5616 = vld [vmem:[%s5527 + $0x2c0] sm:$0xff]
  %v5617 = vld [vmem:[%s5527 + $0x2c8] sm:$0xff]
  %v5618 = vld [vmem:[%s5527 + $0x2d0] sm:$0xff]
  %v5619 = vld [vmem:[%s5527 + $0x2d8] sm:$0xff]
  %v5620 = vld [vmem:[%s5527 + $0x2e0] sm:$0xff]
  %v5621 = vld [vmem:[%s5527 + $0x2e8] sm:$0xff]
  %v5622 = vld [vmem:[%s5527 + $0x2f0] sm:$0xff]
  %v5623 = vld [vmem:[%s5527 + $0x2f8] sm:$0xff]
  %v5624 = vpack.c.bf16 %v5053, %v5049
  %v5625 = vpack.c.bf16 %v5055, %v5051
  %v5626 = vpack.c.bf16 %v5213, %v5209
  %v5627 = vpack.c.bf16 %v5215, %v5211
  %v5628 = vpack.c.bf16 %v5373, %v5369
  %v5629 = vpack.c.bf16 %v5375, %v5371
  %v5630 = vpack.c.bf16 %v5063, %v5059
  %v5631 = vpack.c.bf16 %v5065, %v5061
  %v5632 = vpack.c.bf16 %v5223, %v5219
  %v5633 = vpack.c.bf16 %v5225, %v5221
  %v5634 = vpack.c.bf16 %v5383, %v5379
  %v5635 = vpack.c.bf16 %v5385, %v5381
  %v5636 = vpack.c.bf16 %v5073, %v5069
  %v5637 = vpack.c.bf16 %v5075, %v5071
  %v5638 = vpack.c.bf16 %v5233, %v5229
  %v5639 = vpack.c.bf16 %v5235, %v5231
  %v5640 = vpack.c.bf16 %v5393, %v5389
  %v5641 = vpack.c.bf16 %v5395, %v5391
  %v5642 = vpack.c.bf16 %v5083, %v5079
  %v5643 = vpack.c.bf16 %v5085, %v5081
  %v5644 = vpack.c.bf16 %v5243, %v5239
  %v5645 = vpack.c.bf16 %v5245, %v5241
  %v5646 = vpack.c.bf16 %v5403, %v5399
  %v5647 = vpack.c.bf16 %v5405, %v5401
  %v5648 = vpack.c.bf16 %v5093, %v5089
  %v5649 = vpack.c.bf16 %v5095, %v5091
  %v5650 = vpack.c.bf16 %v5253, %v5249
  %v5651 = vpack.c.bf16 %v5255, %v5251
  %v5652 = vpack.c.bf16 %v5413, %v5409
  %v5653 = vpack.c.bf16 %v5415, %v5411
  %v5654 = vpack.c.bf16 %v5103, %v5099
  %v5655 = vpack.c.bf16 %v5105, %v5101
  %v5656 = vpack.c.bf16 %v5263, %v5259
  %v5657 = vpack.c.bf16 %v5265, %v5261
  %v5658 = vpack.c.bf16 %v5423, %v5419
  %v5659 = vpack.c.bf16 %v5425, %v5421
  %v5660 = vpack.c.bf16 %v5113, %v5109
  %v5661 = vpack.c.bf16 %v5115, %v5111
  %v5662 = vpack.c.bf16 %v5273, %v5269
  %v5663 = vpack.c.bf16 %v5275, %v5271
  %v5664 = vpack.c.bf16 %v5433, %v5429
  %v5665 = vpack.c.bf16 %v5435, %v5431
  %v5666 = vpack.c.bf16 %v5123, %v5119
  %v5667 = vpack.c.bf16 %v5125, %v5121
  %v5668 = vpack.c.bf16 %v5283, %v5279
  %v5669 = vpack.c.bf16 %v5285, %v5281
  %v5670 = vpack.c.bf16 %v5443, %v5439
  %v5671 = vpack.c.bf16 %v5445, %v5441
  %v5672 = vpack.c.bf16 %v5133, %v5129
  %v5673 = vpack.c.bf16 %v5135, %v5131
  %v5674 = vpack.c.bf16 %v5293, %v5289
  %v5675 = vpack.c.bf16 %v5295, %v5291
  %v5676 = vpack.c.bf16 %v5453, %v5449
  %v5677 = vpack.c.bf16 %v5455, %v5451
  %v5678 = vpack.c.bf16 %v5143, %v5139
  %v5679 = vpack.c.bf16 %v5145, %v5141
  %v5680 = vpack.c.bf16 %v5303, %v5299
  %v5681 = vpack.c.bf16 %v5305, %v5301
  %v5682 = vpack.c.bf16 %v5463, %v5459
  %v5683 = vpack.c.bf16 %v5465, %v5461
  %v5684 = vpack.c.bf16 %v5153, %v5149
  %v5685 = vpack.c.bf16 %v5155, %v5151
  %v5686 = vpack.c.bf16 %v5313, %v5309
  %v5687 = vpack.c.bf16 %v5315, %v5311
  %v5688 = vpack.c.bf16 %v5473, %v5469
  %v5689 = vpack.c.bf16 %v5475, %v5471
  %v5690 = vpack.c.bf16 %v5163, %v5159
  %v5691 = vpack.c.bf16 %v5165, %v5161
  %v5692 = vpack.c.bf16 %v5323, %v5319
  %v5693 = vpack.c.bf16 %v5325, %v5321
  %v5694 = vpack.c.bf16 %v5483, %v5479
  %v5695 = vpack.c.bf16 %v5485, %v5481
  %v5696 = vpack.c.bf16 %v5173, %v5169
  %v5697 = vpack.c.bf16 %v5175, %v5171
  %v5698 = vpack.c.bf16 %v5333, %v5329
  %v5699 = vpack.c.bf16 %v5335, %v5331
  %v5700 = vpack.c.bf16 %v5493, %v5489
  %v5701 = vpack.c.bf16 %v5495, %v5491
  %v5702 = vpack.c.bf16 %v5183, %v5179
  %v5703 = vpack.c.bf16 %v5185, %v5181
  %v5704 = vpack.c.bf16 %v5343, %v5339
  %v5705 = vpack.c.bf16 %v5345, %v5341
  %v5706 = vpack.c.bf16 %v5503, %v5499
  %v5707 = vpack.c.bf16 %v5505, %v5501
  %v5708 = vpack.c.bf16 %v5193, %v5189
  %v5709 = vpack.c.bf16 %v5195, %v5191
  %v5710 = vpack.c.bf16 %v5353, %v5349
  %v5711 = vpack.c.bf16 %v5355, %v5351
  %v5712 = vpack.c.bf16 %v5513, %v5509
  %v5713 = vpack.c.bf16 %v5515, %v5511
  %v5714 = vpack.c.bf16 %v5203, %v5199
  %v5715 = vpack.c.bf16 %v5205, %v5201
  %v5716 = vpack.c.bf16 %v5363, %v5359
  %v5717 = vpack.c.bf16 %v5365, %v5361
  %v5718 = vpack.c.bf16 %v5523, %v5519
  %v5719 = vpack.c.bf16 %v5525, %v5521
  %v5816 = vunpack.c.l.b16 %v5528
  %v5817 = vunpack.c.h.b16 %v5528
  %v5818 = vunpack.c.l.b16 %v5529
  %v5819 = vunpack.c.h.b16 %v5529
  %v5820 = vunpack.c.l.b16 %v5530
  %v5821 = vunpack.c.h.b16 %v5530
  %v5822 = vunpack.c.l.b16 %v5531
  %v5823 = vunpack.c.h.b16 %v5531
  %v5824 = vunpack.c.l.b16 %v5532
  %v5825 = vunpack.c.h.b16 %v5532
  %v5826 = vunpack.c.l.b16 %v5533
  %v5827 = vunpack.c.h.b16 %v5533
  %v5828 = vunpack.c.l.b16 %v5534
  %v5829 = vunpack.c.h.b16 %v5534
  %v5830 = vunpack.c.l.b16 %v5535
  %v5831 = vunpack.c.h.b16 %v5535
  %v5832 = vunpack.c.l.b16 %v5536
  %v5833 = vunpack.c.h.b16 %v5536
  %v5834 = vunpack.c.l.b16 %v5537
  %v5835 = vunpack.c.h.b16 %v5537
  %v5836 = vunpack.c.l.b16 %v5538
  %v5837 = vunpack.c.h.b16 %v5538
  %v5838 = vunpack.c.l.b16 %v5539
  %v5839 = vunpack.c.h.b16 %v5539
  %v5840 = vunpack.c.l.b16 %v5540
  %v5841 = vunpack.c.h.b16 %v5540
  %v5842 = vunpack.c.l.b16 %v5541
  %v5843 = vunpack.c.h.b16 %v5541
  %v5844 = vunpack.c.l.b16 %v5542
  %v5845 = vunpack.c.h.b16 %v5542
  %v5846 = vunpack.c.l.b16 %v5543
  %v5847 = vunpack.c.h.b16 %v5543
  %v5848 = vunpack.c.l.b16 %v5544
  %v5849 = vunpack.c.h.b16 %v5544
  %v5850 = vunpack.c.l.b16 %v5545
  %v5851 = vunpack.c.h.b16 %v5545
  %v5852 = vunpack.c.l.b16 %v5546
  %v5853 = vunpack.c.h.b16 %v5546
  %v5854 = vunpack.c.l.b16 %v5547
  %v5855 = vunpack.c.h.b16 %v5547
  %v5856 = vunpack.c.l.b16 %v5548
  %v5857 = vunpack.c.h.b16 %v5548
  %v5858 = vunpack.c.l.b16 %v5549
  %v5859 = vunpack.c.h.b16 %v5549
  %v5860 = vunpack.c.l.b16 %v5550
  %v5861 = vunpack.c.h.b16 %v5550
  %v5862 = vunpack.c.l.b16 %v5551
  %v5863 = vunpack.c.h.b16 %v5551
  %v5864 = vunpack.c.l.b16 %v5552
  %v5865 = vunpack.c.h.b16 %v5552
  %v5866 = vunpack.c.l.b16 %v5553
  %v5867 = vunpack.c.h.b16 %v5553
  %v5868 = vunpack.c.l.b16 %v5554
  %v5869 = vunpack.c.h.b16 %v5554
  %v5870 = vunpack.c.l.b16 %v5555
  %v5871 = vunpack.c.h.b16 %v5555
  %v5872 = vunpack.c.l.b16 %v5556
  %v5873 = vunpack.c.h.b16 %v5556
  %v5874 = vunpack.c.l.b16 %v5557
  %v5875 = vunpack.c.h.b16 %v5557
  %v5876 = vunpack.c.l.b16 %v5558
  %v5877 = vunpack.c.h.b16 %v5558
  %v5878 = vunpack.c.l.b16 %v5559
  %v5879 = vunpack.c.h.b16 %v5559
  %v5880 = vunpack.c.l.b16 %v5560
  %v5881 = vunpack.c.h.b16 %v5560
  %v5882 = vunpack.c.l.b16 %v5561
  %v5883 = vunpack.c.h.b16 %v5561
  %v5884 = vunpack.c.l.b16 %v5562
  %v5885 = vunpack.c.h.b16 %v5562
  %v5886 = vunpack.c.l.b16 %v5563
  %v5887 = vunpack.c.h.b16 %v5563
  %v5888 = vunpack.c.l.b16 %v5564
  %v5889 = vunpack.c.h.b16 %v5564
  %v5890 = vunpack.c.l.b16 %v5565
  %v5891 = vunpack.c.h.b16 %v5565
  %v5892 = vunpack.c.l.b16 %v5566
  %v5893 = vunpack.c.h.b16 %v5566
  %v5894 = vunpack.c.l.b16 %v5567
  %v5895 = vunpack.c.h.b16 %v5567
  %v5896 = vunpack.c.l.b16 %v5568
  %v5897 = vunpack.c.h.b16 %v5568
  %v5898 = vunpack.c.l.b16 %v5569
  %v5899 = vunpack.c.h.b16 %v5569
  %v5900 = vunpack.c.l.b16 %v5570
  %v5901 = vunpack.c.h.b16 %v5570
  %v5902 = vunpack.c.l.b16 %v5571
  %v5903 = vunpack.c.h.b16 %v5571
  %v5904 = vunpack.c.l.b16 %v5572
  %v5905 = vunpack.c.h.b16 %v5572
  %v5906 = vunpack.c.l.b16 %v5573
  %v5907 = vunpack.c.h.b16 %v5573
  %v5908 = vunpack.c.l.b16 %v5574
  %v5909 = vunpack.c.h.b16 %v5574
  %v5910 = vunpack.c.l.b16 %v5575
  %v5911 = vunpack.c.h.b16 %v5575
  %v5912 = vunpack.c.l.b16 %v5576
  %v5913 = vunpack.c.h.b16 %v5576
  %v5914 = vunpack.c.l.b16 %v5577
  %v5915 = vunpack.c.h.b16 %v5577
  %v5916 = vunpack.c.l.b16 %v5578
  %v5917 = vunpack.c.h.b16 %v5578
  %v5918 = vunpack.c.l.b16 %v5579
  %v5919 = vunpack.c.h.b16 %v5579
  %v5920 = vunpack.c.l.b16 %v5580
  %v5921 = vunpack.c.h.b16 %v5580
  %v5922 = vunpack.c.l.b16 %v5581
  %v5923 = vunpack.c.h.b16 %v5581
  %v5924 = vunpack.c.l.b16 %v5582
  %v5925 = vunpack.c.h.b16 %v5582
  %v5926 = vunpack.c.l.b16 %v5583
  %v5927 = vunpack.c.h.b16 %v5583
  %v5928 = vunpack.c.l.b16 %v5584
  %v5929 = vunpack.c.h.b16 %v5584
  %v5930 = vunpack.c.l.b16 %v5585
  %v5931 = vunpack.c.h.b16 %v5585
  %v5932 = vunpack.c.l.b16 %v5586
  %v5933 = vunpack.c.h.b16 %v5586
  %v5934 = vunpack.c.l.b16 %v5587
  %v5935 = vunpack.c.h.b16 %v5587
  %v5936 = vunpack.c.l.b16 %v5588
  %v5937 = vunpack.c.h.b16 %v5588
  %v5938 = vunpack.c.l.b16 %v5589
  %v5939 = vunpack.c.h.b16 %v5589
  %v5940 = vunpack.c.l.b16 %v5590
  %v5941 = vunpack.c.h.b16 %v5590
  %v5942 = vunpack.c.l.b16 %v5591
  %v5943 = vunpack.c.h.b16 %v5591
  %v5944 = vunpack.c.l.b16 %v5592
  %v5945 = vunpack.c.h.b16 %v5592
  %v5946 = vunpack.c.l.b16 %v5593
  %v5947 = vunpack.c.h.b16 %v5593
  %v5948 = vunpack.c.l.b16 %v5594
  %v5949 = vunpack.c.h.b16 %v5594
  %v5950 = vunpack.c.l.b16 %v5595
  %v5951 = vunpack.c.h.b16 %v5595
  %v5952 = vunpack.c.l.b16 %v5596
  %v5953 = vunpack.c.h.b16 %v5596
  %v5954 = vunpack.c.l.b16 %v5597
  %v5955 = vunpack.c.h.b16 %v5597
  %v5956 = vunpack.c.l.b16 %v5598
  %v5957 = vunpack.c.h.b16 %v5598
  %v5958 = vunpack.c.l.b16 %v5599
  %v5959 = vunpack.c.h.b16 %v5599
  %v5960 = vunpack.c.l.b16 %v5600
  %v5961 = vunpack.c.h.b16 %v5600
  %v5962 = vunpack.c.l.b16 %v5601
  %v5963 = vunpack.c.h.b16 %v5601
  %v5964 = vunpack.c.l.b16 %v5602
  %v5965 = vunpack.c.h.b16 %v5602
  %v5966 = vunpack.c.l.b16 %v5603
  %v5967 = vunpack.c.h.b16 %v5603
  %v5968 = vunpack.c.l.b16 %v5604
  %v5969 = vunpack.c.h.b16 %v5604
  %v5970 = vunpack.c.l.b16 %v5605
  %v5971 = vunpack.c.h.b16 %v5605
  %v5972 = vunpack.c.l.b16 %v5606
  %v5973 = vunpack.c.h.b16 %v5606
  %v5974 = vunpack.c.l.b16 %v5607
  %v5975 = vunpack.c.h.b16 %v5607
  %v5976 = vunpack.c.l.b16 %v5608
  %v5977 = vunpack.c.h.b16 %v5608
  %v5978 = vunpack.c.l.b16 %v5609
  %v5979 = vunpack.c.h.b16 %v5609
  %v5980 = vunpack.c.l.b16 %v5610
  %v5981 = vunpack.c.h.b16 %v5610
  %v5982 = vunpack.c.l.b16 %v5611
  %v5983 = vunpack.c.h.b16 %v5611
  %v5984 = vunpack.c.l.b16 %v5612
  %v5985 = vunpack.c.h.b16 %v5612
  %v5986 = vunpack.c.l.b16 %v5613
  %v5987 = vunpack.c.h.b16 %v5613
  %v5988 = vunpack.c.l.b16 %v5614
  %v5989 = vunpack.c.h.b16 %v5614
  %v5990 = vunpack.c.l.b16 %v5615
  %v5991 = vunpack.c.h.b16 %v5615
  %v5992 = vunpack.c.l.b16 %v5616
  %v5993 = vunpack.c.h.b16 %v5616
  %v5994 = vunpack.c.l.b16 %v5617
  %v5995 = vunpack.c.h.b16 %v5617
  %v5996 = vunpack.c.l.b16 %v5618
  %v5997 = vunpack.c.h.b16 %v5618
  %v5998 = vunpack.c.l.b16 %v5619
  %v5999 = vunpack.c.h.b16 %v5619
  %v6000 = vunpack.c.l.b16 %v5620
  %v6001 = vunpack.c.h.b16 %v5620
  %v6002 = vunpack.c.l.b16 %v5621
  %v6003 = vunpack.c.h.b16 %v5621
  %v6004 = vunpack.c.l.b16 %v5622
  %v6005 = vunpack.c.h.b16 %v5622
  %v6006 = vunpack.c.l.b16 %v5623
  %v6007 = vunpack.c.h.b16 %v5623
  %v6008 = vpack.c.b16 %v5818, %v5816
  %v6009 = vpack.c.b16 %v5819, %v5817
  %v6010 = vpack.c.b16 %v5822, %v5820
  %v6011 = vpack.c.b16 %v5823, %v5821
  %v6012 = vpack.c.b16 %v5826, %v5824
  %v6013 = vpack.c.b16 %v5827, %v5825
  %v6014 = vpack.c.b16 %v5830, %v5828
  %v6015 = vpack.c.b16 %v5831, %v5829
  %v6016 = vpack.c.b16 %v5834, %v5832
  %v6017 = vpack.c.b16 %v5835, %v5833
  %v6018 = vpack.c.b16 %v5838, %v5836
  %v6019 = vpack.c.b16 %v5839, %v5837
  %v6020 = vpack.c.b16 %v5842, %v5840
  %v6021 = vpack.c.b16 %v5843, %v5841
  %v6022 = vpack.c.b16 %v5846, %v5844
  %v6023 = vpack.c.b16 %v5847, %v5845
  %v6024 = vpack.c.b16 %v5850, %v5848
  %v6025 = vpack.c.b16 %v5851, %v5849
  %v6026 = vpack.c.b16 %v5854, %v5852
  %v6027 = vpack.c.b16 %v5855, %v5853
  %v6028 = vpack.c.b16 %v5858, %v5856
  %v6029 = vpack.c.b16 %v5859, %v5857
  %v6030 = vpack.c.b16 %v5862, %v5860
  %v6031 = vpack.c.b16 %v5863, %v5861
  %v6032 = vpack.c.b16 %v5866, %v5864
  %v6033 = vpack.c.b16 %v5867, %v5865
  %v6034 = vpack.c.b16 %v5870, %v5868
  %v6035 = vpack.c.b16 %v5871, %v5869
  %v6036 = vpack.c.b16 %v5874, %v5872
  %v6037 = vpack.c.b16 %v5875, %v5873
  %v6038 = vpack.c.b16 %v5878, %v5876
  %v6039 = vpack.c.b16 %v5879, %v5877
  %v6040 = vpack.c.b16 %v5882, %v5880
  %v6041 = vpack.c.b16 %v5883, %v5881
  %v6042 = vpack.c.b16 %v5886, %v5884
  %v6043 = vpack.c.b16 %v5887, %v5885
  %v6044 = vpack.c.b16 %v5890, %v5888
  %v6045 = vpack.c.b16 %v5891, %v5889
  %v6046 = vpack.c.b16 %v5894, %v5892
  %v6047 = vpack.c.b16 %v5895, %v5893
  %v6048 = vpack.c.b16 %v5898, %v5896
  %v6049 = vpack.c.b16 %v5899, %v5897
  %v6050 = vpack.c.b16 %v5902, %v5900
  %v6051 = vpack.c.b16 %v5903, %v5901
  %v6052 = vpack.c.b16 %v5906, %v5904
  %v6053 = vpack.c.b16 %v5907, %v5905
  %v6054 = vpack.c.b16 %v5910, %v5908
  %v6055 = vpack.c.b16 %v5911, %v5909
  %v6056 = vpack.c.b16 %v5914, %v5912
  %v6057 = vpack.c.b16 %v5915, %v5913
  %v6058 = vpack.c.b16 %v5918, %v5916
  %v6059 = vpack.c.b16 %v5919, %v5917
  %v6060 = vpack.c.b16 %v5922, %v5920
  %v6061 = vpack.c.b16 %v5923, %v5921
  %v6062 = vpack.c.b16 %v5926, %v5924
  %v6063 = vpack.c.b16 %v5927, %v5925
  %v6064 = vpack.c.b16 %v5930, %v5928
  %v6065 = vpack.c.b16 %v5931, %v5929
  %v6066 = vpack.c.b16 %v5934, %v5932
  %v6067 = vpack.c.b16 %v5935, %v5933
  %v6068 = vpack.c.b16 %v5938, %v5936
  %v6069 = vpack.c.b16 %v5939, %v5937
  %v6070 = vpack.c.b16 %v5942, %v5940
  %v6071 = vpack.c.b16 %v5943, %v5941
  %v6072 = vpack.c.b16 %v5946, %v5944
  %v6073 = vpack.c.b16 %v5947, %v5945
  %v6074 = vpack.c.b16 %v5950, %v5948
  %v6075 = vpack.c.b16 %v5951, %v5949
  %v6076 = vpack.c.b16 %v5954, %v5952
  %v6077 = vpack.c.b16 %v5955, %v5953
  %v6078 = vpack.c.b16 %v5958, %v5956
  %v6079 = vpack.c.b16 %v5959, %v5957
  %v6080 = vpack.c.b16 %v5962, %v5960
  %v6081 = vpack.c.b16 %v5963, %v5961
  %v6082 = vpack.c.b16 %v5966, %v5964
  %v6083 = vpack.c.b16 %v5967, %v5965
  %v6084 = vpack.c.b16 %v5970, %v5968
  %v6085 = vpack.c.b16 %v5971, %v5969
  %v6086 = vpack.c.b16 %v5974, %v5972
  %v6087 = vpack.c.b16 %v5975, %v5973
  %v6088 = vpack.c.b16 %v5978, %v5976
  %v6089 = vpack.c.b16 %v5979, %v5977
  %v6090 = vpack.c.b16 %v5982, %v5980
  %v6091 = vpack.c.b16 %v5983, %v5981
  %v6092 = vpack.c.b16 %v5986, %v5984
  %v6093 = vpack.c.b16 %v5987, %v5985
  %v6094 = vpack.c.b16 %v5990, %v5988
  %v6095 = vpack.c.b16 %v5991, %v5989
  %v6096 = vpack.c.b16 %v5994, %v5992
  %v6097 = vpack.c.b16 %v5995, %v5993
  %v6098 = vpack.c.b16 %v5998, %v5996
  %v6099 = vpack.c.b16 %v5999, %v5997
  %v6100 = vpack.c.b16 %v6002, %v6000
  %v6101 = vpack.c.b16 %v6003, %v6001
  %v6102 = vpack.c.b16 %v6006, %v6004
  %v6103 = vpack.c.b16 %v6007, %v6005
  %6200 = vmatprep.subr.bf16.mxu0 %v6023
  %6201 = vmatpush1.bf16.msra.mxu0 %v6022
  %6202 = vmatprep.subr.bf16.mxu0 %v6021
  %6203 = vmatpush1.bf16.msra.mxu0 %v6020
  %6204 = vmatprep.subr.bf16.mxu0 %v6019
  %6205 = vmatpush1.bf16.msra.mxu0 %v6018
  %6206 = vmatprep.subr.bf16.mxu0 %v6017
  %6207 = vmatpush1.bf16.msra.mxu0 %v6016
  %6208 = vmatprep.subr.bf16.mxu0 %v6015
  %6209 = vmatpush1.bf16.msra.mxu0 %v6014
  %6210 = vmatprep.subr.bf16.mxu0 %v6013
  %6211 = vmatpush1.bf16.msra.mxu0 %v6012
  %6212 = vmatprep.subr.bf16.mxu0 %v6011
  %6213 = vmatpush1.bf16.msra.mxu0 %v6010
  %6214 = vmatprep.subr.bf16.mxu0 %v6009
  %6215 = vmatpush1.bf16.msra.mxu0 %v6008
  %6216 = vmatprep.subr.bf16.mxu0 %v6039
  %6217 = vmatpush2.bf16.msra.mxu0 %v6038
  %6218 = vmatprep.subr.bf16.mxu0 %v6037
  %6219 = vmatpush2.bf16.msra.mxu0 %v6036
  %6220 = vmatprep.subr.bf16.mxu0 %v6035
  %6221 = vmatpush2.bf16.msra.mxu0 %v6034
  %6222 = vmatprep.subr.bf16.mxu0 %v6033
  %6223 = vmatpush2.bf16.msra.mxu0 %v6032
  %6224 = vmatprep.subr.bf16.mxu0 %v6031
  %6225 = vmatpush2.bf16.msra.mxu0 %v6030
  %6226 = vmatprep.subr.bf16.mxu0 %v6029
  %6227 = vmatpush2.bf16.msra.mxu0 %v6028
  %6228 = vmatprep.subr.bf16.mxu0 %v6027
  %6229 = vmatpush2.bf16.msra.mxu0 %v6026
  %6230 = vmatprep.subr.bf16.mxu0 %v6025
  %6231 = vmatpush2.bf16.msra.mxu0 %v6024
  %6232 = vmatprep.mubr.bf16.mxu0 %v5625
  %6233 = vmatmul.mubr.bf16.gmra.mxu0 %v5624
  %v6234 = vpop.f32.mrf.mxu0
  %v6235 = vadd.f32 0.0, %v6234
  %v6236 = vpop.f32.mrf.mxu0
  %v6237 = vadd.f32 0.0, %v6236
  %v6238 = vpop.f32.mrf.mxu0
  %v6239 = vadd.f32 0.0, %v6238
  %v6240 = vpop.f32.mrf.mxu0
  %v6241 = vadd.f32 0.0, %v6240
  %6242 = vmatprep.mubr.bf16.mxu0 %v5631
  %6243 = vmatmul.mubr.bf16.gmra.mxu0 %v5630
  %v6244 = vpop.f32.mrf.mxu0
  %v6245 = vadd.f32 0.0, %v6244
  %v6246 = vpop.f32.mrf.mxu0
  %v6247 = vadd.f32 0.0, %v6246
  %v6248 = vpop.f32.mrf.mxu0
  %v6249 = vadd.f32 0.0, %v6248
  %v6250 = vpop.f32.mrf.mxu0
  %v6251 = vadd.f32 0.0, %v6250
  %6252 = vmatprep.mubr.bf16.mxu0 %v5637
  %6253 = vmatmul.mubr.bf16.gmra.mxu0 %v5636
  %v6254 = vpop.f32.mrf.mxu0
  %v6255 = vadd.f32 0.0, %v6254
  %v6256 = vpop.f32.mrf.mxu0
  %v6257 = vadd.f32 0.0, %v6256
  %v6258 = vpop.f32.mrf.mxu0
  %v6259 = vadd.f32 0.0, %v6258
  %v6260 = vpop.f32.mrf.mxu0
  %v6261 = vadd.f32 0.0, %v6260
  %6262 = vmatprep.mubr.bf16.mxu0 %v5643
  %6263 = vmatmul.mubr.bf16.gmra.mxu0 %v5642
  %v6264 = vpop.f32.mrf.mxu0
  %v6265 = vadd.f32 0.0, %v6264
  %v6266 = vpop.f32.mrf.mxu0
  %v6267 = vadd.f32 0.0, %v6266
  %v6268 = vpop.f32.mrf.mxu0
  %v6269 = vadd.f32 0.0, %v6268
  %v6270 = vpop.f32.mrf.mxu0
  %v6271 = vadd.f32 0.0, %v6270
  %6272 = vmatprep.mubr.bf16.mxu0 %v5649
  %6273 = vmatmul.mubr.bf16.gmra.mxu0 %v5648
  %v6274 = vpop.f32.mrf.mxu0
  %v6275 = vadd.f32 0.0, %v6274
  %v6276 = vpop.f32.mrf.mxu0
  %v6277 = vadd.f32 0.0, %v6276
  %v6278 = vpop.f32.mrf.mxu0
  %v6279 = vadd.f32 0.0, %v6278
  %v6280 = vpop.f32.mrf.mxu0
  %v6281 = vadd.f32 0.0, %v6280
  %6282 = vmatprep.mubr.bf16.mxu0 %v5655
  %6283 = vmatmul.mubr.bf16.gmra.mxu0 %v5654
  %v6284 = vpop.f32.mrf.mxu0
  %v6285 = vadd.f32 0.0, %v6284
  %v6286 = vpop.f32.mrf.mxu0
  %v6287 = vadd.f32 0.0, %v6286
  %v6288 = vpop.f32.mrf.mxu0
  %v6289 = vadd.f32 0.0, %v6288
  %v6290 = vpop.f32.mrf.mxu0
  %v6291 = vadd.f32 0.0, %v6290
  %6292 = vmatprep.mubr.bf16.mxu0 %v5661
  %6293 = vmatmul.mubr.bf16.gmra.mxu0 %v5660
  %v6294 = vpop.f32.mrf.mxu0
  %v6295 = vadd.f32 0.0, %v6294
  %v6296 = vpop.f32.mrf.mxu0
  %v6297 = vadd.f32 0.0, %v6296
  %v6298 = vpop.f32.mrf.mxu0
  %v6299 = vadd.f32 0.0, %v6298
  %v6300 = vpop.f32.mrf.mxu0
  %v6301 = vadd.f32 0.0, %v6300
  %6302 = vmatprep.mubr.bf16.mxu0 %v5667
  %6303 = vmatmul.mubr.bf16.gmra.mxu0 %v5666
  %v6304 = vpop.f32.mrf.mxu0
  %v6305 = vadd.f32 0.0, %v6304
  %v6306 = vpop.f32.mrf.mxu0
  %v6307 = vadd.f32 0.0, %v6306
  %v6308 = vpop.f32.mrf.mxu0
  %v6309 = vadd.f32 0.0, %v6308
  %v6310 = vpop.f32.mrf.mxu0
  %v6311 = vadd.f32 0.0, %v6310
  %6312 = vmatprep.mubr.bf16.mxu0 %v5673
  %6313 = vmatmul.mubr.bf16.gmra.mxu0 %v5672
  %v6314 = vpop.f32.mrf.mxu0
  %v6315 = vadd.f32 0.0, %v6314
  %v6316 = vpop.f32.mrf.mxu0
  %v6317 = vadd.f32 0.0, %v6316
  %v6318 = vpop.f32.mrf.mxu0
  %v6319 = vadd.f32 0.0, %v6318
  %v6320 = vpop.f32.mrf.mxu0
  %v6321 = vadd.f32 0.0, %v6320
  %6322 = vmatprep.mubr.bf16.mxu0 %v5679
  %6323 = vmatmul.mubr.bf16.gmra.mxu0 %v5678
  %v6324 = vpop.f32.mrf.mxu0
  %v6325 = vadd.f32 0.0, %v6324
  %v6326 = vpop.f32.mrf.mxu0
  %v6327 = vadd.f32 0.0, %v6326
  %v6328 = vpop.f32.mrf.mxu0
  %v6329 = vadd.f32 0.0, %v6328
  %v6330 = vpop.f32.mrf.mxu0
  %v6331 = vadd.f32 0.0, %v6330
  %6332 = vmatprep.mubr.bf16.mxu0 %v5685
  %6333 = vmatmul.mubr.bf16.gmra.mxu0 %v5684
  %v6334 = vpop.f32.mrf.mxu0
  %v6335 = vadd.f32 0.0, %v6334
  %v6336 = vpop.f32.mrf.mxu0
  %v6337 = vadd.f32 0.0, %v6336
  %v6338 = vpop.f32.mrf.mxu0
  %v6339 = vadd.f32 0.0, %v6338
  %v6340 = vpop.f32.mrf.mxu0
  %v6341 = vadd.f32 0.0, %v6340
  %6342 = vmatprep.mubr.bf16.mxu0 %v5691
  %6343 = vmatmul.mubr.bf16.gmra.mxu0 %v5690
  %v6344 = vpop.f32.mrf.mxu0
  %v6345 = vadd.f32 0.0, %v6344
  %v6346 = vpop.f32.mrf.mxu0
  %v6347 = vadd.f32 0.0, %v6346
  %v6348 = vpop.f32.mrf.mxu0
  %v6349 = vadd.f32 0.0, %v6348
  %v6350 = vpop.f32.mrf.mxu0
  %v6351 = vadd.f32 0.0, %v6350
  %6352 = vmatprep.mubr.bf16.mxu0 %v5697
  %6353 = vmatmul.mubr.bf16.gmra.mxu0 %v5696
  %v6354 = vpop.f32.mrf.mxu0
  %v6355 = vadd.f32 0.0, %v6354
  %v6356 = vpop.f32.mrf.mxu0
  %v6357 = vadd.f32 0.0, %v6356
  %v6358 = vpop.f32.mrf.mxu0
  %v6359 = vadd.f32 0.0, %v6358
  %v6360 = vpop.f32.mrf.mxu0
  %v6361 = vadd.f32 0.0, %v6360
  %6362 = vmatprep.mubr.bf16.mxu0 %v5703
  %6363 = vmatmul.mubr.bf16.gmra.mxu0 %v5702
  %v6364 = vpop.f32.mrf.mxu0
  %v6365 = vadd.f32 0.0, %v6364
  %v6366 = vpop.f32.mrf.mxu0
  %v6367 = vadd.f32 0.0, %v6366
  %v6368 = vpop.f32.mrf.mxu0
  %v6369 = vadd.f32 0.0, %v6368
  %v6370 = vpop.f32.mrf.mxu0
  %v6371 = vadd.f32 0.0, %v6370
  %6372 = vmatprep.mubr.bf16.mxu0 %v5709
  %6373 = vmatmul.mubr.bf16.gmra.mxu0 %v5708
  %v6374 = vpop.f32.mrf.mxu0
  %v6375 = vadd.f32 0.0, %v6374
  %v6376 = vpop.f32.mrf.mxu0
  %v6377 = vadd.f32 0.0, %v6376
  %v6378 = vpop.f32.mrf.mxu0
  %v6379 = vadd.f32 0.0, %v6378
  %v6380 = vpop.f32.mrf.mxu0
  %v6381 = vadd.f32 0.0, %v6380
  %6382 = vmatprep.mubr.bf16.mxu0 %v5715
  %6383 = vmatmul.mubr.bf16.gmra.mxu0 %v5714
  %v6384 = vpop.f32.mrf.mxu0
  %v6385 = vadd.f32 0.0, %v6384
  %v6386 = vpop.f32.mrf.mxu0
  %v6387 = vadd.f32 0.0, %v6386
  %v6388 = vpop.f32.mrf.mxu0
  %v6389 = vadd.f32 0.0, %v6388
  %v6390 = vpop.f32.mrf.mxu0
  %v6391 = vadd.f32 0.0, %v6390
  %6392 = vdwg.mxu0
  %6393 = vmatprep.subr.bf16.mxu0 %v6055
  %6394 = vmatpush1.bf16.msra.mxu0 %v6054
  %6395 = vmatprep.subr.bf16.mxu0 %v6053
  %6396 = vmatpush1.bf16.msra.mxu0 %v6052
  %6397 = vmatprep.subr.bf16.mxu0 %v6051
  %6398 = vmatpush1.bf16.msra.mxu0 %v6050
  %6399 = vmatprep.subr.bf16.mxu0 %v6049
  %6400 = vmatpush1.bf16.msra.mxu0 %v6048
  %6401 = vmatprep.subr.bf16.mxu0 %v6047
  %6402 = vmatpush1.bf16.msra.mxu0 %v6046
  %6403 = vmatprep.subr.bf16.mxu0 %v6045
  %6404 = vmatpush1.bf16.msra.mxu0 %v6044
  %6405 = vmatprep.subr.bf16.mxu0 %v6043
  %6406 = vmatpush1.bf16.msra.mxu0 %v6042
  %6407 = vmatprep.subr.bf16.mxu0 %v6041
  %6408 = vmatpush1.bf16.msra.mxu0 %v6040
  %6409 = vmatprep.subr.bf16.mxu0 %v6071
  %6410 = vmatpush2.bf16.msra.mxu0 %v6070
  %6411 = vmatprep.subr.bf16.mxu0 %v6069
  %6412 = vmatpush2.bf16.msra.mxu0 %v6068
  %6413 = vmatprep.subr.bf16.mxu0 %v6067
  %6414 = vmatpush2.bf16.msra.mxu0 %v6066
  %6415 = vmatprep.subr.bf16.mxu0 %v6065
  %6416 = vmatpush2.bf16.msra.mxu0 %v6064
  %6417 = vmatprep.subr.bf16.mxu0 %v6063
  %6418 = vmatpush2.bf16.msra.mxu0 %v6062
  %6419 = vmatprep.subr.bf16.mxu0 %v6061
  %6420 = vmatpush2.bf16.msra.mxu0 %v6060
  %6421 = vmatprep.subr.bf16.mxu0 %v6059
  %6422 = vmatpush2.bf16.msra.mxu0 %v6058
  %6423 = vmatprep.subr.bf16.mxu0 %v6057
  %6424 = vmatpush2.bf16.msra.mxu0 %v6056
  %6425 = vmatprep.mubr.bf16.mxu0 %v5627
  %6426 = vmatmul.mubr.bf16.gmra.mxu0 %v5626
  %v6427 = vpop.f32.mrf.mxu0
  %v6428 = vadd.f32 %v6235, %v6427
  %v6429 = vpop.f32.mrf.mxu0
  %v6430 = vadd.f32 %v6237, %v6429
  %v6431 = vpop.f32.mrf.mxu0
  %v6432 = vadd.f32 %v6239, %v6431
  %v6433 = vpop.f32.mrf.mxu0
  %v6434 = vadd.f32 %v6241, %v6433
  %6435 = vmatprep.mubr.bf16.mxu0 %v5633
  %6436 = vmatmul.mubr.bf16.gmra.mxu0 %v5632
  %v6437 = vpop.f32.mrf.mxu0
  %v6438 = vadd.f32 %v6245, %v6437
  %v6439 = vpop.f32.mrf.mxu0
  %v6440 = vadd.f32 %v6247, %v6439
  %v6441 = vpop.f32.mrf.mxu0
  %v6442 = vadd.f32 %v6249, %v6441
  %v6443 = vpop.f32.mrf.mxu0
  %v6444 = vadd.f32 %v6251, %v6443
  %6445 = vmatprep.mubr.bf16.mxu0 %v5639
  %6446 = vmatmul.mubr.bf16.gmra.mxu0 %v5638
  %v6447 = vpop.f32.mrf.mxu0
  %v6448 = vadd.f32 %v6255, %v6447
  %v6449 = vpop.f32.mrf.mxu0
  %v6450 = vadd.f32 %v6257, %v6449
  %v6451 = vpop.f32.mrf.mxu0
  %v6452 = vadd.f32 %v6259, %v6451
  %v6453 = vpop.f32.mrf.mxu0
  %v6454 = vadd.f32 %v6261, %v6453
  %6455 = vmatprep.mubr.bf16.mxu0 %v5645
  %6456 = vmatmul.mubr.bf16.gmra.mxu0 %v5644
  %v6457 = vpop.f32.mrf.mxu0
  %v6458 = vadd.f32 %v6265, %v6457
  %v6459 = vpop.f32.mrf.mxu0
  %v6460 = vadd.f32 %v6267, %v6459
  %v6461 = vpop.f32.mrf.mxu0
  %v6462 = vadd.f32 %v6269, %v6461
  %v6463 = vpop.f32.mrf.mxu0
  %v6464 = vadd.f32 %v6271, %v6463
  %6465 = vmatprep.mubr.bf16.mxu0 %v5651
  %6466 = vmatmul.mubr.bf16.gmra.mxu0 %v5650
  %v6467 = vpop.f32.mrf.mxu0
  %v6468 = vadd.f32 %v6275, %v6467
  %v6469 = vpop.f32.mrf.mxu0
  %v6470 = vadd.f32 %v6277, %v6469
  %v6471 = vpop.f32.mrf.mxu0
  %v6472 = vadd.f32 %v6279, %v6471
  %v6473 = vpop.f32.mrf.mxu0
  %v6474 = vadd.f32 %v6281, %v6473
  %6475 = vmatprep.mubr.bf16.mxu0 %v5657
  %6476 = vmatmul.mubr.bf16.gmra.mxu0 %v5656
  %v6477 = vpop.f32.mrf.mxu0
  %v6478 = vadd.f32 %v6285, %v6477
  %v6479 = vpop.f32.mrf.mxu0
  %v6480 = vadd.f32 %v6287, %v6479
  %v6481 = vpop.f32.mrf.mxu0
  %v6482 = vadd.f32 %v6289, %v6481
  %v6483 = vpop.f32.mrf.mxu0
  %v6484 = vadd.f32 %v6291, %v6483
  %6485 = vmatprep.mubr.bf16.mxu0 %v5663
  %6486 = vmatmul.mubr.bf16.gmra.mxu0 %v5662
  %v6487 = vpop.f32.mrf.mxu0
  %v6488 = vadd.f32 %v6295, %v6487
  %v6489 = vpop.f32.mrf.mxu0
  %v6490 = vadd.f32 %v6297, %v6489
  %v6491 = vpop.f32.mrf.mxu0
  %v6492 = vadd.f32 %v6299, %v6491
  %v6493 = vpop.f32.mrf.mxu0
  %v6494 = vadd.f32 %v6301, %v6493
  %6495 = vmatprep.mubr.bf16.mxu0 %v5669
  %6496 = vmatmul.mubr.bf16.gmra.mxu0 %v5668
  %v6497 = vpop.f32.mrf.mxu0
  %v6498 = vadd.f32 %v6305, %v6497
  %v6499 = vpop.f32.mrf.mxu0
  %v6500 = vadd.f32 %v6307, %v6499
  %v6501 = vpop.f32.mrf.mxu0
  %v6502 = vadd.f32 %v6309, %v6501
  %v6503 = vpop.f32.mrf.mxu0
  %v6504 = vadd.f32 %v6311, %v6503
  %6505 = vmatprep.mubr.bf16.mxu0 %v5675
  %6506 = vmatmul.mubr.bf16.gmra.mxu0 %v5674
  %v6507 = vpop.f32.mrf.mxu0
  %v6508 = vadd.f32 %v6315, %v6507
  %v6509 = vpop.f32.mrf.mxu0
  %v6510 = vadd.f32 %v6317, %v6509
  %v6511 = vpop.f32.mrf.mxu0
  %v6512 = vadd.f32 %v6319, %v6511
  %v6513 = vpop.f32.mrf.mxu0
  %v6514 = vadd.f32 %v6321, %v6513
  %6515 = vmatprep.mubr.bf16.mxu0 %v5681
  %6516 = vmatmul.mubr.bf16.gmra.mxu0 %v5680
  %v6517 = vpop.f32.mrf.mxu0
  %v6518 = vadd.f32 %v6325, %v6517
  %v6519 = vpop.f32.mrf.mxu0
  %v6520 = vadd.f32 %v6327, %v6519
  %v6521 = vpop.f32.mrf.mxu0
  %v6522 = vadd.f32 %v6329, %v6521
  %v6523 = vpop.f32.mrf.mxu0
  %v6524 = vadd.f32 %v6331, %v6523
  %6525 = vmatprep.mubr.bf16.mxu0 %v5687
  %6526 = vmatmul.mubr.bf16.gmra.mxu0 %v5686
  %v6527 = vpop.f32.mrf.mxu0
  %v6528 = vadd.f32 %v6335, %v6527
  %v6529 = vpop.f32.mrf.mxu0
  %v6530 = vadd.f32 %v6337, %v6529
  %v6531 = vpop.f32.mrf.mxu0
  %v6532 = vadd.f32 %v6339, %v6531
  %v6533 = vpop.f32.mrf.mxu0
  %v6534 = vadd.f32 %v6341, %v6533
  %6535 = vmatprep.mubr.bf16.mxu0 %v5693
  %6536 = vmatmul.mubr.bf16.gmra.mxu0 %v5692
  %v6537 = vpop.f32.mrf.mxu0
  %v6538 = vadd.f32 %v6345, %v6537
  %v6539 = vpop.f32.mrf.mxu0
  %v6540 = vadd.f32 %v6347, %v6539
  %v6541 = vpop.f32.mrf.mxu0
  %v6542 = vadd.f32 %v6349, %v6541
  %v6543 = vpop.f32.mrf.mxu0
  %v6544 = vadd.f32 %v6351, %v6543
  %6545 = vmatprep.mubr.bf16.mxu0 %v5699
  %6546 = vmatmul.mubr.bf16.gmra.mxu0 %v5698
  %v6547 = vpop.f32.mrf.mxu0
  %v6548 = vadd.f32 %v6355, %v6547
  %v6549 = vpop.f32.mrf.mxu0
  %v6550 = vadd.f32 %v6357, %v6549
  %v6551 = vpop.f32.mrf.mxu0
  %v6552 = vadd.f32 %v6359, %v6551
  %v6553 = vpop.f32.mrf.mxu0
  %v6554 = vadd.f32 %v6361, %v6553
  %6555 = vmatprep.mubr.bf16.mxu0 %v5705
  %6556 = vmatmul.mubr.bf16.gmra.mxu0 %v5704
  %v6557 = vpop.f32.mrf.mxu0
  %v6558 = vadd.f32 %v6365, %v6557
  %v6559 = vpop.f32.mrf.mxu0
  %v6560 = vadd.f32 %v6367, %v6559
  %v6561 = vpop.f32.mrf.mxu0
  %v6562 = vadd.f32 %v6369, %v6561
  %v6563 = vpop.f32.mrf.mxu0
  %v6564 = vadd.f32 %v6371, %v6563
  %6565 = vmatprep.mubr.bf16.mxu0 %v5711
  %6566 = vmatmul.mubr.bf16.gmra.mxu0 %v5710
  %v6567 = vpop.f32.mrf.mxu0
  %v6568 = vadd.f32 %v6375, %v6567
  %v6569 = vpop.f32.mrf.mxu0
  %v6570 = vadd.f32 %v6377, %v6569
  %v6571 = vpop.f32.mrf.mxu0
  %v6572 = vadd.f32 %v6379, %v6571
  %v6573 = vpop.f32.mrf.mxu0
  %v6574 = vadd.f32 %v6381, %v6573
  %6575 = vmatprep.mubr.bf16.mxu0 %v5717
  %6576 = vmatmul.mubr.bf16.gmra.mxu0 %v5716
  %v6577 = vpop.f32.mrf.mxu0
  %v6578 = vadd.f32 %v6385, %v6577
  %v6579 = vpop.f32.mrf.mxu0
  %v6580 = vadd.f32 %v6387, %v6579
  %v6581 = vpop.f32.mrf.mxu0
  %v6582 = vadd.f32 %v6389, %v6581
  %v6583 = vpop.f32.mrf.mxu0
  %v6584 = vadd.f32 %v6391, %v6583
  %6585 = vdwg.mxu0
  %6586 = vmatprep.subr.bf16.mxu0 %v6087
  %6587 = vmatpush1.bf16.msra.mxu0 %v6086
  %6588 = vmatprep.subr.bf16.mxu0 %v6085
  %6589 = vmatpush1.bf16.msra.mxu0 %v6084
  %6590 = vmatprep.subr.bf16.mxu0 %v6083
  %6591 = vmatpush1.bf16.msra.mxu0 %v6082
  %6592 = vmatprep.subr.bf16.mxu0 %v6081
  %6593 = vmatpush1.bf16.msra.mxu0 %v6080
  %6594 = vmatprep.subr.bf16.mxu0 %v6079
  %6595 = vmatpush1.bf16.msra.mxu0 %v6078
  %6596 = vmatprep.subr.bf16.mxu0 %v6077
  %6597 = vmatpush1.bf16.msra.mxu0 %v6076
  %6598 = vmatprep.subr.bf16.mxu0 %v6075
  %6599 = vmatpush1.bf16.msra.mxu0 %v6074
  %6600 = vmatprep.subr.bf16.mxu0 %v6073
  %6601 = vmatpush1.bf16.msra.mxu0 %v6072
  %6602 = vmatprep.subr.bf16.mxu0 %v6103
  %6603 = vmatpush2.bf16.msra.mxu0 %v6102
  %6604 = vmatprep.subr.bf16.mxu0 %v6101
  %6605 = vmatpush2.bf16.msra.mxu0 %v6100
  %6606 = vmatprep.subr.bf16.mxu0 %v6099
  %6607 = vmatpush2.bf16.msra.mxu0 %v6098
  %6608 = vmatprep.subr.bf16.mxu0 %v6097
  %6609 = vmatpush2.bf16.msra.mxu0 %v6096
  %6610 = vmatprep.subr.bf16.mxu0 %v6095
  %6611 = vmatpush2.bf16.msra.mxu0 %v6094
  %6612 = vmatprep.subr.bf16.mxu0 %v6093
  %6613 = vmatpush2.bf16.msra.mxu0 %v6092
  %6614 = vmatprep.subr.bf16.mxu0 %v6091
  %6615 = vmatpush2.bf16.msra.mxu0 %v6090
  %6616 = vmatprep.subr.bf16.mxu0 %v6089
  %6617 = vmatpush2.bf16.msra.mxu0 %v6088
  %6618 = vmatprep.mubr.bf16.mxu0 %v5629
  %6619 = vmatmul.mubr.bf16.gmra.mxu0 %v5628
  %v6620 = vpop.f32.mrf.mxu0
  %v6621 = vadd.f32 %v6428, %v6620
  %v6622 = vpop.f32.mrf.mxu0
  %v6623 = vadd.f32 %v6430, %v6622
  %v6624 = vpop.f32.mrf.mxu0
  %v6625 = vadd.f32 %v6432, %v6624
  %v6626 = vpop.f32.mrf.mxu0
  %v6627 = vadd.f32 %v6434, %v6626
  %6628 = vmatprep.mubr.bf16.mxu0 %v5635
  %6629 = vmatmul.mubr.bf16.gmra.mxu0 %v5634
  %v6630 = vpop.f32.mrf.mxu0
  %v6631 = vadd.f32 %v6438, %v6630
  %v6632 = vpop.f32.mrf.mxu0
  %v6633 = vadd.f32 %v6440, %v6632
  %v6634 = vpop.f32.mrf.mxu0
  %v6635 = vadd.f32 %v6442, %v6634
  %v6636 = vpop.f32.mrf.mxu0
  %v6637 = vadd.f32 %v6444, %v6636
  %6638 = vmatprep.mubr.bf16.mxu0 %v5641
  %6639 = vmatmul.mubr.bf16.gmra.mxu0 %v5640
  %v6640 = vpop.f32.mrf.mxu0
  %v6641 = vadd.f32 %v6448, %v6640
  %v6642 = vpop.f32.mrf.mxu0
  %v6643 = vadd.f32 %v6450, %v6642
  %v6644 = vpop.f32.mrf.mxu0
  %v6645 = vadd.f32 %v6452, %v6644
  %v6646 = vpop.f32.mrf.mxu0
  %v6647 = vadd.f32 %v6454, %v6646
  %6648 = vmatprep.mubr.bf16.mxu0 %v5647
  %6649 = vmatmul.mubr.bf16.gmra.mxu0 %v5646
  %v6650 = vpop.f32.mrf.mxu0
  %v6651 = vadd.f32 %v6458, %v6650
  %v6652 = vpop.f32.mrf.mxu0
  %v6653 = vadd.f32 %v6460, %v6652
  %v6654 = vpop.f32.mrf.mxu0
  %v6655 = vadd.f32 %v6462, %v6654
  %v6656 = vpop.f32.mrf.mxu0
  %v6657 = vadd.f32 %v6464, %v6656
  %6658 = vmatprep.mubr.bf16.mxu0 %v5653
  %6659 = vmatmul.mubr.bf16.gmra.mxu0 %v5652
  %v6660 = vpop.f32.mrf.mxu0
  %v6661 = vadd.f32 %v6468, %v6660
  %v6662 = vpop.f32.mrf.mxu0
  %v6663 = vadd.f32 %v6470, %v6662
  %v6664 = vpop.f32.mrf.mxu0
  %v6665 = vadd.f32 %v6472, %v6664
  %v6666 = vpop.f32.mrf.mxu0
  %v6667 = vadd.f32 %v6474, %v6666
  %6668 = vmatprep.mubr.bf16.mxu0 %v5659
  %6669 = vmatmul.mubr.bf16.gmra.mxu0 %v5658
  %v6670 = vpop.f32.mrf.mxu0
  %v6671 = vadd.f32 %v6478, %v6670
  %v6672 = vpop.f32.mrf.mxu0
  %v6673 = vadd.f32 %v6480, %v6672
  %v6674 = vpop.f32.mrf.mxu0
  %v6675 = vadd.f32 %v6482, %v6674
  %v6676 = vpop.f32.mrf.mxu0
  %v6677 = vadd.f32 %v6484, %v6676
  %6678 = vmatprep.mubr.bf16.mxu0 %v5665
  %6679 = vmatmul.mubr.bf16.gmra.mxu0 %v5664
  %v6680 = vpop.f32.mrf.mxu0
  %v6681 = vadd.f32 %v6488, %v6680
  %v6682 = vpop.f32.mrf.mxu0
  %v6683 = vadd.f32 %v6490, %v6682
  %v6684 = vpop.f32.mrf.mxu0
  %v6685 = vadd.f32 %v6492, %v6684
  %v6686 = vpop.f32.mrf.mxu0
  %v6687 = vadd.f32 %v6494, %v6686
  %6688 = vmatprep.mubr.bf16.mxu0 %v5671
  %6689 = vmatmul.mubr.bf16.gmra.mxu0 %v5670
  %v6690 = vpop.f32.mrf.mxu0
  %v6691 = vadd.f32 %v6498, %v6690
  %v6692 = vpop.f32.mrf.mxu0
  %v6693 = vadd.f32 %v6500, %v6692
  %v6694 = vpop.f32.mrf.mxu0
  %v6695 = vadd.f32 %v6502, %v6694
  %v6696 = vpop.f32.mrf.mxu0
  %v6697 = vadd.f32 %v6504, %v6696
  %6698 = vmatprep.mubr.bf16.mxu0 %v5677
  %6699 = vmatmul.mubr.bf16.gmra.mxu0 %v5676
  %v6700 = vpop.f32.mrf.mxu0
  %v6701 = vadd.f32 %v6508, %v6700
  %v6702 = vpop.f32.mrf.mxu0
  %v6703 = vadd.f32 %v6510, %v6702
  %v6704 = vpop.f32.mrf.mxu0
  %v6705 = vadd.f32 %v6512, %v6704
  %v6706 = vpop.f32.mrf.mxu0
  %v6707 = vadd.f32 %v6514, %v6706
  %6708 = vmatprep.mubr.bf16.mxu0 %v5683
  %6709 = vmatmul.mubr.bf16.gmra.mxu0 %v5682
  %v6710 = vpop.f32.mrf.mxu0
  %v6711 = vadd.f32 %v6518, %v6710
  %v6712 = vpop.f32.mrf.mxu0
  %v6713 = vadd.f32 %v6520, %v6712
  %v6714 = vpop.f32.mrf.mxu0
  %v6715 = vadd.f32 %v6522, %v6714
  %v6716 = vpop.f32.mrf.mxu0
  %v6717 = vadd.f32 %v6524, %v6716
  %6718 = vmatprep.mubr.bf16.mxu0 %v5689
  %6719 = vmatmul.mubr.bf16.gmra.mxu0 %v5688
  %v6720 = vpop.f32.mrf.mxu0
  %v6721 = vadd.f32 %v6528, %v6720
  %v6722 = vpop.f32.mrf.mxu0
  %v6723 = vadd.f32 %v6530, %v6722
  %v6724 = vpop.f32.mrf.mxu0
  %v6725 = vadd.f32 %v6532, %v6724
  %v6726 = vpop.f32.mrf.mxu0
  %v6727 = vadd.f32 %v6534, %v6726
  %6728 = vmatprep.mubr.bf16.mxu0 %v5695
  %6729 = vmatmul.mubr.bf16.gmra.mxu0 %v5694
  %v6730 = vpop.f32.mrf.mxu0
  %v6731 = vadd.f32 %v6538, %v6730
  %v6732 = vpop.f32.mrf.mxu0
  %v6733 = vadd.f32 %v6540, %v6732
  %v6734 = vpop.f32.mrf.mxu0
  %v6735 = vadd.f32 %v6542, %v6734
  %v6736 = vpop.f32.mrf.mxu0
  %v6737 = vadd.f32 %v6544, %v6736
  %6738 = vmatprep.mubr.bf16.mxu0 %v5701
  %6739 = vmatmul.mubr.bf16.gmra.mxu0 %v5700
  %v6740 = vpop.f32.mrf.mxu0
  %v6741 = vadd.f32 %v6548, %v6740
  %v6742 = vpop.f32.mrf.mxu0
  %v6743 = vadd.f32 %v6550, %v6742
  %v6744 = vpop.f32.mrf.mxu0
  %v6745 = vadd.f32 %v6552, %v6744
  %v6746 = vpop.f32.mrf.mxu0
  %v6747 = vadd.f32 %v6554, %v6746
  %6748 = vmatprep.mubr.bf16.mxu0 %v5707
  %6749 = vmatmul.mubr.bf16.gmra.mxu0 %v5706
  %v6750 = vpop.f32.mrf.mxu0
  %v6751 = vadd.f32 %v6558, %v6750
  %v6752 = vpop.f32.mrf.mxu0
  %v6753 = vadd.f32 %v6560, %v6752
  %v6754 = vpop.f32.mrf.mxu0
  %v6755 = vadd.f32 %v6562, %v6754
  %v6756 = vpop.f32.mrf.mxu0
  %v6757 = vadd.f32 %v6564, %v6756
  %6758 = vmatprep.mubr.bf16.mxu0 %v5713
  %6759 = vmatmul.mubr.bf16.gmra.mxu0 %v5712
  %v6760 = vpop.f32.mrf.mxu0
  %v6761 = vadd.f32 %v6568, %v6760
  %v6762 = vpop.f32.mrf.mxu0
  %v6763 = vadd.f32 %v6570, %v6762
  %v6764 = vpop.f32.mrf.mxu0
  %v6765 = vadd.f32 %v6572, %v6764
  %v6766 = vpop.f32.mrf.mxu0
  %v6767 = vadd.f32 %v6574, %v6766
  %6768 = vmatprep.mubr.bf16.mxu0 %v5719
  %6769 = vmatmul.mubr.bf16.gmra.mxu0 %v5718
  %v6770 = vpop.f32.mrf.mxu0
  %v6771 = vadd.f32 %v6578, %v6770
  %v6772 = vpop.f32.mrf.mxu0
  %v6773 = vadd.f32 %v6580, %v6772
  %v6774 = vpop.f32.mrf.mxu0
  %v6775 = vadd.f32 %v6582, %v6774
  %v6776 = vpop.f32.mrf.mxu0
  %v6777 = vadd.f32 %v6584, %v6776
  %6778 = vdwg.mxu0
  %s6779 = scalar_lea.vmem %s8, 6
  %v6780 = vld [vmem:[%s6779] ss:$8 sm:$0x3]
  %s6781 = scalar_lea.vmem %s8, 7
  %v6782 = vld [vmem:[%s6781] ss:$8 sm:$0x3]
  %v6783 = vadd.f32 %v6621, %v6625
  %v6784 = vadd.f32 %v6783, %v6631
  %v6785 = vadd.f32 %v6784, %v6635
  %v6786 = vadd.f32 %v6785, %v6641
  %v6787 = vadd.f32 %v6786, %v6645
  %v6788 = vadd.f32 %v6787, %v6651
  %v6789 = vadd.f32 %v6788, %v6655
  %v6790 = vadd.f32 %v6789, %v6661
  %v6791 = vadd.f32 %v6790, %v6665
  %v6792 = vadd.f32 %v6791, %v6671
  %v6793 = vadd.f32 %v6792, %v6675
  %v6794 = vadd.f32 %v6793, %v6681
  %v6795 = vadd.f32 %v6794, %v6685
  %v6796 = vadd.f32 %v6795, %v6691
  %v6797 = vadd.f32 %v6796, %v6695
  %v6798 = vrot.slane %v6797, 4
  %v6799 = vadd.f32 %v6797, %v6798
  %v6800 = vrot.slane %v6799, 2
  %v6801 = vadd.f32 %v6799, %v6800
  %v6802 = vrot.slane %v6801, 1
  %v6803 = vadd.f32 %v6801, %v6802
  %v6804 = vadd.f32 %v6623, %v6627
  %v6805 = vadd.f32 %v6804, %v6633
  %v6806 = vadd.f32 %v6805, %v6637
  %v6807 = vadd.f32 %v6806, %v6643
  %v6808 = vadd.f32 %v6807, %v6647
  %v6809 = vadd.f32 %v6808, %v6653
  %v6810 = vadd.f32 %v6809, %v6657
  %v6811 = vadd.f32 %v6810, %v6663
  %v6812 = vadd.f32 %v6811, %v6667
  %v6813 = vadd.f32 %v6812, %v6673
  %v6814 = vadd.f32 %v6813, %v6677
  %v6815 = vadd.f32 %v6814, %v6683
  %v6816 = vadd.f32 %v6815, %v6687
  %v6817 = vadd.f32 %v6816, %v6693
  %v6818 = vadd.f32 %v6817, %v6697
  %v6819 = vrot.slane %v6818, 4
  %v6820 = vadd.f32 %v6818, %v6819
  %v6821 = vrot.slane %v6820, 2
  %v6822 = vadd.f32 %v6820, %v6821
  %v6823 = vrot.slane %v6822, 1
  %v6824 = vadd.f32 %v6822, %v6823
  %6825 = vrot.lane.b32.xlu0 %v6803, 4
  %v6826 = vpop.permute.xlu0 %6825
  %6827 = vrot.lane.b32.xlu0 %v6824, 4
  %v6828 = vpop.permute.xlu0 %6827
  %vm6829 = vcmp.lt.s32.totalorder %v968, 4
  %v6830 = vsel %vm6829, %v6826, %v6828
  %v6831 = vsel %vm6829, %v6828, %v6826
  %v6832 = vadd.f32 %v6803, %v6831
  %v6833 = vadd.f32 %v6824, %v6830
  %6834 = vrot.lane.b32.xlu0 %v6832, 8
  %v6835 = vpop.permute.xlu0 %6834
  %6836 = vrot.lane.b32.xlu0 %v6833, 8
  %v6837 = vpop.permute.xlu0 %6836
  %v6838 = vsel %vm4162, %v6835, %v6837
  %v6839 = vsel %vm4162, %v6837, %v6835
  %v6840 = vadd.f32 %v6832, %v6839
  %v6841 = vadd.f32 %v6833, %v6838
  %6842 = vrot.lane.b32.xlu0 %v6840, 16
  %v6843 = vpop.permute.xlu0 %6842
  %6844 = vrot.lane.b32.xlu0 %v6841, 16
  %v6845 = vpop.permute.xlu0 %6844
  %v6846 = vsel %vm2326, %v6843, %v6845
  %v6847 = vsel %vm2326, %v6845, %v6843
  %v6848 = vadd.f32 %v6840, %v6847
  %v6849 = vadd.f32 %v6841, %v6846
  %6850 = vrot.lane.b32.xlu0 %v6848, 32
  %v6851 = vpop.permute.xlu0 %6850
  %6852 = vrot.lane.b32.xlu0 %v6849, 32
  %v6853 = vpop.permute.xlu0 %6852
  %v6854 = vsel %vm969, %v6851, %v6853
  %v6855 = vsel %vm969, %v6853, %v6851
  %v6856 = vadd.f32 %v6848, %v6855
  %v6857 = vadd.f32 %v6849, %v6854
  %6858 = vrot.lane.b32.xlu0 %v6856, 64
  %v6859 = vpop.permute.xlu0 %6858
  %6860 = vrot.lane.b32.xlu0 %v6857, 64
  %v6861 = vpop.permute.xlu0 %6860
  %v6862 = vsel %vm978, %v6859, %v6861
  %v6863 = vsel %vm978, %v6861, %v6859
  %v6864 = vadd.f32 %v6856, %v6863
  %v6865 = vadd.f32 %v6857, %v6862
  %v6866 = vadd.f32 %v6864, %v6865
  %v6867 = vmul.f32 %v6866, 0.00012207031
  %v6868 = vlaneseq
  %v6869 = vshrl.u32 %v6868, 7
  %v6870 = vsub.s32 0, %v6869
  %v6871 = vrot.slane %v6867, %v6870
  %v6872 = vsub.f32 %v6621, %v6871
  %v6873 = vsub.f32 %v6623, %v6871
  %v6874 = vsub.f32 %v6625, %v6871
  %v6875 = vsub.f32 %v6627, %v6871
  %v6876 = vsub.f32 %v6631, %v6871
  %v6877 = vsub.f32 %v6633, %v6871
  %v6878 = vsub.f32 %v6635, %v6871
  %v6879 = vsub.f32 %v6637, %v6871
  %v6880 = vsub.f32 %v6641, %v6871
  %v6881 = vsub.f32 %v6643, %v6871
  %v6882 = vsub.f32 %v6645, %v6871
  %v6883 = vsub.f32 %v6647, %v6871
  %v6884 = vsub.f32 %v6651, %v6871
  %v6885 = vsub.f32 %v6653, %v6871
  %v6886 = vsub.f32 %v6655, %v6871
  %v6887 = vsub.f32 %v6657, %v6871
  %v6888 = vsub.f32 %v6661, %v6871
  %v6889 = vsub.f32 %v6663, %v6871
  %v6890 = vsub.f32 %v6665, %v6871
  %v6891 = vsub.f32 %v6667, %v6871
  %v6892 = vsub.f32 %v6671, %v6871
  %v6893 = vsub.f32 %v6673, %v6871
  %v6894 = vsub.f32 %v6675, %v6871
  %v6895 = vsub.f32 %v6677, %v6871
  %v6896 = vsub.f32 %v6681, %v6871
  %v6897 = vsub.f32 %v6683, %v6871
  %v6898 = vsub.f32 %v6685, %v6871
  %v6899 = vsub.f32 %v6687, %v6871
  %v6900 = vsub.f32 %v6691, %v6871
  %v6901 = vsub.f32 %v6693, %v6871
  %v6902 = vsub.f32 %v6695, %v6871
  %v6903 = vsub.f32 %v6697, %v6871
  %v6904 = vmul.f32 %v6872, %v6872
  %v6905 = vmul.f32 %v6873, %v6873
  %v6906 = vmul.f32 %v6874, %v6874
  %v6907 = vmul.f32 %v6875, %v6875
  %v6908 = vmul.f32 %v6876, %v6876
  %v6909 = vmul.f32 %v6877, %v6877
  %v6910 = vmul.f32 %v6878, %v6878
  %v6911 = vmul.f32 %v6879, %v6879
  %v6912 = vmul.f32 %v6880, %v6880
  %v6913 = vmul.f32 %v6881, %v6881
  %v6914 = vmul.f32 %v6882, %v6882
  %v6915 = vmul.f32 %v6883, %v6883
  %v6916 = vmul.f32 %v6884, %v6884
  %v6917 = vmul.f32 %v6885, %v6885
  %v6918 = vmul.f32 %v6886, %v6886
  %v6919 = vmul.f32 %v6887, %v6887
  %v6920 = vmul.f32 %v6888, %v6888
  %v6921 = vmul.f32 %v6889, %v6889
  %v6922 = vmul.f32 %v6890, %v6890
  %v6923 = vmul.f32 %v6891, %v6891
  %v6924 = vmul.f32 %v6892, %v6892
  %v6925 = vmul.f32 %v6893, %v6893
  %v6926 = vmul.f32 %v6894, %v6894
  %v6927 = vmul.f32 %v6895, %v6895
  %v6928 = vmul.f32 %v6896, %v6896
  %v6929 = vmul.f32 %v6897, %v6897
  %v6930 = vmul.f32 %v6898, %v6898
  %v6931 = vmul.f32 %v6899, %v6899
  %v6932 = vmul.f32 %v6900, %v6900
  %v6933 = vmul.f32 %v6901, %v6901
  %v6934 = vmul.f32 %v6902, %v6902
  %v6935 = vmul.f32 %v6903, %v6903
  %v6936 = vadd.f32 %v6904, %v6906
  %v6937 = vadd.f32 %v6936, %v6908
  %v6938 = vadd.f32 %v6937, %v6910
  %v6939 = vadd.f32 %v6938, %v6912
  %v6940 = vadd.f32 %v6939, %v6914
  %v6941 = vadd.f32 %v6940, %v6916
  %v6942 = vadd.f32 %v6941, %v6918
  %v6943 = vadd.f32 %v6942, %v6920
  %v6944 = vadd.f32 %v6943, %v6922
  %v6945 = vadd.f32 %v6944, %v6924
  %v6946 = vadd.f32 %v6945, %v6926
  %v6947 = vadd.f32 %v6946, %v6928
  %v6948 = vadd.f32 %v6947, %v6930
  %v6949 = vadd.f32 %v6948, %v6932
  %v6950 = vadd.f32 %v6949, %v6934
  %v6951 = vrot.slane %v6950, 4
  %v6952 = vadd.f32 %v6950, %v6951
  %v6953 = vrot.slane %v6952, 2
  %v6954 = vadd.f32 %v6952, %v6953
  %v6955 = vrot.slane %v6954, 1
  %v6956 = vadd.f32 %v6954, %v6955
  %v6957 = vadd.f32 %v6905, %v6907
  %v6958 = vadd.f32 %v6957, %v6909
  %v6959 = vadd.f32 %v6958, %v6911
  %v6960 = vadd.f32 %v6959, %v6913
  %v6961 = vadd.f32 %v6960, %v6915
  %v6962 = vadd.f32 %v6961, %v6917
  %v6963 = vadd.f32 %v6962, %v6919
  %v6964 = vadd.f32 %v6963, %v6921
  %v6965 = vadd.f32 %v6964, %v6923
  %v6966 = vadd.f32 %v6965, %v6925
  %v6967 = vadd.f32 %v6966, %v6927
  %v6968 = vadd.f32 %v6967, %v6929
  %v6969 = vadd.f32 %v6968, %v6931
  %v6970 = vadd.f32 %v6969, %v6933
  %v6971 = vadd.f32 %v6970, %v6935
  %v6972 = vrot.slane %v6971, 4
  %v6973 = vadd.f32 %v6971, %v6972
  %v6974 = vrot.slane %v6973, 2
  %v6975 = vadd.f32 %v6973, %v6974
  %v6976 = vrot.slane %v6975, 1
  %v6977 = vadd.f32 %v6975, %v6976
  %6978 = vrot.lane.b32.xlu0 %v6956, 4
  %v6979 = vpop.permute.xlu0 %6978
  %6980 = vrot.lane.b32.xlu0 %v6977, 4
  %v6981 = vpop.permute.xlu0 %6980
  %v6982 = vsel %vm6829, %v6979, %v6981
  %v6983 = vsel %vm6829, %v6981, %v6979
  %v6984 = vadd.f32 %v6956, %v6983
  %v6985 = vadd.f32 %v6977, %v6982
  %6986 = vrot.lane.b32.xlu0 %v6984, 8
  %v6987 = vpop.permute.xlu0 %6986
  %6988 = vrot.lane.b32.xlu0 %v6985, 8
  %v6989 = vpop.permute.xlu0 %6988
  %v6990 = vsel %vm4162, %v6987, %v6989
  %v6991 = vsel %vm4162, %v6989, %v6987
  %v6992 = vadd.f32 %v6984, %v6991
  %v6993 = vadd.f32 %v6985, %v6990
  %6994 = vrot.lane.b32.xlu0 %v6992, 16
  %v6995 = vpop.permute.xlu0 %6994
  %6996 = vrot.lane.b32.xlu0 %v6993, 16
  %v6997 = vpop.permute.xlu0 %6996
  %v6998 = vsel %vm2326, %v6995, %v6997
  %v6999 = vsel %vm2326, %v6997, %v6995
  %v7000 = vadd.f32 %v6992, %v6999
  %v7001 = vadd.f32 %v6993, %v6998
  %7002 = vrot.lane.b32.xlu0 %v7000, 32
  %v7003 = vpop.permute.xlu0 %7002
  %7004 = vrot.lane.b32.xlu0 %v7001, 32
  %v7005 = vpop.permute.xlu0 %7004
  %v7006 = vsel %vm969, %v7003, %v7005
  %v7007 = vsel %vm969, %v7005, %v7003
  %v7008 = vadd.f32 %v7000, %v7007
  %v7009 = vadd.f32 %v7001, %v7006
  %7010 = vrot.lane.b32.xlu0 %v7008, 64
  %v7011 = vpop.permute.xlu0 %7010
  %7012 = vrot.lane.b32.xlu0 %v7009, 64
  %v7013 = vpop.permute.xlu0 %7012
  %v7014 = vsel %vm978, %v7011, %v7013
  %v7015 = vsel %vm978, %v7013, %v7011
  %v7016 = vadd.f32 %v7008, %v7015
  %v7017 = vadd.f32 %v7009, %v7014
  %v7018 = vadd.f32 %v7016, %v7017
  %v7019 = vmul.f32 %v7018, 0.00012207031
  %v7020 = vadd.f32 %v7019, 1e-05
  %v7021 = vrsqrt.pop %v7020
  %v7023 = vcombine.low %v7021, %v7021
  %v7025 = vunpack.c.l.s4 1966171168
  %v7026 = vunpack.c.0.s8 %v7025
  %v7027 = vlaneseq
  %v7028 = vshrl.u32 %v7027, 7
  %v7029 = vsub.s32 %v7026, %v7028
  %v7030 = vrot.slane %v7023, %v7029
  %v7032 = vunpack.c.l.s4 1966171168
  %v7033 = vunpack.c.0.s8 %v7032
  %v7034 = vlaneseq
  %v7035 = vshrl.u32 %v7034, 7
  %v7036 = vsub.s32 %v7033, %v7035
  %v7037 = vrot.slane %v7030, %v7036
  %v7039 = vmul.f32 %v6780, %v7037
  %v7041 = vlaneseq
  %v7042 = vshrl.u32 %v7041, 7
  %v7043 = vsub.s32 0, %v7042
  %v7044 = vrot.slane %v7039, %v7043
  %v7045 = vlaneseq
  %v7046 = vshrl.u32 %v7045, 7
  %v7047 = vsub.s32 1, %v7046
  %v7048 = vrot.slane %v7039, %v7047
  %v7051 = vmul.f32 %v6872, %v7044
  %v7052 = vmul.f32 %v6873, %v7048
  %v7053 = vmul.f32 %v6874, %v7044
  %v7054 = vmul.f32 %v6875, %v7048
  %v7055 = vmul.f32 %v6876, %v7044
  %v7056 = vmul.f32 %v6877, %v7048
  %v7057 = vmul.f32 %v6878, %v7044
  %v7058 = vmul.f32 %v6879, %v7048
  %v7059 = vmul.f32 %v6880, %v7044
  %v7060 = vmul.f32 %v6881, %v7048
  %v7061 = vmul.f32 %v6882, %v7044
  %v7062 = vmul.f32 %v6883, %v7048
  %v7063 = vmul.f32 %v6884, %v7044
  %v7064 = vmul.f32 %v6885, %v7048
  %v7065 = vmul.f32 %v6886, %v7044
  %v7066 = vmul.f32 %v6887, %v7048
  %v7067 = vmul.f32 %v6888, %v7044
  %v7068 = vmul.f32 %v6889, %v7048
  %v7069 = vmul.f32 %v6890, %v7044
  %v7070 = vmul.f32 %v6891, %v7048
  %v7071 = vmul.f32 %v6892, %v7044
  %v7072 = vmul.f32 %v6893, %v7048
  %v7073 = vmul.f32 %v6894, %v7044
  %v7074 = vmul.f32 %v6895, %v7048
  %v7075 = vmul.f32 %v6896, %v7044
  %v7076 = vmul.f32 %v6897, %v7048
  %v7077 = vmul.f32 %v6898, %v7044
  %v7078 = vmul.f32 %v6899, %v7048
  %v7079 = vmul.f32 %v6900, %v7044
  %v7080 = vmul.f32 %v6901, %v7048
  %v7081 = vmul.f32 %v6902, %v7044
  %v7082 = vmul.f32 %v6903, %v7048
  %v7084 = vlaneseq
  %v7085 = vshrl.u32 %v7084, 7
  %v7086 = vsub.s32 0, %v7085
  %v7087 = vrot.slane %v6782, %v7086
  %v7088 = vlaneseq
  %v7089 = vshrl.u32 %v7088, 7
  %v7090 = vsub.s32 1, %v7089
  %v7091 = vrot.slane %v6782, %v7090
  %v7094 = vadd.f32 %v7051, %v7087
  %v7095 = vadd.f32 %v7052, %v7091
  %v7096 = vadd.f32 %v7053, %v7087
  %v7097 = vadd.f32 %v7054, %v7091
  %v7098 = vadd.f32 %v7055, %v7087
  %v7099 = vadd.f32 %v7056, %v7091
  %v7100 = vadd.f32 %v7057, %v7087
  %v7101 = vadd.f32 %v7058, %v7091
  %v7102 = vadd.f32 %v7059, %v7087
  %v7103 = vadd.f32 %v7060, %v7091
  %v7104 = vadd.f32 %v7061, %v7087
  %v7105 = vadd.f32 %v7062, %v7091
  %v7106 = vadd.f32 %v7063, %v7087
  %v7107 = vadd.f32 %v7064, %v7091
  %v7108 = vadd.f32 %v7065, %v7087
  %v7109 = vadd.f32 %v7066, %v7091
  %v7110 = vadd.f32 %v7067, %v7087
  %v7111 = vadd.f32 %v7068, %v7091
  %v7112 = vadd.f32 %v7069, %v7087
  %v7113 = vadd.f32 %v7070, %v7091
  %v7114 = vadd.f32 %v7071, %v7087
  %v7115 = vadd.f32 %v7072, %v7091
  %v7116 = vadd.f32 %v7073, %v7087
  %v7117 = vadd.f32 %v7074, %v7091
  %v7118 = vadd.f32 %v7075, %v7087
  %v7119 = vadd.f32 %v7076, %v7091
  %v7120 = vadd.f32 %v7077, %v7087
  %v7121 = vadd.f32 %v7078, %v7091
  %v7122 = vadd.f32 %v7079, %v7087
  %v7123 = vadd.f32 %v7080, %v7091
  %v7124 = vadd.f32 %v7081, %v7087
  %v7125 = vadd.f32 %v7082, %v7091
  %v7126 = vmax.f32 %v7094, 0.0
  %v7127 = vmax.f32 %v7095, 0.0
  %v7128 = vmax.f32 %v7096, 0.0
  %v7129 = vmax.f32 %v7097, 0.0
  %v7130 = vmax.f32 %v7098, 0.0
  %v7131 = vmax.f32 %v7099, 0.0
  %v7132 = vmax.f32 %v7100, 0.0
  %v7133 = vmax.f32 %v7101, 0.0
  %v7134 = vmax.f32 %v7102, 0.0
  %v7135 = vmax.f32 %v7103, 0.0
  %v7136 = vmax.f32 %v7104, 0.0
  %v7137 = vmax.f32 %v7105, 0.0
  %v7138 = vmax.f32 %v7106, 0.0
  %v7139 = vmax.f32 %v7107, 0.0
  %v7140 = vmax.f32 %v7108, 0.0
  %v7141 = vmax.f32 %v7109, 0.0
  %v7142 = vmax.f32 %v7110, 0.0
  %v7143 = vmax.f32 %v7111, 0.0
  %v7144 = vmax.f32 %v7112, 0.0
  %v7145 = vmax.f32 %v7113, 0.0
  %v7146 = vmax.f32 %v7114, 0.0
  %v7147 = vmax.f32 %v7115, 0.0
  %v7148 = vmax.f32 %v7116, 0.0
  %v7149 = vmax.f32 %v7117, 0.0
  %v7150 = vmax.f32 %v7118, 0.0
  %v7151 = vmax.f32 %v7119, 0.0
  %v7152 = vmax.f32 %v7120, 0.0
  %v7153 = vmax.f32 %v7121, 0.0
  %v7154 = vmax.f32 %v7122, 0.0
  %v7155 = vmax.f32 %v7123, 0.0
  %v7156 = vmax.f32 %v7124, 0.0
  %v7157 = vmax.f32 %v7125, 0.0
  %v7158 = vadd.f32 %v6701, %v6705
  %v7159 = vadd.f32 %v7158, %v6711
  %v7160 = vadd.f32 %v7159, %v6715
  %v7161 = vadd.f32 %v7160, %v6721
  %v7162 = vadd.f32 %v7161, %v6725
  %v7163 = vadd.f32 %v7162, %v6731
  %v7164 = vadd.f32 %v7163, %v6735
  %v7165 = vadd.f32 %v7164, %v6741
  %v7166 = vadd.f32 %v7165, %v6745
  %v7167 = vadd.f32 %v7166, %v6751
  %v7168 = vadd.f32 %v7167, %v6755
  %v7169 = vadd.f32 %v7168, %v6761
  %v7170 = vadd.f32 %v7169, %v6765
  %v7171 = vadd.f32 %v7170, %v6771
  %v7172 = vadd.f32 %v7171, %v6775
  %v7173 = vrot.slane %v7172, 4
  %v7174 = vadd.f32 %v7172, %v7173
  %v7175 = vrot.slane %v7174, 2
  %v7176 = vadd.f32 %v7174, %v7175
  %v7177 = vrot.slane %v7176, 1
  %v7178 = vadd.f32 %v7176, %v7177
  %v7179 = vadd.f32 %v6703, %v6707
  %v7180 = vadd.f32 %v7179, %v6713
  %v7181 = vadd.f32 %v7180, %v6717
  %v7182 = vadd.f32 %v7181, %v6723
  %v7183 = vadd.f32 %v7182, %v6727
  %v7184 = vadd.f32 %v7183, %v6733
  %v7185 = vadd.f32 %v7184, %v6737
  %v7186 = vadd.f32 %v7185, %v6743
  %v7187 = vadd.f32 %v7186, %v6747
  %v7188 = vadd.f32 %v7187, %v6753
  %v7189 = vadd.f32 %v7188, %v6757
  %v7190 = vadd.f32 %v7189, %v6763
  %v7191 = vadd.f32 %v7190, %v6767
  %v7192 = vadd.f32 %v7191, %v6773
  %v7193 = vadd.f32 %v7192, %v6777
  %v7194 = vrot.slane %v7193, 4
  %v7195 = vadd.f32 %v7193, %v7194
  %v7196 = vrot.slane %v7195, 2
  %v7197 = vadd.f32 %v7195, %v7196
  %v7198 = vrot.slane %v7197, 1
  %v7199 = vadd.f32 %v7197, %v7198
  %7200 = vrot.lane.b32.xlu0 %v7178, 4
  %v7201 = vpop.permute.xlu0 %7200
  %7202 = vrot.lane.b32.xlu0 %v7199, 4
  %v7203 = vpop.permute.xlu0 %7202
  %v7204 = vsel %vm6829, %v7201, %v7203
  %v7205 = vsel %vm6829, %v7203, %v7201
  %v7206 = vadd.f32 %v7178, %v7205
  %v7207 = vadd.f32 %v7199, %v7204
  %7208 = vrot.lane.b32.xlu0 %v7206, 8
  %v7209 = vpop.permute.xlu0 %7208
  %7210 = vrot.lane.b32.xlu0 %v7207, 8
  %v7211 = vpop.permute.xlu0 %7210
  %v7212 = vsel %vm4162, %v7209, %v7211
  %v7213 = vsel %vm4162, %v7211, %v7209
  %v7214 = vadd.f32 %v7206, %v7213
  %v7215 = vadd.f32 %v7207, %v7212
  %7216 = vrot.lane.b32.xlu0 %v7214, 16
  %v7217 = vpop.permute.xlu0 %7216
  %7218 = vrot.lane.b32.xlu0 %v7215, 16
  %v7219 = vpop.permute.xlu0 %7218
  %v7220 = vsel %vm2326, %v7217, %v7219
  %v7221 = vsel %vm2326, %v7219, %v7217
  %v7222 = vadd.f32 %v7214, %v7221
  %v7223 = vadd.f32 %v7215, %v7220
  %7224 = vrot.lane.b32.xlu0 %v7222, 32
  %v7225 = vpop.permute.xlu0 %7224
  %7226 = vrot.lane.b32.xlu0 %v7223, 32
  %v7227 = vpop.permute.xlu0 %7226
  %v7228 = vsel %vm969, %v7225, %v7227
  %v7229 = vsel %vm969, %v7227, %v7225
  %v7230 = vadd.f32 %v7222, %v7229
  %v7231 = vadd.f32 %v7223, %v7228
  %7232 = vrot.lane.b32.xlu0 %v7230, 64
  %v7233 = vpop.permute.xlu0 %7232
  %7234 = vrot.lane.b32.xlu0 %v7231, 64
  %v7235 = vpop.permute.xlu0 %7234
  %v7236 = vsel %vm978, %v7233, %v7235
  %v7237 = vsel %vm978, %v7235, %v7233
  %v7238 = vadd.f32 %v7230, %v7237
  %v7239 = vadd.f32 %v7231, %v7236
  %v7240 = vadd.f32 %v7238, %v7239
  %v7241 = vmul.f32 %v7240, 0.00012207031
  %v7242 = vlaneseq
  %v7243 = vshrl.u32 %v7242, 7
  %v7244 = vsub.s32 0, %v7243
  %v7245 = vrot.slane %v7241, %v7244
  %v7246 = vsub.f32 %v6701, %v7245
  %v7247 = vsub.f32 %v6703, %v7245
  %v7248 = vsub.f32 %v6705, %v7245
  %v7249 = vsub.f32 %v6707, %v7245
  %v7250 = vsub.f32 %v6711, %v7245
  %v7251 = vsub.f32 %v6713, %v7245
  %v7252 = vsub.f32 %v6715, %v7245
  %v7253 = vsub.f32 %v6717, %v7245
  %v7254 = vsub.f32 %v6721, %v7245
  %v7255 = vsub.f32 %v6723, %v7245
  %v7256 = vsub.f32 %v6725, %v7245
  %v7257 = vsub.f32 %v6727, %v7245
  %v7258 = vsub.f32 %v6731, %v7245
  %v7259 = vsub.f32 %v6733, %v7245
  %v7260 = vsub.f32 %v6735, %v7245
  %v7261 = vsub.f32 %v6737, %v7245
  %v7262 = vsub.f32 %v6741, %v7245
  %v7263 = vsub.f32 %v6743, %v7245
  %v7264 = vsub.f32 %v6745, %v7245
  %v7265 = vsub.f32 %v6747, %v7245
  %v7266 = vsub.f32 %v6751, %v7245
  %v7267 = vsub.f32 %v6753, %v7245
  %v7268 = vsub.f32 %v6755, %v7245
  %v7269 = vsub.f32 %v6757, %v7245
  %v7270 = vsub.f32 %v6761, %v7245
  %v7271 = vsub.f32 %v6763, %v7245
  %v7272 = vsub.f32 %v6765, %v7245
  %v7273 = vsub.f32 %v6767, %v7245
  %v7274 = vsub.f32 %v6771, %v7245
  %v7275 = vsub.f32 %v6773, %v7245
  %v7276 = vsub.f32 %v6775, %v7245
  %v7277 = vsub.f32 %v6777, %v7245
  %v7278 = vmul.f32 %v7246, %v7246
  %v7279 = vmul.f32 %v7247, %v7247
  %v7280 = vmul.f32 %v7248, %v7248
  %v7281 = vmul.f32 %v7249, %v7249
  %v7282 = vmul.f32 %v7250, %v7250
  %v7283 = vmul.f32 %v7251, %v7251
  %v7284 = vmul.f32 %v7252, %v7252
  %v7285 = vmul.f32 %v7253, %v7253
  %v7286 = vmul.f32 %v7254, %v7254
  %v7287 = vmul.f32 %v7255, %v7255
  %v7288 = vmul.f32 %v7256, %v7256
  %v7289 = vmul.f32 %v7257, %v7257
  %v7290 = vmul.f32 %v7258, %v7258
  %v7291 = vmul.f32 %v7259, %v7259
  %v7292 = vmul.f32 %v7260, %v7260
  %v7293 = vmul.f32 %v7261, %v7261
  %v7294 = vmul.f32 %v7262, %v7262
  %v7295 = vmul.f32 %v7263, %v7263
  %v7296 = vmul.f32 %v7264, %v7264
  %v7297 = vmul.f32 %v7265, %v7265
  %v7298 = vmul.f32 %v7266, %v7266
  %v7299 = vmul.f32 %v7267, %v7267
  %v7300 = vmul.f32 %v7268, %v7268
  %v7301 = vmul.f32 %v7269, %v7269
  %v7302 = vmul.f32 %v7270, %v7270
  %v7303 = vmul.f32 %v7271, %v7271
  %v7304 = vmul.f32 %v7272, %v7272
  %v7305 = vmul.f32 %v7273, %v7273
  %v7306 = vmul.f32 %v7274, %v7274
  %v7307 = vmul.f32 %v7275, %v7275
  %v7308 = vmul.f32 %v7276, %v7276
  %v7309 = vmul.f32 %v7277, %v7277
  %v7310 = vadd.f32 %v7278, %v7280
  %v7311 = vadd.f32 %v7310, %v7282
  %v7312 = vadd.f32 %v7311, %v7284
  %v7313 = vadd.f32 %v7312, %v7286
  %v7314 = vadd.f32 %v7313, %v7288
  %v7315 = vadd.f32 %v7314, %v7290
  %v7316 = vadd.f32 %v7315, %v7292
  %v7317 = vadd.f32 %v7316, %v7294
  %v7318 = vadd.f32 %v7317, %v7296
  %v7319 = vadd.f32 %v7318, %v7298
  %v7320 = vadd.f32 %v7319, %v7300
  %v7321 = vadd.f32 %v7320, %v7302
  %v7322 = vadd.f32 %v7321, %v7304
  %v7323 = vadd.f32 %v7322, %v7306
  %v7324 = vadd.f32 %v7323, %v7308
  %v7325 = vrot.slane %v7324, 4
  %v7326 = vadd.f32 %v7324, %v7325
  %v7327 = vrot.slane %v7326, 2
  %v7328 = vadd.f32 %v7326, %v7327
  %v7329 = vrot.slane %v7328, 1
  %v7330 = vadd.f32 %v7328, %v7329
  %v7331 = vadd.f32 %v7279, %v7281
  %v7332 = vadd.f32 %v7331, %v7283
  %v7333 = vadd.f32 %v7332, %v7285
  %v7334 = vadd.f32 %v7333, %v7287
  %v7335 = vadd.f32 %v7334, %v7289
  %v7336 = vadd.f32 %v7335, %v7291
  %v7337 = vadd.f32 %v7336, %v7293
  %v7338 = vadd.f32 %v7337, %v7295
  %v7339 = vadd.f32 %v7338, %v7297
  %v7340 = vadd.f32 %v7339, %v7299
  %v7341 = vadd.f32 %v7340, %v7301
  %v7342 = vadd.f32 %v7341, %v7303
  %v7343 = vadd.f32 %v7342, %v7305
  %v7344 = vadd.f32 %v7343, %v7307
  %v7345 = vadd.f32 %v7344, %v7309
  %v7346 = vrot.slane %v7345, 4
  %v7347 = vadd.f32 %v7345, %v7346
  %v7348 = vrot.slane %v7347, 2
  %v7349 = vadd.f32 %v7347, %v7348
  %v7350 = vrot.slane %v7349, 1
  %v7351 = vadd.f32 %v7349, %v7350
  %7352 = vrot.lane.b32.xlu0 %v7330, 4
  %v7353 = vpop.permute.xlu0 %7352
  %7354 = vrot.lane.b32.xlu0 %v7351, 4
  %v7355 = vpop.permute.xlu0 %7354
  %v7356 = vsel %vm6829, %v7353, %v7355
  %v7357 = vsel %vm6829, %v7355, %v7353
  %v7358 = vadd.f32 %v7330, %v7357
  %v7359 = vadd.f32 %v7351, %v7356
  %7360 = vrot.lane.b32.xlu0 %v7358, 8
  %v7361 = vpop.permute.xlu0 %7360
  %7362 = vrot.lane.b32.xlu0 %v7359, 8
  %v7363 = vpop.permute.xlu0 %7362
  %v7364 = vsel %vm4162, %v7361, %v7363
  %v7365 = vsel %vm4162, %v7363, %v7361
  %v7366 = vadd.f32 %v7358, %v7365
  %v7367 = vadd.f32 %v7359, %v7364
  %7368 = vrot.lane.b32.xlu0 %v7366, 16
  %v7369 = vpop.permute.xlu0 %7368
  %7370 = vrot.lane.b32.xlu0 %v7367, 16
  %v7371 = vpop.permute.xlu0 %7370
  %v7372 = vsel %vm2326, %v7369, %v7371
  %v7373 = vsel %vm2326, %v7371, %v7369
  %v7374 = vadd.f32 %v7366, %v7373
  %v7375 = vadd.f32 %v7367, %v7372
  %7376 = vrot.lane.b32.xlu0 %v7374, 32
  %v7377 = vpop.permute.xlu0 %7376
  %7378 = vrot.lane.b32.xlu0 %v7375, 32
  %v7379 = vpop.permute.xlu0 %7378
  %v7380 = vsel %vm969, %v7377, %v7379
  %v7381 = vsel %vm969, %v7379, %v7377
  %v7382 = vadd.f32 %v7374, %v7381
  %v7383 = vadd.f32 %v7375, %v7380
  %7384 = vrot.lane.b32.xlu0 %v7382, 64
  %v7385 = vpop.permute.xlu0 %7384
  %7386 = vrot.lane.b32.xlu0 %v7383, 64
  %v7387 = vpop.permute.xlu0 %7386
  %v7388 = vsel %vm978, %v7385, %v7387
  %v7389 = vsel %vm978, %v7387, %v7385
  %v7390 = vadd.f32 %v7382, %v7389
  %v7391 = vadd.f32 %v7383, %v7388
  %v7392 = vadd.f32 %v7390, %v7391
  %v7393 = vmul.f32 %v7392, 0.00012207031
  %v7394 = vadd.f32 %v7393, 1e-05
  %v7395 = vrsqrt.pop %v7394
  %v7397 = vcombine.low %v7395, %v7395
  %v7399 = vunpack.c.l.s4 1966171168
  %v7400 = vunpack.c.0.s8 %v7399
  %v7401 = vlaneseq
  %v7402 = vshrl.u32 %v7401, 7
  %v7403 = vsub.s32 %v7400, %v7402
  %v7404 = vrot.slane %v7397, %v7403
  %v7406 = vunpack.c.l.s4 1966171168
  %v7407 = vunpack.c.0.s8 %v7406
  %v7408 = vlaneseq
  %v7409 = vshrl.u32 %v7408, 7
  %v7410 = vsub.s32 %v7407, %v7409
  %v7411 = vrot.slane %v7404, %v7410
  %v7413 = vmul.f32 %v6780, %v7411
  %v7415 = vlaneseq
  %v7416 = vshrl.u32 %v7415, 7
  %v7417 = vsub.s32 0, %v7416
  %v7418 = vrot.slane %v7413, %v7417
  %v7419 = vlaneseq
  %v7420 = vshrl.u32 %v7419, 7
  %v7421 = vsub.s32 1, %v7420
  %v7422 = vrot.slane %v7413, %v7421
  %v7425 = vmul.f32 %v7246, %v7418
  %v7426 = vmul.f32 %v7247, %v7422
  %v7427 = vmul.f32 %v7248, %v7418
  %v7428 = vmul.f32 %v7249, %v7422
  %v7429 = vmul.f32 %v7250, %v7418
  %v7430 = vmul.f32 %v7251, %v7422
  %v7431 = vmul.f32 %v7252, %v7418
  %v7432 = vmul.f32 %v7253, %v7422
  %v7433 = vmul.f32 %v7254, %v7418
  %v7434 = vmul.f32 %v7255, %v7422
  %v7435 = vmul.f32 %v7256, %v7418
  %v7436 = vmul.f32 %v7257, %v7422
  %v7437 = vmul.f32 %v7258, %v7418
  %v7438 = vmul.f32 %v7259, %v7422
  %v7439 = vmul.f32 %v7260, %v7418
  %v7440 = vmul.f32 %v7261, %v7422
  %v7441 = vmul.f32 %v7262, %v7418
  %v7442 = vmul.f32 %v7263, %v7422
  %v7443 = vmul.f32 %v7264, %v7418
  %v7444 = vmul.f32 %v7265, %v7422
  %v7445 = vmul.f32 %v7266, %v7418
  %v7446 = vmul.f32 %v7267, %v7422
  %v7447 = vmul.f32 %v7268, %v7418
  %v7448 = vmul.f32 %v7269, %v7422
  %v7449 = vmul.f32 %v7270, %v7418
  %v7450 = vmul.f32 %v7271, %v7422
  %v7451 = vmul.f32 %v7272, %v7418
  %v7452 = vmul.f32 %v7273, %v7422
  %v7453 = vmul.f32 %v7274, %v7418
  %v7454 = vmul.f32 %v7275, %v7422
  %v7455 = vmul.f32 %v7276, %v7418
  %v7456 = vmul.f32 %v7277, %v7422
  %v7457 = vadd.f32 %v7425, %v7087
  %v7458 = vadd.f32 %v7426, %v7091
  %v7459 = vadd.f32 %v7427, %v7087
  %v7460 = vadd.f32 %v7428, %v7091
  %v7461 = vadd.f32 %v7429, %v7087
  %v7462 = vadd.f32 %v7430, %v7091
  %v7463 = vadd.f32 %v7431, %v7087
  %v7464 = vadd.f32 %v7432, %v7091
  %v7465 = vadd.f32 %v7433, %v7087
  %v7466 = vadd.f32 %v7434, %v7091
  %v7467 = vadd.f32 %v7435, %v7087
  %v7468 = vadd.f32 %v7436, %v7091
  %v7469 = vadd.f32 %v7437, %v7087
  %v7470 = vadd.f32 %v7438, %v7091
  %v7471 = vadd.f32 %v7439, %v7087
  %v7472 = vadd.f32 %v7440, %v7091
  %v7473 = vadd.f32 %v7441, %v7087
  %v7474 = vadd.f32 %v7442, %v7091
  %v7475 = vadd.f32 %v7443, %v7087
  %v7476 = vadd.f32 %v7444, %v7091
  %v7477 = vadd.f32 %v7445, %v7087
  %v7478 = vadd.f32 %v7446, %v7091
  %v7479 = vadd.f32 %v7447, %v7087
  %v7480 = vadd.f32 %v7448, %v7091
  %v7481 = vadd.f32 %v7449, %v7087
  %v7482 = vadd.f32 %v7450, %v7091
  %v7483 = vadd.f32 %v7451, %v7087
  %v7484 = vadd.f32 %v7452, %v7091
  %v7485 = vadd.f32 %v7453, %v7087
  %v7486 = vadd.f32 %v7454, %v7091
  %v7487 = vadd.f32 %v7455, %v7087
  %v7488 = vadd.f32 %v7456, %v7091
  %v7489 = vmax.f32 %v7457, 0.0
  %v7490 = vmax.f32 %v7458, 0.0
  %v7491 = vmax.f32 %v7459, 0.0
  %v7492 = vmax.f32 %v7460, 0.0
  %v7493 = vmax.f32 %v7461, 0.0
  %v7494 = vmax.f32 %v7462, 0.0
  %v7495 = vmax.f32 %v7463, 0.0
  %v7496 = vmax.f32 %v7464, 0.0
  %v7497 = vmax.f32 %v7465, 0.0
  %v7498 = vmax.f32 %v7466, 0.0
  %v7499 = vmax.f32 %v7467, 0.0
  %v7500 = vmax.f32 %v7468, 0.0
  %v7501 = vmax.f32 %v7469, 0.0
  %v7502 = vmax.f32 %v7470, 0.0
  %v7503 = vmax.f32 %v7471, 0.0
  %v7504 = vmax.f32 %v7472, 0.0
  %v7505 = vmax.f32 %v7473, 0.0
  %v7506 = vmax.f32 %v7474, 0.0
  %v7507 = vmax.f32 %v7475, 0.0
  %v7508 = vmax.f32 %v7476, 0.0
  %v7509 = vmax.f32 %v7477, 0.0
  %v7510 = vmax.f32 %v7478, 0.0
  %v7511 = vmax.f32 %v7479, 0.0
  %v7512 = vmax.f32 %v7480, 0.0
  %v7513 = vmax.f32 %v7481, 0.0
  %v7514 = vmax.f32 %v7482, 0.0
  %v7515 = vmax.f32 %v7483, 0.0
  %v7516 = vmax.f32 %v7484, 0.0
  %v7517 = vmax.f32 %v7485, 0.0
  %v7518 = vmax.f32 %v7486, 0.0
  %v7519 = vmax.f32 %v7487, 0.0
  %v7520 = vmax.f32 %v7488, 0.0
  %v7521 = vpack.c.bf16 %v7128, %v7126
  %v7522 = vpack.c.bf16 %v7129, %v7127
  %v7523 = vpack.c.bf16 %v7132, %v7130
  %v7524 = vpack.c.bf16 %v7133, %v7131
  %v7525 = vpack.c.bf16 %v7136, %v7134
  %v7526 = vpack.c.bf16 %v7137, %v7135
  %v7527 = vpack.c.bf16 %v7140, %v7138
  %v7528 = vpack.c.bf16 %v7141, %v7139
  %v7529 = vpack.c.bf16 %v7144, %v7142
  %v7530 = vpack.c.bf16 %v7145, %v7143
  %v7531 = vpack.c.bf16 %v7148, %v7146
  %v7532 = vpack.c.bf16 %v7149, %v7147
  %v7533 = vpack.c.bf16 %v7152, %v7150
  %v7534 = vpack.c.bf16 %v7153, %v7151
  %v7535 = vpack.c.bf16 %v7156, %v7154
  %v7536 = vpack.c.bf16 %v7157, %v7155
  %v7537 = vpack.c.bf16 %v7491, %v7489
  %v7538 = vpack.c.bf16 %v7492, %v7490
  %v7539 = vpack.c.bf16 %v7495, %v7493
  %v7540 = vpack.c.bf16 %v7496, %v7494
  %v7541 = vpack.c.bf16 %v7499, %v7497
  %v7542 = vpack.c.bf16 %v7500, %v7498
  %v7543 = vpack.c.bf16 %v7503, %v7501
  %v7544 = vpack.c.bf16 %v7504, %v7502
  %v7545 = vpack.c.bf16 %v7507, %v7505
  %v7546 = vpack.c.bf16 %v7508, %v7506
  %v7547 = vpack.c.bf16 %v7511, %v7509
  %v7548 = vpack.c.bf16 %v7512, %v7510
  %v7549 = vpack.c.bf16 %v7515, %v7513
  %v7550 = vpack.c.bf16 %v7516, %v7514
  %v7551 = vpack.c.bf16 %v7519, %v7517
  %v7552 = vpack.c.bf16 %v7520, %v7518
  %v7553 = vld [vmem:[%s5] sm:$0xff]
  %v7554 = vld [vmem:[%s5 + $0x8] sm:$0xff]
  %v7555 = vld [vmem:[%s5 + $0x10] sm:$0xff]
  %v7556 = vld [vmem:[%s5 + $0x18] sm:$0xff]
  %v7557 = vld [vmem:[%s5 + $0x20] sm:$0xff]
  %v7558 = vld [vmem:[%s5 + $0x28] sm:$0xff]
  %v7559 = vld [vmem:[%s5 + $0x30] sm:$0xff]
  %v7560 = vld [vmem:[%s5 + $0x38] sm:$0xff]
  %v7561 = vld [vmem:[%s5 + $0x40] sm:$0xff]
  %v7562 = vld [vmem:[%s5 + $0x48] sm:$0xff]
  %v7563 = vld [vmem:[%s5 + $0x50] sm:$0xff]
  %v7564 = vld [vmem:[%s5 + $0x58] sm:$0xff]
  %v7565 = vld [vmem:[%s5 + $0x60] sm:$0xff]
  %v7566 = vld [vmem:[%s5 + $0x68] sm:$0xff]
  %v7567 = vld [vmem:[%s5 + $0x70] sm:$0xff]
  %v7568 = vld [vmem:[%s5 + $0x78] sm:$0xff]
  %v7569 = vld [vmem:[%s5 + $0x80] sm:$0xff]
  %v7570 = vld [vmem:[%s5 + $0x88] sm:$0xff]
  %v7571 = vld [vmem:[%s5 + $0x90] sm:$0xff]
  %v7572 = vld [vmem:[%s5 + $0x98] sm:$0xff]
  %v7573 = vld [vmem:[%s5 + $0xa0] sm:$0xff]
  %v7574 = vld [vmem:[%s5 + $0xa8] sm:$0xff]
  %v7575 = vld [vmem:[%s5 + $0xb0] sm:$0xff]
  %v7576 = vld [vmem:[%s5 + $0xb8] sm:$0xff]
  %v7577 = vld [vmem:[%s5 + $0xc0] sm:$0xff]
  %v7578 = vld [vmem:[%s5 + $0xc8] sm:$0xff]
  %v7579 = vld [vmem:[%s5 + $0xd0] sm:$0xff]
  %v7580 = vld [vmem:[%s5 + $0xd8] sm:$0xff]
  %v7581 = vld [vmem:[%s5 + $0xe0] sm:$0xff]
  %v7582 = vld [vmem:[%s5 + $0xe8] sm:$0xff]
  %v7583 = vld [vmem:[%s5 + $0xf0] sm:$0xff]
  %v7584 = vld [vmem:[%s5 + $0xf8] sm:$0xff]
  %v7585 = vld [vmem:[%s5 + $0x100] sm:$0xff]
  %v7586 = vld [vmem:[%s5 + $0x108] sm:$0xff]
  %v7587 = vld [vmem:[%s5 + $0x110] sm:$0xff]
  %v7588 = vld [vmem:[%s5 + $0x118] sm:$0xff]
  %v7589 = vld [vmem:[%s5 + $0x120] sm:$0xff]
  %v7590 = vld [vmem:[%s5 + $0x128] sm:$0xff]
  %v7591 = vld [vmem:[%s5 + $0x130] sm:$0xff]
  %v7592 = vld [vmem:[%s5 + $0x138] sm:$0xff]
  %v7593 = vld [vmem:[%s5 + $0x140] sm:$0xff]
  %v7594 = vld [vmem:[%s5 + $0x148] sm:$0xff]
  %v7595 = vld [vmem:[%s5 + $0x150] sm:$0xff]
  %v7596 = vld [vmem:[%s5 + $0x158] sm:$0xff]
  %v7597 = vld [vmem:[%s5 + $0x160] sm:$0xff]
  %v7598 = vld [vmem:[%s5 + $0x168] sm:$0xff]
  %v7599 = vld [vmem:[%s5 + $0x170] sm:$0xff]
  %v7600 = vld [vmem:[%s5 + $0x178] sm:$0xff]
  %v7601 = vld [vmem:[%s5 + $0x180] sm:$0xff]
  %v7602 = vld [vmem:[%s5 + $0x188] sm:$0xff]
  %v7603 = vld [vmem:[%s5 + $0x190] sm:$0xff]
  %v7604 = vld [vmem:[%s5 + $0x198] sm:$0xff]
  %v7605 = vld [vmem:[%s5 + $0x1a0] sm:$0xff]
  %v7606 = vld [vmem:[%s5 + $0x1a8] sm:$0xff]
  %v7607 = vld [vmem:[%s5 + $0x1b0] sm:$0xff]
  %v7608 = vld [vmem:[%s5 + $0x1b8] sm:$0xff]
  %v7609 = vld [vmem:[%s5 + $0x1c0] sm:$0xff]
  %v7610 = vld [vmem:[%s5 + $0x1c8] sm:$0xff]
  %v7611 = vld [vmem:[%s5 + $0x1d0] sm:$0xff]
  %v7612 = vld [vmem:[%s5 + $0x1d8] sm:$0xff]
  %v7613 = vld [vmem:[%s5 + $0x1e0] sm:$0xff]
  %v7614 = vld [vmem:[%s5 + $0x1e8] sm:$0xff]
  %v7615 = vld [vmem:[%s5 + $0x1f0] sm:$0xff]
  %v7616 = vld [vmem:[%s5 + $0x1f8] sm:$0xff]
  %v7617 = vld [vmem:[%s5 + $0x200] sm:$0xff]
  %v7618 = vld [vmem:[%s5 + $0x208] sm:$0xff]
  %v7619 = vld [vmem:[%s5 + $0x210] sm:$0xff]
  %v7620 = vld [vmem:[%s5 + $0x218] sm:$0xff]
  %v7621 = vld [vmem:[%s5 + $0x220] sm:$0xff]
  %v7622 = vld [vmem:[%s5 + $0x228] sm:$0xff]
  %v7623 = vld [vmem:[%s5 + $0x230] sm:$0xff]
  %v7624 = vld [vmem:[%s5 + $0x238] sm:$0xff]
  %v7625 = vld [vmem:[%s5 + $0x240] sm:$0xff]
  %v7626 = vld [vmem:[%s5 + $0x248] sm:$0xff]
  %v7627 = vld [vmem:[%s5 + $0x250] sm:$0xff]
  %v7628 = vld [vmem:[%s5 + $0x258] sm:$0xff]
  %v7629 = vld [vmem:[%s5 + $0x260] sm:$0xff]
  %v7630 = vld [vmem:[%s5 + $0x268] sm:$0xff]
  %v7631 = vld [vmem:[%s5 + $0x270] sm:$0xff]
  %v7632 = vld [vmem:[%s5 + $0x278] sm:$0xff]
  %v7633 = vld [vmem:[%s5 + $0x280] sm:$0xff]
  %v7634 = vld [vmem:[%s5 + $0x288] sm:$0xff]
  %v7635 = vld [vmem:[%s5 + $0x290] sm:$0xff]
  %v7636 = vld [vmem:[%s5 + $0x298] sm:$0xff]
  %v7637 = vld [vmem:[%s5 + $0x2a0] sm:$0xff]
  %v7638 = vld [vmem:[%s5 + $0x2a8] sm:$0xff]
  %v7639 = vld [vmem:[%s5 + $0x2b0] sm:$0xff]
  %v7640 = vld [vmem:[%s5 + $0x2b8] sm:$0xff]
  %v7641 = vld [vmem:[%s5 + $0x2c0] sm:$0xff]
  %v7642 = vld [vmem:[%s5 + $0x2c8] sm:$0xff]
  %v7643 = vld [vmem:[%s5 + $0x2d0] sm:$0xff]
  %v7644 = vld [vmem:[%s5 + $0x2d8] sm:$0xff]
  %v7645 = vld [vmem:[%s5 + $0x2e0] sm:$0xff]
  %v7646 = vld [vmem:[%s5 + $0x2e8] sm:$0xff]
  %v7647 = vld [vmem:[%s5 + $0x2f0] sm:$0xff]
  %v7648 = vld [vmem:[%s5 + $0x2f8] sm:$0xff]
  %v7745 = vunpack.c.l.b16 %v7553
  %v7746 = vunpack.c.h.b16 %v7553
  %v7747 = vunpack.c.l.b16 %v7554
  %v7748 = vunpack.c.h.b16 %v7554
  %v7749 = vunpack.c.l.b16 %v7555
  %v7750 = vunpack.c.h.b16 %v7555
  %v7751 = vunpack.c.l.b16 %v7556
  %v7752 = vunpack.c.h.b16 %v7556
  %v7753 = vunpack.c.l.b16 %v7557
  %v7754 = vunpack.c.h.b16 %v7557
  %v7755 = vunpack.c.l.b16 %v7558
  %v7756 = vunpack.c.h.b16 %v7558
  %v7757 = vunpack.c.l.b16 %v7559
  %v7758 = vunpack.c.h.b16 %v7559
  %v7759 = vunpack.c.l.b16 %v7560
  %v7760 = vunpack.c.h.b16 %v7560
  %v7761 = vunpack.c.l.b16 %v7561
  %v7762 = vunpack.c.h.b16 %v7561
  %v7763 = vunpack.c.l.b16 %v7562
  %v7764 = vunpack.c.h.b16 %v7562
  %v7765 = vunpack.c.l.b16 %v7563
  %v7766 = vunpack.c.h.b16 %v7563
  %v7767 = vunpack.c.l.b16 %v7564
  %v7768 = vunpack.c.h.b16 %v7564
  %v7769 = vunpack.c.l.b16 %v7565
  %v7770 = vunpack.c.h.b16 %v7565
  %v7771 = vunpack.c.l.b16 %v7566
  %v7772 = vunpack.c.h.b16 %v7566
  %v7773 = vunpack.c.l.b16 %v7567
  %v7774 = vunpack.c.h.b16 %v7567
  %v7775 = vunpack.c.l.b16 %v7568
  %v7776 = vunpack.c.h.b16 %v7568
  %v7777 = vunpack.c.l.b16 %v7569
  %v7778 = vunpack.c.h.b16 %v7569
  %v7779 = vunpack.c.l.b16 %v7570
  %v7780 = vunpack.c.h.b16 %v7570
  %v7781 = vunpack.c.l.b16 %v7571
  %v7782 = vunpack.c.h.b16 %v7571
  %v7783 = vunpack.c.l.b16 %v7572
  %v7784 = vunpack.c.h.b16 %v7572
  %v7785 = vunpack.c.l.b16 %v7573
  %v7786 = vunpack.c.h.b16 %v7573
  %v7787 = vunpack.c.l.b16 %v7574
  %v7788 = vunpack.c.h.b16 %v7574
  %v7789 = vunpack.c.l.b16 %v7575
  %v7790 = vunpack.c.h.b16 %v7575
  %v7791 = vunpack.c.l.b16 %v7576
  %v7792 = vunpack.c.h.b16 %v7576
  %v7793 = vunpack.c.l.b16 %v7577
  %v7794 = vunpack.c.h.b16 %v7577
  %v7795 = vunpack.c.l.b16 %v7578
  %v7796 = vunpack.c.h.b16 %v7578
  %v7797 = vunpack.c.l.b16 %v7579
  %v7798 = vunpack.c.h.b16 %v7579
  %v7799 = vunpack.c.l.b16 %v7580
  %v7800 = vunpack.c.h.b16 %v7580
  %v7801 = vunpack.c.l.b16 %v7581
  %v7802 = vunpack.c.h.b16 %v7581
  %v7803 = vunpack.c.l.b16 %v7582
  %v7804 = vunpack.c.h.b16 %v7582
  %v7805 = vunpack.c.l.b16 %v7583
  %v7806 = vunpack.c.h.b16 %v7583
  %v7807 = vunpack.c.l.b16 %v7584
  %v7808 = vunpack.c.h.b16 %v7584
  %v7809 = vunpack.c.l.b16 %v7585
  %v7810 = vunpack.c.h.b16 %v7585
  %v7811 = vunpack.c.l.b16 %v7586
  %v7812 = vunpack.c.h.b16 %v7586
  %v7813 = vunpack.c.l.b16 %v7587
  %v7814 = vunpack.c.h.b16 %v7587
  %v7815 = vunpack.c.l.b16 %v7588
  %v7816 = vunpack.c.h.b16 %v7588
  %v7817 = vunpack.c.l.b16 %v7589
  %v7818 = vunpack.c.h.b16 %v7589
  %v7819 = vunpack.c.l.b16 %v7590
  %v7820 = vunpack.c.h.b16 %v7590
  %v7821 = vunpack.c.l.b16 %v7591
  %v7822 = vunpack.c.h.b16 %v7591
  %v7823 = vunpack.c.l.b16 %v7592
  %v7824 = vunpack.c.h.b16 %v7592
  %v7825 = vunpack.c.l.b16 %v7593
  %v7826 = vunpack.c.h.b16 %v7593
  %v7827 = vunpack.c.l.b16 %v7594
  %v7828 = vunpack.c.h.b16 %v7594
  %v7829 = vunpack.c.l.b16 %v7595
  %v7830 = vunpack.c.h.b16 %v7595
  %v7831 = vunpack.c.l.b16 %v7596
  %v7832 = vunpack.c.h.b16 %v7596
  %v7833 = vunpack.c.l.b16 %v7597
  %v7834 = vunpack.c.h.b16 %v7597
  %v7835 = vunpack.c.l.b16 %v7598
  %v7836 = vunpack.c.h.b16 %v7598
  %v7837 = vunpack.c.l.b16 %v7599
  %v7838 = vunpack.c.h.b16 %v7599
  %v7839 = vunpack.c.l.b16 %v7600
  %v7840 = vunpack.c.h.b16 %v7600
  %v7841 = vunpack.c.l.b16 %v7601
  %v7842 = vunpack.c.h.b16 %v7601
  %v7843 = vunpack.c.l.b16 %v7602
  %v7844 = vunpack.c.h.b16 %v7602
  %v7845 = vunpack.c.l.b16 %v7603
  %v7846 = vunpack.c.h.b16 %v7603
  %v7847 = vunpack.c.l.b16 %v7604
  %v7848 = vunpack.c.h.b16 %v7604
  %v7849 = vunpack.c.l.b16 %v7605
  %v7850 = vunpack.c.h.b16 %v7605
  %v7851 = vunpack.c.l.b16 %v7606
  %v7852 = vunpack.c.h.b16 %v7606
  %v7853 = vunpack.c.l.b16 %v7607
  %v7854 = vunpack.c.h.b16 %v7607
  %v7855 = vunpack.c.l.b16 %v7608
  %v7856 = vunpack.c.h.b16 %v7608
  %v7857 = vunpack.c.l.b16 %v7609
  %v7858 = vunpack.c.h.b16 %v7609
  %v7859 = vunpack.c.l.b16 %v7610
  %v7860 = vunpack.c.h.b16 %v7610
  %v7861 = vunpack.c.l.b16 %v7611
  %v7862 = vunpack.c.h.b16 %v7611
  %v7863 = vunpack.c.l.b16 %v7612
  %v7864 = vunpack.c.h.b16 %v7612
  %v7865 = vunpack.c.l.b16 %v7613
  %v7866 = vunpack.c.h.b16 %v7613
  %v7867 = vunpack.c.l.b16 %v7614
  %v7868 = vunpack.c.h.b16 %v7614
  %v7869 = vunpack.c.l.b16 %v7615
  %v7870 = vunpack.c.h.b16 %v7615
  %v7871 = vunpack.c.l.b16 %v7616
  %v7872 = vunpack.c.h.b16 %v7616
  %v7873 = vunpack.c.l.b16 %v7617
  %v7874 = vunpack.c.h.b16 %v7617
  %v7875 = vunpack.c.l.b16 %v7618
  %v7876 = vunpack.c.h.b16 %v7618
  %v7877 = vunpack.c.l.b16 %v7619
  %v7878 = vunpack.c.h.b16 %v7619
  %v7879 = vunpack.c.l.b16 %v7620
  %v7880 = vunpack.c.h.b16 %v7620
  %v7881 = vunpack.c.l.b16 %v7621
  %v7882 = vunpack.c.h.b16 %v7621
  %v7883 = vunpack.c.l.b16 %v7622
  %v7884 = vunpack.c.h.b16 %v7622
  %v7885 = vunpack.c.l.b16 %v7623
  %v7886 = vunpack.c.h.b16 %v7623
  %v7887 = vunpack.c.l.b16 %v7624
  %v7888 = vunpack.c.h.b16 %v7624
  %v7889 = vunpack.c.l.b16 %v7625
  %v7890 = vunpack.c.h.b16 %v7625
  %v7891 = vunpack.c.l.b16 %v7626
  %v7892 = vunpack.c.h.b16 %v7626
  %v7893 = vunpack.c.l.b16 %v7627
  %v7894 = vunpack.c.h.b16 %v7627
  %v7895 = vunpack.c.l.b16 %v7628
  %v7896 = vunpack.c.h.b16 %v7628
  %v7897 = vunpack.c.l.b16 %v7629
  %v7898 = vunpack.c.h.b16 %v7629
  %v7899 = vunpack.c.l.b16 %v7630
  %v7900 = vunpack.c.h.b16 %v7630
  %v7901 = vunpack.c.l.b16 %v7631
  %v7902 = vunpack.c.h.b16 %v7631
  %v7903 = vunpack.c.l.b16 %v7632
  %v7904 = vunpack.c.h.b16 %v7632
  %v7905 = vunpack.c.l.b16 %v7633
  %v7906 = vunpack.c.h.b16 %v7633
  %v7907 = vunpack.c.l.b16 %v7634
  %v7908 = vunpack.c.h.b16 %v7634
  %v7909 = vunpack.c.l.b16 %v7635
  %v7910 = vunpack.c.h.b16 %v7635
  %v7911 = vunpack.c.l.b16 %v7636
  %v7912 = vunpack.c.h.b16 %v7636
  %v7913 = vunpack.c.l.b16 %v7637
  %v7914 = vunpack.c.h.b16 %v7637
  %v7915 = vunpack.c.l.b16 %v7638
  %v7916 = vunpack.c.h.b16 %v7638
  %v7917 = vunpack.c.l.b16 %v7639
  %v7918 = vunpack.c.h.b16 %v7639
  %v7919 = vunpack.c.l.b16 %v7640
  %v7920 = vunpack.c.h.b16 %v7640
  %v7921 = vunpack.c.l.b16 %v7641
  %v7922 = vunpack.c.h.b16 %v7641
  %v7923 = vunpack.c.l.b16 %v7642
  %v7924 = vunpack.c.h.b16 %v7642
  %v7925 = vunpack.c.l.b16 %v7643
  %v7926 = vunpack.c.h.b16 %v7643
  %v7927 = vunpack.c.l.b16 %v7644
  %v7928 = vunpack.c.h.b16 %v7644
  %v7929 = vunpack.c.l.b16 %v7645
  %v7930 = vunpack.c.h.b16 %v7645
  %v7931 = vunpack.c.l.b16 %v7646
  %v7932 = vunpack.c.h.b16 %v7646
  %v7933 = vunpack.c.l.b16 %v7647
  %v7934 = vunpack.c.h.b16 %v7647
  %v7935 = vunpack.c.l.b16 %v7648
  %v7936 = vunpack.c.h.b16 %v7648
  %v7937 = vpack.c.b16 %v7747, %v7745
  %v7938 = vpack.c.b16 %v7748, %v7746
  %v7939 = vpack.c.b16 %v7751, %v7749
  %v7940 = vpack.c.b16 %v7752, %v7750
  %v7941 = vpack.c.b16 %v7755, %v7753
  %v7942 = vpack.c.b16 %v7756, %v7754
  %v7943 = vpack.c.b16 %v7759, %v7757
  %v7944 = vpack.c.b16 %v7760, %v7758
  %v7945 = vpack.c.b16 %v7763, %v7761
  %v7946 = vpack.c.b16 %v7764, %v7762
  %v7947 = vpack.c.b16 %v7767, %v7765
  %v7948 = vpack.c.b16 %v7768, %v7766
  %v7949 = vpack.c.b16 %v7771, %v7769
  %v7950 = vpack.c.b16 %v7772, %v7770
  %v7951 = vpack.c.b16 %v7775, %v7773
  %v7952 = vpack.c.b16 %v7776, %v7774
  %v7953 = vpack.c.b16 %v7779, %v7777
  %v7954 = vpack.c.b16 %v7780, %v7778
  %v7955 = vpack.c.b16 %v7783, %v7781
  %v7956 = vpack.c.b16 %v7784, %v7782
  %v7957 = vpack.c.b16 %v7787, %v7785
  %v7958 = vpack.c.b16 %v7788, %v7786
  %v7959 = vpack.c.b16 %v7791, %v7789
  %v7960 = vpack.c.b16 %v7792, %v7790
  %v7961 = vpack.c.b16 %v7795, %v7793
  %v7962 = vpack.c.b16 %v7796, %v7794
  %v7963 = vpack.c.b16 %v7799, %v7797
  %v7964 = vpack.c.b16 %v7800, %v7798
  %v7965 = vpack.c.b16 %v7803, %v7801
  %v7966 = vpack.c.b16 %v7804, %v7802
  %v7967 = vpack.c.b16 %v7807, %v7805
  %v7968 = vpack.c.b16 %v7808, %v7806
  %v7969 = vpack.c.b16 %v7811, %v7809
  %v7970 = vpack.c.b16 %v7812, %v7810
  %v7971 = vpack.c.b16 %v7815, %v7813
  %v7972 = vpack.c.b16 %v7816, %v7814
  %v7973 = vpack.c.b16 %v7819, %v7817
  %v7974 = vpack.c.b16 %v7820, %v7818
  %v7975 = vpack.c.b16 %v7823, %v7821
  %v7976 = vpack.c.b16 %v7824, %v7822
  %v7977 = vpack.c.b16 %v7827, %v7825
  %v7978 = vpack.c.b16 %v7828, %v7826
  %v7979 = vpack.c.b16 %v7831, %v7829
  %v7980 = vpack.c.b16 %v7832, %v7830
  %v7981 = vpack.c.b16 %v7835, %v7833
  %v7982 = vpack.c.b16 %v7836, %v7834
  %v7983 = vpack.c.b16 %v7839, %v7837
  %v7984 = vpack.c.b16 %v7840, %v7838
  %v7985 = vpack.c.b16 %v7843, %v7841
  %v7986 = vpack.c.b16 %v7844, %v7842
  %v7987 = vpack.c.b16 %v7847, %v7845
  %v7988 = vpack.c.b16 %v7848, %v7846
  %v7989 = vpack.c.b16 %v7851, %v7849
  %v7990 = vpack.c.b16 %v7852, %v7850
  %v7991 = vpack.c.b16 %v7855, %v7853
  %v7992 = vpack.c.b16 %v7856, %v7854
  %v7993 = vpack.c.b16 %v7859, %v7857
  %v7994 = vpack.c.b16 %v7860, %v7858
  %v7995 = vpack.c.b16 %v7863, %v7861
  %v7996 = vpack.c.b16 %v7864, %v7862
  %v7997 = vpack.c.b16 %v7867, %v7865
  %v7998 = vpack.c.b16 %v7868, %v7866
  %v7999 = vpack.c.b16 %v7871, %v7869
  %v8000 = vpack.c.b16 %v7872, %v7870
  %v8001 = vpack.c.b16 %v7875, %v7873
  %v8002 = vpack.c.b16 %v7876, %v7874
  %v8003 = vpack.c.b16 %v7879, %v7877
  %v8004 = vpack.c.b16 %v7880, %v7878
  %v8005 = vpack.c.b16 %v7883, %v7881
  %v8006 = vpack.c.b16 %v7884, %v7882
  %v8007 = vpack.c.b16 %v7887, %v7885
  %v8008 = vpack.c.b16 %v7888, %v7886
  %v8009 = vpack.c.b16 %v7891, %v7889
  %v8010 = vpack.c.b16 %v7892, %v7890
  %v8011 = vpack.c.b16 %v7895, %v7893
  %v8012 = vpack.c.b16 %v7896, %v7894
  %v8013 = vpack.c.b16 %v7899, %v7897
  %v8014 = vpack.c.b16 %v7900, %v7898
  %v8015 = vpack.c.b16 %v7903, %v7901
  %v8016 = vpack.c.b16 %v7904, %v7902
  %v8017 = vpack.c.b16 %v7907, %v7905
  %v8018 = vpack.c.b16 %v7908, %v7906
  %v8019 = vpack.c.b16 %v7911, %v7909
  %v8020 = vpack.c.b16 %v7912, %v7910
  %v8021 = vpack.c.b16 %v7915, %v7913
  %v8022 = vpack.c.b16 %v7916, %v7914
  %v8023 = vpack.c.b16 %v7919, %v7917
  %v8024 = vpack.c.b16 %v7920, %v7918
  %v8025 = vpack.c.b16 %v7923, %v7921
  %v8026 = vpack.c.b16 %v7924, %v7922
  %v8027 = vpack.c.b16 %v7927, %v7925
  %v8028 = vpack.c.b16 %v7928, %v7926
  %v8029 = vpack.c.b16 %v7931, %v7929
  %v8030 = vpack.c.b16 %v7932, %v7930
  %v8031 = vpack.c.b16 %v7935, %v7933
  %v8032 = vpack.c.b16 %v7936, %v7934
  %8129 = vmatprep.subr.bf16.mxu0 %v7536
  %8130 = vmatpush1.bf16.msra.mxu0 %v7535
  %8131 = vmatprep.subr.bf16.mxu0 %v7534
  %8132 = vmatpush1.bf16.msra.mxu0 %v7533
  %8133 = vmatprep.subr.bf16.mxu0 %v7532
  %8134 = vmatpush1.bf16.msra.mxu0 %v7531
  %8135 = vmatprep.subr.bf16.mxu0 %v7530
  %8136 = vmatpush1.bf16.msra.mxu0 %v7529
  %8137 = vmatprep.subr.bf16.mxu0 %v7528
  %8138 = vmatpush1.bf16.msra.mxu0 %v7527
  %8139 = vmatprep.subr.bf16.mxu0 %v7526
  %8140 = vmatpush1.bf16.msra.mxu0 %v7525
  %8141 = vmatprep.subr.bf16.mxu0 %v7524
  %8142 = vmatpush1.bf16.msra.mxu0 %v7523
  %8143 = vmatprep.subr.bf16.mxu0 %v7522
  %8144 = vmatpush1.bf16.msra.mxu0 %v7521
  %8145 = vmatprep.subr.bf16.mxu0 %v7552
  %8146 = vmatpush2.bf16.msra.mxu0 %v7551
  %8147 = vmatprep.subr.bf16.mxu0 %v7550
  %8148 = vmatpush2.bf16.msra.mxu0 %v7549
  %8149 = vmatprep.subr.bf16.mxu0 %v7548
  %8150 = vmatpush2.bf16.msra.mxu0 %v7547
  %8151 = vmatprep.subr.bf16.mxu0 %v7546
  %8152 = vmatpush2.bf16.msra.mxu0 %v7545
  %8153 = vmatprep.subr.bf16.mxu0 %v7544
  %8154 = vmatpush2.bf16.msra.mxu0 %v7543
  %8155 = vmatprep.subr.bf16.mxu0 %v7542
  %8156 = vmatpush2.bf16.msra.mxu0 %v7541
  %8157 = vmatprep.subr.bf16.mxu0 %v7540
  %8158 = vmatpush2.bf16.msra.mxu0 %v7539
  %8159 = vmatprep.subr.bf16.mxu0 %v7538
  %8160 = vmatpush2.bf16.msra.mxu0 %v7537
  %8161 = vmatprep.mubr.bf16.mxu0 %v7938
  %8162 = vmatmul.mubr.bf16.gmra.mxu0 %v7937
  %v8163 = vpop.f32.mrf.mxu0
  %v8164 = vadd.f32 0.0, %v8163
  %v8165 = vpop.f32.mrf.mxu0
  %v8166 = vadd.f32 0.0, %v8165
  %v8167 = vpop.f32.mrf.mxu0
  %v8168 = vadd.f32 0.0, %v8167
  %v8169 = vpop.f32.mrf.mxu0
  %v8170 = vadd.f32 0.0, %v8169
  %8171 = vmatprep.mubr.bf16.mxu0 %v7940
  %8172 = vmatmul.mubr.bf16.gmra.mxu0 %v7939
  %v8173 = vpop.f32.mrf.mxu0
  %v8174 = vadd.f32 0.0, %v8173
  %v8175 = vpop.f32.mrf.mxu0
  %v8176 = vadd.f32 0.0, %v8175
  %v8177 = vpop.f32.mrf.mxu0
  %v8178 = vadd.f32 0.0, %v8177
  %v8179 = vpop.f32.mrf.mxu0
  %v8180 = vadd.f32 0.0, %v8179
  %8181 = vmatprep.mubr.bf16.mxu0 %v7942
  %8182 = vmatmul.mubr.bf16.gmra.mxu0 %v7941
  %v8183 = vpop.f32.mrf.mxu0
  %v8184 = vadd.f32 0.0, %v8183
  %v8185 = vpop.f32.mrf.mxu0
  %v8186 = vadd.f32 0.0, %v8185
  %v8187 = vpop.f32.mrf.mxu0
  %v8188 = vadd.f32 0.0, %v8187
  %v8189 = vpop.f32.mrf.mxu0
  %v8190 = vadd.f32 0.0, %v8189
  %8191 = vmatprep.mubr.bf16.mxu0 %v7944
  %8192 = vmatmul.mubr.bf16.gmra.mxu0 %v7943
  %v8193 = vpop.f32.mrf.mxu0
  %v8194 = vadd.f32 0.0, %v8193
  %v8195 = vpop.f32.mrf.mxu0
  %v8196 = vadd.f32 0.0, %v8195
  %v8197 = vpop.f32.mrf.mxu0
  %v8198 = vadd.f32 0.0, %v8197
  %v8199 = vpop.f32.mrf.mxu0
  %v8200 = vadd.f32 0.0, %v8199
  %8201 = vmatprep.mubr.bf16.mxu0 %v7946
  %8202 = vmatmul.mubr.bf16.gmra.mxu0 %v7945
  %v8203 = vpop.f32.mrf.mxu0
  %v8204 = vadd.f32 0.0, %v8203
  %v8205 = vpop.f32.mrf.mxu0
  %v8206 = vadd.f32 0.0, %v8205
  %v8207 = vpop.f32.mrf.mxu0
  %v8208 = vadd.f32 0.0, %v8207
  %v8209 = vpop.f32.mrf.mxu0
  %v8210 = vadd.f32 0.0, %v8209
  %8211 = vmatprep.mubr.bf16.mxu0 %v7948
  %8212 = vmatmul.mubr.bf16.gmra.mxu0 %v7947
  %v8213 = vpop.f32.mrf.mxu0
  %v8214 = vadd.f32 0.0, %v8213
  %v8215 = vpop.f32.mrf.mxu0
  %v8216 = vadd.f32 0.0, %v8215
  %v8217 = vpop.f32.mrf.mxu0
  %v8218 = vadd.f32 0.0, %v8217
  %v8219 = vpop.f32.mrf.mxu0
  %v8220 = vadd.f32 0.0, %v8219
  %8221 = vmatprep.mubr.bf16.mxu0 %v7950
  %8222 = vmatmul.mubr.bf16.gmra.mxu0 %v7949
  %v8223 = vpop.f32.mrf.mxu0
  %v8224 = vadd.f32 0.0, %v8223
  %v8225 = vpop.f32.mrf.mxu0
  %v8226 = vadd.f32 0.0, %v8225
  %v8227 = vpop.f32.mrf.mxu0
  %v8228 = vadd.f32 0.0, %v8227
  %v8229 = vpop.f32.mrf.mxu0
  %v8230 = vadd.f32 0.0, %v8229
  %8231 = vmatprep.mubr.bf16.mxu0 %v7952
  %8232 = vmatmul.mubr.bf16.gmra.mxu0 %v7951
  %v8233 = vpop.f32.mrf.mxu0
  %v8234 = vadd.f32 0.0, %v8233
  %v8235 = vpop.f32.mrf.mxu0
  %v8236 = vadd.f32 0.0, %v8235
  %v8237 = vpop.f32.mrf.mxu0
  %v8238 = vadd.f32 0.0, %v8237
  %v8239 = vpop.f32.mrf.mxu0
  %v8240 = vadd.f32 0.0, %v8239
  %8241 = vmatprep.mubr.bf16.mxu0 %v7954
  %8242 = vmatmul.mubr.bf16.gmra.mxu0 %v7953
  %v8243 = vpop.f32.mrf.mxu0
  %v8244 = vadd.f32 0.0, %v8243
  %v8245 = vpop.f32.mrf.mxu0
  %v8246 = vadd.f32 0.0, %v8245
  %v8247 = vpop.f32.mrf.mxu0
  %v8248 = vadd.f32 0.0, %v8247
  %v8249 = vpop.f32.mrf.mxu0
  %v8250 = vadd.f32 0.0, %v8249
  %8251 = vmatprep.mubr.bf16.mxu0 %v7956
  %8252 = vmatmul.mubr.bf16.gmra.mxu0 %v7955
  %v8253 = vpop.f32.mrf.mxu0
  %v8254 = vadd.f32 0.0, %v8253
  %v8255 = vpop.f32.mrf.mxu0
  %v8256 = vadd.f32 0.0, %v8255
  %v8257 = vpop.f32.mrf.mxu0
  %v8258 = vadd.f32 0.0, %v8257
  %v8259 = vpop.f32.mrf.mxu0
  %v8260 = vadd.f32 0.0, %v8259
  %8261 = vmatprep.mubr.bf16.mxu0 %v7958
  %8262 = vmatmul.mubr.bf16.gmra.mxu0 %v7957
  %v8263 = vpop.f32.mrf.mxu0
  %v8264 = vadd.f32 0.0, %v8263
  %v8265 = vpop.f32.mrf.mxu0
  %v8266 = vadd.f32 0.0, %v8265
  %v8267 = vpop.f32.mrf.mxu0
  %v8268 = vadd.f32 0.0, %v8267
  %v8269 = vpop.f32.mrf.mxu0
  %v8270 = vadd.f32 0.0, %v8269
  %8271 = vmatprep.mubr.bf16.mxu0 %v7960
  %8272 = vmatmul.mubr.bf16.gmra.mxu0 %v7959
  %v8273 = vpop.f32.mrf.mxu0
  %v8274 = vadd.f32 0.0, %v8273
  %v8275 = vpop.f32.mrf.mxu0
  %v8276 = vadd.f32 0.0, %v8275
  %v8277 = vpop.f32.mrf.mxu0
  %v8278 = vadd.f32 0.0, %v8277
  %v8279 = vpop.f32.mrf.mxu0
  %v8280 = vadd.f32 0.0, %v8279
  %8281 = vmatprep.mubr.bf16.mxu0 %v7962
  %8282 = vmatmul.mubr.bf16.gmra.mxu0 %v7961
  %v8283 = vpop.f32.mrf.mxu0
  %v8284 = vadd.f32 0.0, %v8283
  %v8285 = vpop.f32.mrf.mxu0
  %v8286 = vadd.f32 0.0, %v8285
  %v8287 = vpop.f32.mrf.mxu0
  %v8288 = vadd.f32 0.0, %v8287
  %v8289 = vpop.f32.mrf.mxu0
  %v8290 = vadd.f32 0.0, %v8289
  %8291 = vmatprep.mubr.bf16.mxu0 %v7964
  %8292 = vmatmul.mubr.bf16.gmra.mxu0 %v7963
  %v8293 = vpop.f32.mrf.mxu0
  %v8294 = vadd.f32 0.0, %v8293
  %v8295 = vpop.f32.mrf.mxu0
  %v8296 = vadd.f32 0.0, %v8295
  %v8297 = vpop.f32.mrf.mxu0
  %v8298 = vadd.f32 0.0, %v8297
  %v8299 = vpop.f32.mrf.mxu0
  %v8300 = vadd.f32 0.0, %v8299
  %8301 = vmatprep.mubr.bf16.mxu0 %v7966
  %8302 = vmatmul.mubr.bf16.gmra.mxu0 %v7965
  %v8303 = vpop.f32.mrf.mxu0
  %v8304 = vadd.f32 0.0, %v8303
  %v8305 = vpop.f32.mrf.mxu0
  %v8306 = vadd.f32 0.0, %v8305
  %v8307 = vpop.f32.mrf.mxu0
  %v8308 = vadd.f32 0.0, %v8307
  %v8309 = vpop.f32.mrf.mxu0
  %v8310 = vadd.f32 0.0, %v8309
  %8311 = vmatprep.mubr.bf16.mxu0 %v7968
  %8312 = vmatmul.mubr.bf16.gmra.mxu0 %v7967
  %v8313 = vpop.f32.mrf.mxu0
  %v8314 = vadd.f32 0.0, %v8313
  %v8315 = vpop.f32.mrf.mxu0
  %v8316 = vadd.f32 0.0, %v8315
  %v8317 = vpop.f32.mrf.mxu0
  %v8318 = vadd.f32 0.0, %v8317
  %v8319 = vpop.f32.mrf.mxu0
  %v8320 = vadd.f32 0.0, %v8319
  %8321 = vmatprep.mubr.bf16.mxu0 %v7970
  %8322 = vmatmul.mubr.bf16.gmra.mxu0 %v7969
  %v8323 = vpop.f32.mrf.mxu0
  %v8324 = vadd.f32 0.0, %v8323
  %v8325 = vpop.f32.mrf.mxu0
  %v8326 = vadd.f32 0.0, %v8325
  %v8327 = vpop.f32.mrf.mxu0
  %v8328 = vadd.f32 0.0, %v8327
  %v8329 = vpop.f32.mrf.mxu0
  %v8330 = vadd.f32 0.0, %v8329
  %8331 = vmatprep.mubr.bf16.mxu0 %v7972
  %8332 = vmatmul.mubr.bf16.gmra.mxu0 %v7971
  %v8333 = vpop.f32.mrf.mxu0
  %v8334 = vadd.f32 0.0, %v8333
  %v8335 = vpop.f32.mrf.mxu0
  %v8336 = vadd.f32 0.0, %v8335
  %v8337 = vpop.f32.mrf.mxu0
  %v8338 = vadd.f32 0.0, %v8337
  %v8339 = vpop.f32.mrf.mxu0
  %v8340 = vadd.f32 0.0, %v8339
  %8341 = vmatprep.mubr.bf16.mxu0 %v7974
  %8342 = vmatmul.mubr.bf16.gmra.mxu0 %v7973
  %v8343 = vpop.f32.mrf.mxu0
  %v8344 = vadd.f32 0.0, %v8343
  %v8345 = vpop.f32.mrf.mxu0
  %v8346 = vadd.f32 0.0, %v8345
  %v8347 = vpop.f32.mrf.mxu0
  %v8348 = vadd.f32 0.0, %v8347
  %v8349 = vpop.f32.mrf.mxu0
  %v8350 = vadd.f32 0.0, %v8349
  %8351 = vmatprep.mubr.bf16.mxu0 %v7976
  %8352 = vmatmul.mubr.bf16.gmra.mxu0 %v7975
  %v8353 = vpop.f32.mrf.mxu0
  %v8354 = vadd.f32 0.0, %v8353
  %v8355 = vpop.f32.mrf.mxu0
  %v8356 = vadd.f32 0.0, %v8355
  %v8357 = vpop.f32.mrf.mxu0
  %v8358 = vadd.f32 0.0, %v8357
  %v8359 = vpop.f32.mrf.mxu0
  %v8360 = vadd.f32 0.0, %v8359
  %8361 = vmatprep.mubr.bf16.mxu0 %v7978
  %8362 = vmatmul.mubr.bf16.gmra.mxu0 %v7977
  %v8363 = vpop.f32.mrf.mxu0
  %v8364 = vadd.f32 0.0, %v8363
  %v8365 = vpop.f32.mrf.mxu0
  %v8366 = vadd.f32 0.0, %v8365
  %v8367 = vpop.f32.mrf.mxu0
  %v8368 = vadd.f32 0.0, %v8367
  %v8369 = vpop.f32.mrf.mxu0
  %v8370 = vadd.f32 0.0, %v8369
  %8371 = vmatprep.mubr.bf16.mxu0 %v7980
  %8372 = vmatmul.mubr.bf16.gmra.mxu0 %v7979
  %v8373 = vpop.f32.mrf.mxu0
  %v8374 = vadd.f32 0.0, %v8373
  %v8375 = vpop.f32.mrf.mxu0
  %v8376 = vadd.f32 0.0, %v8375
  %v8377 = vpop.f32.mrf.mxu0
  %v8378 = vadd.f32 0.0, %v8377
  %v8379 = vpop.f32.mrf.mxu0
  %v8380 = vadd.f32 0.0, %v8379
  %8381 = vmatprep.mubr.bf16.mxu0 %v7982
  %8382 = vmatmul.mubr.bf16.gmra.mxu0 %v7981
  %v8383 = vpop.f32.mrf.mxu0
  %v8384 = vadd.f32 0.0, %v8383
  %v8385 = vpop.f32.mrf.mxu0
  %v8386 = vadd.f32 0.0, %v8385
  %v8387 = vpop.f32.mrf.mxu0
  %v8388 = vadd.f32 0.0, %v8387
  %v8389 = vpop.f32.mrf.mxu0
  %v8390 = vadd.f32 0.0, %v8389
  %8391 = vmatprep.mubr.bf16.mxu0 %v7984
  %8392 = vmatmul.mubr.bf16.gmra.mxu0 %v7983
  %v8393 = vpop.f32.mrf.mxu0
  %v8394 = vadd.f32 0.0, %v8393
  %v8395 = vpop.f32.mrf.mxu0
  %v8396 = vadd.f32 0.0, %v8395
  %v8397 = vpop.f32.mrf.mxu0
  %v8398 = vadd.f32 0.0, %v8397
  %v8399 = vpop.f32.mrf.mxu0
  %v8400 = vadd.f32 0.0, %v8399
  %8401 = vmatprep.mubr.bf16.mxu0 %v7986
  %8402 = vmatmul.mubr.bf16.gmra.mxu0 %v7985
  %v8403 = vpop.f32.mrf.mxu0
  %v8404 = vadd.f32 0.0, %v8403
  %v8405 = vpop.f32.mrf.mxu0
  %v8406 = vadd.f32 0.0, %v8405
  %v8407 = vpop.f32.mrf.mxu0
  %v8408 = vadd.f32 0.0, %v8407
  %v8409 = vpop.f32.mrf.mxu0
  %v8410 = vadd.f32 0.0, %v8409
  %8411 = vmatprep.mubr.bf16.mxu0 %v7988
  %8412 = vmatmul.mubr.bf16.gmra.mxu0 %v7987
  %v8413 = vpop.f32.mrf.mxu0
  %v8414 = vadd.f32 0.0, %v8413
  %v8415 = vpop.f32.mrf.mxu0
  %v8416 = vadd.f32 0.0, %v8415
  %v8417 = vpop.f32.mrf.mxu0
  %v8418 = vadd.f32 0.0, %v8417
  %v8419 = vpop.f32.mrf.mxu0
  %v8420 = vadd.f32 0.0, %v8419
  %8421 = vmatprep.mubr.bf16.mxu0 %v7990
  %8422 = vmatmul.mubr.bf16.gmra.mxu0 %v7989
  %v8423 = vpop.f32.mrf.mxu0
  %v8424 = vadd.f32 0.0, %v8423
  %v8425 = vpop.f32.mrf.mxu0
  %v8426 = vadd.f32 0.0, %v8425
  %v8427 = vpop.f32.mrf.mxu0
  %v8428 = vadd.f32 0.0, %v8427
  %v8429 = vpop.f32.mrf.mxu0
  %v8430 = vadd.f32 0.0, %v8429
  %8431 = vmatprep.mubr.bf16.mxu0 %v7992
  %8432 = vmatmul.mubr.bf16.gmra.mxu0 %v7991
  %v8433 = vpop.f32.mrf.mxu0
  %v8434 = vadd.f32 0.0, %v8433
  %v8435 = vpop.f32.mrf.mxu0
  %v8436 = vadd.f32 0.0, %v8435
  %v8437 = vpop.f32.mrf.mxu0
  %v8438 = vadd.f32 0.0, %v8437
  %v8439 = vpop.f32.mrf.mxu0
  %v8440 = vadd.f32 0.0, %v8439
  %8441 = vmatprep.mubr.bf16.mxu0 %v7994
  %8442 = vmatmul.mubr.bf16.gmra.mxu0 %v7993
  %v8443 = vpop.f32.mrf.mxu0
  %v8444 = vadd.f32 0.0, %v8443
  %v8445 = vpop.f32.mrf.mxu0
  %v8446 = vadd.f32 0.0, %v8445
  %v8447 = vpop.f32.mrf.mxu0
  %v8448 = vadd.f32 0.0, %v8447
  %v8449 = vpop.f32.mrf.mxu0
  %v8450 = vadd.f32 0.0, %v8449
  %8451 = vmatprep.mubr.bf16.mxu0 %v7996
  %8452 = vmatmul.mubr.bf16.gmra.mxu0 %v7995
  %v8453 = vpop.f32.mrf.mxu0
  %v8454 = vadd.f32 0.0, %v8453
  %v8455 = vpop.f32.mrf.mxu0
  %v8456 = vadd.f32 0.0, %v8455
  %v8457 = vpop.f32.mrf.mxu0
  %v8458 = vadd.f32 0.0, %v8457
  %v8459 = vpop.f32.mrf.mxu0
  %v8460 = vadd.f32 0.0, %v8459
  %8461 = vmatprep.mubr.bf16.mxu0 %v7998
  %8462 = vmatmul.mubr.bf16.gmra.mxu0 %v7997
  %v8463 = vpop.f32.mrf.mxu0
  %v8464 = vadd.f32 0.0, %v8463
  %v8465 = vpop.f32.mrf.mxu0
  %v8466 = vadd.f32 0.0, %v8465
  %v8467 = vpop.f32.mrf.mxu0
  %v8468 = vadd.f32 0.0, %v8467
  %v8469 = vpop.f32.mrf.mxu0
  %v8470 = vadd.f32 0.0, %v8469
  %8471 = vmatprep.mubr.bf16.mxu0 %v8000
  %8472 = vmatmul.mubr.bf16.gmra.mxu0 %v7999
  %v8473 = vpop.f32.mrf.mxu0
  %v8474 = vadd.f32 0.0, %v8473
  %v8475 = vpop.f32.mrf.mxu0
  %v8476 = vadd.f32 0.0, %v8475
  %v8477 = vpop.f32.mrf.mxu0
  %v8478 = vadd.f32 0.0, %v8477
  %v8479 = vpop.f32.mrf.mxu0
  %v8480 = vadd.f32 0.0, %v8479
  %8481 = vmatprep.mubr.bf16.mxu0 %v8002
  %8482 = vmatmul.mubr.bf16.gmra.mxu0 %v8001
  %v8483 = vpop.f32.mrf.mxu0
  %v8484 = vadd.f32 0.0, %v8483
  %v8485 = vpop.f32.mrf.mxu0
  %v8486 = vadd.f32 0.0, %v8485
  %v8487 = vpop.f32.mrf.mxu0
  %v8488 = vadd.f32 0.0, %v8487
  %v8489 = vpop.f32.mrf.mxu0
  %v8490 = vadd.f32 0.0, %v8489
  %8491 = vmatprep.mubr.bf16.mxu0 %v8004
  %8492 = vmatmul.mubr.bf16.gmra.mxu0 %v8003
  %v8493 = vpop.f32.mrf.mxu0
  %v8494 = vadd.f32 0.0, %v8493
  %v8495 = vpop.f32.mrf.mxu0
  %v8496 = vadd.f32 0.0, %v8495
  %v8497 = vpop.f32.mrf.mxu0
  %v8498 = vadd.f32 0.0, %v8497
  %v8499 = vpop.f32.mrf.mxu0
  %v8500 = vadd.f32 0.0, %v8499
  %8501 = vmatprep.mubr.bf16.mxu0 %v8006
  %8502 = vmatmul.mubr.bf16.gmra.mxu0 %v8005
  %v8503 = vpop.f32.mrf.mxu0
  %v8504 = vadd.f32 0.0, %v8503
  %v8505 = vpop.f32.mrf.mxu0
  %v8506 = vadd.f32 0.0, %v8505
  %v8507 = vpop.f32.mrf.mxu0
  %v8508 = vadd.f32 0.0, %v8507
  %v8509 = vpop.f32.mrf.mxu0
  %v8510 = vadd.f32 0.0, %v8509
  %8511 = vmatprep.mubr.bf16.mxu0 %v8008
  %8512 = vmatmul.mubr.bf16.gmra.mxu0 %v8007
  %v8513 = vpop.f32.mrf.mxu0
  %v8514 = vadd.f32 0.0, %v8513
  %v8515 = vpop.f32.mrf.mxu0
  %v8516 = vadd.f32 0.0, %v8515
  %v8517 = vpop.f32.mrf.mxu0
  %v8518 = vadd.f32 0.0, %v8517
  %v8519 = vpop.f32.mrf.mxu0
  %v8520 = vadd.f32 0.0, %v8519
  %8521 = vmatprep.mubr.bf16.mxu0 %v8010
  %8522 = vmatmul.mubr.bf16.gmra.mxu0 %v8009
  %v8523 = vpop.f32.mrf.mxu0
  %v8524 = vadd.f32 0.0, %v8523
  %v8525 = vpop.f32.mrf.mxu0
  %v8526 = vadd.f32 0.0, %v8525
  %v8527 = vpop.f32.mrf.mxu0
  %v8528 = vadd.f32 0.0, %v8527
  %v8529 = vpop.f32.mrf.mxu0
  %v8530 = vadd.f32 0.0, %v8529
  %8531 = vmatprep.mubr.bf16.mxu0 %v8012
  %8532 = vmatmul.mubr.bf16.gmra.mxu0 %v8011
  %v8533 = vpop.f32.mrf.mxu0
  %v8534 = vadd.f32 0.0, %v8533
  %v8535 = vpop.f32.mrf.mxu0
  %v8536 = vadd.f32 0.0, %v8535
  %v8537 = vpop.f32.mrf.mxu0
  %v8538 = vadd.f32 0.0, %v8537
  %v8539 = vpop.f32.mrf.mxu0
  %v8540 = vadd.f32 0.0, %v8539
  %8541 = vmatprep.mubr.bf16.mxu0 %v8014
  %8542 = vmatmul.mubr.bf16.gmra.mxu0 %v8013
  %v8543 = vpop.f32.mrf.mxu0
  %v8544 = vadd.f32 0.0, %v8543
  %v8545 = vpop.f32.mrf.mxu0
  %v8546 = vadd.f32 0.0, %v8545
  %v8547 = vpop.f32.mrf.mxu0
  %v8548 = vadd.f32 0.0, %v8547
  %v8549 = vpop.f32.mrf.mxu0
  %v8550 = vadd.f32 0.0, %v8549
  %8551 = vmatprep.mubr.bf16.mxu0 %v8016
  %8552 = vmatmul.mubr.bf16.gmra.mxu0 %v8015
  %v8553 = vpop.f32.mrf.mxu0
  %v8554 = vadd.f32 0.0, %v8553
  %v8555 = vpop.f32.mrf.mxu0
  %v8556 = vadd.f32 0.0, %v8555
  %v8557 = vpop.f32.mrf.mxu0
  %v8558 = vadd.f32 0.0, %v8557
  %v8559 = vpop.f32.mrf.mxu0
  %v8560 = vadd.f32 0.0, %v8559
  %8561 = vmatprep.mubr.bf16.mxu0 %v8018
  %8562 = vmatmul.mubr.bf16.gmra.mxu0 %v8017
  %v8563 = vpop.f32.mrf.mxu0
  %v8564 = vadd.f32 0.0, %v8563
  %v8565 = vpop.f32.mrf.mxu0
  %v8566 = vadd.f32 0.0, %v8565
  %v8567 = vpop.f32.mrf.mxu0
  %v8568 = vadd.f32 0.0, %v8567
  %v8569 = vpop.f32.mrf.mxu0
  %v8570 = vadd.f32 0.0, %v8569
  %8571 = vmatprep.mubr.bf16.mxu0 %v8020
  %8572 = vmatmul.mubr.bf16.gmra.mxu0 %v8019
  %v8573 = vpop.f32.mrf.mxu0
  %v8574 = vadd.f32 0.0, %v8573
  %v8575 = vpop.f32.mrf.mxu0
  %v8576 = vadd.f32 0.0, %v8575
  %v8577 = vpop.f32.mrf.mxu0
  %v8578 = vadd.f32 0.0, %v8577
  %v8579 = vpop.f32.mrf.mxu0
  %v8580 = vadd.f32 0.0, %v8579
  %8581 = vmatprep.mubr.bf16.mxu0 %v8022
  %8582 = vmatmul.mubr.bf16.gmra.mxu0 %v8021
  %v8583 = vpop.f32.mrf.mxu0
  %v8584 = vadd.f32 0.0, %v8583
  %v8585 = vpop.f32.mrf.mxu0
  %v8586 = vadd.f32 0.0, %v8585
  %v8587 = vpop.f32.mrf.mxu0
  %v8588 = vadd.f32 0.0, %v8587
  %v8589 = vpop.f32.mrf.mxu0
  %v8590 = vadd.f32 0.0, %v8589
  %8591 = vmatprep.mubr.bf16.mxu0 %v8024
  %8592 = vmatmul.mubr.bf16.gmra.mxu0 %v8023
  %v8593 = vpop.f32.mrf.mxu0
  %v8594 = vadd.f32 0.0, %v8593
  %v8595 = vpop.f32.mrf.mxu0
  %v8596 = vadd.f32 0.0, %v8595
  %v8597 = vpop.f32.mrf.mxu0
  %v8598 = vadd.f32 0.0, %v8597
  %v8599 = vpop.f32.mrf.mxu0
  %v8600 = vadd.f32 0.0, %v8599
  %8601 = vmatprep.mubr.bf16.mxu0 %v8026
  %8602 = vmatmul.mubr.bf16.gmra.mxu0 %v8025
  %v8603 = vpop.f32.mrf.mxu0
  %v8604 = vadd.f32 0.0, %v8603
  %v8605 = vpop.f32.mrf.mxu0
  %v8606 = vadd.f32 0.0, %v8605
  %v8607 = vpop.f32.mrf.mxu0
  %v8608 = vadd.f32 0.0, %v8607
  %v8609 = vpop.f32.mrf.mxu0
  %v8610 = vadd.f32 0.0, %v8609
  %8611 = vmatprep.mubr.bf16.mxu0 %v8028
  %8612 = vmatmul.mubr.bf16.gmra.mxu0 %v8027
  %v8613 = vpop.f32.mrf.mxu0
  %v8614 = vadd.f32 0.0, %v8613
  %v8615 = vpop.f32.mrf.mxu0
  %v8616 = vadd.f32 0.0, %v8615
  %v8617 = vpop.f32.mrf.mxu0
  %v8618 = vadd.f32 0.0, %v8617
  %v8619 = vpop.f32.mrf.mxu0
  %v8620 = vadd.f32 0.0, %v8619
  %8621 = vmatprep.mubr.bf16.mxu0 %v8030
  %8622 = vmatmul.mubr.bf16.gmra.mxu0 %v8029
  %v8623 = vpop.f32.mrf.mxu0
  %v8624 = vadd.f32 0.0, %v8623
  %v8625 = vpop.f32.mrf.mxu0
  %v8626 = vadd.f32 0.0, %v8625
  %v8627 = vpop.f32.mrf.mxu0
  %v8628 = vadd.f32 0.0, %v8627
  %v8629 = vpop.f32.mrf.mxu0
  %v8630 = vadd.f32 0.0, %v8629
  %8631 = vmatprep.mubr.bf16.mxu0 %v8032
  %8632 = vmatmul.mubr.bf16.gmra.mxu0 %v8031
  %v8633 = vpop.f32.mrf.mxu0
  %v8634 = vadd.f32 0.0, %v8633
  %v8635 = vpop.f32.mrf.mxu0
  %v8636 = vadd.f32 0.0, %v8635
  %v8637 = vpop.f32.mrf.mxu0
  %v8638 = vadd.f32 0.0, %v8637
  %v8639 = vpop.f32.mrf.mxu0
  %v8640 = vadd.f32 0.0, %v8639
  %8641 = vdwg.mxu0
  %v8642 = vld [vmem:[%s7] sm:$0xff]
  %v8643 = vld [vmem:[%s7 + $0x8] sm:$0xff]
  %v8644 = vld [vmem:[%s7 + $0x10] sm:$0xff]
  %v8645 = vld [vmem:[%s7 + $0x18] sm:$0xff]
  %v8646 = vld [vmem:[%s7 + $0x20] sm:$0xff]
  %v8647 = vld [vmem:[%s7 + $0x28] sm:$0xff]
  %v8648 = vld [vmem:[%s7 + $0x30] sm:$0xff]
  %v8649 = vld [vmem:[%s7 + $0x38] sm:$0xff]
  %v8650 = vld [vmem:[%s7 + $0x40] sm:$0xff]
  %v8651 = vld [vmem:[%s7 + $0x48] sm:$0xff]
  %v8652 = vld [vmem:[%s7 + $0x50] sm:$0xff]
  %v8653 = vld [vmem:[%s7 + $0x58] sm:$0xff]
  %v8654 = vld [vmem:[%s7 + $0x60] sm:$0xff]
  %v8655 = vld [vmem:[%s7 + $0x68] sm:$0xff]
  %v8656 = vld [vmem:[%s7 + $0x70] sm:$0xff]
  %v8657 = vld [vmem:[%s7 + $0x78] sm:$0xff]
  %v8658 = vld [vmem:[%s7 + $0x80] sm:$0xff]
  %v8659 = vld [vmem:[%s7 + $0x88] sm:$0xff]
  %v8660 = vld [vmem:[%s7 + $0x90] sm:$0xff]
  %v8661 = vld [vmem:[%s7 + $0x98] sm:$0xff]
  %v8662 = vld [vmem:[%s7 + $0xa0] sm:$0xff]
  %v8663 = vld [vmem:[%s7 + $0xa8] sm:$0xff]
  %v8664 = vld [vmem:[%s7 + $0xb0] sm:$0xff]
  %v8665 = vld [vmem:[%s7 + $0xb8] sm:$0xff]
  %v8666 = vld [vmem:[%s7 + $0xc0] sm:$0xff]
  %v8667 = vld [vmem:[%s7 + $0xc8] sm:$0xff]
  %v8668 = vld [vmem:[%s7 + $0xd0] sm:$0xff]
  %v8669 = vld [vmem:[%s7 + $0xd8] sm:$0xff]
  %v8670 = vld [vmem:[%s7 + $0xe0] sm:$0xff]
  %v8671 = vld [vmem:[%s7 + $0xe8] sm:$0xff]
  %v8672 = vld [vmem:[%s7 + $0xf0] sm:$0xff]
  %v8673 = vld [vmem:[%s7 + $0xf8] sm:$0xff]
  %v8674 = vld [vmem:[%s7 + $0x100] sm:$0xff]
  %v8675 = vld [vmem:[%s7 + $0x108] sm:$0xff]
  %v8676 = vld [vmem:[%s7 + $0x110] sm:$0xff]
  %v8677 = vld [vmem:[%s7 + $0x118] sm:$0xff]
  %v8678 = vld [vmem:[%s7 + $0x120] sm:$0xff]
  %v8679 = vld [vmem:[%s7 + $0x128] sm:$0xff]
  %v8680 = vld [vmem:[%s7 + $0x130] sm:$0xff]
  %v8681 = vld [vmem:[%s7 + $0x138] sm:$0xff]
  %v8682 = vld [vmem:[%s7 + $0x140] sm:$0xff]
  %v8683 = vld [vmem:[%s7 + $0x148] sm:$0xff]
  %v8684 = vld [vmem:[%s7 + $0x150] sm:$0xff]
  %v8685 = vld [vmem:[%s7 + $0x158] sm:$0xff]
  %v8686 = vld [vmem:[%s7 + $0x160] sm:$0xff]
  %v8687 = vld [vmem:[%s7 + $0x168] sm:$0xff]
  %v8688 = vld [vmem:[%s7 + $0x170] sm:$0xff]
  %v8689 = vld [vmem:[%s7 + $0x178] sm:$0xff]
  %v8690 = vld [vmem:[%s7 + $0x180] sm:$0xff]
  %v8691 = vld [vmem:[%s7 + $0x188] sm:$0xff]
  %v8692 = vld [vmem:[%s7 + $0x190] sm:$0xff]
  %v8693 = vld [vmem:[%s7 + $0x198] sm:$0xff]
  %v8694 = vld [vmem:[%s7 + $0x1a0] sm:$0xff]
  %v8695 = vld [vmem:[%s7 + $0x1a8] sm:$0xff]
  %v8696 = vld [vmem:[%s7 + $0x1b0] sm:$0xff]
  %v8697 = vld [vmem:[%s7 + $0x1b8] sm:$0xff]
  %v8698 = vld [vmem:[%s7 + $0x1c0] sm:$0xff]
  %v8699 = vld [vmem:[%s7 + $0x1c8] sm:$0xff]
  %v8700 = vld [vmem:[%s7 + $0x1d0] sm:$0xff]
  %v8701 = vld [vmem:[%s7 + $0x1d8] sm:$0xff]
  %v8702 = vld [vmem:[%s7 + $0x1e0] sm:$0xff]
  %v8703 = vld [vmem:[%s7 + $0x1e8] sm:$0xff]
  %v8704 = vld [vmem:[%s7 + $0x1f0] sm:$0xff]
  %v8705 = vld [vmem:[%s7 + $0x1f8] sm:$0xff]
  %v8706 = vld [vmem:[%s7 + $0x200] sm:$0xff]
  %v8707 = vld [vmem:[%s7 + $0x208] sm:$0xff]
  %v8708 = vld [vmem:[%s7 + $0x210] sm:$0xff]
  %v8709 = vld [vmem:[%s7 + $0x218] sm:$0xff]
  %v8710 = vld [vmem:[%s7 + $0x220] sm:$0xff]
  %v8711 = vld [vmem:[%s7 + $0x228] sm:$0xff]
  %v8712 = vld [vmem:[%s7 + $0x230] sm:$0xff]
  %v8713 = vld [vmem:[%s7 + $0x238] sm:$0xff]
  %v8714 = vld [vmem:[%s7 + $0x240] sm:$0xff]
  %v8715 = vld [vmem:[%s7 + $0x248] sm:$0xff]
  %v8716 = vld [vmem:[%s7 + $0x250] sm:$0xff]
  %v8717 = vld [vmem:[%s7 + $0x258] sm:$0xff]
  %v8718 = vld [vmem:[%s7 + $0x260] sm:$0xff]
  %v8719 = vld [vmem:[%s7 + $0x268] sm:$0xff]
  %v8720 = vld [vmem:[%s7 + $0x270] sm:$0xff]
  %v8721 = vld [vmem:[%s7 + $0x278] sm:$0xff]
  %v8722 = vld [vmem:[%s7 + $0x280] sm:$0xff]
  %v8723 = vld [vmem:[%s7 + $0x288] sm:$0xff]
  %v8724 = vld [vmem:[%s7 + $0x290] sm:$0xff]
  %v8725 = vld [vmem:[%s7 + $0x298] sm:$0xff]
  %v8726 = vld [vmem:[%s7 + $0x2a0] sm:$0xff]
  %v8727 = vld [vmem:[%s7 + $0x2a8] sm:$0xff]
  %v8728 = vld [vmem:[%s7 + $0x2b0] sm:$0xff]
  %v8729 = vld [vmem:[%s7 + $0x2b8] sm:$0xff]
  %v8730 = vld [vmem:[%s7 + $0x2c0] sm:$0xff]
  %v8731 = vld [vmem:[%s7 + $0x2c8] sm:$0xff]
  %v8732 = vld [vmem:[%s7 + $0x2d0] sm:$0xff]
  %v8733 = vld [vmem:[%s7 + $0x2d8] sm:$0xff]
  %v8734 = vld [vmem:[%s7 + $0x2e0] sm:$0xff]
  %v8735 = vld [vmem:[%s7 + $0x2e8] sm:$0xff]
  %v8736 = vld [vmem:[%s7 + $0x2f0] sm:$0xff]
  %v8737 = vld [vmem:[%s7 + $0x2f8] sm:$0xff]
  %v8738 = vpack.c.bf16 %v8168, %v8164
  %v8739 = vpack.c.bf16 %v8170, %v8166
  %v8740 = vpack.c.bf16 %v8328, %v8324
  %v8741 = vpack.c.bf16 %v8330, %v8326
  %v8742 = vpack.c.bf16 %v8488, %v8484
  %v8743 = vpack.c.bf16 %v8490, %v8486
  %v8744 = vpack.c.bf16 %v8178, %v8174
  %v8745 = vpack.c.bf16 %v8180, %v8176
  %v8746 = vpack.c.bf16 %v8338, %v8334
  %v8747 = vpack.c.bf16 %v8340, %v8336
  %v8748 = vpack.c.bf16 %v8498, %v8494
  %v8749 = vpack.c.bf16 %v8500, %v8496
  %v8750 = vpack.c.bf16 %v8188, %v8184
  %v8751 = vpack.c.bf16 %v8190, %v8186
  %v8752 = vpack.c.bf16 %v8348, %v8344
  %v8753 = vpack.c.bf16 %v8350, %v8346
  %v8754 = vpack.c.bf16 %v8508, %v8504
  %v8755 = vpack.c.bf16 %v8510, %v8506
  %v8756 = vpack.c.bf16 %v8198, %v8194
  %v8757 = vpack.c.bf16 %v8200, %v8196
  %v8758 = vpack.c.bf16 %v8358, %v8354
  %v8759 = vpack.c.bf16 %v8360, %v8356
  %v8760 = vpack.c.bf16 %v8518, %v8514
  %v8761 = vpack.c.bf16 %v8520, %v8516
  %v8762 = vpack.c.bf16 %v8208, %v8204
  %v8763 = vpack.c.bf16 %v8210, %v8206
  %v8764 = vpack.c.bf16 %v8368, %v8364
  %v8765 = vpack.c.bf16 %v8370, %v8366
  %v8766 = vpack.c.bf16 %v8528, %v8524
  %v8767 = vpack.c.bf16 %v8530, %v8526
  %v8768 = vpack.c.bf16 %v8218, %v8214
  %v8769 = vpack.c.bf16 %v8220, %v8216
  %v8770 = vpack.c.bf16 %v8378, %v8374
  %v8771 = vpack.c.bf16 %v8380, %v8376
  %v8772 = vpack.c.bf16 %v8538, %v8534
  %v8773 = vpack.c.bf16 %v8540, %v8536
  %v8774 = vpack.c.bf16 %v8228, %v8224
  %v8775 = vpack.c.bf16 %v8230, %v8226
  %v8776 = vpack.c.bf16 %v8388, %v8384
  %v8777 = vpack.c.bf16 %v8390, %v8386
  %v8778 = vpack.c.bf16 %v8548, %v8544
  %v8779 = vpack.c.bf16 %v8550, %v8546
  %v8780 = vpack.c.bf16 %v8238, %v8234
  %v8781 = vpack.c.bf16 %v8240, %v8236
  %v8782 = vpack.c.bf16 %v8398, %v8394
  %v8783 = vpack.c.bf16 %v8400, %v8396
  %v8784 = vpack.c.bf16 %v8558, %v8554
  %v8785 = vpack.c.bf16 %v8560, %v8556
  %v8786 = vpack.c.bf16 %v8248, %v8244
  %v8787 = vpack.c.bf16 %v8250, %v8246
  %v8788 = vpack.c.bf16 %v8408, %v8404
  %v8789 = vpack.c.bf16 %v8410, %v8406
  %v8790 = vpack.c.bf16 %v8568, %v8564
  %v8791 = vpack.c.bf16 %v8570, %v8566
  %v8792 = vpack.c.bf16 %v8258, %v8254
  %v8793 = vpack.c.bf16 %v8260, %v8256
  %v8794 = vpack.c.bf16 %v8418, %v8414
  %v8795 = vpack.c.bf16 %v8420, %v8416
  %v8796 = vpack.c.bf16 %v8578, %v8574
  %v8797 = vpack.c.bf16 %v8580, %v8576
  %v8798 = vpack.c.bf16 %v8268, %v8264
  %v8799 = vpack.c.bf16 %v8270, %v8266
  %v8800 = vpack.c.bf16 %v8428, %v8424
  %v8801 = vpack.c.bf16 %v8430, %v8426
  %v8802 = vpack.c.bf16 %v8588, %v8584
  %v8803 = vpack.c.bf16 %v8590, %v8586
  %v8804 = vpack.c.bf16 %v8278, %v8274
  %v8805 = vpack.c.bf16 %v8280, %v8276
  %v8806 = vpack.c.bf16 %v8438, %v8434
  %v8807 = vpack.c.bf16 %v8440, %v8436
  %v8808 = vpack.c.bf16 %v8598, %v8594
  %v8809 = vpack.c.bf16 %v8600, %v8596
  %v8810 = vpack.c.bf16 %v8288, %v8284
  %v8811 = vpack.c.bf16 %v8290, %v8286
  %v8812 = vpack.c.bf16 %v8448, %v8444
  %v8813 = vpack.c.bf16 %v8450, %v8446
  %v8814 = vpack.c.bf16 %v8608, %v8604
  %v8815 = vpack.c.bf16 %v8610, %v8606
  %v8816 = vpack.c.bf16 %v8298, %v8294
  %v8817 = vpack.c.bf16 %v8300, %v8296
  %v8818 = vpack.c.bf16 %v8458, %v8454
  %v8819 = vpack.c.bf16 %v8460, %v8456
  %v8820 = vpack.c.bf16 %v8618, %v8614
  %v8821 = vpack.c.bf16 %v8620, %v8616
  %v8822 = vpack.c.bf16 %v8308, %v8304
  %v8823 = vpack.c.bf16 %v8310, %v8306
  %v8824 = vpack.c.bf16 %v8468, %v8464
  %v8825 = vpack.c.bf16 %v8470, %v8466
  %v8826 = vpack.c.bf16 %v8628, %v8624
  %v8827 = vpack.c.bf16 %v8630, %v8626
  %v8828 = vpack.c.bf16 %v8318, %v8314
  %v8829 = vpack.c.bf16 %v8320, %v8316
  %v8830 = vpack.c.bf16 %v8478, %v8474
  %v8831 = vpack.c.bf16 %v8480, %v8476
  %v8832 = vpack.c.bf16 %v8638, %v8634
  %v8833 = vpack.c.bf16 %v8640, %v8636
  %v8930 = vunpack.c.l.b16 %v8642
  %v8931 = vunpack.c.h.b16 %v8642
  %v8932 = vunpack.c.l.b16 %v8643
  %v8933 = vunpack.c.h.b16 %v8643
  %v8934 = vunpack.c.l.b16 %v8644
  %v8935 = vunpack.c.h.b16 %v8644
  %v8936 = vunpack.c.l.b16 %v8645
  %v8937 = vunpack.c.h.b16 %v8645
  %v8938 = vunpack.c.l.b16 %v8646
  %v8939 = vunpack.c.h.b16 %v8646
  %v8940 = vunpack.c.l.b16 %v8647
  %v8941 = vunpack.c.h.b16 %v8647
  %v8942 = vunpack.c.l.b16 %v8648
  %v8943 = vunpack.c.h.b16 %v8648
  %v8944 = vunpack.c.l.b16 %v8649
  %v8945 = vunpack.c.h.b16 %v8649
  %v8946 = vunpack.c.l.b16 %v8650
  %v8947 = vunpack.c.h.b16 %v8650
  %v8948 = vunpack.c.l.b16 %v8651
  %v8949 = vunpack.c.h.b16 %v8651
  %v8950 = vunpack.c.l.b16 %v8652
  %v8951 = vunpack.c.h.b16 %v8652
  %v8952 = vunpack.c.l.b16 %v8653
  %v8953 = vunpack.c.h.b16 %v8653
  %v8954 = vunpack.c.l.b16 %v8654
  %v8955 = vunpack.c.h.b16 %v8654
  %v8956 = vunpack.c.l.b16 %v8655
  %v8957 = vunpack.c.h.b16 %v8655
  %v8958 = vunpack.c.l.b16 %v8656
  %v8959 = vunpack.c.h.b16 %v8656
  %v8960 = vunpack.c.l.b16 %v8657
  %v8961 = vunpack.c.h.b16 %v8657
  %v8962 = vunpack.c.l.b16 %v8658
  %v8963 = vunpack.c.h.b16 %v8658
  %v8964 = vunpack.c.l.b16 %v8659
  %v8965 = vunpack.c.h.b16 %v8659
  %v8966 = vunpack.c.l.b16 %v8660
  %v8967 = vunpack.c.h.b16 %v8660
  %v8968 = vunpack.c.l.b16 %v8661
  %v8969 = vunpack.c.h.b16 %v8661
  %v8970 = vunpack.c.l.b16 %v8662
  %v8971 = vunpack.c.h.b16 %v8662
  %v8972 = vunpack.c.l.b16 %v8663
  %v8973 = vunpack.c.h.b16 %v8663
  %v8974 = vunpack.c.l.b16 %v8664
  %v8975 = vunpack.c.h.b16 %v8664
  %v8976 = vunpack.c.l.b16 %v8665
  %v8977 = vunpack.c.h.b16 %v8665
  %v8978 = vunpack.c.l.b16 %v8666
  %v8979 = vunpack.c.h.b16 %v8666
  %v8980 = vunpack.c.l.b16 %v8667
  %v8981 = vunpack.c.h.b16 %v8667
  %v8982 = vunpack.c.l.b16 %v8668
  %v8983 = vunpack.c.h.b16 %v8668
  %v8984 = vunpack.c.l.b16 %v8669
  %v8985 = vunpack.c.h.b16 %v8669
  %v8986 = vunpack.c.l.b16 %v8670
  %v8987 = vunpack.c.h.b16 %v8670
  %v8988 = vunpack.c.l.b16 %v8671
  %v8989 = vunpack.c.h.b16 %v8671
  %v8990 = vunpack.c.l.b16 %v8672
  %v8991 = vunpack.c.h.b16 %v8672
  %v8992 = vunpack.c.l.b16 %v8673
  %v8993 = vunpack.c.h.b16 %v8673
  %v8994 = vunpack.c.l.b16 %v8674
  %v8995 = vunpack.c.h.b16 %v8674
  %v8996 = vunpack.c.l.b16 %v8675
  %v8997 = vunpack.c.h.b16 %v8675
  %v8998 = vunpack.c.l.b16 %v8676
  %v8999 = vunpack.c.h.b16 %v8676
  %v9000 = vunpack.c.l.b16 %v8677
  %v9001 = vunpack.c.h.b16 %v8677
  %v9002 = vunpack.c.l.b16 %v8678
  %v9003 = vunpack.c.h.b16 %v8678
  %v9004 = vunpack.c.l.b16 %v8679
  %v9005 = vunpack.c.h.b16 %v8679
  %v9006 = vunpack.c.l.b16 %v8680
  %v9007 = vunpack.c.h.b16 %v8680
  %v9008 = vunpack.c.l.b16 %v8681
  %v9009 = vunpack.c.h.b16 %v8681
  %v9010 = vunpack.c.l.b16 %v8682
  %v9011 = vunpack.c.h.b16 %v8682
  %v9012 = vunpack.c.l.b16 %v8683
  %v9013 = vunpack.c.h.b16 %v8683
  %v9014 = vunpack.c.l.b16 %v8684
  %v9015 = vunpack.c.h.b16 %v8684
  %v9016 = vunpack.c.l.b16 %v8685
  %v9017 = vunpack.c.h.b16 %v8685
  %v9018 = vunpack.c.l.b16 %v8686
  %v9019 = vunpack.c.h.b16 %v8686
  %v9020 = vunpack.c.l.b16 %v8687
  %v9021 = vunpack.c.h.b16 %v8687
  %v9022 = vunpack.c.l.b16 %v8688
  %v9023 = vunpack.c.h.b16 %v8688
  %v9024 = vunpack.c.l.b16 %v8689
  %v9025 = vunpack.c.h.b16 %v8689
  %v9026 = vunpack.c.l.b16 %v8690
  %v9027 = vunpack.c.h.b16 %v8690
  %v9028 = vunpack.c.l.b16 %v8691
  %v9029 = vunpack.c.h.b16 %v8691
  %v9030 = vunpack.c.l.b16 %v8692
  %v9031 = vunpack.c.h.b16 %v8692
  %v9032 = vunpack.c.l.b16 %v8693
  %v9033 = vunpack.c.h.b16 %v8693
  %v9034 = vunpack.c.l.b16 %v8694
  %v9035 = vunpack.c.h.b16 %v8694
  %v9036 = vunpack.c.l.b16 %v8695
  %v9037 = vunpack.c.h.b16 %v8695
  %v9038 = vunpack.c.l.b16 %v8696
  %v9039 = vunpack.c.h.b16 %v8696
  %v9040 = vunpack.c.l.b16 %v8697
  %v9041 = vunpack.c.h.b16 %v8697
  %v9042 = vunpack.c.l.b16 %v8698
  %v9043 = vunpack.c.h.b16 %v8698
  %v9044 = vunpack.c.l.b16 %v8699
  %v9045 = vunpack.c.h.b16 %v8699
  %v9046 = vunpack.c.l.b16 %v8700
  %v9047 = vunpack.c.h.b16 %v8700
  %v9048 = vunpack.c.l.b16 %v8701
  %v9049 = vunpack.c.h.b16 %v8701
  %v9050 = vunpack.c.l.b16 %v8702
  %v9051 = vunpack.c.h.b16 %v8702
  %v9052 = vunpack.c.l.b16 %v8703
  %v9053 = vunpack.c.h.b16 %v8703
  %v9054 = vunpack.c.l.b16 %v8704
  %v9055 = vunpack.c.h.b16 %v8704
  %v9056 = vunpack.c.l.b16 %v8705
  %v9057 = vunpack.c.h.b16 %v8705
  %v9058 = vunpack.c.l.b16 %v8706
  %v9059 = vunpack.c.h.b16 %v8706
  %v9060 = vunpack.c.l.b16 %v8707
  %v9061 = vunpack.c.h.b16 %v8707
  %v9062 = vunpack.c.l.b16 %v8708
  %v9063 = vunpack.c.h.b16 %v8708
  %v9064 = vunpack.c.l.b16 %v8709
  %v9065 = vunpack.c.h.b16 %v8709
  %v9066 = vunpack.c.l.b16 %v8710
  %v9067 = vunpack.c.h.b16 %v8710
  %v9068 = vunpack.c.l.b16 %v8711
  %v9069 = vunpack.c.h.b16 %v8711
  %v9070 = vunpack.c.l.b16 %v8712
  %v9071 = vunpack.c.h.b16 %v8712
  %v9072 = vunpack.c.l.b16 %v8713
  %v9073 = vunpack.c.h.b16 %v8713
  %v9074 = vunpack.c.l.b16 %v8714
  %v9075 = vunpack.c.h.b16 %v8714
  %v9076 = vunpack.c.l.b16 %v8715
  %v9077 = vunpack.c.h.b16 %v8715
  %v9078 = vunpack.c.l.b16 %v8716
  %v9079 = vunpack.c.h.b16 %v8716
  %v9080 = vunpack.c.l.b16 %v8717
  %v9081 = vunpack.c.h.b16 %v8717
  %v9082 = vunpack.c.l.b16 %v8718
  %v9083 = vunpack.c.h.b16 %v8718
  %v9084 = vunpack.c.l.b16 %v8719
  %v9085 = vunpack.c.h.b16 %v8719
  %v9086 = vunpack.c.l.b16 %v8720
  %v9087 = vunpack.c.h.b16 %v8720
  %v9088 = vunpack.c.l.b16 %v8721
  %v9089 = vunpack.c.h.b16 %v8721
  %v9090 = vunpack.c.l.b16 %v8722
  %v9091 = vunpack.c.h.b16 %v8722
  %v9092 = vunpack.c.l.b16 %v8723
  %v9093 = vunpack.c.h.b16 %v8723
  %v9094 = vunpack.c.l.b16 %v8724
  %v9095 = vunpack.c.h.b16 %v8724
  %v9096 = vunpack.c.l.b16 %v8725
  %v9097 = vunpack.c.h.b16 %v8725
  %v9098 = vunpack.c.l.b16 %v8726
  %v9099 = vunpack.c.h.b16 %v8726
  %v9100 = vunpack.c.l.b16 %v8727
  %v9101 = vunpack.c.h.b16 %v8727
  %v9102 = vunpack.c.l.b16 %v8728
  %v9103 = vunpack.c.h.b16 %v8728
  %v9104 = vunpack.c.l.b16 %v8729
  %v9105 = vunpack.c.h.b16 %v8729
  %v9106 = vunpack.c.l.b16 %v8730
  %v9107 = vunpack.c.h.b16 %v8730
  %v9108 = vunpack.c.l.b16 %v8731
  %v9109 = vunpack.c.h.b16 %v8731
  %v9110 = vunpack.c.l.b16 %v8732
  %v9111 = vunpack.c.h.b16 %v8732
  %v9112 = vunpack.c.l.b16 %v8733
  %v9113 = vunpack.c.h.b16 %v8733
  %v9114 = vunpack.c.l.b16 %v8734
  %v9115 = vunpack.c.h.b16 %v8734
  %v9116 = vunpack.c.l.b16 %v8735
  %v9117 = vunpack.c.h.b16 %v8735
  %v9118 = vunpack.c.l.b16 %v8736
  %v9119 = vunpack.c.h.b16 %v8736
  %v9120 = vunpack.c.l.b16 %v8737
  %v9121 = vunpack.c.h.b16 %v8737
  %v9122 = vpack.c.b16 %v8932, %v8930
  %v9123 = vpack.c.b16 %v8933, %v8931
  %v9124 = vpack.c.b16 %v8936, %v8934
  %v9125 = vpack.c.b16 %v8937, %v8935
  %v9126 = vpack.c.b16 %v8940, %v8938
  %v9127 = vpack.c.b16 %v8941, %v8939
  %v9128 = vpack.c.b16 %v8944, %v8942
  %v9129 = vpack.c.b16 %v8945, %v8943
  %v9130 = vpack.c.b16 %v8948, %v8946
  %v9131 = vpack.c.b16 %v8949, %v8947
  %v9132 = vpack.c.b16 %v8952, %v8950
  %v9133 = vpack.c.b16 %v8953, %v8951
  %v9134 = vpack.c.b16 %v8956, %v8954
  %v9135 = vpack.c.b16 %v8957, %v8955
  %v9136 = vpack.c.b16 %v8960, %v8958
  %v9137 = vpack.c.b16 %v8961, %v8959
  %v9138 = vpack.c.b16 %v8964, %v8962
  %v9139 = vpack.c.b16 %v8965, %v8963
  %v9140 = vpack.c.b16 %v8968, %v8966
  %v9141 = vpack.c.b16 %v8969, %v8967
  %v9142 = vpack.c.b16 %v8972, %v8970
  %v9143 = vpack.c.b16 %v8973, %v8971
  %v9144 = vpack.c.b16 %v8976, %v8974
  %v9145 = vpack.c.b16 %v8977, %v8975
  %v9146 = vpack.c.b16 %v8980, %v8978
  %v9147 = vpack.c.b16 %v8981, %v8979
  %v9148 = vpack.c.b16 %v8984, %v8982
  %v9149 = vpack.c.b16 %v8985, %v8983
  %v9150 = vpack.c.b16 %v8988, %v8986
  %v9151 = vpack.c.b16 %v8989, %v8987
  %v9152 = vpack.c.b16 %v8992, %v8990
  %v9153 = vpack.c.b16 %v8993, %v8991
  %v9154 = vpack.c.b16 %v8996, %v8994
  %v9155 = vpack.c.b16 %v8997, %v8995
  %v9156 = vpack.c.b16 %v9000, %v8998
  %v9157 = vpack.c.b16 %v9001, %v8999
  %v9158 = vpack.c.b16 %v9004, %v9002
  %v9159 = vpack.c.b16 %v9005, %v9003
  %v9160 = vpack.c.b16 %v9008, %v9006
  %v9161 = vpack.c.b16 %v9009, %v9007
  %v9162 = vpack.c.b16 %v9012, %v9010
  %v9163 = vpack.c.b16 %v9013, %v9011
  %v9164 = vpack.c.b16 %v9016, %v9014
  %v9165 = vpack.c.b16 %v9017, %v9015
  %v9166 = vpack.c.b16 %v9020, %v9018
  %v9167 = vpack.c.b16 %v9021, %v9019
  %v9168 = vpack.c.b16 %v9024, %v9022
  %v9169 = vpack.c.b16 %v9025, %v9023
  %v9170 = vpack.c.b16 %v9028, %v9026
  %v9171 = vpack.c.b16 %v9029, %v9027
  %v9172 = vpack.c.b16 %v9032, %v9030
  %v9173 = vpack.c.b16 %v9033, %v9031
  %v9174 = vpack.c.b16 %v9036, %v9034
  %v9175 = vpack.c.b16 %v9037, %v9035
  %v9176 = vpack.c.b16 %v9040, %v9038
  %v9177 = vpack.c.b16 %v9041, %v9039
  %v9178 = vpack.c.b16 %v9044, %v9042
  %v9179 = vpack.c.b16 %v9045, %v9043
  %v9180 = vpack.c.b16 %v9048, %v9046
  %v9181 = vpack.c.b16 %v9049, %v9047
  %v9182 = vpack.c.b16 %v9052, %v9050
  %v9183 = vpack.c.b16 %v9053, %v9051
  %v9184 = vpack.c.b16 %v9056, %v9054
  %v9185 = vpack.c.b16 %v9057, %v9055
  %v9186 = vpack.c.b16 %v9060, %v9058
  %v9187 = vpack.c.b16 %v9061, %v9059
  %v9188 = vpack.c.b16 %v9064, %v9062
  %v9189 = vpack.c.b16 %v9065, %v9063
  %v9190 = vpack.c.b16 %v9068, %v9066
  %v9191 = vpack.c.b16 %v9069, %v9067
  %v9192 = vpack.c.b16 %v9072, %v9070
  %v9193 = vpack.c.b16 %v9073, %v9071
  %v9194 = vpack.c.b16 %v9076, %v9074
  %v9195 = vpack.c.b16 %v9077, %v9075
  %v9196 = vpack.c.b16 %v9080, %v9078
  %v9197 = vpack.c.b16 %v9081, %v9079
  %v9198 = vpack.c.b16 %v9084, %v9082
  %v9199 = vpack.c.b16 %v9085, %v9083
  %v9200 = vpack.c.b16 %v9088, %v9086
  %v9201 = vpack.c.b16 %v9089, %v9087
  %v9202 = vpack.c.b16 %v9092, %v9090
  %v9203 = vpack.c.b16 %v9093, %v9091
  %v9204 = vpack.c.b16 %v9096, %v9094
  %v9205 = vpack.c.b16 %v9097, %v9095
  %v9206 = vpack.c.b16 %v9100, %v9098
  %v9207 = vpack.c.b16 %v9101, %v9099
  %v9208 = vpack.c.b16 %v9104, %v9102
  %v9209 = vpack.c.b16 %v9105, %v9103
  %v9210 = vpack.c.b16 %v9108, %v9106
  %v9211 = vpack.c.b16 %v9109, %v9107
  %v9212 = vpack.c.b16 %v9112, %v9110
  %v9213 = vpack.c.b16 %v9113, %v9111
  %v9214 = vpack.c.b16 %v9116, %v9114
  %v9215 = vpack.c.b16 %v9117, %v9115
  %v9216 = vpack.c.b16 %v9120, %v9118
  %v9217 = vpack.c.b16 %v9121, %v9119
  %9314 = vmatprep.subr.bf16.mxu0 %v9137
  %9315 = vmatpush1.bf16.msra.mxu0 %v9136
  %9316 = vmatprep.subr.bf16.mxu0 %v9135
  %9317 = vmatpush1.bf16.msra.mxu0 %v9134
  %9318 = vmatprep.subr.bf16.mxu0 %v9133
  %9319 = vmatpush1.bf16.msra.mxu0 %v9132
  %9320 = vmatprep.subr.bf16.mxu0 %v9131
  %9321 = vmatpush1.bf16.msra.mxu0 %v9130
  %9322 = vmatprep.subr.bf16.mxu0 %v9129
  %9323 = vmatpush1.bf16.msra.mxu0 %v9128
  %9324 = vmatprep.subr.bf16.mxu0 %v9127
  %9325 = vmatpush1.bf16.msra.mxu0 %v9126
  %9326 = vmatprep.subr.bf16.mxu0 %v9125
  %9327 = vmatpush1.bf16.msra.mxu0 %v9124
  %9328 = vmatprep.subr.bf16.mxu0 %v9123
  %9329 = vmatpush1.bf16.msra.mxu0 %v9122
  %9330 = vmatprep.subr.bf16.mxu0 %v9153
  %9331 = vmatpush2.bf16.msra.mxu0 %v9152
  %9332 = vmatprep.subr.bf16.mxu0 %v9151
  %9333 = vmatpush2.bf16.msra.mxu0 %v9150
  %9334 = vmatprep.subr.bf16.mxu0 %v9149
  %9335 = vmatpush2.bf16.msra.mxu0 %v9148
  %9336 = vmatprep.subr.bf16.mxu0 %v9147
  %9337 = vmatpush2.bf16.msra.mxu0 %v9146
  %9338 = vmatprep.subr.bf16.mxu0 %v9145
  %9339 = vmatpush2.bf16.msra.mxu0 %v9144
  %9340 = vmatprep.subr.bf16.mxu0 %v9143
  %9341 = vmatpush2.bf16.msra.mxu0 %v9142
  %9342 = vmatprep.subr.bf16.mxu0 %v9141
  %9343 = vmatpush2.bf16.msra.mxu0 %v9140
  %9344 = vmatprep.subr.bf16.mxu0 %v9139
  %9345 = vmatpush2.bf16.msra.mxu0 %v9138
  %9346 = vmatprep.mubr.bf16.mxu0 %v8739
  %9347 = vmatmul.mubr.bf16.gmra.mxu0 %v8738
  %v9348 = vpop.f32.mrf.mxu0
  %v9349 = vadd.f32 0.0, %v9348
  %v9350 = vpop.f32.mrf.mxu0
  %v9351 = vadd.f32 0.0, %v9350
  %v9352 = vpop.f32.mrf.mxu0
  %v9353 = vadd.f32 0.0, %v9352
  %v9354 = vpop.f32.mrf.mxu0
  %v9355 = vadd.f32 0.0, %v9354
  %9356 = vmatprep.mubr.bf16.mxu0 %v8745
  %9357 = vmatmul.mubr.bf16.gmra.mxu0 %v8744
  %v9358 = vpop.f32.mrf.mxu0
  %v9359 = vadd.f32 0.0, %v9358
  %v9360 = vpop.f32.mrf.mxu0
  %v9361 = vadd.f32 0.0, %v9360
  %v9362 = vpop.f32.mrf.mxu0
  %v9363 = vadd.f32 0.0, %v9362
  %v9364 = vpop.f32.mrf.mxu0
  %v9365 = vadd.f32 0.0, %v9364
  %9366 = vmatprep.mubr.bf16.mxu0 %v8751
  %9367 = vmatmul.mubr.bf16.gmra.mxu0 %v8750
  %v9368 = vpop.f32.mrf.mxu0
  %v9369 = vadd.f32 0.0, %v9368
  %v9370 = vpop.f32.mrf.mxu0
  %v9371 = vadd.f32 0.0, %v9370
  %v9372 = vpop.f32.mrf.mxu0
  %v9373 = vadd.f32 0.0, %v9372
  %v9374 = vpop.f32.mrf.mxu0
  %v9375 = vadd.f32 0.0, %v9374
  %9376 = vmatprep.mubr.bf16.mxu0 %v8757
  %9377 = vmatmul.mubr.bf16.gmra.mxu0 %v8756
  %v9378 = vpop.f32.mrf.mxu0
  %v9379 = vadd.f32 0.0, %v9378
  %v9380 = vpop.f32.mrf.mxu0
  %v9381 = vadd.f32 0.0, %v9380
  %v9382 = vpop.f32.mrf.mxu0
  %v9383 = vadd.f32 0.0, %v9382
  %v9384 = vpop.f32.mrf.mxu0
  %v9385 = vadd.f32 0.0, %v9384
  %9386 = vmatprep.mubr.bf16.mxu0 %v8763
  %9387 = vmatmul.mubr.bf16.gmra.mxu0 %v8762
  %v9388 = vpop.f32.mrf.mxu0
  %v9389 = vadd.f32 0.0, %v9388
  %v9390 = vpop.f32.mrf.mxu0
  %v9391 = vadd.f32 0.0, %v9390
  %v9392 = vpop.f32.mrf.mxu0
  %v9393 = vadd.f32 0.0, %v9392
  %v9394 = vpop.f32.mrf.mxu0
  %v9395 = vadd.f32 0.0, %v9394
  %9396 = vmatprep.mubr.bf16.mxu0 %v8769
  %9397 = vmatmul.mubr.bf16.gmra.mxu0 %v8768
  %v9398 = vpop.f32.mrf.mxu0
  %v9399 = vadd.f32 0.0, %v9398
  %v9400 = vpop.f32.mrf.mxu0
  %v9401 = vadd.f32 0.0, %v9400
  %v9402 = vpop.f32.mrf.mxu0
  %v9403 = vadd.f32 0.0, %v9402
  %v9404 = vpop.f32.mrf.mxu0
  %v9405 = vadd.f32 0.0, %v9404
  %9406 = vmatprep.mubr.bf16.mxu0 %v8775
  %9407 = vmatmul.mubr.bf16.gmra.mxu0 %v8774
  %v9408 = vpop.f32.mrf.mxu0
  %v9409 = vadd.f32 0.0, %v9408
  %v9410 = vpop.f32.mrf.mxu0
  %v9411 = vadd.f32 0.0, %v9410
  %v9412 = vpop.f32.mrf.mxu0
  %v9413 = vadd.f32 0.0, %v9412
  %v9414 = vpop.f32.mrf.mxu0
  %v9415 = vadd.f32 0.0, %v9414
  %9416 = vmatprep.mubr.bf16.mxu0 %v8781
  %9417 = vmatmul.mubr.bf16.gmra.mxu0 %v8780
  %v9418 = vpop.f32.mrf.mxu0
  %v9419 = vadd.f32 0.0, %v9418
  %v9420 = vpop.f32.mrf.mxu0
  %v9421 = vadd.f32 0.0, %v9420
  %v9422 = vpop.f32.mrf.mxu0
  %v9423 = vadd.f32 0.0, %v9422
  %v9424 = vpop.f32.mrf.mxu0
  %v9425 = vadd.f32 0.0, %v9424
  %9426 = vmatprep.mubr.bf16.mxu0 %v8787
  %9427 = vmatmul.mubr.bf16.gmra.mxu0 %v8786
  %v9428 = vpop.f32.mrf.mxu0
  %v9429 = vadd.f32 0.0, %v9428
  %v9430 = vpop.f32.mrf.mxu0
  %v9431 = vadd.f32 0.0, %v9430
  %v9432 = vpop.f32.mrf.mxu0
  %v9433 = vadd.f32 0.0, %v9432
  %v9434 = vpop.f32.mrf.mxu0
  %v9435 = vadd.f32 0.0, %v9434
  %9436 = vmatprep.mubr.bf16.mxu0 %v8793
  %9437 = vmatmul.mubr.bf16.gmra.mxu0 %v8792
  %v9438 = vpop.f32.mrf.mxu0
  %v9439 = vadd.f32 0.0, %v9438
  %v9440 = vpop.f32.mrf.mxu0
  %v9441 = vadd.f32 0.0, %v9440
  %v9442 = vpop.f32.mrf.mxu0
  %v9443 = vadd.f32 0.0, %v9442
  %v9444 = vpop.f32.mrf.mxu0
  %v9445 = vadd.f32 0.0, %v9444
  %9446 = vmatprep.mubr.bf16.mxu0 %v8799
  %9447 = vmatmul.mubr.bf16.gmra.mxu0 %v8798
  %v9448 = vpop.f32.mrf.mxu0
  %v9449 = vadd.f32 0.0, %v9448
  %v9450 = vpop.f32.mrf.mxu0
  %v9451 = vadd.f32 0.0, %v9450
  %v9452 = vpop.f32.mrf.mxu0
  %v9453 = vadd.f32 0.0, %v9452
  %v9454 = vpop.f32.mrf.mxu0
  %v9455 = vadd.f32 0.0, %v9454
  %9456 = vmatprep.mubr.bf16.mxu0 %v8805
  %9457 = vmatmul.mubr.bf16.gmra.mxu0 %v8804
  %v9458 = vpop.f32.mrf.mxu0
  %v9459 = vadd.f32 0.0, %v9458
  %v9460 = vpop.f32.mrf.mxu0
  %v9461 = vadd.f32 0.0, %v9460
  %v9462 = vpop.f32.mrf.mxu0
  %v9463 = vadd.f32 0.0, %v9462
  %v9464 = vpop.f32.mrf.mxu0
  %v9465 = vadd.f32 0.0, %v9464
  %9466 = vmatprep.mubr.bf16.mxu0 %v8811
  %9467 = vmatmul.mubr.bf16.gmra.mxu0 %v8810
  %v9468 = vpop.f32.mrf.mxu0
  %v9469 = vadd.f32 0.0, %v9468
  %v9470 = vpop.f32.mrf.mxu0
  %v9471 = vadd.f32 0.0, %v9470
  %v9472 = vpop.f32.mrf.mxu0
  %v9473 = vadd.f32 0.0, %v9472
  %v9474 = vpop.f32.mrf.mxu0
  %v9475 = vadd.f32 0.0, %v9474
  %9476 = vmatprep.mubr.bf16.mxu0 %v8817
  %9477 = vmatmul.mubr.bf16.gmra.mxu0 %v8816
  %v9478 = vpop.f32.mrf.mxu0
  %v9479 = vadd.f32 0.0, %v9478
  %v9480 = vpop.f32.mrf.mxu0
  %v9481 = vadd.f32 0.0, %v9480
  %v9482 = vpop.f32.mrf.mxu0
  %v9483 = vadd.f32 0.0, %v9482
  %v9484 = vpop.f32.mrf.mxu0
  %v9485 = vadd.f32 0.0, %v9484
  %9486 = vmatprep.mubr.bf16.mxu0 %v8823
  %9487 = vmatmul.mubr.bf16.gmra.mxu0 %v8822
  %v9488 = vpop.f32.mrf.mxu0
  %v9489 = vadd.f32 0.0, %v9488
  %v9490 = vpop.f32.mrf.mxu0
  %v9491 = vadd.f32 0.0, %v9490
  %v9492 = vpop.f32.mrf.mxu0
  %v9493 = vadd.f32 0.0, %v9492
  %v9494 = vpop.f32.mrf.mxu0
  %v9495 = vadd.f32 0.0, %v9494
  %9496 = vmatprep.mubr.bf16.mxu0 %v8829
  %9497 = vmatmul.mubr.bf16.gmra.mxu0 %v8828
  %v9498 = vpop.f32.mrf.mxu0
  %v9499 = vadd.f32 0.0, %v9498
  %v9500 = vpop.f32.mrf.mxu0
  %v9501 = vadd.f32 0.0, %v9500
  %v9502 = vpop.f32.mrf.mxu0
  %v9503 = vadd.f32 0.0, %v9502
  %v9504 = vpop.f32.mrf.mxu0
  %v9505 = vadd.f32 0.0, %v9504
  %9506 = vdwg.mxu0
  %9507 = vmatprep.subr.bf16.mxu0 %v9169
  %9508 = vmatpush1.bf16.msra.mxu0 %v9168
  %9509 = vmatprep.subr.bf16.mxu0 %v9167
  %9510 = vmatpush1.bf16.msra.mxu0 %v9166
  %9511 = vmatprep.subr.bf16.mxu0 %v9165
  %9512 = vmatpush1.bf16.msra.mxu0 %v9164
  %9513 = vmatprep.subr.bf16.mxu0 %v9163
  %9514 = vmatpush1.bf16.msra.mxu0 %v9162
  %9515 = vmatprep.subr.bf16.mxu0 %v9161
  %9516 = vmatpush1.bf16.msra.mxu0 %v9160
  %9517 = vmatprep.subr.bf16.mxu0 %v9159
  %9518 = vmatpush1.bf16.msra.mxu0 %v9158
  %9519 = vmatprep.subr.bf16.mxu0 %v9157
  %9520 = vmatpush1.bf16.msra.mxu0 %v9156
  %9521 = vmatprep.subr.bf16.mxu0 %v9155
  %9522 = vmatpush1.bf16.msra.mxu0 %v9154
  %9523 = vmatprep.subr.bf16.mxu0 %v9185
  %9524 = vmatpush2.bf16.msra.mxu0 %v9184
  %9525 = vmatprep.subr.bf16.mxu0 %v9183
  %9526 = vmatpush2.bf16.msra.mxu0 %v9182
  %9527 = vmatprep.subr.bf16.mxu0 %v9181
  %9528 = vmatpush2.bf16.msra.mxu0 %v9180
  %9529 = vmatprep.subr.bf16.mxu0 %v9179
  %9530 = vmatpush2.bf16.msra.mxu0 %v9178
  %9531 = vmatprep.subr.bf16.mxu0 %v9177
  %9532 = vmatpush2.bf16.msra.mxu0 %v9176
  %9533 = vmatprep.subr.bf16.mxu0 %v9175
  %9534 = vmatpush2.bf16.msra.mxu0 %v9174
  %9535 = vmatprep.subr.bf16.mxu0 %v9173
  %9536 = vmatpush2.bf16.msra.mxu0 %v9172
  %9537 = vmatprep.subr.bf16.mxu0 %v9171
  %9538 = vmatpush2.bf16.msra.mxu0 %v9170
  %9539 = vmatprep.mubr.bf16.mxu0 %v8741
  %9540 = vmatmul.mubr.bf16.gmra.mxu0 %v8740
  %v9541 = vpop.f32.mrf.mxu0
  %v9542 = vadd.f32 %v9349, %v9541
  %v9543 = vpop.f32.mrf.mxu0
  %v9544 = vadd.f32 %v9351, %v9543
  %v9545 = vpop.f32.mrf.mxu0
  %v9546 = vadd.f32 %v9353, %v9545
  %v9547 = vpop.f32.mrf.mxu0
  %v9548 = vadd.f32 %v9355, %v9547
  %9549 = vmatprep.mubr.bf16.mxu0 %v8747
  %9550 = vmatmul.mubr.bf16.gmra.mxu0 %v8746
  %v9551 = vpop.f32.mrf.mxu0
  %v9552 = vadd.f32 %v9359, %v9551
  %v9553 = vpop.f32.mrf.mxu0
  %v9554 = vadd.f32 %v9361, %v9553
  %v9555 = vpop.f32.mrf.mxu0
  %v9556 = vadd.f32 %v9363, %v9555
  %v9557 = vpop.f32.mrf.mxu0
  %v9558 = vadd.f32 %v9365, %v9557
  %9559 = vmatprep.mubr.bf16.mxu0 %v8753
  %9560 = vmatmul.mubr.bf16.gmra.mxu0 %v8752
  %v9561 = vpop.f32.mrf.mxu0
  %v9562 = vadd.f32 %v9369, %v9561
  %v9563 = vpop.f32.mrf.mxu0
  %v9564 = vadd.f32 %v9371, %v9563
  %v9565 = vpop.f32.mrf.mxu0
  %v9566 = vadd.f32 %v9373, %v9565
  %v9567 = vpop.f32.mrf.mxu0
  %v9568 = vadd.f32 %v9375, %v9567
  %9569 = vmatprep.mubr.bf16.mxu0 %v8759
  %9570 = vmatmul.mubr.bf16.gmra.mxu0 %v8758
  %v9571 = vpop.f32.mrf.mxu0
  %v9572 = vadd.f32 %v9379, %v9571
  %v9573 = vpop.f32.mrf.mxu0
  %v9574 = vadd.f32 %v9381, %v9573
  %v9575 = vpop.f32.mrf.mxu0
  %v9576 = vadd.f32 %v9383, %v9575
  %v9577 = vpop.f32.mrf.mxu0
  %v9578 = vadd.f32 %v9385, %v9577
  %9579 = vmatprep.mubr.bf16.mxu0 %v8765
  %9580 = vmatmul.mubr.bf16.gmra.mxu0 %v8764
  %v9581 = vpop.f32.mrf.mxu0
  %v9582 = vadd.f32 %v9389, %v9581
  %v9583 = vpop.f32.mrf.mxu0
  %v9584 = vadd.f32 %v9391, %v9583
  %v9585 = vpop.f32.mrf.mxu0
  %v9586 = vadd.f32 %v9393, %v9585
  %v9587 = vpop.f32.mrf.mxu0
  %v9588 = vadd.f32 %v9395, %v9587
  %9589 = vmatprep.mubr.bf16.mxu0 %v8771
  %9590 = vmatmul.mubr.bf16.gmra.mxu0 %v8770
  %v9591 = vpop.f32.mrf.mxu0
  %v9592 = vadd.f32 %v9399, %v9591
  %v9593 = vpop.f32.mrf.mxu0
  %v9594 = vadd.f32 %v9401, %v9593
  %v9595 = vpop.f32.mrf.mxu0
  %v9596 = vadd.f32 %v9403, %v9595
  %v9597 = vpop.f32.mrf.mxu0
  %v9598 = vadd.f32 %v9405, %v9597
  %9599 = vmatprep.mubr.bf16.mxu0 %v8777
  %9600 = vmatmul.mubr.bf16.gmra.mxu0 %v8776
  %v9601 = vpop.f32.mrf.mxu0
  %v9602 = vadd.f32 %v9409, %v9601
  %v9603 = vpop.f32.mrf.mxu0
  %v9604 = vadd.f32 %v9411, %v9603
  %v9605 = vpop.f32.mrf.mxu0
  %v9606 = vadd.f32 %v9413, %v9605
  %v9607 = vpop.f32.mrf.mxu0
  %v9608 = vadd.f32 %v9415, %v9607
  %9609 = vmatprep.mubr.bf16.mxu0 %v8783
  %9610 = vmatmul.mubr.bf16.gmra.mxu0 %v8782
  %v9611 = vpop.f32.mrf.mxu0
  %v9612 = vadd.f32 %v9419, %v9611
  %v9613 = vpop.f32.mrf.mxu0
  %v9614 = vadd.f32 %v9421, %v9613
  %v9615 = vpop.f32.mrf.mxu0
  %v9616 = vadd.f32 %v9423, %v9615
  %v9617 = vpop.f32.mrf.mxu0
  %v9618 = vadd.f32 %v9425, %v9617
  %9619 = vmatprep.mubr.bf16.mxu0 %v8789
  %9620 = vmatmul.mubr.bf16.gmra.mxu0 %v8788
  %v9621 = vpop.f32.mrf.mxu0
  %v9622 = vadd.f32 %v9429, %v9621
  %v9623 = vpop.f32.mrf.mxu0
  %v9624 = vadd.f32 %v9431, %v9623
  %v9625 = vpop.f32.mrf.mxu0
  %v9626 = vadd.f32 %v9433, %v9625
  %v9627 = vpop.f32.mrf.mxu0
  %v9628 = vadd.f32 %v9435, %v9627
  %9629 = vmatprep.mubr.bf16.mxu0 %v8795
  %9630 = vmatmul.mubr.bf16.gmra.mxu0 %v8794
  %v9631 = vpop.f32.mrf.mxu0
  %v9632 = vadd.f32 %v9439, %v9631
  %v9633 = vpop.f32.mrf.mxu0
  %v9634 = vadd.f32 %v9441, %v9633
  %v9635 = vpop.f32.mrf.mxu0
  %v9636 = vadd.f32 %v9443, %v9635
  %v9637 = vpop.f32.mrf.mxu0
  %v9638 = vadd.f32 %v9445, %v9637
  %9639 = vmatprep.mubr.bf16.mxu0 %v8801
  %9640 = vmatmul.mubr.bf16.gmra.mxu0 %v8800
  %v9641 = vpop.f32.mrf.mxu0
  %v9642 = vadd.f32 %v9449, %v9641
  %v9643 = vpop.f32.mrf.mxu0
  %v9644 = vadd.f32 %v9451, %v9643
  %v9645 = vpop.f32.mrf.mxu0
  %v9646 = vadd.f32 %v9453, %v9645
  %v9647 = vpop.f32.mrf.mxu0
  %v9648 = vadd.f32 %v9455, %v9647
  %9649 = vmatprep.mubr.bf16.mxu0 %v8807
  %9650 = vmatmul.mubr.bf16.gmra.mxu0 %v8806
  %v9651 = vpop.f32.mrf.mxu0
  %v9652 = vadd.f32 %v9459, %v9651
  %v9653 = vpop.f32.mrf.mxu0
  %v9654 = vadd.f32 %v9461, %v9653
  %v9655 = vpop.f32.mrf.mxu0
  %v9656 = vadd.f32 %v9463, %v9655
  %v9657 = vpop.f32.mrf.mxu0
  %v9658 = vadd.f32 %v9465, %v9657
  %9659 = vmatprep.mubr.bf16.mxu0 %v8813
  %9660 = vmatmul.mubr.bf16.gmra.mxu0 %v8812
  %v9661 = vpop.f32.mrf.mxu0
  %v9662 = vadd.f32 %v9469, %v9661
  %v9663 = vpop.f32.mrf.mxu0
  %v9664 = vadd.f32 %v9471, %v9663
  %v9665 = vpop.f32.mrf.mxu0
  %v9666 = vadd.f32 %v9473, %v9665
  %v9667 = vpop.f32.mrf.mxu0
  %v9668 = vadd.f32 %v9475, %v9667
  %9669 = vmatprep.mubr.bf16.mxu0 %v8819
  %9670 = vmatmul.mubr.bf16.gmra.mxu0 %v8818
  %v9671 = vpop.f32.mrf.mxu0
  %v9672 = vadd.f32 %v9479, %v9671
  %v9673 = vpop.f32.mrf.mxu0
  %v9674 = vadd.f32 %v9481, %v9673
  %v9675 = vpop.f32.mrf.mxu0
  %v9676 = vadd.f32 %v9483, %v9675
  %v9677 = vpop.f32.mrf.mxu0
  %v9678 = vadd.f32 %v9485, %v9677
  %9679 = vmatprep.mubr.bf16.mxu0 %v8825
  %9680 = vmatmul.mubr.bf16.gmra.mxu0 %v8824
  %v9681 = vpop.f32.mrf.mxu0
  %v9682 = vadd.f32 %v9489, %v9681
  %v9683 = vpop.f32.mrf.mxu0
  %v9684 = vadd.f32 %v9491, %v9683
  %v9685 = vpop.f32.mrf.mxu0
  %v9686 = vadd.f32 %v9493, %v9685
  %v9687 = vpop.f32.mrf.mxu0
  %v9688 = vadd.f32 %v9495, %v9687
  %9689 = vmatprep.mubr.bf16.mxu0 %v8831
  %9690 = vmatmul.mubr.bf16.gmra.mxu0 %v8830
  %v9691 = vpop.f32.mrf.mxu0
  %v9692 = vadd.f32 %v9499, %v9691
  %v9693 = vpop.f32.mrf.mxu0
  %v9694 = vadd.f32 %v9501, %v9693
  %v9695 = vpop.f32.mrf.mxu0
  %v9696 = vadd.f32 %v9503, %v9695
  %v9697 = vpop.f32.mrf.mxu0
  %v9698 = vadd.f32 %v9505, %v9697
  %9699 = vdwg.mxu0
  %9700 = vmatprep.subr.bf16.mxu0 %v9201
  %9701 = vmatpush1.bf16.msra.mxu0 %v9200
  %9702 = vmatprep.subr.bf16.mxu0 %v9199
  %9703 = vmatpush1.bf16.msra.mxu0 %v9198
  %9704 = vmatprep.subr.bf16.mxu0 %v9197
  %9705 = vmatpush1.bf16.msra.mxu0 %v9196
  %9706 = vmatprep.subr.bf16.mxu0 %v9195
  %9707 = vmatpush1.bf16.msra.mxu0 %v9194
  %9708 = vmatprep.subr.bf16.mxu0 %v9193
  %9709 = vmatpush1.bf16.msra.mxu0 %v9192
  %9710 = vmatprep.subr.bf16.mxu0 %v9191
  %9711 = vmatpush1.bf16.msra.mxu0 %v9190
  %9712 = vmatprep.subr.bf16.mxu0 %v9189
  %9713 = vmatpush1.bf16.msra.mxu0 %v9188
  %9714 = vmatprep.subr.bf16.mxu0 %v9187
  %9715 = vmatpush1.bf16.msra.mxu0 %v9186
  %9716 = vmatprep.subr.bf16.mxu0 %v9217
  %9717 = vmatpush2.bf16.msra.mxu0 %v9216
  %9718 = vmatprep.subr.bf16.mxu0 %v9215
  %9719 = vmatpush2.bf16.msra.mxu0 %v9214
  %9720 = vmatprep.subr.bf16.mxu0 %v9213
  %9721 = vmatpush2.bf16.msra.mxu0 %v9212
  %9722 = vmatprep.subr.bf16.mxu0 %v9211
  %9723 = vmatpush2.bf16.msra.mxu0 %v9210
  %9724 = vmatprep.subr.bf16.mxu0 %v9209
  %9725 = vmatpush2.bf16.msra.mxu0 %v9208
  %9726 = vmatprep.subr.bf16.mxu0 %v9207
  %9727 = vmatpush2.bf16.msra.mxu0 %v9206
  %9728 = vmatprep.subr.bf16.mxu0 %v9205
  %9729 = vmatpush2.bf16.msra.mxu0 %v9204
  %9730 = vmatprep.subr.bf16.mxu0 %v9203
  %9731 = vmatpush2.bf16.msra.mxu0 %v9202
  %9732 = vmatprep.mubr.bf16.mxu0 %v8743
  %9733 = vmatmul.mubr.bf16.gmra.mxu0 %v8742
  %v9734 = vpop.f32.mrf.mxu0
  %v9735 = vadd.f32 %v9542, %v9734
  %v9736 = vpop.f32.mrf.mxu0
  %v9737 = vadd.f32 %v9544, %v9736
  %v9738 = vpop.f32.mrf.mxu0
  %v9739 = vadd.f32 %v9546, %v9738
  %v9740 = vpop.f32.mrf.mxu0
  %v9741 = vadd.f32 %v9548, %v9740
  %9742 = vmatprep.mubr.bf16.mxu0 %v8749
  %9743 = vmatmul.mubr.bf16.gmra.mxu0 %v8748
  %v9744 = vpop.f32.mrf.mxu0
  %v9745 = vadd.f32 %v9552, %v9744
  %v9746 = vpop.f32.mrf.mxu0
  %v9747 = vadd.f32 %v9554, %v9746
  %v9748 = vpop.f32.mrf.mxu0
  %v9749 = vadd.f32 %v9556, %v9748
  %v9750 = vpop.f32.mrf.mxu0
  %v9751 = vadd.f32 %v9558, %v9750
  %9752 = vmatprep.mubr.bf16.mxu0 %v8755
  %9753 = vmatmul.mubr.bf16.gmra.mxu0 %v8754
  %v9754 = vpop.f32.mrf.mxu0
  %v9755 = vadd.f32 %v9562, %v9754
  %v9756 = vpop.f32.mrf.mxu0
  %v9757 = vadd.f32 %v9564, %v9756
  %v9758 = vpop.f32.mrf.mxu0
  %v9759 = vadd.f32 %v9566, %v9758
  %v9760 = vpop.f32.mrf.mxu0
  %v9761 = vadd.f32 %v9568, %v9760
  %9762 = vmatprep.mubr.bf16.mxu0 %v8761
  %9763 = vmatmul.mubr.bf16.gmra.mxu0 %v8760
  %v9764 = vpop.f32.mrf.mxu0
  %v9765 = vadd.f32 %v9572, %v9764
  %v9766 = vpop.f32.mrf.mxu0
  %v9767 = vadd.f32 %v9574, %v9766
  %v9768 = vpop.f32.mrf.mxu0
  %v9769 = vadd.f32 %v9576, %v9768
  %v9770 = vpop.f32.mrf.mxu0
  %v9771 = vadd.f32 %v9578, %v9770
  %9772 = vmatprep.mubr.bf16.mxu0 %v8767
  %9773 = vmatmul.mubr.bf16.gmra.mxu0 %v8766
  %v9774 = vpop.f32.mrf.mxu0
  %v9775 = vadd.f32 %v9582, %v9774
  %v9776 = vpop.f32.mrf.mxu0
  %v9777 = vadd.f32 %v9584, %v9776
  %v9778 = vpop.f32.mrf.mxu0
  %v9779 = vadd.f32 %v9586, %v9778
  %v9780 = vpop.f32.mrf.mxu0
  %v9781 = vadd.f32 %v9588, %v9780
  %9782 = vmatprep.mubr.bf16.mxu0 %v8773
  %9783 = vmatmul.mubr.bf16.gmra.mxu0 %v8772
  %v9784 = vpop.f32.mrf.mxu0
  %v9785 = vadd.f32 %v9592, %v9784
  %v9786 = vpop.f32.mrf.mxu0
  %v9787 = vadd.f32 %v9594, %v9786
  %v9788 = vpop.f32.mrf.mxu0
  %v9789 = vadd.f32 %v9596, %v9788
  %v9790 = vpop.f32.mrf.mxu0
  %v9791 = vadd.f32 %v9598, %v9790
  %9792 = vmatprep.mubr.bf16.mxu0 %v8779
  %9793 = vmatmul.mubr.bf16.gmra.mxu0 %v8778
  %v9794 = vpop.f32.mrf.mxu0
  %v9795 = vadd.f32 %v9602, %v9794
  %v9796 = vpop.f32.mrf.mxu0
  %v9797 = vadd.f32 %v9604, %v9796
  %v9798 = vpop.f32.mrf.mxu0
  %v9799 = vadd.f32 %v9606, %v9798
  %v9800 = vpop.f32.mrf.mxu0
  %v9801 = vadd.f32 %v9608, %v9800
  %9802 = vmatprep.mubr.bf16.mxu0 %v8785
  %9803 = vmatmul.mubr.bf16.gmra.mxu0 %v8784
  %v9804 = vpop.f32.mrf.mxu0
  %v9805 = vadd.f32 %v9612, %v9804
  %v9806 = vpop.f32.mrf.mxu0
  %v9807 = vadd.f32 %v9614, %v9806
  %v9808 = vpop.f32.mrf.mxu0
  %v9809 = vadd.f32 %v9616, %v9808
  %v9810 = vpop.f32.mrf.mxu0
  %v9811 = vadd.f32 %v9618, %v9810
  %9812 = vmatprep.mubr.bf16.mxu0 %v8791
  %9813 = vmatmul.mubr.bf16.gmra.mxu0 %v8790
  %v9814 = vpop.f32.mrf.mxu0
  %v9815 = vadd.f32 %v9622, %v9814
  %v9816 = vpop.f32.mrf.mxu0
  %v9817 = vadd.f32 %v9624, %v9816
  %v9818 = vpop.f32.mrf.mxu0
  %v9819 = vadd.f32 %v9626, %v9818
  %v9820 = vpop.f32.mrf.mxu0
  %v9821 = vadd.f32 %v9628, %v9820
  %9822 = vmatprep.mubr.bf16.mxu0 %v8797
  %9823 = vmatmul.mubr.bf16.gmra.mxu0 %v8796
  %v9824 = vpop.f32.mrf.mxu0
  %v9825 = vadd.f32 %v9632, %v9824
  %v9826 = vpop.f32.mrf.mxu0
  %v9827 = vadd.f32 %v9634, %v9826
  %v9828 = vpop.f32.mrf.mxu0
  %v9829 = vadd.f32 %v9636, %v9828
  %v9830 = vpop.f32.mrf.mxu0
  %v9831 = vadd.f32 %v9638, %v9830
  %9832 = vmatprep.mubr.bf16.mxu0 %v8803
  %9833 = vmatmul.mubr.bf16.gmra.mxu0 %v8802
  %v9834 = vpop.f32.mrf.mxu0
  %v9835 = vadd.f32 %v9642, %v9834
  %v9836 = vpop.f32.mrf.mxu0
  %v9837 = vadd.f32 %v9644, %v9836
  %v9838 = vpop.f32.mrf.mxu0
  %v9839 = vadd.f32 %v9646, %v9838
  %v9840 = vpop.f32.mrf.mxu0
  %v9841 = vadd.f32 %v9648, %v9840
  %9842 = vmatprep.mubr.bf16.mxu0 %v8809
  %9843 = vmatmul.mubr.bf16.gmra.mxu0 %v8808
  %v9844 = vpop.f32.mrf.mxu0
  %v9845 = vadd.f32 %v9652, %v9844
  %v9846 = vpop.f32.mrf.mxu0
  %v9847 = vadd.f32 %v9654, %v9846
  %v9848 = vpop.f32.mrf.mxu0
  %v9849 = vadd.f32 %v9656, %v9848
  %v9850 = vpop.f32.mrf.mxu0
  %v9851 = vadd.f32 %v9658, %v9850
  %9852 = vmatprep.mubr.bf16.mxu0 %v8815
  %9853 = vmatmul.mubr.bf16.gmra.mxu0 %v8814
  %v9854 = vpop.f32.mrf.mxu0
  %v9855 = vadd.f32 %v9662, %v9854
  %v9856 = vpop.f32.mrf.mxu0
  %v9857 = vadd.f32 %v9664, %v9856
  %v9858 = vpop.f32.mrf.mxu0
  %v9859 = vadd.f32 %v9666, %v9858
  %v9860 = vpop.f32.mrf.mxu0
  %v9861 = vadd.f32 %v9668, %v9860
  %9862 = vmatprep.mubr.bf16.mxu0 %v8821
  %9863 = vmatmul.mubr.bf16.gmra.mxu0 %v8820
  %v9864 = vpop.f32.mrf.mxu0
  %v9865 = vadd.f32 %v9672, %v9864
  %v9866 = vpop.f32.mrf.mxu0
  %v9867 = vadd.f32 %v9674, %v9866
  %v9868 = vpop.f32.mrf.mxu0
  %v9869 = vadd.f32 %v9676, %v9868
  %v9870 = vpop.f32.mrf.mxu0
  %v9871 = vadd.f32 %v9678, %v9870
  %9872 = vmatprep.mubr.bf16.mxu0 %v8827
  %9873 = vmatmul.mubr.bf16.gmra.mxu0 %v8826
  %v9874 = vpop.f32.mrf.mxu0
  %v9875 = vadd.f32 %v9682, %v9874
  %v9876 = vpop.f32.mrf.mxu0
  %v9877 = vadd.f32 %v9684, %v9876
  %v9878 = vpop.f32.mrf.mxu0
  %v9879 = vadd.f32 %v9686, %v9878
  %v9880 = vpop.f32.mrf.mxu0
  %v9881 = vadd.f32 %v9688, %v9880
  %9882 = vmatprep.mubr.bf16.mxu0 %v8833
  %9883 = vmatmul.mubr.bf16.gmra.mxu0 %v8832
  %v9884 = vpop.f32.mrf.mxu0
  %v9885 = vadd.f32 %v9692, %v9884
  %v9886 = vpop.f32.mrf.mxu0
  %v9887 = vadd.f32 %v9694, %v9886
  %v9888 = vpop.f32.mrf.mxu0
  %v9889 = vadd.f32 %v9696, %v9888
  %v9890 = vpop.f32.mrf.mxu0
  %v9891 = vadd.f32 %v9698, %v9890
  %9892 = vdwg.mxu0
  %v9893 = vtanh.pop %v9735
  %v9894 = vtanh.pop %v9737
  %v9895 = vtanh.pop %v9739
  %v9896 = vtanh.pop %v9741
  %v9897 = vtanh.pop %v9745
  %v9898 = vtanh.pop %v9747
  %v9899 = vtanh.pop %v9749
  %v9900 = vtanh.pop %v9751
  %v9901 = vtanh.pop %v9755
  %v9902 = vtanh.pop %v9757
  %v9903 = vtanh.pop %v9759
  %v9904 = vtanh.pop %v9761
  %v9905 = vtanh.pop %v9765
  %v9906 = vtanh.pop %v9767
  %v9907 = vtanh.pop %v9769
  %v9908 = vtanh.pop %v9771
  %v9909 = vtanh.pop %v9775
  %v9910 = vtanh.pop %v9777
  %v9911 = vtanh.pop %v9779
  %v9912 = vtanh.pop %v9781
  %v9913 = vtanh.pop %v9785
  %v9914 = vtanh.pop %v9787
  %v9915 = vtanh.pop %v9789
  %v9916 = vtanh.pop %v9791
  %v9917 = vtanh.pop %v9795
  %v9918 = vtanh.pop %v9797
  %v9919 = vtanh.pop %v9799
  %v9920 = vtanh.pop %v9801
  %v9921 = vtanh.pop %v9805
  %v9922 = vtanh.pop %v9807
  %v9923 = vtanh.pop %v9809
  %v9924 = vtanh.pop %v9811
  %v9925 = vtanh.pop %v9815
  %v9926 = vtanh.pop %v9817
  %v9927 = vtanh.pop %v9819
  %v9928 = vtanh.pop %v9821
  %v9929 = vtanh.pop %v9825
  %v9930 = vtanh.pop %v9827
  %v9931 = vtanh.pop %v9829
  %v9932 = vtanh.pop %v9831
  %v9933 = vtanh.pop %v9835
  %v9934 = vtanh.pop %v9837
  %v9935 = vtanh.pop %v9839
  %v9936 = vtanh.pop %v9841
  %v9937 = vtanh.pop %v9845
  %v9938 = vtanh.pop %v9847
  %v9939 = vtanh.pop %v9849
  %v9940 = vtanh.pop %v9851
  %v9941 = vtanh.pop %v9855
  %v9942 = vtanh.pop %v9857
  %v9943 = vtanh.pop %v9859
  %v9944 = vtanh.pop %v9861
  %v9945 = vtanh.pop %v9865
  %v9946 = vtanh.pop %v9867
  %v9947 = vtanh.pop %v9869
  %v9948 = vtanh.pop %v9871
  %v9949 = vtanh.pop %v9875
  %v9950 = vtanh.pop %v9877
  %v9951 = vtanh.pop %v9879
  %v9952 = vtanh.pop %v9881
  %v9953 = vtanh.pop %v9885
  %v9954 = vtanh.pop %v9887
  %v9955 = vtanh.pop %v9889
  %v9956 = vtanh.pop %v9891
  %9957 = vst [vmem:[%s9] sm:$0xff] %v9893
  %9958 = vst [vmem:[%s9 + $0x8] sm:$0xff] %v9894
  %9959 = vst [vmem:[%s9 + $0x10] sm:$0xff] %v9895
  %9960 = vst [vmem:[%s9 + $0x18] sm:$0xff] %v9896
  %9961 = vst [vmem:[%s9 + $0x20] sm:$0xff] %v9897
  %9962 = vst [vmem:[%s9 + $0x28] sm:$0xff] %v9898
  %9963 = vst [vmem:[%s9 + $0x30] sm:$0xff] %v9899
  %9964 = vst [vmem:[%s9 + $0x38] sm:$0xff] %v9900
  %9965 = vst [vmem:[%s9 + $0x40] sm:$0xff] %v9901
  %9966 = vst [vmem:[%s9 + $0x48] sm:$0xff] %v9902
  %9967 = vst [vmem:[%s9 + $0x50] sm:$0xff] %v9903
  %9968 = vst [vmem:[%s9 + $0x58] sm:$0xff] %v9904
  %9969 = vst [vmem:[%s9 + $0x60] sm:$0xff] %v9905
  %9970 = vst [vmem:[%s9 + $0x68] sm:$0xff] %v9906
  %9971 = vst [vmem:[%s9 + $0x70] sm:$0xff] %v9907
  %9972 = vst [vmem:[%s9 + $0x78] sm:$0xff] %v9908
  %9973 = vst [vmem:[%s9 + $0x80] sm:$0xff] %v9909
  %9974 = vst [vmem:[%s9 + $0x88] sm:$0xff] %v9910
  %9975 = vst [vmem:[%s9 + $0x90] sm:$0xff] %v9911
  %9976 = vst [vmem:[%s9 + $0x98] sm:$0xff] %v9912
  %9977 = vst [vmem:[%s9 + $0xa0] sm:$0xff] %v9913
  %9978 = vst [vmem:[%s9 + $0xa8] sm:$0xff] %v9914
  %9979 = vst [vmem:[%s9 + $0xb0] sm:$0xff] %v9915
  %9980 = vst [vmem:[%s9 + $0xb8] sm:$0xff] %v9916
  %9981 = vst [vmem:[%s9 + $0xc0] sm:$0xff] %v9917
  %9982 = vst [vmem:[%s9 + $0xc8] sm:$0xff] %v9918
  %9983 = vst [vmem:[%s9 + $0xd0] sm:$0xff] %v9919
  %9984 = vst [vmem:[%s9 + $0xd8] sm:$0xff] %v9920
  %9985 = vst [vmem:[%s9 + $0xe0] sm:$0xff] %v9921
  %9986 = vst [vmem:[%s9 + $0xe8] sm:$0xff] %v9922
  %9987 = vst [vmem:[%s9 + $0xf0] sm:$0xff] %v9923
  %9988 = vst [vmem:[%s9 + $0xf8] sm:$0xff] %v9924
  %9989 = vst [vmem:[%s9 + $0x100] sm:$0xff] %v9925
  %9990 = vst [vmem:[%s9 + $0x108] sm:$0xff] %v9926
  %9991 = vst [vmem:[%s9 + $0x110] sm:$0xff] %v9927
  %9992 = vst [vmem:[%s9 + $0x118] sm:$0xff] %v9928
  %9993 = vst [vmem:[%s9 + $0x120] sm:$0xff] %v9929
  %9994 = vst [vmem:[%s9 + $0x128] sm:$0xff] %v9930
  %9995 = vst [vmem:[%s9 + $0x130] sm:$0xff] %v9931
  %9996 = vst [vmem:[%s9 + $0x138] sm:$0xff] %v9932
  %9997 = vst [vmem:[%s9 + $0x140] sm:$0xff] %v9933
  %9998 = vst [vmem:[%s9 + $0x148] sm:$0xff] %v9934
  %9999 = vst [vmem:[%s9 + $0x150] sm:$0xff] %v9935
  %10000 = vst [vmem:[%s9 + $0x158] sm:$0xff] %v9936
  %10001 = vst [vmem:[%s9 + $0x160] sm:$0xff] %v9937
  %10002 = vst [vmem:[%s9 + $0x168] sm:$0xff] %v9938
  %10003 = vst [vmem:[%s9 + $0x170] sm:$0xff] %v9939
  %10004 = vst [vmem:[%s9 + $0x178] sm:$0xff] %v9940
  %10005 = vst [vmem:[%s9 + $0x180] sm:$0xff] %v9941
  %10006 = vst [vmem:[%s9 + $0x188] sm:$0xff] %v9942
  %10007 = vst [vmem:[%s9 + $0x190] sm:$0xff] %v9943
  %10008 = vst [vmem:[%s9 + $0x198] sm:$0xff] %v9944
  %10009 = vst [vmem:[%s9 + $0x1a0] sm:$0xff] %v9945
  %10010 = vst [vmem:[%s9 + $0x1a8] sm:$0xff] %v9946
  %10011 = vst [vmem:[%s9 + $0x1b0] sm:$0xff] %v9947
  %10012 = vst [vmem:[%s9 + $0x1b8] sm:$0xff] %v9948
  %10013 = vst [vmem:[%s9 + $0x1c0] sm:$0xff] %v9949
  %10014 = vst [vmem:[%s9 + $0x1c8] sm:$0xff] %v9950
  %10015 = vst [vmem:[%s9 + $0x1d0] sm:$0xff] %v9951
  %10016 = vst [vmem:[%s9 + $0x1d8] sm:$0xff] %v9952
  %10017 = vst [vmem:[%s9 + $0x1e0] sm:$0xff] %v9953
  %10018 = vst [vmem:[%s9 + $0x1e8] sm:$0xff] %v9954
  %10019 = vst [vmem:[%s9 + $0x1f0] sm:$0xff] %v9955
  %10020 = vst [vmem:[%s9 + $0x1f8] sm:$0xff] %v9956
  // Predicated region
  $region38: #{decoder1_forward.1} parent=0 // pred_check
    _
  $region39: #{decoder1_forward.1} parent=0 // pred_check_branch
    %10022 = sbr.rel (0) target = $region41
  $region40: #{decoder1_forward.1} parent=0 // pred_region
    _
  $region41: #{decoder1_forward.1} parent=0 // pred_fallthru
    _
  // Predicated region
  $region42: #{decoder1_forward.1} parent=0 // pred_check
    _
  $region43: #{decoder1_forward.1} parent=0 // pred_check_branch
    %10024 = sbr.rel (0) target = $region45
  $region44: #{decoder1_forward.1} parent=0 // pred_region
    _
  $region45: #{decoder1_forward.1} parent=0 // pred_fallthru
    _

</llo_original>
